<compile_context>
chip_gen: v7x
topology: tpu7x:2x2x1
jax: 0.10.0
libtpu: 0.0.40
codegen_flags: <defaults>
</compile_context>

<pallas_src>
import functools
import math

import jax
import jax.numpy as jnp
from jax import lax
from jax.experimental import pallas as pl
from jax.experimental.pallas import tpu as pltpu

BN_EPS = 1e-5                   # torch.nn.BatchNorm default eps
VMEM_LIMIT = 48 * 1024 * 1024   # safe on v5e/v6e (128 MiB) and v7x (64 MiB)
TILE_M = 512                    # row/point tile target, 128-aligned


def _pick_tile(m, target):
    """Largest multiple of 8 <= target that divides m (or m itself)."""
    if m <= target:
        return m
    t = (target // 8) * 8
    while t >= 8:
        if m % t == 0:
            return t
        t -= 8
    return m


# ----------------------------------------------------------------------------
# Fused per-point linear layer, tiled over rows (B*N flattened).
#   - optionally applies the PREVIOUS layer's BatchNorm (per-channel affine)
#     and ReLU to the input tile,
#   - matmul (bf16 operands, fp32 accumulation) + bias,
#   - optionally ReLU on the output (layers without BN),
#   - optionally emits per-tile partial sum / sum-of-squares of the pre-BN
#     output so THIS layer's training-mode BN can be fused into the next call.
# ----------------------------------------------------------------------------
def _linear_kernel(x_ref, w_ref, b_ref, ps_ref, pq_ref, o_ref,
                   sum_ref=None, sq_ref=None, *,
                   prev_affine, prev_relu, out_relu, compute_stats, mm_dtype):
    h = x_ref[...]
    if prev_affine:
        h = h * ps_ref[...] + pq_ref[...]
    if prev_relu:
        h = jnp.maximum(h, 0.0)
    y = jnp.dot(h.astype(mm_dtype), w_ref[...],
                preferred_element_type=jnp.float32)
    y = y + b_ref[...]
    if out_relu:
        y = jnp.maximum(y, 0.0)
    o_ref[...] = y
    if compute_stats:
        sum_ref[...] = jnp.sum(y, axis=0, keepdims=True).reshape(sum_ref.shape)
        sq_ref[...] = jnp.sum(y * y, axis=0, keepdims=True).reshape(sq_ref.shape)


def linear(x, w, bias, pscale=None, pshift=None, *, prev_affine=False,
           prev_relu=False, out_relu=False, compute_stats=False,
           tm_target=TILE_M):
    M, K = x.shape
    Kw, Nout = w.shape
    assert Kw == K
    tm = _pick_tile(M, tm_target)
    nt = M // tm

    # bf16 on the MXU for real matmul layers; tiny K=3 layers stay fp32.
    mm_dtype = jnp.bfloat16 if K >= 64 else jnp.float32
    w = w.astype(mm_dtype)
    bias = bias.reshape(1, Nout).astype(jnp.float32)
    if pscale is None:
        pscale = jnp.ones((1, K), jnp.float32)
    if pshift is None:
        pshift = jnp.zeros((1, K), jnp.float32)

    kern = functools.partial(
        _linear_kernel, prev_affine=prev_affine, prev_relu=prev_relu,
        out_relu=out_relu, compute_stats=compute_stats, mm_dtype=mm_dtype)

    in_specs = [
        pl.BlockSpec((tm, K), lambda i: (i, 0)),
        pl.BlockSpec((K, Nout), lambda i: (0, 0)),
        pl.BlockSpec((1, Nout), lambda i: (0, 0)),
        pl.BlockSpec((1, K), lambda i: (0, 0)),
        pl.BlockSpec((1, K), lambda i: (0, 0)),
    ]
    out_shape = jax.ShapeDtypeStruct((M, Nout), jnp.float32)
    out_specs = pl.BlockSpec((tm, Nout), lambda i: (i, 0))
    if compute_stats:
        out_shape = (out_shape,
                     jax.ShapeDtypeStruct((nt, 1, Nout), jnp.float32),
                     jax.ShapeDtypeStruct((nt, 1, Nout), jnp.float32))
        out_specs = (out_specs,
                     pl.BlockSpec((1, 1, Nout), lambda i: (i, 0, 0)),
                     pl.BlockSpec((1, 1, Nout), lambda i: (i, 0, 0)))

    return pl.pallas_call(
        kern,
        out_shape=out_shape,
        grid_spec=pltpu.PrefetchScalarGridSpec(
            num_scalar_prefetch=0,
            grid=(nt,),
            in_specs=in_specs,
            out_specs=out_specs),
        compiler_params=pltpu.CompilerParams(
            dimension_semantics=("parallel",),
            vmem_limit_bytes=VMEM_LIMIT),
    )(x, w, bias, pscale, pshift)


# ----------------------------------------------------------------------------
# conv1 with the STN transform folded in: per-batch effective weight
# (trans @ W1), pre-BN output + per-tile BN partial stats.
# ----------------------------------------------------------------------------
def _conv1_kernel(x_ref, w_ref, b_ref, o_ref, sum_ref, sq_ref):
    y = jnp.dot(x_ref[0], w_ref[0], preferred_element_type=jnp.float32)
    y = y + b_ref[...]
    o_ref[0] = y
    sum_ref[...] = jnp.sum(y, axis=0, keepdims=True).reshape(sum_ref.shape)
    sq_ref[...] = jnp.sum(y * y, axis=0, keepdims=True).reshape(sq_ref.shape)


def conv1_folded(x, w_eff, bias, tp_target=TILE_M):
    B, N, Cin = x.shape
    Cout = w_eff.shape[-1]
    tp = _pick_tile(N, tp_target)
    nt = N // tp
    bias = bias.reshape(1, Cout).astype(jnp.float32)
    return pl.pallas_call(
        _conv1_kernel,
        out_shape=(jax.ShapeDtypeStruct((B, N, Cout), jnp.float32),
                   jax.ShapeDtypeStruct((B, nt, 1, Cout), jnp.float32),
                   jax.ShapeDtypeStruct((B, nt, 1, Cout), jnp.float32)),
        grid_spec=pltpu.PrefetchScalarGridSpec(
            num_scalar_prefetch=0,
            grid=(B, nt),
            in_specs=[pl.BlockSpec((1, tp, Cin), lambda b, t: (b, t, 0)),
                      pl.BlockSpec((1, Cin, Cout), lambda b, t: (b, 0, 0)),
                      pl.BlockSpec((1, Cout), lambda b, t: (0, 0))],
            out_specs=(pl.BlockSpec((1, tp, Cout), lambda b, t: (b, t, 0)),
                       pl.BlockSpec((1, 1, 1, Cout), lambda b, t: (b, t, 0, 0)),
                       pl.BlockSpec((1, 1, 1, Cout), lambda b, t: (b, t, 0, 0)))),
        compiler_params=pltpu.CompilerParams(
            dimension_semantics=("parallel", "parallel"),
            vmem_limit_bytes=VMEM_LIMIT),
    )(x, w_eff, bias)


# ----------------------------------------------------------------------------
# Fused (prev-BN+ReLU) -> linear -> [ReLU] -> max-pool-over-points kernel.
# Grid (B, point-tiles).  The per-batch channel max is accumulated in the
# resident output block across the point-tile axis ("arbitrary"), so the big
# (B*N, Cout) activation never round-trips through HBM.  Optionally emits
# per-tile partial stats of the pre-BN output (for the following BatchNorm,
# which - being a positive-scale affine - commutes with the max).
# ----------------------------------------------------------------------------
def _conv_max_kernel(x_ref, w_ref, b_ref, ps_ref, pq_ref, max_ref,
                     sum_ref=None, sq_ref=None, *,
                     prev_affine, prev_relu, out_relu, compute_stats, mm_dtype):
    t = pl.program_id(1)
    h = x_ref[0]
    if prev_affine:
        h = h * ps_ref[...] + pq_ref[...]
    if prev_relu:
        h = jnp.maximum(h, 0.0)
    y = jnp.dot(h.astype(mm_dtype), w_ref[...],
                preferred_element_type=jnp.float32)
    y = y + b_ref[...]
    if out_relu:
        y = jnp.maximum(y, 0.0)
    m = jnp.max(y, axis=0, keepdims=True)            # (1, Cout)

    @pl.when(t == 0)
    def _():
        max_ref[0] = m

    @pl.when(t != 0)
    def _():
        max_ref[0] = jnp.maximum(max_ref[0], m)

    if compute_stats:
        sum_ref[...] = jnp.sum(y, axis=0, keepdims=True).reshape(sum_ref.shape)
        sq_ref[...] = jnp.sum(y * y, axis=0, keepdims=True).reshape(sq_ref.shape)


def conv_maxpool(x, w, bias, pscale=None, pshift=None, *, prev_affine=False,
                 prev_relu=False, out_relu=False, compute_stats=False,
                 tp_target=TILE_M):
    B, N, K = x.shape
    Kw, Cout = w.shape
    assert Kw == K
    tp = _pick_tile(N, tp_target)
    nt = N // tp

    mm_dtype = jnp.bfloat16 if K >= 64 else jnp.float32
    w = w.astype(mm_dtype)
    bias = bias.reshape(1, Cout).astype(jnp.float32)
    if pscale is None:
        pscale = jnp.ones((1, K), jnp.float32)
    if pshift is None:
        pshift = jnp.zeros((1, K), jnp.float32)

    kern = functools.partial(
        _conv_max_kernel, prev_affine=prev_affine, prev_relu=prev_relu,
        out_relu=out_relu, compute_stats=compute_stats, mm_dtype=mm_dtype)

    in_specs = [
        pl.BlockSpec((1, tp, K), lambda b, t: (b, t, 0)),
        pl.BlockSpec((K, Cout), lambda b, t: (0, 0)),
        pl.BlockSpec((1, Cout), lambda b, t: (0, 0)),
        pl.BlockSpec((1, K), lambda b, t: (0, 0)),
        pl.BlockSpec((1, K), lambda b, t: (0, 0)),
    ]
    out_shape = jax.ShapeDtypeStruct((B, 1, Cout), jnp.float32)
    out_specs = pl.BlockSpec((1, 1, Cout), lambda b, t: (b, 0, 0))
    if compute_stats:
        out_shape = (out_shape,
                     jax.ShapeDtypeStruct((B, nt, 1, Cout), jnp.float32),
                     jax.ShapeDtypeStruct((B, nt, 1, Cout), jnp.float32))
        out_specs = (out_specs,
                     pl.BlockSpec((1, 1, 1, Cout), lambda b, t: (b, t, 0, 0)),
                     pl.BlockSpec((1, 1, 1, Cout), lambda b, t: (b, t, 0, 0)))

    res = pl.pallas_call(
        kern,
        out_shape=out_shape,
        grid_spec=pltpu.PrefetchScalarGridSpec(
            num_scalar_prefetch=0,
            grid=(B, nt),
            in_specs=in_specs,
            out_specs=out_specs),
        compiler_params=pltpu.CompilerParams(
            dimension_semantics=("parallel", "arbitrary"),
            vmem_limit_bytes=VMEM_LIMIT),
    )(x, w, bias, pscale, pshift)

    if compute_stats:
        mx, s, sq = res
        return mx.reshape(B, Cout), s, sq
    return res.reshape(B, Cout)


# ----------------------------------------------------------------------------
# Training-mode BatchNorm scale/shift (gamma=1, beta=0) from partial sums.
# ----------------------------------------------------------------------------
def bn_scale_shift(sum_arr, sq_arr, count):
    c = sum_arr.shape[-1]
    s = jnp.sum(sum_arr.reshape(-1, c), axis=0)
    sq = jnp.sum(sq_arr.reshape(-1, c), axis=0)
    mean = s / count
    var = jnp.maximum(sq / count - mean * mean, 0.0)   # biased, like BN train
    scale = lax.rsqrt(var + BN_EPS)                    # gamma = 1
    shift = -mean * scale                              # beta = 0
    return scale.reshape(1, c), shift.reshape(1, c)


# ----------------------------------------------------------------------------
# Parameters (deterministic; shapes from the module __init__, fc3 zero-init).
# ----------------------------------------------------------------------------
def init_params(key):
    keys = iter(jax.random.split(key, 24))

    def w(shape, fan_in):
        return jax.random.normal(next(keys), shape, jnp.float32) / math.sqrt(fan_in)

    p = {}
    # STN3d (k=3, use_bn=False)
    p['s_conv1_w'], p['s_conv1_b'] = w((3, 64), 3), w((64,), 3)
    p['s_conv2_w'], p['s_conv2_b'] = w((64, 128), 64), w((128,), 64)
    p['s_conv3_w'], p['s_conv3_b'] = w((128, 1024), 128), w((1024,), 128)
    p['s_fc1_w'], p['s_fc1_b'] = w((1024, 512), 1024), w((512,), 1024)
    p['s_fc2_w'], p['s_fc2_b'] = w((512, 256), 512), w((256,), 512)
    p['s_fc3_w'] = jnp.zeros((256, 9), jnp.float32)    # zero-init per module
    p['s_fc3_b'] = jnp.zeros((9,), jnp.float32)
    # PointNetfeat conv stack (each followed by BatchNorm2d)
    p['conv1_w'], p['conv1_b'] = w((3, 64), 3), w((64,), 3)
    p['conv2_w'], p['conv2_b'] = w((64, 64), 64), w((64,), 64)
    p['conv3_w'], p['conv3_b'] = w((64, 64), 64), w((64,), 64)
    p['conv4_w'], p['conv4_b'] = w((64, 128), 64), w((128,), 64)
    p['conv5_w'], p['conv5_b'] = w((128, 1024), 128), w((1024,), 128)
    return p


# ----------------------------------------------------------------------------
# Full PointNetfeat forward: (B, N, 3) -> (global_feature (B,1024), trans).
# ----------------------------------------------------------------------------
def forward(p, x):
    B, N, _ = x.shape
    rows = B * N

    # ---- STN3d (k=3, use_bn=False): per-point MLP -> max-pool -> FC head ---
    h = x.reshape(rows, 3)
    h = linear(h, p['s_conv1_w'], p['s_conv1_b'], out_relu=True)     # 3 -> 64
    h = linear(h, p['s_conv2_w'], p['s_conv2_b'], out_relu=True)     # 64 -> 128
    # conv3 (128 -> 1024) + ReLU + max-pool fused; the (B*N, 1024) activation
    # never touches HBM (ReLU is monotone, so max commutes with it).
    g = conv_maxpool(h.reshape(B, N, 128), p['s_conv3_w'], p['s_conv3_b'],
                     out_relu=True)                                   # (B, 1024)
    g = linear(g, p['s_fc1_w'], p['s_fc1_b'], out_relu=True)         # -> 512
    g = linear(g, p['s_fc2_w'], p['s_fc2_b'], out_relu=True)         # -> 256
    g = linear(g, p['s_fc3_w'], p['s_fc3_b'])                        # -> 9 (zero)
    trans = (g + jnp.eye(3, dtype=jnp.float32).reshape(1, 9)).reshape(B, 3, 3)

    # ---- fold the STN transform into conv1: (x @ T) @ W1 == x @ (T @ W1) ---
    w1_eff = jnp.einsum('bij,jc->bic', trans, p['conv1_w'])          # (B, 3, 64)
    h1, s1, q1 = conv1_folded(x, w1_eff, p['conv1_b'])               # pre-BN
    sc1, sh1 = bn_scale_shift(s1, q1, rows)

    # ---- conv2..conv4: previous layer's BN + ReLU fused into each matmul ---
    h1 = h1.reshape(rows, 64)
    h2, s2, q2 = linear(h1, p['conv2_w'], p['conv2_b'], sc1, sh1,
                        prev_affine=True, prev_relu=True, compute_stats=True)
    sc2, sh2 = bn_scale_shift(s2, q2, rows)
    h3, s3, q3 = linear(h2, p['conv3_w'], p['conv3_b'], sc2, sh2,
                        prev_affine=True, prev_relu=True, compute_stats=True)
    sc3, sh3 = bn_scale_shift(s3, q3, rows)
    h4, s4, q4 = linear(h3, p['conv4_w'], p['conv4_b'], sc3, sh3,
                        prev_affine=True, prev_relu=True, compute_stats=True)
    sc4, sh4 = bn_scale_shift(s4, q4, rows)

    # ---- conv5 (128 -> 1024) fused with the max-pool over points; bn4+ReLU
    # applied to the input tile inside the kernel, bn5 partial stats emitted.
    mx5, s5, q5 = conv_maxpool(h4.reshape(B, N, 128), p['conv5_w'],
                               p['conv5_b'], sc4, sh4, prev_affine=True,
                               prev_relu=True, compute_stats=True)   # pre-bn5 max
    sc5, sh5 = bn_scale_shift(s5, q5, rows)
    # bn5 is a positive-scale per-channel affine -> commutes with the max.
    feat = mx5 * sc5 + sh5                                           # (B, 1024)
    return feat, trans


if __name__ == "__main__":
    B, N = 2, 32                                  # small demo: 2 clouds, 32 pts
    key = jax.random.PRNGKey(0)
    pkey, xkey = jax.random.split(key)
    params = init_params(pkey)
    x = jax.random.normal(xkey, (B, N, 3), jnp.float32)

    fwd = jax.jit(functools.partial(forward, params))
    feat, trans = fwd(x)
    jax.block_until_ready((feat, trans))

    assert feat.shape == (B, 1024), feat.shape
    assert trans.shape == (B, 3, 3), trans.shape
    assert bool(jnp.all(jnp.isfinite(feat)))
    assert bool(jnp.all(jnp.isfinite(trans)))
    # fc3 is zero-initialized exactly as in the module -> identity transform.
    eye = jnp.broadcast_to(jnp.eye(3, dtype=jnp.float32), (B, 3, 3))
    assert bool(jnp.allclose(trans, eye, atol=1e-5))
    print("KERNEL_OK")
</pallas_src>

<mosaic_0001>
module attributes {stable_mosaic.version = 11 : i64} {
  func.func @_linear_kernel(%arg0: i32, %arg1: memref<64x64xf32, #tpu.memory_space<vmem>>, %arg2: memref<64x128xbf16, #tpu.memory_space<vmem>>, %arg3: memref<1x128xf32, #tpu.memory_space<vmem>>, %arg4: memref<1x64xf32, #tpu.memory_space<vmem>>, %arg5: memref<1x64xf32, #tpu.memory_space<vmem>>, %arg6: memref<64x128xf32, #tpu.memory_space<vmem>>) attributes {dimension_semantics = [#tpu.dimension_semantics<parallel>], iteration_bounds = array<i64: 1>, scalar_prefetch = 0 : i64, scratch_operands = 0 : i64, tpu.core_type = #tpu.core_type<tc>, window_params = [{transform_indices = @transform_0, window_bounds = array<i64: 64, 64>}, {pipeline_mode = #tpu.pipeline_mode<synchronous>, transform_indices = @transform_1, window_bounds = array<i64: 64, 128>}, {pipeline_mode = #tpu.pipeline_mode<synchronous>, transform_indices = @transform_2, window_bounds = array<i64: 1, 128>}, {pipeline_mode = #tpu.pipeline_mode<synchronous>, transform_indices = @transform_3, window_bounds = array<i64: 1, 64>}, {pipeline_mode = #tpu.pipeline_mode<synchronous>, transform_indices = @transform_4, window_bounds = array<i64: 1, 64>}, {transform_indices = @transform_5, window_bounds = array<i64: 64, 128>}]} {
    %c0 = arith.constant 0 : index
    %c0_0 = arith.constant 0 : index
    %0 = vector.load %arg1[%c0, %c0_0] : memref<64x64xf32, #tpu.memory_space<vmem>>, vector<64x64xf32>
    %1 = arith.truncf %0 : vector<64x64xf32> to vector<64x64xbf16>
    %c0_1 = arith.constant 0 : index
    %c0_2 = arith.constant 0 : index
    %2 = vector.load %arg2[%c0_1, %c0_2] : memref<64x128xbf16, #tpu.memory_space<vmem>>, vector<64x128xbf16>
    %cst = arith.constant dense<0.000000e+00> : vector<64x128xf32>
    %3 = tpu.matmul %1, %2, %cst {dimension_numbers = #tpu.dot_dimension_numbers<[1], [0], [0], [1], [0, 0, 1, 1], [], []>} : vector<64x64xbf16>, vector<64x128xbf16>, vector<64x128xf32> -> vector<64x128xf32>
    %c0_3 = arith.constant 0 : index
    %c0_4 = arith.constant 0 : index
    %4 = vector.load %arg3[%c0_3, %c0_4] : memref<1x128xf32, #tpu.memory_space<vmem>>, vector<1x128xf32>
    %5 = vector.broadcast %4 : vector<1x128xf32> to vector<64x128xf32>
    %6 = arith.addf %3, %5 : vector<64x128xf32>
    %cst_5 = arith.constant 0.000000e+00 : f32
    %7 = vector.broadcast %cst_5 : f32 to vector<64x128xf32>
    %8 = arith.maximumf %6, %7 : vector<64x128xf32>
    %c0_6 = arith.constant 0 : index
    %c0_7 = arith.constant 0 : index
    %9 = vector.load %arg6[%c0_6, %c0_7] : memref<64x128xf32, #tpu.memory_space<vmem>>, vector<64x128xf32>
    tpu.vector_store %arg6[%c0_6, %c0_7], %8 {strides = array<i32>} : memref<64x128xf32, #tpu.memory_space<vmem>>, vector<64x128xf32>,
    return
  }
  func.func @transform_0(%arg0: i32) -> (i32, i32) {
    %c0_i32 = arith.constant 0 : i32
    %c0_i32_0 = arith.constant 0 : i32
    return %arg0, %c0_i32 : i32, i32
  }
  func.func @transform_1(%arg0: i32) -> (i32, i32) {
    %c0_i32 = arith.constant 0 : i32
    %c0_i32_0 = arith.constant 0 : i32
    %c0_i32_1 = arith.constant 0 : i32
    return %c0_i32, %c0_i32_0 : i32, i32
  }
  func.func @transform_2(%arg0: i32) -> (i32, i32) {
    %c0_i32 = arith.constant 0 : i32
    %c0_i32_0 = arith.constant 0 : i32
    %c0_i32_1 = arith.constant 0 : i32
    return %c0_i32, %c0_i32_0 : i32, i32
  }
  func.func @transform_3(%arg0: i32) -> (i32, i32) {
    %c0_i32 = arith.constant 0 : i32
    %c0_i32_0 = arith.constant 0 : i32
    %c0_i32_1 = arith.constant 0 : i32
    return %c0_i32, %c0_i32_0 : i32, i32
  }
  func.func @transform_4(%arg0: i32) -> (i32, i32) {
    %c0_i32 = arith.constant 0 : i32
    %c0_i32_0 = arith.constant 0 : i32
    %c0_i32_1 = arith.constant 0 : i32
    return %c0_i32, %c0_i32_0 : i32, i32
  }
  func.func @transform_5(%arg0: i32) -> (i32, i32) {
    %c0_i32 = arith.constant 0 : i32
    %c0_i32_0 = arith.constant 0 : i32
    return %arg0, %c0_i32 : i32, i32
  }
}

module attributes {stable_mosaic.version = 11 : i64} {
  func.func @_linear_kernel(%arg0: i32, %arg1: memref<64x3xf32, #tpu.memory_space<vmem>>, %arg2: memref<3x64xf32, #tpu.memory_space<vmem>>, %arg3: memref<1x64xf32, #tpu.memory_space<vmem>>, %arg4: memref<1x3xf32, #tpu.memory_space<vmem>>, %arg5: memref<1x3xf32, #tpu.memory_space<vmem>>, %arg6: memref<64x64xf32, #tpu.memory_space<vmem>>) attributes {dimension_semantics = [#tpu.dimension_semantics<parallel>], iteration_bounds = array<i64: 1>, scalar_prefetch = 0 : i64, scratch_operands = 0 : i64, tpu.core_type = #tpu.core_type<tc>, window_params = [{transform_indices = @transform_0, window_bounds = array<i64: 64, 3>}, {pipeline_mode = #tpu.pipeline_mode<synchronous>, transform_indices = @transform_1, window_bounds = array<i64: 3, 64>}, {pipeline_mode = #tpu.pipeline_mode<synchronous>, transform_indices = @transform_2, window_bounds = array<i64: 1, 64>}, {pipeline_mode = #tpu.pipeline_mode<synchronous>, transform_indices = @transform_3, window_bounds = array<i64: 1, 3>}, {pipeline_mode = #tpu.pipeline_mode<synchronous>, transform_indices = @transform_4, window_bounds = array<i64: 1, 3>}, {transform_indices = @transform_5, window_bounds = array<i64: 64, 64>}]} {
    %c0 = arith.constant 0 : index
    %c0_0 = arith.constant 0 : index
    %0 = vector.load %arg1[%c0, %c0_0] : memref<64x3xf32, #tpu.memory_space<vmem>>, vector<64x3xf32>
    %c0_1 = arith.constant 0 : index
    %c0_2 = arith.constant 0 : index
    %1 = vector.load %arg2[%c0_1, %c0_2] : memref<3x64xf32, #tpu.memory_space<vmem>>, vector<3x64xf32>
    %cst = arith.constant dense<0.000000e+00> : vector<64x64xf32>
    %2 = tpu.matmul %0, %1, %cst {dimension_numbers = #tpu.dot_dimension_numbers<[1], [0], [0], [1], [0, 0, 1, 1], [], []>} : vector<64x3xf32>, vector<3x64xf32>, vector<64x64xf32> -> vector<64x64xf32>
    %c0_3 = arith.constant 0 : index
    %c0_4 = arith.constant 0 : index
    %3 = vector.load %arg3[%c0_3, %c0_4] : memref<1x64xf32, #tpu.memory_space<vmem>>, vector<1x64xf32>
    %4 = vector.broadcast %3 : vector<1x64xf32> to vector<64x64xf32>
    %5 = arith.addf %2, %4 : vector<64x64xf32>
    %cst_5 = arith.constant 0.000000e+00 : f32
    %6 = vector.broadcast %cst_5 : f32 to vector<64x64xf32>
    %7 = arith.maximumf %5, %6 : vector<64x64xf32>
    %c0_6 = arith.constant 0 : index
    %c0_7 = arith.constant 0 : index
    %8 = vector.load %arg6[%c0_6, %c0_7] : memref<64x64xf32, #tpu.memory_space<vmem>>, vector<64x64xf32>
    tpu.vector_store %arg6[%c0_6, %c0_7], %7 {strides = array<i32>} : memref<64x64xf32, #tpu.memory_space<vmem>>, vector<64x64xf32>,
    return
  }
  func.func @transform_0(%arg0: i32) -> (i32, i32) {
    %c0_i32 = arith.constant 0 : i32
    %c0_i32_0 = arith.constant 0 : i32
    return %arg0, %c0_i32 : i32, i32
  }
  func.func @transform_1(%arg0: i32) -> (i32, i32) {
    %c0_i32 = arith.constant 0 : i32
    %c0_i32_0 = arith.constant 0 : i32
    %c0_i32_1 = arith.constant 0 : i32
    return %c0_i32, %c0_i32_0 : i32, i32
  }
  func.func @transform_2(%arg0: i32) -> (i32, i32) {
    %c0_i32 = arith.constant 0 : i32
    %c0_i32_0 = arith.constant 0 : i32
    %c0_i32_1 = arith.constant 0 : i32
    return %c0_i32, %c0_i32_0 : i32, i32
  }
  func.func @transform_3(%arg0: i32) -> (i32, i32) {
    %c0_i32 = arith.constant 0 : i32
    %c0_i32_0 = arith.constant 0 : i32
    %c0_i32_1 = arith.constant 0 : i32
    return %c0_i32, %c0_i32_0 : i32, i32
  }
  func.func @transform_4(%arg0: i32) -> (i32, i32) {
    %c0_i32 = arith.constant 0 : i32
    %c0_i32_0 = arith.constant 0 : i32
    %c0_i32_1 = arith.constant 0 : i32
    return %c0_i32, %c0_i32_0 : i32, i32
  }
  func.func @transform_5(%arg0: i32) -> (i32, i32) {
    %c0_i32 = arith.constant 0 : i32
    %c0_i32_0 = arith.constant 0 : i32
    return %arg0, %c0_i32 : i32, i32
  }
}

module attributes {stable_mosaic.version = 11 : i64} {
  func.func @_conv_max_kernel(%arg0: i32, %arg1: i32, %arg2: memref<1x32x128xf32, #tpu.memory_space<vmem>>, %arg3: memref<128x1024xbf16, #tpu.memory_space<vmem>>, %arg4: memref<1x1024xf32, #tpu.memory_space<vmem>>, %arg5: memref<1x128xf32, #tpu.memory_space<vmem>>, %arg6: memref<1x128xf32, #tpu.memory_space<vmem>>, %arg7: memref<1x1x1024xf32, #tpu.memory_space<vmem>>) attributes {dimension_semantics = [#tpu.dimension_semantics<parallel>, #tpu.dimension_semantics<arbitrary>], iteration_bounds = array<i64: 2, 1>, scalar_prefetch = 0 : i64, scratch_operands = 0 : i64, tpu.core_type = #tpu.core_type<tc>, window_params = [{transform_indices = @transform_0, window_bounds = array<i64: 1, 32, 128>}, {pipeline_mode = #tpu.pipeline_mode<synchronous>, transform_indices = @transform_1, window_bounds = array<i64: 128, 1024>}, {pipeline_mode = #tpu.pipeline_mode<synchronous>, transform_indices = @transform_2, window_bounds = array<i64: 1, 1024>}, {pipeline_mode = #tpu.pipeline_mode<synchronous>, transform_indices = @transform_3, window_bounds = array<i64: 1, 128>}, {pipeline_mode = #tpu.pipeline_mode<synchronous>, transform_indices = @transform_4, window_bounds = array<i64: 1, 128>}, {transform_indices = @transform_5, window_bounds = array<i64: 1, 1, 1024>}]} {
    %c0 = arith.constant 0 : index
    %c0_0 = arith.constant 0 : index
    %c0_1 = arith.constant 0 : index
    %0 = vector.load %arg2[%c0, %c0_0, %c0_1] : memref<1x32x128xf32, #tpu.memory_space<vmem>>, vector<1x32x128xf32>
    %1 = vector.shape_cast %0 : vector<1x32x128xf32> to vector<32x128xf32>
    %2 = arith.truncf %1 : vector<32x128xf32> to vector<32x128xbf16>
    %c0_2 = arith.constant 0 : index
    %c0_3 = arith.constant 0 : index
    %3 = vector.load %arg3[%c0_2, %c0_3] : memref<128x1024xbf16, #tpu.memory_space<vmem>>, vector<128x1024xbf16>
    %cst = arith.constant dense<0.000000e+00> : vector<32x1024xf32>
    %4 = tpu.matmul %2, %3, %cst {dimension_numbers = #tpu.dot_dimension_numbers<[1], [0], [0], [1], [0, 0, 1, 1], [], []>} : vector<32x128xbf16>, vector<128x1024xbf16>, vector<32x1024xf32> -> vector<32x1024xf32>
    %c0_4 = arith.constant 0 : index
    %c0_5 = arith.constant 0 : index
    %5 = vector.load %arg4[%c0_4, %c0_5] : memref<1x1024xf32, #tpu.memory_space<vmem>>, vector<1x1024xf32>
    %6 = vector.broadcast %5 : vector<1x1024xf32> to vector<32x1024xf32>
    %7 = arith.addf %4, %6 : vector<32x1024xf32>
    %cst_6 = arith.constant 0.000000e+00 : f32
    %8 = vector.broadcast %cst_6 : f32 to vector<32x1024xf32>
    %9 = arith.maximumf %7, %8 : vector<32x1024xf32>
    %cst_7 = arith.constant dense<0xFF800000> : vector<1024xf32>
    %10 = vector.multi_reduction <maximumf>, %9, %cst_7 [0] : vector<32x1024xf32> to vector<1024xf32>
    %11 = vector.shape_cast %10 : vector<1024xf32> to vector<1x1024xf32>
    %c0_i32 = arith.constant 0 : i32
    %12 = arith.cmpi eq, %arg1, %c0_i32 : i32
    %13 = arith.extui %12 : i1 to i32
    %c0_i32_8 = arith.constant 0 : i32
    %14 = arith.cmpi ne, %13, %c0_i32_8 : i32
    scf.if %14 {
      %c0_11 = arith.constant 0 : index
      %c0_12 = arith.constant 0 : index
      %c0_13 = arith.constant 0 : index
      %18 = vector.load %arg7[%c0_11, %c0_12, %c0_13] : memref<1x1x1024xf32, #tpu.memory_space<vmem>>, vector<1x1x1024xf32>
      %19 = vector.shape_cast %18 : vector<1x1x1024xf32> to vector<1x1024xf32>
      %20 = vector.shape_cast %11 : vector<1x1024xf32> to vector<1x1x1024xf32>
      tpu.vector_store %arg7[%c0_11, %c0_12, %c0_13], %20 {strides = array<i32>} : memref<1x1x1024xf32, #tpu.memory_space<vmem>>, vector<1x1x1024xf32>,
    } else {
    }
    %c0_i32_9 = arith.constant 0 : i32
    %15 = arith.cmpi ne, %arg1, %c0_i32_9 : i32
    %16 = arith.extui %15 : i1 to i32
    %c0_i32_10 = arith.constant 0 : i32
    %17 = arith.cmpi ne, %16, %c0_i32_10 : i32
    scf.if %17 {
      %c0_11 = arith.constant 0 : index
      %c0_12 = arith.constant 0 : index
      %c0_13 = arith.constant 0 : index
      %18 = vector.load %arg7[%c0_11, %c0_12, %c0_13] : memref<1x1x1024xf32, #tpu.memory_space<vmem>>, vector<1x1x1024xf32>
      %19 = vector.shape_cast %18 : vector<1x1x1024xf32> to vector<1x1024xf32>
      %20 = arith.maximumf %19, %11 : vector<1x1024xf32>
      %c0_14 = arith.constant 0 : index
      %c0_15 = arith.constant 0 : index
      %c0_16 = arith.constant 0 : index
      %21 = vector.load %arg7[%c0_14, %c0_15, %c0_16] : memref<1x1x1024xf32, #tpu.memory_space<vmem>>, vector<1x1x1024xf32>
      %22 = vector.shape_cast %21 : vector<1x1x1024xf32> to vector<1x1024xf32>
      %23 = vector.shape_cast %20 : vector<1x1024xf32> to vector<1x1x1024xf32>
      tpu.vector_store %arg7[%c0_14, %c0_15, %c0_16], %23 {strides = array<i32>} : memref<1x1x1024xf32, #tpu.memory_space<vmem>>, vector<1x1x1024xf32>,
    } else {
    }
    return
  }
  func.func @transform_0(%arg0: i32, %arg1: i32) -> (i32, i32, i32) {
    %c0_i32 = arith.constant 0 : i32
    %c0_i32_0 = arith.constant 0 : i32
    return %arg0, %arg1, %c0_i32 : i32, i32, i32
  }
  func.func @transform_1(%arg0: i32, %arg1: i32) -> (i32, i32) {
    %c0_i32 = arith.constant 0 : i32
    %c0_i32_0 = arith.constant 0 : i32
    %c0_i32_1 = arith.constant 0 : i32
    return %c0_i32, %c0_i32_0 : i32, i32
  }
  func.func @transform_2(%arg0: i32, %arg1: i32) -> (i32, i32) {
    %c0_i32 = arith.constant 0 : i32
    %c0_i32_0 = arith.constant 0 : i32
    %c0_i32_1 = arith.constant 0 : i32
    return %c0_i32, %c0_i32_0 : i32, i32
  }
  func.func @transform_3(%arg0: i32, %arg1: i32) -> (i32, i32) {
    %c0_i32 = arith.constant 0 : i32
    %c0_i32_0 = arith.constant 0 : i32
    %c0_i32_1 = arith.constant 0 : i32
    return %c0_i32, %c0_i32_0 : i32, i32
  }
  func.func @transform_4(%arg0: i32, %arg1: i32) -> (i32, i32) {
    %c0_i32 = arith.constant 0 : i32
    %c0_i32_0 = arith.constant 0 : i32
    %c0_i32_1 = arith.constant 0 : i32
    return %c0_i32, %c0_i32_0 : i32, i32
  }
  func.func @transform_5(%arg0: i32, %arg1: i32) -> (i32, i32, i32) {
    %c0_i32 = arith.constant 0 : i32
    %c0_i32_0 = arith.constant 0 : i32
    %c0_i32_1 = arith.constant 0 : i32
    return %arg0, %c0_i32, %c0_i32_0 : i32, i32, i32
  }
}

module attributes {stable_mosaic.version = 11 : i64} {
  func.func @_linear_kernel(%arg0: i32, %arg1: memref<2x1024xf32, #tpu.memory_space<vmem>>, %arg2: memref<1024x512xbf16, #tpu.memory_space<vmem>>, %arg3: memref<1x512xf32, #tpu.memory_space<vmem>>, %arg4: memref<1x1024xf32, #tpu.memory_space<vmem>>, %arg5: memref<1x1024xf32, #tpu.memory_space<vmem>>, %arg6: memref<2x512xf32, #tpu.memory_space<vmem>>) attributes {dimension_semantics = [#tpu.dimension_semantics<parallel>], iteration_bounds = array<i64: 1>, scalar_prefetch = 0 : i64, scratch_operands = 0 : i64, tpu.core_type = #tpu.core_type<tc>, window_params = [{transform_indices = @transform_0, window_bounds = array<i64: 2, 1024>}, {pipeline_mode = #tpu.pipeline_mode<synchronous>, transform_indices = @transform_1, window_bounds = array<i64: 1024, 512>}, {pipeline_mode = #tpu.pipeline_mode<synchronous>, transform_indices = @transform_2, window_bounds = array<i64: 1, 512>}, {pipeline_mode = #tpu.pipeline_mode<synchronous>, transform_indices = @transform_3, window_bounds = array<i64: 1, 1024>}, {pipeline_mode = #tpu.pipeline_mode<synchronous>, transform_indices = @transform_4, window_bounds = array<i64: 1, 1024>}, {transform_indices = @transform_5, window_bounds = array<i64: 2, 512>}]} {
    %c0 = arith.constant 0 : index
    %c0_0 = arith.constant 0 : index
    %0 = vector.load %arg1[%c0, %c0_0] : memref<2x1024xf32, #tpu.memory_space<vmem>>, vector<2x1024xf32>
    %1 = arith.truncf %0 : vector<2x1024xf32> to vector<2x1024xbf16>
    %c0_1 = arith.constant 0 : index
    %c0_2 = arith.constant 0 : index
    %2 = vector.load %arg2[%c0_1, %c0_2] : memref<1024x512xbf16, #tpu.memory_space<vmem>>, vector<1024x512xbf16>
    %cst = arith.constant dense<0.000000e+00> : vector<2x512xf32>
    %3 = tpu.matmul %1, %2, %cst {dimension_numbers = #tpu.dot_dimension_numbers<[1], [0], [0], [1], [0, 0, 1, 1], [], []>} : vector<2x1024xbf16>, vector<1024x512xbf16>, vector<2x512xf32> -> vector<2x512xf32>
    %c0_3 = arith.constant 0 : index
    %c0_4 = arith.constant 0 : index
    %4 = vector.load %arg3[%c0_3, %c0_4] : memref<1x512xf32, #tpu.memory_space<vmem>>, vector<1x512xf32>
    %5 = vector.broadcast %4 : vector<1x512xf32> to vector<2x512xf32>
    %6 = arith.addf %3, %5 : vector<2x512xf32>
    %cst_5 = arith.constant 0.000000e+00 : f32
    %7 = vector.broadcast %cst_5 : f32 to vector<2x512xf32>
    %8 = arith.maximumf %6, %7 : vector<2x512xf32>
    %c0_6 = arith.constant 0 : index
    %c0_7 = arith.constant 0 : index
    %9 = vector.load %arg6[%c0_6, %c0_7] : memref<2x512xf32, #tpu.memory_space<vmem>>, vector<2x512xf32>
    tpu.vector_store %arg6[%c0_6, %c0_7], %8 {strides = array<i32>} : memref<2x512xf32, #tpu.memory_space<vmem>>, vector<2x512xf32>,
    return
  }
  func.func @transform_0(%arg0: i32) -> (i32, i32) {
    %c0_i32 = arith.constant 0 : i32
    %c0_i32_0 = arith.constant 0 : i32
    return %arg0, %c0_i32 : i32, i32
  }
  func.func @transform_1(%arg0: i32) -> (i32, i32) {
    %c0_i32 = arith.constant 0 : i32
    %c0_i32_0 = arith.constant 0 : i32
    %c0_i32_1 = arith.constant 0 : i32
    return %c0_i32, %c0_i32_0 : i32, i32
  }
  func.func @transform_2(%arg0: i32) -> (i32, i32) {
    %c0_i32 = arith.constant 0 : i32
    %c0_i32_0 = arith.constant 0 : i32
    %c0_i32_1 = arith.constant 0 : i32
    return %c0_i32, %c0_i32_0 : i32, i32
  }
  func.func @transform_3(%arg0: i32) -> (i32, i32) {
    %c0_i32 = arith.constant 0 : i32
    %c0_i32_0 = arith.constant 0 : i32
    %c0_i32_1 = arith.constant 0 : i32
    return %c0_i32, %c0_i32_0 : i32, i32
  }
  func.func @transform_4(%arg0: i32) -> (i32, i32) {
    %c0_i32 = arith.constant 0 : i32
    %c0_i32_0 = arith.constant 0 : i32
    %c0_i32_1 = arith.constant 0 : i32
    return %c0_i32, %c0_i32_0 : i32, i32
  }
  func.func @transform_5(%arg0: i32) -> (i32, i32) {
    %c0_i32 = arith.constant 0 : i32
    %c0_i32_0 = arith.constant 0 : i32
    return %arg0, %c0_i32 : i32, i32
  }
}

module attributes {stable_mosaic.version = 11 : i64} {
  func.func @_linear_kernel(%arg0: i32, %arg1: memref<2x512xf32, #tpu.memory_space<vmem>>, %arg2: memref<512x256xbf16, #tpu.memory_space<vmem>>, %arg3: memref<1x256xf32, #tpu.memory_space<vmem>>, %arg4: memref<1x512xf32, #tpu.memory_space<vmem>>, %arg5: memref<1x512xf32, #tpu.memory_space<vmem>>, %arg6: memref<2x256xf32, #tpu.memory_space<vmem>>) attributes {dimension_semantics = [#tpu.dimension_semantics<parallel>], iteration_bounds = array<i64: 1>, scalar_prefetch = 0 : i64, scratch_operands = 0 : i64, tpu.core_type = #tpu.core_type<tc>, window_params = [{transform_indices = @transform_0, window_bounds = array<i64: 2, 512>}, {pipeline_mode = #tpu.pipeline_mode<synchronous>, transform_indices = @transform_1, window_bounds = array<i64: 512, 256>}, {pipeline_mode = #tpu.pipeline_mode<synchronous>, transform_indices = @transform_2, window_bounds = array<i64: 1, 256>}, {pipeline_mode = #tpu.pipeline_mode<synchronous>, transform_indices = @transform_3, window_bounds = array<i64: 1, 512>}, {pipeline_mode = #tpu.pipeline_mode<synchronous>, transform_indices = @transform_4, window_bounds = array<i64: 1, 512>}, {transform_indices = @transform_5, window_bounds = array<i64: 2, 256>}]} {
    %c0 = arith.constant 0 : index
    %c0_0 = arith.constant 0 : index
    %0 = vector.load %arg1[%c0, %c0_0] : memref<2x512xf32, #tpu.memory_space<vmem>>, vector<2x512xf32>
    %1 = arith.truncf %0 : vector<2x512xf32> to vector<2x512xbf16>
    %c0_1 = arith.constant 0 : index
    %c0_2 = arith.constant 0 : index
    %2 = vector.load %arg2[%c0_1, %c0_2] : memref<512x256xbf16, #tpu.memory_space<vmem>>, vector<512x256xbf16>
    %cst = arith.constant dense<0.000000e+00> : vector<2x256xf32>
    %3 = tpu.matmul %1, %2, %cst {dimension_numbers = #tpu.dot_dimension_numbers<[1], [0], [0], [1], [0, 0, 1, 1], [], []>} : vector<2x512xbf16>, vector<512x256xbf16>, vector<2x256xf32> -> vector<2x256xf32>
    %c0_3 = arith.constant 0 : index
    %c0_4 = arith.constant 0 : index
    %4 = vector.load %arg3[%c0_3, %c0_4] : memref<1x256xf32, #tpu.memory_space<vmem>>, vector<1x256xf32>
    %5 = vector.broadcast %4 : vector<1x256xf32> to vector<2x256xf32>
    %6 = arith.addf %3, %5 : vector<2x256xf32>
    %cst_5 = arith.constant 0.000000e+00 : f32
    %7 = vector.broadcast %cst_5 : f32 to vector<2x256xf32>
    %8 = arith.maximumf %6, %7 : vector<2x256xf32>
    %c0_6 = arith.constant 0 : index
    %c0_7 = arith.constant 0 : index
    %9 = vector.load %arg6[%c0_6, %c0_7] : memref<2x256xf32, #tpu.memory_space<vmem>>, vector<2x256xf32>
    tpu.vector_store %arg6[%c0_6, %c0_7], %8 {strides = array<i32>} : memref<2x256xf32, #tpu.memory_space<vmem>>, vector<2x256xf32>,
    return
  }
  func.func @transform_0(%arg0: i32) -> (i32, i32) {
    %c0_i32 = arith.constant 0 : i32
    %c0_i32_0 = arith.constant 0 : i32
    return %arg0, %c0_i32 : i32, i32
  }
  func.func @transform_1(%arg0: i32) -> (i32, i32) {
    %c0_i32 = arith.constant 0 : i32
    %c0_i32_0 = arith.constant 0 : i32
    %c0_i32_1 = arith.constant 0 : i32
    return %c0_i32, %c0_i32_0 : i32, i32
  }
  func.func @transform_2(%arg0: i32) -> (i32, i32) {
    %c0_i32 = arith.constant 0 : i32
    %c0_i32_0 = arith.constant 0 : i32
    %c0_i32_1 = arith.constant 0 : i32
    return %c0_i32, %c0_i32_0 : i32, i32
  }
  func.func @transform_3(%arg0: i32) -> (i32, i32) {
    %c0_i32 = arith.constant 0 : i32
    %c0_i32_0 = arith.constant 0 : i32
    %c0_i32_1 = arith.constant 0 : i32
    return %c0_i32, %c0_i32_0 : i32, i32
  }
  func.func @transform_4(%arg0: i32) -> (i32, i32) {
    %c0_i32 = arith.constant 0 : i32
    %c0_i32_0 = arith.constant 0 : i32
    %c0_i32_1 = arith.constant 0 : i32
    return %c0_i32, %c0_i32_0 : i32, i32
  }
  func.func @transform_5(%arg0: i32) -> (i32, i32) {
    %c0_i32 = arith.constant 0 : i32
    %c0_i32_0 = arith.constant 0 : i32
    return %arg0, %c0_i32 : i32, i32
  }
}

module attributes {stable_mosaic.version = 11 : i64} {
  func.func @_linear_kernel(%arg0: i32, %arg1: memref<2x256xf32, #tpu.memory_space<vmem>>, %arg2: memref<256x9xbf16, #tpu.memory_space<vmem>>, %arg3: memref<1x9xf32, #tpu.memory_space<vmem>>, %arg4: memref<1x256xf32, #tpu.memory_space<vmem>>, %arg5: memref<1x256xf32, #tpu.memory_space<vmem>>, %arg6: memref<2x9xf32, #tpu.memory_space<vmem>>) attributes {dimension_semantics = [#tpu.dimension_semantics<parallel>], iteration_bounds = array<i64: 1>, scalar_prefetch = 0 : i64, scratch_operands = 0 : i64, tpu.core_type = #tpu.core_type<tc>, window_params = [{transform_indices = @transform_0, window_bounds = array<i64: 2, 256>}, {pipeline_mode = #tpu.pipeline_mode<synchronous>, transform_indices = @transform_1, window_bounds = array<i64: 256, 9>}, {pipeline_mode = #tpu.pipeline_mode<synchronous>, transform_indices = @transform_2, window_bounds = array<i64: 1, 9>}, {pipeline_mode = #tpu.pipeline_mode<synchronous>, transform_indices = @transform_3, window_bounds = array<i64: 1, 256>}, {pipeline_mode = #tpu.pipeline_mode<synchronous>, transform_indices = @transform_4, window_bounds = array<i64: 1, 256>}, {transform_indices = @transform_5, window_bounds = array<i64: 2, 9>}]} {
    %c0 = arith.constant 0 : index
    %c0_0 = arith.constant 0 : index
    %0 = vector.load %arg1[%c0, %c0_0] : memref<2x256xf32, #tpu.memory_space<vmem>>, vector<2x256xf32>
    %1 = arith.truncf %0 : vector<2x256xf32> to vector<2x256xbf16>
    %c0_1 = arith.constant 0 : index
    %c0_2 = arith.constant 0 : index
    %2 = vector.load %arg2[%c0_1, %c0_2] : memref<256x9xbf16, #tpu.memory_space<vmem>>, vector<256x9xbf16>
    %cst = arith.constant dense<0.000000e+00> : vector<2x9xf32>
    %3 = tpu.matmul %1, %2, %cst {dimension_numbers = #tpu.dot_dimension_numbers<[1], [0], [0], [1], [0, 0, 1, 1], [], []>} : vector<2x256xbf16>, vector<256x9xbf16>, vector<2x9xf32> -> vector<2x9xf32>
    %c0_3 = arith.constant 0 : index
    %c0_4 = arith.constant 0 : index
    %4 = vector.load %arg3[%c0_3, %c0_4] : memref<1x9xf32, #tpu.memory_space<vmem>>, vector<1x9xf32>
    %5 = vector.broadcast %4 : vector<1x9xf32> to vector<2x9xf32>
    %6 = arith.addf %3, %5 : vector<2x9xf32>
    %c0_5 = arith.constant 0 : index
    %c0_6 = arith.constant 0 : index
    %7 = vector.load %arg6[%c0_5, %c0_6] : memref<2x9xf32, #tpu.memory_space<vmem>>, vector<2x9xf32>
    tpu.vector_store %arg6[%c0_5, %c0_6], %6 {strides = array<i32>} : memref<2x9xf32, #tpu.memory_space<vmem>>, vector<2x9xf32>,
    return
  }
  func.func @transform_0(%arg0: i32) -> (i32, i32) {
    %c0_i32 = arith.constant 0 : i32
    %c0_i32_0 = arith.constant 0 : i32
    return %arg0, %c0_i32 : i32, i32
  }
  func.func @transform_1(%arg0: i32) -> (i32, i32) {
    %c0_i32 = arith.constant 0 : i32
    %c0_i32_0 = arith.constant 0 : i32
    %c0_i32_1 = arith.constant 0 : i32
    return %c0_i32, %c0_i32_0 : i32, i32
  }
  func.func @transform_2(%arg0: i32) -> (i32, i32) {
    %c0_i32 = arith.constant 0 : i32
    %c0_i32_0 = arith.constant 0 : i32
    %c0_i32_1 = arith.constant 0 : i32
    return %c0_i32, %c0_i32_0 : i32, i32
  }
  func.func @transform_3(%arg0: i32) -> (i32, i32) {
    %c0_i32 = arith.constant 0 : i32
    %c0_i32_0 = arith.constant 0 : i32
    %c0_i32_1 = arith.constant 0 : i32
    return %c0_i32, %c0_i32_0 : i32, i32
  }
  func.func @transform_4(%arg0: i32) -> (i32, i32) {
    %c0_i32 = arith.constant 0 : i32
    %c0_i32_0 = arith.constant 0 : i32
    %c0_i32_1 = arith.constant 0 : i32
    return %c0_i32, %c0_i32_0 : i32, i32
  }
  func.func @transform_5(%arg0: i32) -> (i32, i32) {
    %c0_i32 = arith.constant 0 : i32
    %c0_i32_0 = arith.constant 0 : i32
    return %arg0, %c0_i32 : i32, i32
  }
}

module attributes {stable_mosaic.version = 11 : i64} {
  func.func @_linear_kernel(%arg0: i32, %arg1: memref<64x64xf32, #tpu.memory_space<vmem>>, %arg2: memref<64x64xbf16, #tpu.memory_space<vmem>>, %arg3: memref<1x64xf32, #tpu.memory_space<vmem>>, %arg4: memref<1x64xf32, #tpu.memory_space<vmem>>, %arg5: memref<1x64xf32, #tpu.memory_space<vmem>>, %arg6: memref<64x64xf32, #tpu.memory_space<vmem>>, %arg7: memref<1x1x64xf32, #tpu.memory_space<vmem>>, %arg8: memref<1x1x64xf32, #tpu.memory_space<vmem>>) attributes {dimension_semantics = [#tpu.dimension_semantics<parallel>], iteration_bounds = array<i64: 1>, scalar_prefetch = 0 : i64, scratch_operands = 0 : i64, tpu.core_type = #tpu.core_type<tc>, window_params = [{transform_indices = @transform_0, window_bounds = array<i64: 64, 64>}, {pipeline_mode = #tpu.pipeline_mode<synchronous>, transform_indices = @transform_1, window_bounds = array<i64: 64, 64>}, {pipeline_mode = #tpu.pipeline_mode<synchronous>, transform_indices = @transform_2, window_bounds = array<i64: 1, 64>}, {pipeline_mode = #tpu.pipeline_mode<synchronous>, transform_indices = @transform_3, window_bounds = array<i64: 1, 64>}, {pipeline_mode = #tpu.pipeline_mode<synchronous>, transform_indices = @transform_4, window_bounds = array<i64: 1, 64>}, {transform_indices = @transform_5, window_bounds = array<i64: 64, 64>}, {transform_indices = @transform_6, window_bounds = array<i64: 1, 1, 64>}, {transform_indices = @transform_7, window_bounds = array<i64: 1, 1, 64>}]} {
    %c0 = arith.constant 0 : index
    %c0_0 = arith.constant 0 : index
    %0 = vector.load %arg1[%c0, %c0_0] : memref<64x64xf32, #tpu.memory_space<vmem>>, vector<64x64xf32>
    %c0_1 = arith.constant 0 : index
    %c0_2 = arith.constant 0 : index
    %1 = vector.load %arg4[%c0_1, %c0_2] : memref<1x64xf32, #tpu.memory_space<vmem>>, vector<1x64xf32>
    %2 = vector.broadcast %1 : vector<1x64xf32> to vector<64x64xf32>
    %3 = arith.mulf %0, %2 : vector<64x64xf32>
    %c0_3 = arith.constant 0 : index
    %c0_4 = arith.constant 0 : index
    %4 = vector.load %arg5[%c0_3, %c0_4] : memref<1x64xf32, #tpu.memory_space<vmem>>, vector<1x64xf32>
    %5 = vector.broadcast %4 : vector<1x64xf32> to vector<64x64xf32>
    %6 = arith.addf %3, %5 : vector<64x64xf32>
    %cst = arith.constant 0.000000e+00 : f32
    %7 = vector.broadcast %cst : f32 to vector<64x64xf32>
    %8 = arith.maximumf %6, %7 : vector<64x64xf32>
    %9 = arith.truncf %8 : vector<64x64xf32> to vector<64x64xbf16>
    %c0_5 = arith.constant 0 : index
    %c0_6 = arith.constant 0 : index
    %10 = vector.load %arg2[%c0_5, %c0_6] : memref<64x64xbf16, #tpu.memory_space<vmem>>, vector<64x64xbf16>
    %cst_7 = arith.constant dense<0.000000e+00> : vector<64x64xf32>
    %11 = tpu.matmul %9, %10, %cst_7 {dimension_numbers = #tpu.dot_dimension_numbers<[1], [0], [0], [1], [0, 0, 1, 1], [], []>} : vector<64x64xbf16>, vector<64x64xbf16>, vector<64x64xf32> -> vector<64x64xf32>
    %c0_8 = arith.constant 0 : index
    %c0_9 = arith.constant 0 : index
    %12 = vector.load %arg3[%c0_8, %c0_9] : memref<1x64xf32, #tpu.memory_space<vmem>>, vector<1x64xf32>
    %13 = vector.broadcast %12 : vector<1x64xf32> to vector<64x64xf32>
    %14 = arith.addf %11, %13 : vector<64x64xf32>
    %c0_10 = arith.constant 0 : index
    %c0_11 = arith.constant 0 : index
    %15 = vector.load %arg6[%c0_10, %c0_11] : memref<64x64xf32, #tpu.memory_space<vmem>>, vector<64x64xf32>
    tpu.vector_store %arg6[%c0_10, %c0_11], %14 {strides = array<i32>} : memref<64x64xf32, #tpu.memory_space<vmem>>, vector<64x64xf32>,
    %cst_12 = arith.constant dense<0.000000e+00> : vector<64xf32>
    %16 = vector.multi_reduction <add>, %14, %cst_12 [0] : vector<64x64xf32> to vector<64xf32>
    %17 = vector.shape_cast %16 : vector<64xf32> to vector<1x64xf32>
    %18 = vector.shape_cast %17 : vector<1x64xf32> to vector<1x1x64xf32>
    %c0_13 = arith.constant 0 : index
    %c0_14 = arith.constant 0 : index
    %c0_15 = arith.constant 0 : index
    %19 = vector.load %arg7[%c0_13, %c0_14, %c0_15] : memref<1x1x64xf32, #tpu.memory_space<vmem>>, vector<1x1x64xf32>
    tpu.vector_store %arg7[%c0_13, %c0_14, %c0_15], %18 {strides = array<i32>} : memref<1x1x64xf32, #tpu.memory_space<vmem>>, vector<1x1x64xf32>,
    %20 = arith.mulf %14, %14 : vector<64x64xf32>
    %cst_16 = arith.constant dense<0.000000e+00> : vector<64xf32>
    %21 = vector.multi_reduction <add>, %20, %cst_16 [0] : vector<64x64xf32> to vector<64xf32>
    %22 = vector.shape_cast %21 : vector<64xf32> to vector<1x64xf32>
    %23 = vector.shape_cast %22 : vector<1x64xf32> to vector<1x1x64xf32>
    %c0_17 = arith.constant 0 : index
    %c0_18 = arith.constant 0 : index
    %c0_19 = arith.constant 0 : index
    %24 = vector.load %arg8[%c0_17, %c0_18, %c0_19] : memref<1x1x64xf32, #tpu.memory_space<vmem>>, vector<1x1x64xf32>
    tpu.vector_store %arg8[%c0_17, %c0_18, %c0_19], %23 {strides = array<i32>} : memref<1x1x64xf32, #tpu.memory_space<vmem>>, vector<1x1x64xf32>,
    return
  }
  func.func @transform_0(%arg0: i32) -> (i32, i32) {
    %c0_i32 = arith.constant 0 : i32
    %c0_i32_0 = arith.constant 0 : i32
    return %arg0, %c0_i32 : i32, i32
  }
  func.func @transform_1(%arg0: i32) -> (i32, i32) {
    %c0_i32 = arith.constant 0 : i32
    %c0_i32_0 = arith.constant 0 : i32
    %c0_i32_1 = arith.constant 0 : i32
    return %c0_i32, %c0_i32_0 : i32, i32
  }
  func.func @transform_2(%arg0: i32) -> (i32, i32) {
    %c0_i32 = arith.constant 0 : i32
    %c0_i32_0 = arith.constant 0 : i32
    %c0_i32_1 = arith.constant 0 : i32
    return %c0_i32, %c0_i32_0 : i32, i32
  }
  func.func @transform_3(%arg0: i32) -> (i32, i32) {
    %c0_i32 = arith.constant 0 : i32
    %c0_i32_0 = arith.constant 0 : i32
    %c0_i32_1 = arith.constant 0 : i32
    return %c0_i32, %c0_i32_0 : i32, i32
  }
  func.func @transform_4(%arg0: i32) -> (i32, i32) {
    %c0_i32 = arith.constant 0 : i32
    %c0_i32_0 = arith.constant 0 : i32
    %c0_i32_1 = arith.constant 0 : i32
    return %c0_i32, %c0_i32_0 : i32, i32
  }
  func.func @transform_5(%arg0: i32) -> (i32, i32) {
    %c0_i32 = arith.constant 0 : i32
    %c0_i32_0 = arith.constant 0 : i32
    return %arg0, %c0_i32 : i32, i32
  }
  func.func @transform_6(%arg0: i32) -> (i32, i32, i32) {
    %c0_i32 = arith.constant 0 : i32
    %c0_i32_0 = arith.constant 0 : i32
    %c0_i32_1 = arith.constant 0 : i32
    return %arg0, %c0_i32, %c0_i32_0 : i32, i32, i32
  }
  func.func @transform_7(%arg0: i32) -> (i32, i32, i32) {
    %c0_i32 = arith.constant 0 : i32
    %c0_i32_0 = arith.constant 0 : i32
    %c0_i32_1 = arith.constant 0 : i32
    return %arg0, %c0_i32, %c0_i32_0 : i32, i32, i32
  }
}

module attributes {stable_mosaic.version = 11 : i64} {
  func.func @_conv1_kernel(%arg0: i32, %arg1: i32, %arg2: memref<1x32x3xf32, #tpu.memory_space<vmem>>, %arg3: memref<1x3x64xf32, #tpu.memory_space<vmem>>, %arg4: memref<1x64xf32, #tpu.memory_space<vmem>>, %arg5: memref<1x32x64xf32, #tpu.memory_space<vmem>>, %arg6: memref<1x1x1x64xf32, #tpu.memory_space<vmem>>, %arg7: memref<1x1x1x64xf32, #tpu.memory_space<vmem>>) attributes {dimension_semantics = [#tpu.dimension_semantics<parallel>, #tpu.dimension_semantics<parallel>], iteration_bounds = array<i64: 2, 1>, scalar_prefetch = 0 : i64, scratch_operands = 0 : i64, tpu.core_type = #tpu.core_type<tc>, window_params = [{transform_indices = @transform_0, window_bounds = array<i64: 1, 32, 3>}, {transform_indices = @transform_1, window_bounds = array<i64: 1, 3, 64>}, {pipeline_mode = #tpu.pipeline_mode<synchronous>, transform_indices = @transform_2, window_bounds = array<i64: 1, 64>}, {transform_indices = @transform_3, window_bounds = array<i64: 1, 32, 64>}, {transform_indices = @transform_4, window_bounds = array<i64: 1, 1, 1, 64>}, {transform_indices = @transform_5, window_bounds = array<i64: 1, 1, 1, 64>}]} {
    %c0 = arith.constant 0 : index
    %c0_0 = arith.constant 0 : index
    %c0_1 = arith.constant 0 : index
    %0 = vector.load %arg2[%c0, %c0_0, %c0_1] : memref<1x32x3xf32, #tpu.memory_space<vmem>>, vector<1x32x3xf32>
    %1 = vector.shape_cast %0 : vector<1x32x3xf32> to vector<32x3xf32>
    %c0_2 = arith.constant 0 : index
    %c0_3 = arith.constant 0 : index
    %c0_4 = arith.constant 0 : index
    %2 = vector.load %arg3[%c0_2, %c0_3, %c0_4] : memref<1x3x64xf32, #tpu.memory_space<vmem>>, vector<1x3x64xf32>
    %3 = vector.shape_cast %2 : vector<1x3x64xf32> to vector<3x64xf32>
    %cst = arith.constant dense<0.000000e+00> : vector<32x64xf32>
    %4 = tpu.matmul %1, %3, %cst {dimension_numbers = #tpu.dot_dimension_numbers<[1], [0], [0], [1], [0, 0, 1, 1], [], []>} : vector<32x3xf32>, vector<3x64xf32>, vector<32x64xf32> -> vector<32x64xf32>
    %c0_5 = arith.constant 0 : index
    %c0_6 = arith.constant 0 : index
    %5 = vector.load %arg4[%c0_5, %c0_6] : memref<1x64xf32, #tpu.memory_space<vmem>>, vector<1x64xf32>
    %6 = vector.broadcast %5 : vector<1x64xf32> to vector<32x64xf32>
    %7 = arith.addf %4, %6 : vector<32x64xf32>
    %c0_7 = arith.constant 0 : index
    %c0_8 = arith.constant 0 : index
    %c0_9 = arith.constant 0 : index
    %8 = vector.load %arg5[%c0_7, %c0_8, %c0_9] : memref<1x32x64xf32, #tpu.memory_space<vmem>>, vector<1x32x64xf32>
    %9 = vector.shape_cast %8 : vector<1x32x64xf32> to vector<32x64xf32>
    %10 = vector.shape_cast %7 : vector<32x64xf32> to vector<1x32x64xf32>
    tpu.vector_store %arg5[%c0_7, %c0_8, %c0_9], %10 {strides = array<i32>} : memref<1x32x64xf32, #tpu.memory_space<vmem>>, vector<1x32x64xf32>,
    %cst_10 = arith.constant dense<0.000000e+00> : vector<64xf32>
    %11 = vector.multi_reduction <add>, %7, %cst_10 [0] : vector<32x64xf32> to vector<64xf32>
    %12 = vector.shape_cast %11 : vector<64xf32> to vector<1x64xf32>
    %13 = vector.shape_cast %12 : vector<1x64xf32> to vector<1x1x1x64xf32>
    %c0_11 = arith.constant 0 : index
    %c0_12 = arith.constant 0 : index
    %c0_13 = arith.constant 0 : index
    %c0_14 = arith.constant 0 : index
    %14 = vector.load %arg6[%c0_11, %c0_12, %c0_13, %c0_14] : memref<1x1x1x64xf32, #tpu.memory_space<vmem>>, vector<1x1x1x64xf32>
    tpu.vector_store %arg6[%c0_11, %c0_12, %c0_13, %c0_14], %13 {strides = array<i32>} : memref<1x1x1x64xf32, #tpu.memory_space<vmem>>, vector<1x1x1x64xf32>,
    %15 = arith.mulf %7, %7 : vector<32x64xf32>
    %cst_15 = arith.constant dense<0.000000e+00> : vector<64xf32>
    %16 = vector.multi_reduction <add>, %15, %cst_15 [0] : vector<32x64xf32> to vector<64xf32>
    %17 = vector.shape_cast %16 : vector<64xf32> to vector<1x64xf32>
    %18 = vector.shape_cast %17 : vector<1x64xf32> to vector<1x1x1x64xf32>
    %c0_16 = arith.constant 0 : index
    %c0_17 = arith.constant 0 : index
    %c0_18 = arith.constant 0 : index
    %c0_19 = arith.constant 0 : index
    %19 = vector.load %arg7[%c0_16, %c0_17, %c0_18, %c0_19] : memref<1x1x1x64xf32, #tpu.memory_space<vmem>>, vector<1x1x1x64xf32>
    tpu.vector_store %arg7[%c0_16, %c0_17, %c0_18, %c0_19], %18 {strides = array<i32>} : memref<1x1x1x64xf32, #tpu.memory_space<vmem>>, vector<1x1x1x64xf32>,
    return
  }
  func.func @transform_0(%arg0: i32, %arg1: i32) -> (i32, i32, i32) {
    %c0_i32 = arith.constant 0 : i32
    %c0_i32_0 = arith.constant 0 : i32
    return %arg0, %arg1, %c0_i32 : i32, i32, i32
  }
  func.func @transform_1(%arg0: i32, %arg1: i32) -> (i32, i32, i32) {
    %c0_i32 = arith.constant 0 : i32
    %c0_i32_0 = arith.constant 0 : i32
    %c0_i32_1 = arith.constant 0 : i32
    return %arg0, %c0_i32, %c0_i32_0 : i32, i32, i32
  }
  func.func @transform_2(%arg0: i32, %arg1: i32) -> (i32, i32) {
    %c0_i32 = arith.constant 0 : i32
    %c0_i32_0 = arith.constant 0 : i32
    %c0_i32_1 = arith.constant 0 : i32
    return %c0_i32, %c0_i32_0 : i32, i32
  }
  func.func @transform_3(%arg0: i32, %arg1: i32) -> (i32, i32, i32) {
    %c0_i32 = arith.constant 0 : i32
    %c0_i32_0 = arith.constant 0 : i32
    return %arg0, %arg1, %c0_i32 : i32, i32, i32
  }
  func.func @transform_4(%arg0: i32, %arg1: i32) -> (i32, i32, i32, i32) {
    %c0_i32 = arith.constant 0 : i32
    %c0_i32_0 = arith.constant 0 : i32
    %c0_i32_1 = arith.constant 0 : i32
    return %arg0, %arg1, %c0_i32, %c0_i32_0 : i32, i32, i32, i32
  }
  func.func @transform_5(%arg0: i32, %arg1: i32) -> (i32, i32, i32, i32) {
    %c0_i32 = arith.constant 0 : i32
    %c0_i32_0 = arith.constant 0 : i32
    %c0_i32_1 = arith.constant 0 : i32
    return %arg0, %arg1, %c0_i32, %c0_i32_0 : i32, i32, i32, i32
  }
}

module attributes {stable_mosaic.version = 11 : i64} {
  func.func @_linear_kernel(%arg0: i32, %arg1: memref<64x64xf32, #tpu.memory_space<vmem>>, %arg2: memref<64x128xbf16, #tpu.memory_space<vmem>>, %arg3: memref<1x128xf32, #tpu.memory_space<vmem>>, %arg4: memref<1x64xf32, #tpu.memory_space<vmem>>, %arg5: memref<1x64xf32, #tpu.memory_space<vmem>>, %arg6: memref<64x128xf32, #tpu.memory_space<vmem>>, %arg7: memref<1x1x128xf32, #tpu.memory_space<vmem>>, %arg8: memref<1x1x128xf32, #tpu.memory_space<vmem>>) attributes {dimension_semantics = [#tpu.dimension_semantics<parallel>], iteration_bounds = array<i64: 1>, scalar_prefetch = 0 : i64, scratch_operands = 0 : i64, tpu.core_type = #tpu.core_type<tc>, window_params = [{transform_indices = @transform_0, window_bounds = array<i64: 64, 64>}, {pipeline_mode = #tpu.pipeline_mode<synchronous>, transform_indices = @transform_1, window_bounds = array<i64: 64, 128>}, {pipeline_mode = #tpu.pipeline_mode<synchronous>, transform_indices = @transform_2, window_bounds = array<i64: 1, 128>}, {pipeline_mode = #tpu.pipeline_mode<synchronous>, transform_indices = @transform_3, window_bounds = array<i64: 1, 64>}, {pipeline_mode = #tpu.pipeline_mode<synchronous>, transform_indices = @transform_4, window_bounds = array<i64: 1, 64>}, {transform_indices = @transform_5, window_bounds = array<i64: 64, 128>}, {transform_indices = @transform_6, window_bounds = array<i64: 1, 1, 128>}, {transform_indices = @transform_7, window_bounds = array<i64: 1, 1, 128>}]} {
    %c0 = arith.constant 0 : index
    %c0_0 = arith.constant 0 : index
    %0 = vector.load %arg1[%c0, %c0_0] : memref<64x64xf32, #tpu.memory_space<vmem>>, vector<64x64xf32>
    %c0_1 = arith.constant 0 : index
    %c0_2 = arith.constant 0 : index
    %1 = vector.load %arg4[%c0_1, %c0_2] : memref<1x64xf32, #tpu.memory_space<vmem>>, vector<1x64xf32>
    %2 = vector.broadcast %1 : vector<1x64xf32> to vector<64x64xf32>
    %3 = arith.mulf %0, %2 : vector<64x64xf32>
    %c0_3 = arith.constant 0 : index
    %c0_4 = arith.constant 0 : index
    %4 = vector.load %arg5[%c0_3, %c0_4] : memref<1x64xf32, #tpu.memory_space<vmem>>, vector<1x64xf32>
    %5 = vector.broadcast %4 : vector<1x64xf32> to vector<64x64xf32>
    %6 = arith.addf %3, %5 : vector<64x64xf32>
    %cst = arith.constant 0.000000e+00 : f32
    %7 = vector.broadcast %cst : f32 to vector<64x64xf32>
    %8 = arith.maximumf %6, %7 : vector<64x64xf32>
    %9 = arith.truncf %8 : vector<64x64xf32> to vector<64x64xbf16>
    %c0_5 = arith.constant 0 : index
    %c0_6 = arith.constant 0 : index
    %10 = vector.load %arg2[%c0_5, %c0_6] : memref<64x128xbf16, #tpu.memory_space<vmem>>, vector<64x128xbf16>
    %cst_7 = arith.constant dense<0.000000e+00> : vector<64x128xf32>
    %11 = tpu.matmul %9, %10, %cst_7 {dimension_numbers = #tpu.dot_dimension_numbers<[1], [0], [0], [1], [0, 0, 1, 1], [], []>} : vector<64x64xbf16>, vector<64x128xbf16>, vector<64x128xf32> -> vector<64x128xf32>
    %c0_8 = arith.constant 0 : index
    %c0_9 = arith.constant 0 : index
    %12 = vector.load %arg3[%c0_8, %c0_9] : memref<1x128xf32, #tpu.memory_space<vmem>>, vector<1x128xf32>
    %13 = vector.broadcast %12 : vector<1x128xf32> to vector<64x128xf32>
    %14 = arith.addf %11, %13 : vector<64x128xf32>
    %c0_10 = arith.constant 0 : index
    %c0_11 = arith.constant 0 : index
    %15 = vector.load %arg6[%c0_10, %c0_11] : memref<64x128xf32, #tpu.memory_space<vmem>>, vector<64x128xf32>
    tpu.vector_store %arg6[%c0_10, %c0_11], %14 {strides = array<i32>} : memref<64x128xf32, #tpu.memory_space<vmem>>, vector<64x128xf32>,
    %cst_12 = arith.constant dense<0.000000e+00> : vector<128xf32>
    %16 = vector.multi_reduction <add>, %14, %cst_12 [0] : vector<64x128xf32> to vector<128xf32>
    %17 = vector.shape_cast %16 : vector<128xf32> to vector<1x128xf32>
    %18 = vector.shape_cast %17 : vector<1x128xf32> to vector<1x1x128xf32>
    %c0_13 = arith.constant 0 : index
    %c0_14 = arith.constant 0 : index
    %c0_15 = arith.constant 0 : index
    %19 = vector.load %arg7[%c0_13, %c0_14, %c0_15] : memref<1x1x128xf32, #tpu.memory_space<vmem>>, vector<1x1x128xf32>
    tpu.vector_store %arg7[%c0_13, %c0_14, %c0_15], %18 {strides = array<i32>} : memref<1x1x128xf32, #tpu.memory_space<vmem>>, vector<1x1x128xf32>,
    %20 = arith.mulf %14, %14 : vector<64x128xf32>
    %cst_16 = arith.constant dense<0.000000e+00> : vector<128xf32>
    %21 = vector.multi_reduction <add>, %20, %cst_16 [0] : vector<64x128xf32> to vector<128xf32>
    %22 = vector.shape_cast %21 : vector<128xf32> to vector<1x128xf32>
    %23 = vector.shape_cast %22 : vector<1x128xf32> to vector<1x1x128xf32>
    %c0_17 = arith.constant 0 : index
    %c0_18 = arith.constant 0 : index
    %c0_19 = arith.constant 0 : index
    %24 = vector.load %arg8[%c0_17, %c0_18, %c0_19] : memref<1x1x128xf32, #tpu.memory_space<vmem>>, vector<1x1x128xf32>
    tpu.vector_store %arg8[%c0_17, %c0_18, %c0_19], %23 {strides = array<i32>} : memref<1x1x128xf32, #tpu.memory_space<vmem>>, vector<1x1x128xf32>,
    return
  }
  func.func @transform_0(%arg0: i32) -> (i32, i32) {
    %c0_i32 = arith.constant 0 : i32
    %c0_i32_0 = arith.constant 0 : i32
    return %arg0, %c0_i32 : i32, i32
  }
  func.func @transform_1(%arg0: i32) -> (i32, i32) {
    %c0_i32 = arith.constant 0 : i32
    %c0_i32_0 = arith.constant 0 : i32
    %c0_i32_1 = arith.constant 0 : i32
    return %c0_i32, %c0_i32_0 : i32, i32
  }
  func.func @transform_2(%arg0: i32) -> (i32, i32) {
    %c0_i32 = arith.constant 0 : i32
    %c0_i32_0 = arith.constant 0 : i32
    %c0_i32_1 = arith.constant 0 : i32
    return %c0_i32, %c0_i32_0 : i32, i32
  }
  func.func @transform_3(%arg0: i32) -> (i32, i32) {
    %c0_i32 = arith.constant 0 : i32
    %c0_i32_0 = arith.constant 0 : i32
    %c0_i32_1 = arith.constant 0 : i32
    return %c0_i32, %c0_i32_0 : i32, i32
  }
  func.func @transform_4(%arg0: i32) -> (i32, i32) {
    %c0_i32 = arith.constant 0 : i32
    %c0_i32_0 = arith.constant 0 : i32
    %c0_i32_1 = arith.constant 0 : i32
    return %c0_i32, %c0_i32_0 : i32, i32
  }
  func.func @transform_5(%arg0: i32) -> (i32, i32) {
    %c0_i32 = arith.constant 0 : i32
    %c0_i32_0 = arith.constant 0 : i32
    return %arg0, %c0_i32 : i32, i32
  }
  func.func @transform_6(%arg0: i32) -> (i32, i32, i32) {
    %c0_i32 = arith.constant 0 : i32
    %c0_i32_0 = arith.constant 0 : i32
    %c0_i32_1 = arith.constant 0 : i32
    return %arg0, %c0_i32, %c0_i32_0 : i32, i32, i32
  }
  func.func @transform_7(%arg0: i32) -> (i32, i32, i32) {
    %c0_i32 = arith.constant 0 : i32
    %c0_i32_0 = arith.constant 0 : i32
    %c0_i32_1 = arith.constant 0 : i32
    return %arg0, %c0_i32, %c0_i32_0 : i32, i32, i32
  }
}

module attributes {stable_mosaic.version = 11 : i64} {
  func.func @_conv_max_kernel(%arg0: i32, %arg1: i32, %arg2: memref<1x32x128xf32, #tpu.memory_space<vmem>>, %arg3: memref<128x1024xbf16, #tpu.memory_space<vmem>>, %arg4: memref<1x1024xf32, #tpu.memory_space<vmem>>, %arg5: memref<1x128xf32, #tpu.memory_space<vmem>>, %arg6: memref<1x128xf32, #tpu.memory_space<vmem>>, %arg7: memref<1x1x1024xf32, #tpu.memory_space<vmem>>, %arg8: memref<1x1x1x1024xf32, #tpu.memory_space<vmem>>, %arg9: memref<1x1x1x1024xf32, #tpu.memory_space<vmem>>) attributes {dimension_semantics = [#tpu.dimension_semantics<parallel>, #tpu.dimension_semantics<arbitrary>], iteration_bounds = array<i64: 2, 1>, scalar_prefetch = 0 : i64, scratch_operands = 0 : i64, tpu.core_type = #tpu.core_type<tc>, window_params = [{transform_indices = @transform_0, window_bounds = array<i64: 1, 32, 128>}, {pipeline_mode = #tpu.pipeline_mode<synchronous>, transform_indices = @transform_1, window_bounds = array<i64: 128, 1024>}, {pipeline_mode = #tpu.pipeline_mode<synchronous>, transform_indices = @transform_2, window_bounds = array<i64: 1, 1024>}, {pipeline_mode = #tpu.pipeline_mode<synchronous>, transform_indices = @transform_3, window_bounds = array<i64: 1, 128>}, {pipeline_mode = #tpu.pipeline_mode<synchronous>, transform_indices = @transform_4, window_bounds = array<i64: 1, 128>}, {transform_indices = @transform_5, window_bounds = array<i64: 1, 1, 1024>}, {transform_indices = @transform_6, window_bounds = array<i64: 1, 1, 1, 1024>}, {transform_indices = @transform_7, window_bounds = array<i64: 1, 1, 1, 1024>}]} {
    %c0 = arith.constant 0 : index
    %c0_0 = arith.constant 0 : index
    %c0_1 = arith.constant 0 : index
    %0 = vector.load %arg2[%c0, %c0_0, %c0_1] : memref<1x32x128xf32, #tpu.memory_space<vmem>>, vector<1x32x128xf32>
    %1 = vector.shape_cast %0 : vector<1x32x128xf32> to vector<32x128xf32>
    %c0_2 = arith.constant 0 : index
    %c0_3 = arith.constant 0 : index
    %2 = vector.load %arg5[%c0_2, %c0_3] : memref<1x128xf32, #tpu.memory_space<vmem>>, vector<1x128xf32>
    %3 = vector.broadcast %2 : vector<1x128xf32> to vector<32x128xf32>
    %4 = arith.mulf %1, %3 : vector<32x128xf32>
    %c0_4 = arith.constant 0 : index
    %c0_5 = arith.constant 0 : index
    %5 = vector.load %arg6[%c0_4, %c0_5] : memref<1x128xf32, #tpu.memory_space<vmem>>, vector<1x128xf32>
    %6 = vector.broadcast %5 : vector<1x128xf32> to vector<32x128xf32>
    %7 = arith.addf %4, %6 : vector<32x128xf32>
    %cst = arith.constant 0.000000e+00 : f32
    %8 = vector.broadcast %cst : f32 to vector<32x128xf32>
    %9 = arith.maximumf %7, %8 : vector<32x128xf32>
    %10 = arith.truncf %9 : vector<32x128xf32> to vector<32x128xbf16>
    %c0_6 = arith.constant 0 : index
    %c0_7 = arith.constant 0 : index
    %11 = vector.load %arg3[%c0_6, %c0_7] : memref<128x1024xbf16, #tpu.memory_space<vmem>>, vector<128x1024xbf16>
    %cst_8 = arith.constant dense<0.000000e+00> : vector<32x1024xf32>
    %12 = tpu.matmul %10, %11, %cst_8 {dimension_numbers = #tpu.dot_dimension_numbers<[1], [0], [0], [1], [0, 0, 1, 1], [], []>} : vector<32x128xbf16>, vector<128x1024xbf16>, vector<32x1024xf32> -> vector<32x1024xf32>
    %c0_9 = arith.constant 0 : index
    %c0_10 = arith.constant 0 : index
    %13 = vector.load %arg4[%c0_9, %c0_10] : memref<1x1024xf32, #tpu.memory_space<vmem>>, vector<1x1024xf32>
    %14 = vector.broadcast %13 : vector<1x1024xf32> to vector<32x1024xf32>
    %15 = arith.addf %12, %14 : vector<32x1024xf32>
    %cst_11 = arith.constant dense<0xFF800000> : vector<1024xf32>
    %16 = vector.multi_reduction <maximumf>, %15, %cst_11 [0] : vector<32x1024xf32> to vector<1024xf32>
    %17 = vector.shape_cast %16 : vector<1024xf32> to vector<1x1024xf32>
    %c0_i32 = arith.constant 0 : i32
    %18 = arith.cmpi eq, %arg1, %c0_i32 : i32
    %19 = arith.extui %18 : i1 to i32
    %c0_i32_12 = arith.constant 0 : i32
    %20 = arith.cmpi ne, %19, %c0_i32_12 : i32
    scf.if %20 {
      %c0_25 = arith.constant 0 : index
      %c0_26 = arith.constant 0 : index
      %c0_27 = arith.constant 0 : index
      %33 = vector.load %arg7[%c0_25, %c0_26, %c0_27] : memref<1x1x1024xf32, #tpu.memory_space<vmem>>, vector<1x1x1024xf32>
      %34 = vector.shape_cast %33 : vector<1x1x1024xf32> to vector<1x1024xf32>
      %35 = vector.shape_cast %17 : vector<1x1024xf32> to vector<1x1x1024xf32>
      tpu.vector_store %arg7[%c0_25, %c0_26, %c0_27], %35 {strides = array<i32>} : memref<1x1x1024xf32, #tpu.memory_space<vmem>>, vector<1x1x1024xf32>,
    } else {
    }
    %c0_i32_13 = arith.constant 0 : i32
    %21 = arith.cmpi ne, %arg1, %c0_i32_13 : i32
    %22 = arith.extui %21 : i1 to i32
    %c0_i32_14 = arith.constant 0 : i32
    %23 = arith.cmpi ne, %22, %c0_i32_14 : i32
    scf.if %23 {
      %c0_25 = arith.constant 0 : index
      %c0_26 = arith.constant 0 : index
      %c0_27 = arith.constant 0 : index
      %33 = vector.load %arg7[%c0_25, %c0_26, %c0_27] : memref<1x1x1024xf32, #tpu.memory_space<vmem>>, vector<1x1x1024xf32>
      %34 = vector.shape_cast %33 : vector<1x1x1024xf32> to vector<1x1024xf32>
      %35 = arith.maximumf %34, %17 : vector<1x1024xf32>
      %c0_28 = arith.constant 0 : index
      %c0_29 = arith.constant 0 : index
      %c0_30 = arith.constant 0 : index
      %36 = vector.load %arg7[%c0_28, %c0_29, %c0_30] : memref<1x1x1024xf32, #tpu.memory_space<vmem>>, vector<1x1x1024xf32>
      %37 = vector.shape_cast %36 : vector<1x1x1024xf32> to vector<1x1024xf32>
      %38 = vector.shape_cast %35 : vector<1x1024xf32> to vector<1x1x1024xf32>
      tpu.vector_store %arg7[%c0_28, %c0_29, %c0_30], %38 {strides = array<i32>} : memref<1x1x1024xf32, #tpu.memory_space<vmem>>, vector<1x1x1024xf32>,
    } else {
    }
    %cst_15 = arith.constant dense<0.000000e+00> : vector<1024xf32>
    %24 = vector.multi_reduction <add>, %15, %cst_15 [0] : vector<32x1024xf32> to vector<1024xf32>
    %25 = vector.shape_cast %24 : vector<1024xf32> to vector<1x1024xf32>
    %26 = vector.shape_cast %25 : vector<1x1024xf32> to vector<1x1x1x1024xf32>
    %c0_16 = arith.constant 0 : index
    %c0_17 = arith.constant 0 : index
    %c0_18 = arith.constant 0 : index
    %c0_19 = arith.constant 0 : index
    %27 = vector.load %arg8[%c0_16, %c0_17, %c0_18, %c0_19] : memref<1x1x1x1024xf32, #tpu.memory_space<vmem>>, vector<1x1x1x1024xf32>
    tpu.vector_store %arg8[%c0_16, %c0_17, %c0_18, %c0_19], %26 {strides = array<i32>} : memref<1x1x1x1024xf32, #tpu.memory_space<vmem>>, vector<1x1x1x1024xf32>,
    %28 = arith.mulf %15, %15 : vector<32x1024xf32>
    %cst_20 = arith.constant dense<0.000000e+00> : vector<1024xf32>
    %29 = vector.multi_reduction <add>, %28, %cst_20 [0] : vector<32x1024xf32> to vector<1024xf32>
    %30 = vector.shape_cast %29 : vector<1024xf32> to vector<1x1024xf32>
    %31 = vector.shape_cast %30 : vector<1x1024xf32> to vector<1x1x1x1024xf32>
    %c0_21 = arith.constant 0 : index
    %c0_22 = arith.constant 0 : index
    %c0_23 = arith.constant 0 : index
    %c0_24 = arith.constant 0 : index
    %32 = vector.load %arg9[%c0_21, %c0_22, %c0_23, %c0_24] : memref<1x1x1x1024xf32, #tpu.memory_space<vmem>>, vector<1x1x1x1024xf32>
    tpu.vector_store %arg9[%c0_21, %c0_22, %c0_23, %c0_24], %31 {strides = array<i32>} : memref<1x1x1x1024xf32, #tpu.memory_space<vmem>>, vector<1x1x1x1024xf32>,
    return
  }
  func.func @transform_0(%arg0: i32, %arg1: i32) -> (i32, i32, i32) {
    %c0_i32 = arith.constant 0 : i32
    %c0_i32_0 = arith.constant 0 : i32
    return %arg0, %arg1, %c0_i32 : i32, i32, i32
  }
  func.func @transform_1(%arg0: i32, %arg1: i32) -> (i32, i32) {
    %c0_i32 = arith.constant 0 : i32
    %c0_i32_0 = arith.constant 0 : i32
    %c0_i32_1 = arith.constant 0 : i32
    return %c0_i32, %c0_i32_0 : i32, i32
  }
  func.func @transform_2(%arg0: i32, %arg1: i32) -> (i32, i32) {
    %c0_i32 = arith.constant 0 : i32
    %c0_i32_0 = arith.constant 0 : i32
    %c0_i32_1 = arith.constant 0 : i32
    return %c0_i32, %c0_i32_0 : i32, i32
  }
  func.func @transform_3(%arg0: i32, %arg1: i32) -> (i32, i32) {
    %c0_i32 = arith.constant 0 : i32
    %c0_i32_0 = arith.constant 0 : i32
    %c0_i32_1 = arith.constant 0 : i32
    return %c0_i32, %c0_i32_0 : i32, i32
  }
  func.func @transform_4(%arg0: i32, %arg1: i32) -> (i32, i32) {
    %c0_i32 = arith.constant 0 : i32
    %c0_i32_0 = arith.constant 0 : i32
    %c0_i32_1 = arith.constant 0 : i32
    return %c0_i32, %c0_i32_0 : i32, i32
  }
  func.func @transform_5(%arg0: i32, %arg1: i32) -> (i32, i32, i32) {
    %c0_i32 = arith.constant 0 : i32
    %c0_i32_0 = arith.constant 0 : i32
    %c0_i32_1 = arith.constant 0 : i32
    return %arg0, %c0_i32, %c0_i32_0 : i32, i32, i32
  }
  func.func @transform_6(%arg0: i32, %arg1: i32) -> (i32, i32, i32, i32) {
    %c0_i32 = arith.constant 0 : i32
    %c0_i32_0 = arith.constant 0 : i32
    %c0_i32_1 = arith.constant 0 : i32
    return %arg0, %arg1, %c0_i32, %c0_i32_0 : i32, i32, i32, i32
  }
  func.func @transform_7(%arg0: i32, %arg1: i32) -> (i32, i32, i32, i32) {
    %c0_i32 = arith.constant 0 : i32
    %c0_i32_0 = arith.constant 0 : i32
    %c0_i32_1 = arith.constant 0 : i32
    return %arg0, %arg1, %c0_i32, %c0_i32_0 : i32, i32, i32, i32
  }
}

</mosaic_0001>

<llo_original>
// kernel: forward.12
$region0: #{forward.12}
  #allocation0 [shape = 'u32[]', space=smem, size = 0x4, offset = 0x4, fixed_abs, tag = 'smem constant byte address 0x4 - core index']
  #allocation1 [shape = 'u32[144,128]{1,0:T(1,128)}', space=vmem, size = 0x12000, scoped, tag = 'internal scratch']
  %s0 = inlined_call_operand.vmem [shape: f32[64,64], index: 0, kind: input, shape index: {}]
  %s1 = inlined_call_operand.vmem [shape: bf16[64,128], index: 1, kind: input, shape index: {}]
  %s2 = inlined_call_operand.vmem [shape: f32[1,128], index: 2, kind: input, shape index: {}]
  %s3 = inlined_call_operand.vmem [shape: f32[1,64], index: 3, kind: input, shape index: {}]
  %s4 = inlined_call_operand.vmem [shape: f32[1,64], index: 4, kind: input, shape index: {}]
  %s5 = inlined_call_operand.vmem [shape: f32[64,128], index: 5, kind: output, shape index: {}]
  %s6 = sld [smem:[#allocation0]]
  $region30: #{forward.12} parent=0
    _
  %s8 = ssub.s32 1, %s6
  %s9 = scalar_select 0, %s8, %s6
  // Predicated region
  $region2: #{forward.12} parent=0 // pred_check
    _
  $region3: #{forward.12} parent=0 // pred_check_branch
    %11 = sbr.rel (0) target = $region5
  $region4: #{forward.12} parent=0 // pred_region
    _
  $region5: #{forward.12} parent=0 // pred_fallthru
    _
  // Predicated region
  $region6: #{forward.12} parent=0 // pred_check
    _
  $region7: #{forward.12} parent=0 // pred_check_branch
    %13 = sbr.rel (0) target = $region9
  $region8: #{forward.12} parent=0 // pred_region
    _
  $region9: #{forward.12} parent=0 // pred_fallthru
    _
  // Predicated region
  $region10: #{forward.12} parent=0 // pred_check
    _
  $region11: #{forward.12} parent=0 // pred_check_branch
    %15 = sbr.rel (0) target = $region13
  $region12: #{forward.12} parent=0 // pred_region
    _
  $region13: #{forward.12} parent=0 // pred_fallthru
    _
  // Predicated region
  $region14: #{forward.12} parent=0 // pred_check
    _
  $region15: #{forward.12} parent=0 // pred_check_branch
    %17 = sbr.rel (0) target = $region17
  $region16: #{forward.12} parent=0 // pred_region
    _
  $region17: #{forward.12} parent=0 // pred_fallthru
    _
  // Predicated region
  $region18: #{forward.12} parent=0 // pred_check
    _
  $region19: #{forward.12} parent=0 // pred_check_branch
    %19 = sbr.rel (0) target = $region21
  $region20: #{forward.12} parent=0 // pred_region
    _
  $region21: #{forward.12} parent=0 // pred_fallthru
    _
  %v21 = vld [vmem:[%s0] sm:$0xff]
  %v22 = vld [vmem:[%s0 + $0x8] sm:$0xff]
  %v23 = vld [vmem:[%s0 + $0x10] sm:$0xff]
  %v24 = vld [vmem:[%s0 + $0x18] sm:$0xff]
  %v25 = vld [vmem:[%s0 + $0x20] sm:$0xff]
  %v26 = vld [vmem:[%s0 + $0x28] sm:$0xff]
  %v27 = vld [vmem:[%s0 + $0x30] sm:$0xff]
  %v28 = vld [vmem:[%s0 + $0x38] sm:$0xff]
  %v29 = vpack.c.bf16 %v22, %v21
  %v30 = vpack.c.bf16 %v24, %v23
  %v31 = vpack.c.bf16 %v26, %v25
  %v32 = vpack.c.bf16 %v28, %v27
  %v33 = vld [vmem:[%s1] sm:$0xf]
  %v34 = vld [vmem:[%s1 + $0x4] sm:$0xf]
  %v35 = vld [vmem:[%s1 + $0x8] sm:$0xf]
  %v36 = vld [vmem:[%s1 + $0xc] sm:$0xf]
  %v37 = vld [vmem:[%s1 + $0x10] sm:$0xf]
  %v38 = vld [vmem:[%s1 + $0x14] sm:$0xf]
  %v39 = vld [vmem:[%s1 + $0x18] sm:$0xf]
  %v40 = vld [vmem:[%s1 + $0x1c] sm:$0xf]
  %v41 = vld [vmem:[%s2] sm:$0x1]
  %v43 = vlaneseq
  %v44 = vshrl.u32 %v43, 7
  %v45 = vsub.s32 0, %v44
  %v46 = vrot.slane %v41, %v45
  %v56 = vunpack.c.l.b16 %v33
  %v57 = vunpack.c.l.b16 %v34
  %v58 = vunpack.c.l.b16 %v35
  %v59 = vunpack.c.l.b16 %v36
  %v60 = vunpack.c.l.b16 %v37
  %v61 = vunpack.c.l.b16 %v38
  %v62 = vunpack.c.l.b16 %v39
  %v63 = vunpack.c.l.b16 %v40
  %v64 = vpack.c.b16 %v57, %v56
  %v65 = vpack.c.b16 %v59, %v58
  %v66 = vpack.c.b16 %v61, %v60
  %v67 = vpack.c.b16 %v63, %v62
  %vm72 = vcmask 523264
  %v74 = vsel %vm72, %v29, 0
  %v77 = vsel %vm72, %v30, 0
  %v80 = vsel %vm72, %v31, 0
  %v83 = vsel %vm72, %v32, 0
  %85 = vmatprep.subr.bf16.mxu0 0
  %86 = vmatpush1.bf16.msra.mxu0 %v64
  %87 = vmatprep.subr.bf16.mxu0 0
  %88 = vmatpush1.bf16.msra.mxu0 %v65
  %89 = vmatprep.subr.bf16.mxu0 0
  %90 = vmatpush1.bf16.msra.mxu0 %v66
  %91 = vmatprep.subr.bf16.mxu0 0
  %92 = vmatpush1.bf16.msra.mxu0 %v67
  %93 = vmatprep.subr.bf16.mxu0 0
  %94 = vmatpush1.bf16.msra.mxu0 0
  %95 = vmatprep.subr.bf16.mxu0 0
  %96 = vmatpush1.bf16.msra.mxu0 0
  %97 = vmatprep.subr.bf16.mxu0 0
  %98 = vmatpush1.bf16.msra.mxu0 0
  %99 = vmatprep.subr.bf16.mxu0 0
  %100 = vmatpush1.bf16.msra.mxu0 0
  %101 = vmatprep.subr.bf16.mxu0 0
  %102 = vmatpush1.bf16.msra.mxu0 0
  %103 = vmatprep.subr.bf16.mxu0 0
  %104 = vmatpush1.bf16.msra.mxu0 0
  %105 = vmatprep.subr.bf16.mxu0 0
  %106 = vmatpush1.bf16.msra.mxu0 0
  %107 = vmatprep.subr.bf16.mxu0 0
  %108 = vmatpush1.bf16.msra.mxu0 0
  %109 = vmatprep.subr.bf16.mxu0 0
  %110 = vmatpush1.bf16.msra.mxu0 0
  %111 = vmatprep.subr.bf16.mxu0 0
  %112 = vmatpush1.bf16.msra.mxu0 0
  %113 = vmatprep.subr.bf16.mxu0 0
  %114 = vmatpush1.bf16.msra.mxu0 0
  %115 = vmatprep.subr.bf16.mxu0 0
  %116 = vmatpush1.bf16.msra.mxu0 0
  %117 = vmatprep.mubr.bf16.mxu0 0
  %118 = vmatmul.mubr.bf16.gmra.mrb[0].mxu0 %v74
  %v119 = vpop.f32.mrb[0].mxu0
  %v120 = vadd.f32 %v46, %v119
  %v121 = vpop.f32.mrb[0].mxu0
  %v122 = vpop.f32.mrb[0].mxu0
  %v123 = vadd.f32 %v46, %v122
  %v124 = vpop.f32.mrb[0].mxu0
  %125 = vmatprep.mubr.bf16.mxu0 0
  %126 = vmatmul.mubr.bf16.gmra.mrb[0].mxu0 %v77
  %v127 = vpop.f32.mrb[0].mxu0
  %v128 = vadd.f32 %v46, %v127
  %v129 = vpop.f32.mrb[0].mxu0
  %v130 = vpop.f32.mrb[0].mxu0
  %v131 = vadd.f32 %v46, %v130
  %v132 = vpop.f32.mrb[0].mxu0
  %133 = vmatprep.mubr.bf16.mxu0 0
  %134 = vmatmul.mubr.bf16.gmra.mrb[0].mxu0 %v80
  %v135 = vpop.f32.mrb[0].mxu0
  %v136 = vadd.f32 %v46, %v135
  %v137 = vpop.f32.mrb[0].mxu0
  %v138 = vpop.f32.mrb[0].mxu0
  %v139 = vadd.f32 %v46, %v138
  %v140 = vpop.f32.mrb[0].mxu0
  %141 = vmatprep.mubr.bf16.mxu0 0
  %142 = vmatmul.mubr.bf16.gmra.mrb[0].mxu0 %v83
  %v143 = vpop.f32.mrb[0].mxu0
  %v144 = vadd.f32 %v46, %v143
  %v145 = vpop.f32.mrb[0].mxu0
  %v146 = vpop.f32.mrb[0].mxu0
  %v147 = vadd.f32 %v46, %v146
  %v148 = vpop.f32.mrb[0].mxu0
  %149 = vdwg.mxu0
  %v150 = vmax.f32 %v120, 0.0
  %v151 = vmax.f32 %v123, 0.0
  %v152 = vmax.f32 %v128, 0.0
  %v153 = vmax.f32 %v131, 0.0
  %v154 = vmax.f32 %v136, 0.0
  %v155 = vmax.f32 %v139, 0.0
  %v156 = vmax.f32 %v144, 0.0
  %v157 = vmax.f32 %v147, 0.0
  %158 = vst [vmem:[%s5] sm:$0xff] %v150
  %159 = vst [vmem:[%s5 + $0x8] sm:$0xff] %v151
  %160 = vst [vmem:[%s5 + $0x10] sm:$0xff] %v152
  %161 = vst [vmem:[%s5 + $0x18] sm:$0xff] %v153
  %162 = vst [vmem:[%s5 + $0x20] sm:$0xff] %v154
  %163 = vst [vmem:[%s5 + $0x28] sm:$0xff] %v155
  %164 = vst [vmem:[%s5 + $0x30] sm:$0xff] %v156
  %165 = vst [vmem:[%s5 + $0x38] sm:$0xff] %v157
  // Predicated region
  $region22: #{forward.12} parent=0 // pred_check
    _
  $region23: #{forward.12} parent=0 // pred_check_branch
    %167 = sbr.rel (0) target = $region25
  $region24: #{forward.12} parent=0 // pred_region
    _
  $region25: #{forward.12} parent=0 // pred_fallthru
    _
  // Predicated region
  $region26: #{forward.12} parent=0 // pred_check
    _
  $region27: #{forward.12} parent=0 // pred_check_branch
    %169 = sbr.rel (0) target = $region29
  $region28: #{forward.12} parent=0 // pred_region
    _
  $region29: #{forward.12} parent=0 // pred_fallthru
    _

// kernel: forward.11
$region0: #{forward.11}
  #allocation0 [shape = 'u32[]', space=smem, size = 0x4, offset = 0x4, fixed_abs, tag = 'smem constant byte address 0x4 - core index']
  #allocation1 [shape = 'u32[144,128]{1,0:T(1,128)}', space=vmem, size = 0x12000, scoped, tag = 'internal scratch']
  %s0 = inlined_call_operand.vmem [shape: f32[64,3], index: 0, kind: input, shape index: {}]
  %s1 = inlined_call_operand.vmem [shape: f32[3,64], index: 1, kind: input, shape index: {}]
  %s2 = inlined_call_operand.vmem [shape: f32[1,64], index: 2, kind: input, shape index: {}]
  %s3 = inlined_call_operand.vmem [shape: f32[1,3], index: 3, kind: input, shape index: {}]
  %s4 = inlined_call_operand.vmem [shape: f32[1,3], index: 4, kind: input, shape index: {}]
  %s5 = inlined_call_operand.vmem [shape: f32[64,64], index: 5, kind: output, shape index: {}]
  %s6 = sld [smem:[#allocation0]]
  $region30: #{forward.11} parent=0
    _
  %s8 = ssub.s32 1, %s6
  %s9 = scalar_select 0, %s8, %s6
  // Predicated region
  $region2: #{forward.11} parent=0 // pred_check
    _
  $region3: #{forward.11} parent=0 // pred_check_branch
    %11 = sbr.rel (0) target = $region5
  $region4: #{forward.11} parent=0 // pred_region
    _
  $region5: #{forward.11} parent=0 // pred_fallthru
    _
  // Predicated region
  $region6: #{forward.11} parent=0 // pred_check
    _
  $region7: #{forward.11} parent=0 // pred_check_branch
    %13 = sbr.rel (0) target = $region9
  $region8: #{forward.11} parent=0 // pred_region
    _
  $region9: #{forward.11} parent=0 // pred_fallthru
    _
  // Predicated region
  $region10: #{forward.11} parent=0 // pred_check
    _
  $region11: #{forward.11} parent=0 // pred_check_branch
    %15 = sbr.rel (0) target = $region13
  $region12: #{forward.11} parent=0 // pred_region
    _
  $region13: #{forward.11} parent=0 // pred_fallthru
    _
  // Predicated region
  $region14: #{forward.11} parent=0 // pred_check
    _
  $region15: #{forward.11} parent=0 // pred_check_branch
    %17 = sbr.rel (0) target = $region17
  $region16: #{forward.11} parent=0 // pred_region
    _
  $region17: #{forward.11} parent=0 // pred_fallthru
    _
  // Predicated region
  $region18: #{forward.11} parent=0 // pred_check
    _
  $region19: #{forward.11} parent=0 // pred_check_branch
    %19 = sbr.rel (0) target = $region21
  $region20: #{forward.11} parent=0 // pred_region
    _
  $region21: #{forward.11} parent=0 // pred_fallthru
    _
  %v20 = vld [vmem:[%s0] sm:$0xff]
  %v21 = vld [vmem:[%s0 + $0x8] sm:$0xff]
  %v22 = vld [vmem:[%s0 + $0x10] sm:$0xff]
  %v23 = vld [vmem:[%s0 + $0x18] sm:$0xff]
  %v24 = vld [vmem:[%s0 + $0x20] sm:$0xff]
  %v25 = vld [vmem:[%s0 + $0x28] sm:$0xff]
  %v26 = vld [vmem:[%s0 + $0x30] sm:$0xff]
  %v27 = vld [vmem:[%s0 + $0x38] sm:$0xff]
  %v28 = vld [vmem:[%s1] sm:$0x7]
  %v29 = vld [vmem:[%s2] sm:$0x1]
  %v31 = vlaneseq
  %v32 = vshrl.u32 %v31, 7
  %v33 = vsub.s32 0, %v32
  %v34 = vrot.slane %v29, %v33
  %vm36 = vcmask 23552
  %v38 = vsel %vm36, %v20, 0
  %v41 = vsel %vm36, %v21, 0
  %v44 = vsel %vm36, %v22, 0
  %v47 = vsel %vm36, %v23, 0
  %v50 = vsel %vm36, %v24, 0
  %v53 = vsel %vm36, %v25, 0
  %v56 = vsel %vm36, %v26, 0
  %v59 = vsel %vm36, %v27, 0
  %vm61 = vcmask 1042432
  %v63 = vsel %vm61, %v28, 0
  %65 = vmatprep.subr.mxu0 0.0
  %66 = vmatpush1.msra.mxu0 %v63
  %67 = vmatprep.subr.mxu0 0.0
  %68 = vmatpush1.msra.mxu0 0.0
  %69 = vmatprep.subr.mxu0 0.0
  %70 = vmatpush1.msra.mxu0 0.0
  %71 = vmatprep.subr.mxu0 0.0
  %72 = vmatpush1.msra.mxu0 0.0
  %73 = vmatprep.subr.mxu0 0.0
  %74 = vmatpush1.msra.mxu0 0.0
  %75 = vmatprep.subr.mxu0 0.0
  %76 = vmatpush1.msra.mxu0 0.0
  %77 = vmatprep.subr.mxu0 0.0
  %78 = vmatpush1.msra.mxu0 0.0
  %79 = vmatprep.subr.mxu0 0.0
  %80 = vmatpush1.msra.mxu0 0.0
  %81 = vmatprep.subr.mxu0 0.0
  %82 = vmatpush1.msra.mxu0 0.0
  %83 = vmatprep.subr.mxu0 0.0
  %84 = vmatpush1.msra.mxu0 0.0
  %85 = vmatprep.subr.mxu0 0.0
  %86 = vmatpush1.msra.mxu0 0.0
  %87 = vmatprep.subr.mxu0 0.0
  %88 = vmatpush1.msra.mxu0 0.0
  %89 = vmatprep.subr.mxu0 0.0
  %90 = vmatpush1.msra.mxu0 0.0
  %91 = vmatprep.subr.mxu0 0.0
  %92 = vmatpush1.msra.mxu0 0.0
  %93 = vmatprep.subr.mxu0 0.0
  %94 = vmatpush1.msra.mxu0 0.0
  %95 = vmatprep.subr.mxu0 0.0
  %96 = vmatpush1.msra.mxu0 0.0
  %97 = vmatprep.subr.mxu0 0.0
  %98 = vmatpush1.msra.mxu0 0.0
  %99 = vmatprep.subr.mxu0 0.0
  %100 = vmatpush1.msra.mxu0 0.0
  %101 = vmatprep.subr.mxu0 0.0
  %102 = vmatpush1.msra.mxu0 0.0
  %103 = vmatprep.subr.mxu0 0.0
  %104 = vmatpush1.msra.mxu0 0.0
  %105 = vmatprep.subr.mxu0 0.0
  %106 = vmatpush1.msra.mxu0 0.0
  %107 = vmatprep.subr.mxu0 0.0
  %108 = vmatpush1.msra.mxu0 0.0
  %109 = vmatprep.subr.mxu0 0.0
  %110 = vmatpush1.msra.mxu0 0.0
  %111 = vmatprep.subr.mxu0 0.0
  %112 = vmatpush1.msra.mxu0 0.0
  %113 = vmatprep.subr.mxu0 0.0
  %114 = vmatpush1.msra.mxu0 0.0
  %115 = vmatprep.subr.mxu0 0.0
  %116 = vmatpush1.msra.mxu0 0.0
  %117 = vmatprep.subr.mxu0 0.0
  %118 = vmatpush1.msra.mxu0 0.0
  %119 = vmatprep.subr.mxu0 0.0
  %120 = vmatpush1.msra.mxu0 0.0
  %121 = vmatprep.subr.mxu0 0.0
  %122 = vmatpush1.msra.mxu0 0.0
  %123 = vmatprep.subr.mxu0 0.0
  %124 = vmatpush1.msra.mxu0 0.0
  %125 = vmatprep.subr.mxu0 0.0
  %126 = vmatpush1.msra.mxu0 0.0
  %127 = vmatprep.subr.mxu0 0.0
  %128 = vmatpush1.msra.mxu0 0.0
  %129 = vmatprep.mubr.f32.mxu0 0.0
  %130 = vmatmul.mubr.f32.gmra.mrb[0].mxu0 %v38
  %v131 = vpop.f32.mrb[0].mxu0
  %v132 = vadd.f32 %v34, %v131
  %v133 = vpop.f32.mrb[0].mxu0
  %134 = vmatprep.mubr.f32.mxu0 0.0
  %135 = vmatmul.mubr.f32.gmra.mrb[0].mxu0 %v41
  %v136 = vpop.f32.mrb[0].mxu0
  %v137 = vadd.f32 %v34, %v136
  %v138 = vpop.f32.mrb[0].mxu0
  %139 = vmatprep.mubr.f32.mxu0 0.0
  %140 = vmatmul.mubr.f32.gmra.mrb[0].mxu0 %v44
  %v141 = vpop.f32.mrb[0].mxu0
  %v142 = vadd.f32 %v34, %v141
  %v143 = vpop.f32.mrb[0].mxu0
  %144 = vmatprep.mubr.f32.mxu0 0.0
  %145 = vmatmul.mubr.f32.gmra.mrb[0].mxu0 %v47
  %v146 = vpop.f32.mrb[0].mxu0
  %v147 = vadd.f32 %v34, %v146
  %v148 = vpop.f32.mrb[0].mxu0
  %149 = vmatprep.mubr.f32.mxu0 0.0
  %150 = vmatmul.mubr.f32.gmra.mrb[0].mxu0 %v50
  %v151 = vpop.f32.mrb[0].mxu0
  %v152 = vadd.f32 %v34, %v151
  %v153 = vpop.f32.mrb[0].mxu0
  %154 = vmatprep.mubr.f32.mxu0 0.0
  %155 = vmatmul.mubr.f32.gmra.mrb[0].mxu0 %v53
  %v156 = vpop.f32.mrb[0].mxu0
  %v157 = vadd.f32 %v34, %v156
  %v158 = vpop.f32.mrb[0].mxu0
  %159 = vmatprep.mubr.f32.mxu0 0.0
  %160 = vmatmul.mubr.f32.gmra.mrb[0].mxu0 %v56
  %v161 = vpop.f32.mrb[0].mxu0
  %v162 = vadd.f32 %v34, %v161
  %v163 = vpop.f32.mrb[0].mxu0
  %164 = vmatprep.mubr.f32.mxu0 0.0
  %165 = vmatmul.mubr.f32.gmra.mrb[0].mxu0 %v59
  %v166 = vpop.f32.mrb[0].mxu0
  %v167 = vadd.f32 %v34, %v166
  %v168 = vpop.f32.mrb[0].mxu0
  %169 = vdwg.mxu0
  %v170 = vmax.f32 %v132, 0.0
  %v171 = vmax.f32 %v137, 0.0
  %v172 = vmax.f32 %v142, 0.0
  %v173 = vmax.f32 %v147, 0.0
  %v174 = vmax.f32 %v152, 0.0
  %v175 = vmax.f32 %v157, 0.0
  %v176 = vmax.f32 %v162, 0.0
  %v177 = vmax.f32 %v167, 0.0
  %vm178 = vcmask 523264
  %179 = vst.msk [vmem:[%s5] sm:$0xff] %vm178, %v170
  %180 = vst.msk [vmem:[%s5 + $0x8] sm:$0xff] %vm178, %v171
  %181 = vst.msk [vmem:[%s5 + $0x10] sm:$0xff] %vm178, %v172
  %182 = vst.msk [vmem:[%s5 + $0x18] sm:$0xff] %vm178, %v173
  %183 = vst.msk [vmem:[%s5 + $0x20] sm:$0xff] %vm178, %v174
  %184 = vst.msk [vmem:[%s5 + $0x28] sm:$0xff] %vm178, %v175
  %185 = vst.msk [vmem:[%s5 + $0x30] sm:$0xff] %vm178, %v176
  %186 = vst.msk [vmem:[%s5 + $0x38] sm:$0xff] %vm178, %v177
  // Predicated region
  $region22: #{forward.11} parent=0 // pred_check
    _
  $region23: #{forward.11} parent=0 // pred_check_branch
    %188 = sbr.rel (0) target = $region25
  $region24: #{forward.11} parent=0 // pred_region
    _
  $region25: #{forward.11} parent=0 // pred_fallthru
    _
  // Predicated region
  $region26: #{forward.11} parent=0 // pred_check
    _
  $region27: #{forward.11} parent=0 // pred_check_branch
    %190 = sbr.rel (0) target = $region29
  $region28: #{forward.11} parent=0 // pred_region
    _
  $region29: #{forward.11} parent=0 // pred_fallthru
    _

// kernel: forward.13
$region0: #{forward.13}
  #allocation0 [shape = 'u32[]', space=smem, size = 0x4, offset = 0x4, fixed_abs, tag = 'smem constant byte address 0x4 - core index']
  #allocation1 [shape = 'u32[144,128]{1,0:T(1,128)}', space=vmem, size = 0x12000, scoped, tag = 'internal scratch']
  %s0 = inlined_call_operand.vmem [shape: f32[2,32,128], index: 0, kind: input, shape index: {}]
  %s1 = inlined_call_operand.vmem [shape: bf16[128,1024], index: 1, kind: input, shape index: {}]
  %s2 = inlined_call_operand.vmem [shape: f32[1,1024], index: 2, kind: input, shape index: {}]
  %s3 = inlined_call_operand.vmem [shape: f32[1,128], index: 3, kind: input, shape index: {}]
  %s4 = inlined_call_operand.vmem [shape: f32[1,128], index: 4, kind: input, shape index: {}]
  %s5 = inlined_call_operand.vmem [shape: f32[2,1,1024], index: 5, kind: output, shape index: {}]
  %s6 = sld [smem:[#allocation0]]
  $region61: #{forward.13} parent=0
    _
  %s8 = ssub.s32 1, %s6
  %s9 = scalar_select 0, %s8, %s6
  loop: start=0, step=1, limit=4
  $region2: #{forward.13} parent=0 // loop_pre_header
    _
  $region3: #{forward.13} parent=0 // loop_header
    %s11 = sphi 0, %s15
    %p12 = scmp.ge.s32.totalorder %s11, 4
    %s18 = sphi 0, %s30
    %s19 = sphi 0, %s26
    %s20 = sphi 0, %s18
    %s21 = sphi 0, %s19
    %s22 = sphi 0, %s20
    %s23 = sphi 0, %s21
    %s35 = sphi 0, %s37
    %s38 = sphi 0, %s35
    %s39 = sphi 0, %s38
    %s55 = sphi 0, %s39
    %s59 = sphi 0, %s59
    %s61 = sphi 0, %s59
    %s62 = sphi 0, %s61
    %s76 = sphi 0, %s62
    %s80 = sphi 0, %s80
    %s82 = sphi 0, %s80
    %s83 = sphi 0, %s82
    %s97 = sphi 0, %s83
    %s101 = sphi 0, %s101
    %s103 = sphi 0, %s101
    %s104 = sphi 0, %s103
    %s118 = sphi 0, %s104
    %s122 = sphi 0, %s122
    %s124 = sphi 0, %s122
    %s125 = sphi 0, %s124
    %s139 = sphi 0, %s125
    %s145 = sphi 0, %s147
    %s148 = sphi 0, %s145
    %s149 = sphi 0, %s148
    %s165 = sphi 0, %s149
  $region4: #{forward.13} parent=0 // loop_header_branch
    %14 = sbr.rel (%p12) target = $region8
  $region5: #{forward.13} parent=0 // loop_body
    %s16 = ssub.s32 %s11, 1
    %s17 = ssub.s32 %s11, 2
    %s24 = sadd.s32 1, %s19
    %p25 = scmp.ge.s32.totalorder %s24, 1
    %s26 = scalar_select %p25, 0, %s24
    %s27 = sadd.s32 1, %s18
    %s28 = scalar_select %p25, %s27, %s18
    %p29 = scmp.ge.s32.totalorder %s28, 2
    %s30 = scalar_select %p29, 0, %s28
    %s31 = ssub.s32 %s18, %s30
    %s32 = ssub.s32 %s19, %s26
    %s33 = sor.u32 %s31, %s32
    %p34 = scmp.eq.s32.totalorder %s33, 0
    %s36 = sadd.s32 %s35, 1
    %s37 = scalar_select %p34, %s35, %s36
    %p40 = pneg %p34
    %p41 = scmp.eq.s32.totalorder %s11, 1
    %p42 = por %p40, %p41
    %p43 = scmp.ne.s32.totalorder %s35, %s38
    %p44 = scmp.eq.s32.totalorder %s11, 0
    %p45 = por %p43, %p44
    %p46 = scmp.ne.s32.totalorder %s35, %s38
    %p47 = scmp.eq.s32.totalorder %s16, 1
    %p48 = por %p46, %p47
    %p49 = scmp.ne.s32.totalorder %s38, %s39
    %p50 = scmp.eq.s32.totalorder %s16, 0
    %p51 = por %p49, %p50
    %p52 = scmp.ne.s32.totalorder %s38, %s39
    %p53 = scmp.eq.s32.totalorder %s17, 1
    %p54 = por %p52, %p53
    %p56 = scmp.ne.s32.totalorder %s39, %s55
    %p57 = scmp.eq.s32.totalorder %s17, 0
    %p58 = por %p56, %p57
    %s60 = sadd.s32 %s59, 1
    %p63 = scmp.eq.s32.totalorder %s11, 1
    %p64 = scmp.ne.s32.totalorder %s59, %s61
    %p65 = scmp.eq.s32.totalorder %s11, 0
    %p66 = por %p64, %p65
    %p67 = scmp.ne.s32.totalorder %s59, %s61
    %p68 = scmp.eq.s32.totalorder %s16, 1
    %p69 = por %p67, %p68
    %p70 = scmp.ne.s32.totalorder %s61, %s62
    %p71 = scmp.eq.s32.totalorder %s16, 0
    %p72 = por %p70, %p71
    %p73 = scmp.ne.s32.totalorder %s61, %s62
    %p74 = scmp.eq.s32.totalorder %s17, 1
    %p75 = por %p73, %p74
    %p77 = scmp.ne.s32.totalorder %s62, %s76
    %p78 = scmp.eq.s32.totalorder %s17, 0
    %p79 = por %p77, %p78
    %s81 = sadd.s32 %s80, 1
    %p84 = scmp.eq.s32.totalorder %s11, 1
    %p85 = scmp.ne.s32.totalorder %s80, %s82
    %p86 = scmp.eq.s32.totalorder %s11, 0
    %p87 = por %p85, %p86
    %p88 = scmp.ne.s32.totalorder %s80, %s82
    %p89 = scmp.eq.s32.totalorder %s16, 1
    %p90 = por %p88, %p89
    %p91 = scmp.ne.s32.totalorder %s82, %s83
    %p92 = scmp.eq.s32.totalorder %s16, 0
    %p93 = por %p91, %p92
    %p94 = scmp.ne.s32.totalorder %s82, %s83
    %p95 = scmp.eq.s32.totalorder %s17, 1
    %p96 = por %p94, %p95
    %p98 = scmp.ne.s32.totalorder %s83, %s97
    %p99 = scmp.eq.s32.totalorder %s17, 0
    %p100 = por %p98, %p99
    %s102 = sadd.s32 %s101, 1
    %p105 = scmp.eq.s32.totalorder %s11, 1
    %p106 = scmp.ne.s32.totalorder %s101, %s103
    %p107 = scmp.eq.s32.totalorder %s11, 0
    %p108 = por %p106, %p107
    %p109 = scmp.ne.s32.totalorder %s101, %s103
    %p110 = scmp.eq.s32.totalorder %s16, 1
    %p111 = por %p109, %p110
    %p112 = scmp.ne.s32.totalorder %s103, %s104
    %p113 = scmp.eq.s32.totalorder %s16, 0
    %p114 = por %p112, %p113
    %p115 = scmp.ne.s32.totalorder %s103, %s104
    %p116 = scmp.eq.s32.totalorder %s17, 1
    %p117 = por %p115, %p116
    %p119 = scmp.ne.s32.totalorder %s104, %s118
    %p120 = scmp.eq.s32.totalorder %s17, 0
    %p121 = por %p119, %p120
    %s123 = sadd.s32 %s122, 1
    %p126 = scmp.eq.s32.totalorder %s11, 1
    %p127 = scmp.ne.s32.totalorder %s122, %s124
    %p128 = scmp.eq.s32.totalorder %s11, 0
    %p129 = por %p127, %p128
    %p130 = scmp.ne.s32.totalorder %s122, %s124
    %p131 = scmp.eq.s32.totalorder %s16, 1
    %p132 = por %p130, %p131
    %p133 = scmp.ne.s32.totalorder %s124, %s125
    %p134 = scmp.eq.s32.totalorder %s16, 0
    %p135 = por %p133, %p134
    %p136 = scmp.ne.s32.totalorder %s124, %s125
    %p137 = scmp.eq.s32.totalorder %s17, 1
    %p138 = por %p136, %p137
    %p140 = scmp.ne.s32.totalorder %s125, %s139
    %p141 = scmp.eq.s32.totalorder %s17, 0
    %p142 = por %p140, %p141
    %s143 = ssub.s32 %s18, %s30
    %p144 = scmp.eq.s32.totalorder %s143, 0
    %s146 = sadd.s32 %s145, 1
    %s147 = scalar_select %p144, %s145, %s146
    %p150 = pneg %p144
    %p151 = scmp.eq.s32.totalorder %s11, 1
    %p152 = por %p150, %p151
    %p153 = scmp.ne.s32.totalorder %s145, %s148
    %p154 = scmp.eq.s32.totalorder %s11, 0
    %p155 = por %p153, %p154
    %p156 = scmp.ne.s32.totalorder %s145, %s148
    %p157 = scmp.eq.s32.totalorder %s16, 1
    %p158 = por %p156, %p157
    %p159 = scmp.ne.s32.totalorder %s148, %s149
    %p160 = scmp.eq.s32.totalorder %s16, 0
    %p161 = por %p159, %p160
    %p162 = scmp.ne.s32.totalorder %s148, %s149
    %p163 = scmp.eq.s32.totalorder %s17, 1
    %p164 = por %p162, %p163
    %p166 = scmp.ne.s32.totalorder %s149, %s165
    %p167 = scmp.eq.s32.totalorder %s17, 0
    %p168 = por %p166, %p167
    %p169 = scmp.le.s32.totalorder 1, %s11
    %p170 = scmp.lt.s32.totalorder %s11, 3
    %p171 = pnand %p169, %p170
    %p172 = pneg %p171
    // Predicated region
    $region9: #{forward.13} parent=5 // pred_check
      _
    $region10: #{forward.13} parent=5 // pred_check_branch
      %174 = sbr.rel (%p171) target = $region12
    $region11: #{forward.13} parent=5 // pred_region
      %s175 = ssub.s32 %s11, 1
      // Predicated region
      $region13: #{forward.13} parent=11 // pred_check
        %p176 = pneg %p72
      $region14: #{forward.13} parent=11 // pred_check_branch
        %178 = sbr.rel (%p176) target = $region16
      $region15: #{forward.13} parent=11 // pred_region
        _
      $region16: #{forward.13} parent=11 // pred_fallthru
        _
      // Predicated region
      $region17: #{forward.13} parent=11 // pred_check
        %p179 = pneg %p93
      $region18: #{forward.13} parent=11 // pred_check_branch
        %181 = sbr.rel (%p179) target = $region20
      $region19: #{forward.13} parent=11 // pred_region
        _
      $region20: #{forward.13} parent=11 // pred_fallthru
        _
      // Predicated region
      $region21: #{forward.13} parent=11 // pred_check
        %p182 = pneg %p114
      $region22: #{forward.13} parent=11 // pred_check_branch
        %184 = sbr.rel (%p182) target = $region24
      $region23: #{forward.13} parent=11 // pred_region
        _
      $region24: #{forward.13} parent=11 // pred_fallthru
        _
      // Predicated region
      $region25: #{forward.13} parent=11 // pred_check
        %p185 = pneg %p135
      $region26: #{forward.13} parent=11 // pred_check_branch
        %187 = sbr.rel (%p185) target = $region28
      $region27: #{forward.13} parent=11 // pred_region
        _
      $region28: #{forward.13} parent=11 // pred_fallthru
        _
    $region12: #{forward.13} parent=5 // pred_fallthru
      _
    %p188 = scmp.lt.s32.totalorder %s11, 2
    // Predicated region
    $region29: #{forward.13} parent=5 // pred_check
      %p189 = pneg %p188
    $region30: #{forward.13} parent=5 // pred_check_branch
      %191 = sbr.rel (%p189) target = $region32
    $region31: #{forward.13} parent=5 // pred_region
      // Predicated region
      $region33: #{forward.13} parent=31 // pred_check
        %p192 = pneg %p45
      $region34: #{forward.13} parent=31 // pred_check_branch
        %194 = sbr.rel (%p192) target = $region36
      $region35: #{forward.13} parent=31 // pred_region
        %s195 = smul.u32 4, %s19
        %p196 = scmp.lt.s32.totalorder %s18, 1
        %s197 = scalar_select %p196, %s18, 1
        %p198 = scmp.lt.s32.totalorder %s195, 3
        %s199 = scalar_select %p198, %s195, 3
        %s200 = smul.addr %s197, 4
        %s201 = sadd.s32 %s199, %s200
        %s202 = smul.addr %s201, 8
        %s203 = scalar_lea.vmem %s0, %s202
        %s204 = smul.u32 4, %s19
      $region36: #{forward.13} parent=31 // pred_fallthru
        _
    $region32: #{forward.13} parent=5 // pred_fallthru
      _
    %p205 = scmp.le.s32.totalorder 1, %s11
    %p206 = scmp.lt.s32.totalorder %s11, 3
    %p207 = pnand %p205, %p206
    %p208 = pneg %p207
    // Predicated region
    $region37: #{forward.13} parent=5 // pred_check
      _
    $region38: #{forward.13} parent=5 // pred_check_branch
      %210 = sbr.rel (%p207) target = $region40
    $region39: #{forward.13} parent=5 // pred_region
      %s211 = ssub.s32 %s11, 1
      %s212 = smul.u32 4, %s21
      %p213 = scmp.lt.s32.totalorder %s20, 1
      %s214 = scalar_select %p213, %s20, 1
      %p215 = scmp.lt.s32.totalorder %s212, 3
      %s216 = scalar_select %p215, %s212, 3
      %s217 = smul.addr %s214, 4
      %s218 = sadd.s32 %s216, %s217
      %s219 = smul.addr %s218, 8
      %s220 = scalar_lea.vmem %s0, %s219
      %p221 = pneg %p51
      %p222 = pneg %p48
      %p223 = pneg %p72
      %p224 = pneg %p69
      %p225 = pneg %p93
      %p226 = pneg %p90
      %p227 = pneg %p114
      %p228 = pneg %p111
      %p229 = pneg %p135
      %p230 = pneg %p132
      %p231 = pneg %p161
      %p232 = pneg %p158
      %p233 = scmp.lt.s32.totalorder %s20, 1
      %s234 = scalar_select %p233, %s20, 1
      %s235 = smul.addr %s234, 8
      %s236 = scalar_lea.vmem %s5, %s235
      %s237 = smul.u32 4, %s21
      %p238 = scmp.lt.s32.totalorder %s20, 1
      %s239 = scalar_select %p238, %s20, 1
      %p240 = scmp.lt.s32.totalorder %s237, 3
      %s241 = scalar_select %p240, %s237, 3
      %s242 = smul.addr %s239, 4
      %s243 = sadd.s32 %s241, %s242
      %s244 = smul.addr %s243, 8
      %s245 = scalar_lea.vmem %s0, %s244
      %s246 = smul.u32 4, %s21
      %p247 = scmp.lt.s32.totalorder %s20, 1
      %s248 = scalar_select %p247, %s20, 1
      %s249 = smul.addr %s248, 8
      %s250 = scalar_lea.vmem %s5, %s249
      %v252 = vld [vmem:[%s245] sm:$0xff]
      %v253 = vld [vmem:[%s245 + $0x8] sm:$0xff]
      %v254 = vld [vmem:[%s245 + $0x10] sm:$0xff]
      %v255 = vld [vmem:[%s245 + $0x18] sm:$0xff]
      %v256 = vpack.c.bf16 %v253, %v252
      %v257 = vpack.c.bf16 %v255, %v254
      %v258 = vld [vmem:[%s1] sm:$0xff]
      %v259 = vld [vmem:[%s1 + $0x8] sm:$0xff]
      %v260 = vld [vmem:[%s1 + $0x10] sm:$0xff]
      %v261 = vld [vmem:[%s1 + $0x18] sm:$0xff]
      %v262 = vld [vmem:[%s1 + $0x20] sm:$0xff]
      %v263 = vld [vmem:[%s1 + $0x28] sm:$0xff]
      %v264 = vld [vmem:[%s1 + $0x30] sm:$0xff]
      %v265 = vld [vmem:[%s1 + $0x38] sm:$0xff]
      %v266 = vld [vmem:[%s1 + $0x40] sm:$0xff]
      %v267 = vld [vmem:[%s1 + $0x48] sm:$0xff]
      %v268 = vld [vmem:[%s1 + $0x50] sm:$0xff]
      %v269 = vld [vmem:[%s1 + $0x58] sm:$0xff]
      %v270 = vld [vmem:[%s1 + $0x60] sm:$0xff]
      %v271 = vld [vmem:[%s1 + $0x68] sm:$0xff]
      %v272 = vld [vmem:[%s1 + $0x70] sm:$0xff]
      %v273 = vld [vmem:[%s1 + $0x78] sm:$0xff]
      %v274 = vld [vmem:[%s1 + $0x80] sm:$0xff]
      %v275 = vld [vmem:[%s1 + $0x88] sm:$0xff]
      %v276 = vld [vmem:[%s1 + $0x90] sm:$0xff]
      %v277 = vld [vmem:[%s1 + $0x98] sm:$0xff]
      %v278 = vld [vmem:[%s1 + $0xa0] sm:$0xff]
      %v279 = vld [vmem:[%s1 + $0xa8] sm:$0xff]
      %v280 = vld [vmem:[%s1 + $0xb0] sm:$0xff]
      %v281 = vld [vmem:[%s1 + $0xb8] sm:$0xff]
      %v282 = vld [vmem:[%s1 + $0xc0] sm:$0xff]
      %v283 = vld [vmem:[%s1 + $0xc8] sm:$0xff]
      %v284 = vld [vmem:[%s1 + $0xd0] sm:$0xff]
      %v285 = vld [vmem:[%s1 + $0xd8] sm:$0xff]
      %v286 = vld [vmem:[%s1 + $0xe0] sm:$0xff]
      %v287 = vld [vmem:[%s1 + $0xe8] sm:$0xff]
      %v288 = vld [vmem:[%s1 + $0xf0] sm:$0xff]
      %v289 = vld [vmem:[%s1 + $0xf8] sm:$0xff]
      %v290 = vld [vmem:[%s1 + $0x100] sm:$0xff]
      %v291 = vld [vmem:[%s1 + $0x108] sm:$0xff]
      %v292 = vld [vmem:[%s1 + $0x110] sm:$0xff]
      %v293 = vld [vmem:[%s1 + $0x118] sm:$0xff]
      %v294 = vld [vmem:[%s1 + $0x120] sm:$0xff]
      %v295 = vld [vmem:[%s1 + $0x128] sm:$0xff]
      %v296 = vld [vmem:[%s1 + $0x130] sm:$0xff]
      %v297 = vld [vmem:[%s1 + $0x138] sm:$0xff]
      %v298 = vld [vmem:[%s1 + $0x140] sm:$0xff]
      %v299 = vld [vmem:[%s1 + $0x148] sm:$0xff]
      %v300 = vld [vmem:[%s1 + $0x150] sm:$0xff]
      %v301 = vld [vmem:[%s1 + $0x158] sm:$0xff]
      %v302 = vld [vmem:[%s1 + $0x160] sm:$0xff]
      %v303 = vld [vmem:[%s1 + $0x168] sm:$0xff]
      %v304 = vld [vmem:[%s1 + $0x170] sm:$0xff]
      %v305 = vld [vmem:[%s1 + $0x178] sm:$0xff]
      %v306 = vld [vmem:[%s1 + $0x180] sm:$0xff]
      %v307 = vld [vmem:[%s1 + $0x188] sm:$0xff]
      %v308 = vld [vmem:[%s1 + $0x190] sm:$0xff]
      %v309 = vld [vmem:[%s1 + $0x198] sm:$0xff]
      %v310 = vld [vmem:[%s1 + $0x1a0] sm:$0xff]
      %v311 = vld [vmem:[%s1 + $0x1a8] sm:$0xff]
      %v312 = vld [vmem:[%s1 + $0x1b0] sm:$0xff]
      %v313 = vld [vmem:[%s1 + $0x1b8] sm:$0xff]
      %v314 = vld [vmem:[%s1 + $0x1c0] sm:$0xff]
      %v315 = vld [vmem:[%s1 + $0x1c8] sm:$0xff]
      %v316 = vld [vmem:[%s1 + $0x1d0] sm:$0xff]
      %v317 = vld [vmem:[%s1 + $0x1d8] sm:$0xff]
      %v318 = vld [vmem:[%s1 + $0x1e0] sm:$0xff]
      %v319 = vld [vmem:[%s1 + $0x1e8] sm:$0xff]
      %v320 = vld [vmem:[%s1 + $0x1f0] sm:$0xff]
      %v321 = vld [vmem:[%s1 + $0x1f8] sm:$0xff]
      %v322 = vld [vmem:[%s2] sm:$0xff]
      %v324 = vlaneseq
      %v325 = vshrl.u32 %v324, 7
      %v326 = vsub.s32 0, %v325
      %v327 = vrot.slane %v322, %v326
      %v328 = vlaneseq
      %v329 = vshrl.u32 %v328, 7
      %v330 = vsub.s32 1, %v329
      %v331 = vrot.slane %v322, %v330
      %v332 = vlaneseq
      %v333 = vshrl.u32 %v332, 7
      %v334 = vsub.s32 2, %v333
      %v335 = vrot.slane %v322, %v334
      %v336 = vlaneseq
      %v337 = vshrl.u32 %v336, 7
      %v338 = vsub.s32 3, %v337
      %v339 = vrot.slane %v322, %v338
      %v340 = vlaneseq
      %v341 = vshrl.u32 %v340, 7
      %v342 = vsub.s32 4, %v341
      %v343 = vrot.slane %v322, %v342
      %v344 = vlaneseq
      %v345 = vshrl.u32 %v344, 7
      %v346 = vsub.s32 5, %v345
      %v347 = vrot.slane %v322, %v346
      %v348 = vlaneseq
      %v349 = vshrl.u32 %v348, 7
      %v350 = vsub.s32 6, %v349
      %v351 = vrot.slane %v322, %v350
      %v352 = vlaneseq
      %v353 = vshrl.u32 %v352, 7
      %v354 = vsub.s32 7, %v353
      %v355 = vrot.slane %v322, %v354
      %v428 = vunpack.c.l.b16 %v258
      %v429 = vunpack.c.h.b16 %v258
      %v430 = vunpack.c.l.b16 %v259
      %v431 = vunpack.c.h.b16 %v259
      %v432 = vunpack.c.l.b16 %v260
      %v433 = vunpack.c.h.b16 %v260
      %v434 = vunpack.c.l.b16 %v261
      %v435 = vunpack.c.h.b16 %v261
      %v436 = vunpack.c.l.b16 %v262
      %v437 = vunpack.c.h.b16 %v262
      %v438 = vunpack.c.l.b16 %v263
      %v439 = vunpack.c.h.b16 %v263
      %v440 = vunpack.c.l.b16 %v264
      %v441 = vunpack.c.h.b16 %v264
      %v442 = vunpack.c.l.b16 %v265
      %v443 = vunpack.c.h.b16 %v265
      %v444 = vunpack.c.l.b16 %v266
      %v445 = vunpack.c.h.b16 %v266
      %v446 = vunpack.c.l.b16 %v267
      %v447 = vunpack.c.h.b16 %v267
      %v448 = vunpack.c.l.b16 %v268
      %v449 = vunpack.c.h.b16 %v268
      %v450 = vunpack.c.l.b16 %v269
      %v451 = vunpack.c.h.b16 %v269
      %v452 = vunpack.c.l.b16 %v270
      %v453 = vunpack.c.h.b16 %v270
      %v454 = vunpack.c.l.b16 %v271
      %v455 = vunpack.c.h.b16 %v271
      %v456 = vunpack.c.l.b16 %v272
      %v457 = vunpack.c.h.b16 %v272
      %v458 = vunpack.c.l.b16 %v273
      %v459 = vunpack.c.h.b16 %v273
      %v460 = vunpack.c.l.b16 %v274
      %v461 = vunpack.c.h.b16 %v274
      %v462 = vunpack.c.l.b16 %v275
      %v463 = vunpack.c.h.b16 %v275
      %v464 = vunpack.c.l.b16 %v276
      %v465 = vunpack.c.h.b16 %v276
      %v466 = vunpack.c.l.b16 %v277
      %v467 = vunpack.c.h.b16 %v277
      %v468 = vunpack.c.l.b16 %v278
      %v469 = vunpack.c.h.b16 %v278
      %v470 = vunpack.c.l.b16 %v279
      %v471 = vunpack.c.h.b16 %v279
      %v472 = vunpack.c.l.b16 %v280
      %v473 = vunpack.c.h.b16 %v280
      %v474 = vunpack.c.l.b16 %v281
      %v475 = vunpack.c.h.b16 %v281
      %v476 = vunpack.c.l.b16 %v282
      %v477 = vunpack.c.h.b16 %v282
      %v478 = vunpack.c.l.b16 %v283
      %v479 = vunpack.c.h.b16 %v283
      %v480 = vunpack.c.l.b16 %v284
      %v481 = vunpack.c.h.b16 %v284
      %v482 = vunpack.c.l.b16 %v285
      %v483 = vunpack.c.h.b16 %v285
      %v484 = vunpack.c.l.b16 %v286
      %v485 = vunpack.c.h.b16 %v286
      %v486 = vunpack.c.l.b16 %v287
      %v487 = vunpack.c.h.b16 %v287
      %v488 = vunpack.c.l.b16 %v288
      %v489 = vunpack.c.h.b16 %v288
      %v490 = vunpack.c.l.b16 %v289
      %v491 = vunpack.c.h.b16 %v289
      %v492 = vunpack.c.l.b16 %v290
      %v493 = vunpack.c.h.b16 %v290
      %v494 = vunpack.c.l.b16 %v291
      %v495 = vunpack.c.h.b16 %v291
      %v496 = vunpack.c.l.b16 %v292
      %v497 = vunpack.c.h.b16 %v292
      %v498 = vunpack.c.l.b16 %v293
      %v499 = vunpack.c.h.b16 %v293
      %v500 = vunpack.c.l.b16 %v294
      %v501 = vunpack.c.h.b16 %v294
      %v502 = vunpack.c.l.b16 %v295
      %v503 = vunpack.c.h.b16 %v295
      %v504 = vunpack.c.l.b16 %v296
      %v505 = vunpack.c.h.b16 %v296
      %v506 = vunpack.c.l.b16 %v297
      %v507 = vunpack.c.h.b16 %v297
      %v508 = vunpack.c.l.b16 %v298
      %v509 = vunpack.c.h.b16 %v298
      %v510 = vunpack.c.l.b16 %v299
      %v511 = vunpack.c.h.b16 %v299
      %v512 = vunpack.c.l.b16 %v300
      %v513 = vunpack.c.h.b16 %v300
      %v514 = vunpack.c.l.b16 %v301
      %v515 = vunpack.c.h.b16 %v301
      %v516 = vunpack.c.l.b16 %v302
      %v517 = vunpack.c.h.b16 %v302
      %v518 = vunpack.c.l.b16 %v303
      %v519 = vunpack.c.h.b16 %v303
      %v520 = vunpack.c.l.b16 %v304
      %v521 = vunpack.c.h.b16 %v304
      %v522 = vunpack.c.l.b16 %v305
      %v523 = vunpack.c.h.b16 %v305
      %v524 = vunpack.c.l.b16 %v306
      %v525 = vunpack.c.h.b16 %v306
      %v526 = vunpack.c.l.b16 %v307
      %v527 = vunpack.c.h.b16 %v307
      %v528 = vunpack.c.l.b16 %v308
      %v529 = vunpack.c.h.b16 %v308
      %v530 = vunpack.c.l.b16 %v309
      %v531 = vunpack.c.h.b16 %v309
      %v532 = vunpack.c.l.b16 %v310
      %v533 = vunpack.c.h.b16 %v310
      %v534 = vunpack.c.l.b16 %v311
      %v535 = vunpack.c.h.b16 %v311
      %v536 = vunpack.c.l.b16 %v312
      %v537 = vunpack.c.h.b16 %v312
      %v538 = vunpack.c.l.b16 %v313
      %v539 = vunpack.c.h.b16 %v313
      %v540 = vunpack.c.l.b16 %v314
      %v541 = vunpack.c.h.b16 %v314
      %v542 = vunpack.c.l.b16 %v315
      %v543 = vunpack.c.h.b16 %v315
      %v544 = vunpack.c.l.b16 %v316
      %v545 = vunpack.c.h.b16 %v316
      %v546 = vunpack.c.l.b16 %v317
      %v547 = vunpack.c.h.b16 %v317
      %v548 = vunpack.c.l.b16 %v318
      %v549 = vunpack.c.h.b16 %v318
      %v550 = vunpack.c.l.b16 %v319
      %v551 = vunpack.c.h.b16 %v319
      %v552 = vunpack.c.l.b16 %v320
      %v553 = vunpack.c.h.b16 %v320
      %v554 = vunpack.c.l.b16 %v321
      %v555 = vunpack.c.h.b16 %v321
      %v556 = vpack.c.b16 %v436, %v428
      %v557 = vpack.c.b16 %v437, %v429
      %v558 = vpack.c.b16 %v438, %v430
      %v559 = vpack.c.b16 %v439, %v431
      %v560 = vpack.c.b16 %v440, %v432
      %v561 = vpack.c.b16 %v441, %v433
      %v562 = vpack.c.b16 %v442, %v434
      %v563 = vpack.c.b16 %v443, %v435
      %v564 = vpack.c.b16 %v452, %v444
      %v565 = vpack.c.b16 %v453, %v445
      %v566 = vpack.c.b16 %v454, %v446
      %v567 = vpack.c.b16 %v455, %v447
      %v568 = vpack.c.b16 %v456, %v448
      %v569 = vpack.c.b16 %v457, %v449
      %v570 = vpack.c.b16 %v458, %v450
      %v571 = vpack.c.b16 %v459, %v451
      %v572 = vpack.c.b16 %v468, %v460
      %v573 = vpack.c.b16 %v469, %v461
      %v574 = vpack.c.b16 %v470, %v462
      %v575 = vpack.c.b16 %v471, %v463
      %v576 = vpack.c.b16 %v472, %v464
      %v577 = vpack.c.b16 %v473, %v465
      %v578 = vpack.c.b16 %v474, %v466
      %v579 = vpack.c.b16 %v475, %v467
      %v580 = vpack.c.b16 %v484, %v476
      %v581 = vpack.c.b16 %v485, %v477
      %v582 = vpack.c.b16 %v486, %v478
      %v583 = vpack.c.b16 %v487, %v479
      %v584 = vpack.c.b16 %v488, %v480
      %v585 = vpack.c.b16 %v489, %v481
      %v586 = vpack.c.b16 %v490, %v482
      %v587 = vpack.c.b16 %v491, %v483
      %v588 = vpack.c.b16 %v500, %v492
      %v589 = vpack.c.b16 %v501, %v493
      %v590 = vpack.c.b16 %v502, %v494
      %v591 = vpack.c.b16 %v503, %v495
      %v592 = vpack.c.b16 %v504, %v496
      %v593 = vpack.c.b16 %v505, %v497
      %v594 = vpack.c.b16 %v506, %v498
      %v595 = vpack.c.b16 %v507, %v499
      %v596 = vpack.c.b16 %v516, %v508
      %v597 = vpack.c.b16 %v517, %v509
      %v598 = vpack.c.b16 %v518, %v510
      %v599 = vpack.c.b16 %v519, %v511
      %v600 = vpack.c.b16 %v520, %v512
      %v601 = vpack.c.b16 %v521, %v513
      %v602 = vpack.c.b16 %v522, %v514
      %v603 = vpack.c.b16 %v523, %v515
      %v604 = vpack.c.b16 %v532, %v524
      %v605 = vpack.c.b16 %v533, %v525
      %v606 = vpack.c.b16 %v534, %v526
      %v607 = vpack.c.b16 %v535, %v527
      %v608 = vpack.c.b16 %v536, %v528
      %v609 = vpack.c.b16 %v537, %v529
      %v610 = vpack.c.b16 %v538, %v530
      %v611 = vpack.c.b16 %v539, %v531
      %v612 = vpack.c.b16 %v548, %v540
      %v613 = vpack.c.b16 %v549, %v541
      %v614 = vpack.c.b16 %v550, %v542
      %v615 = vpack.c.b16 %v551, %v543
      %v616 = vpack.c.b16 %v552, %v544
      %v617 = vpack.c.b16 %v553, %v545
      %v618 = vpack.c.b16 %v554, %v546
      %v619 = vpack.c.b16 %v555, %v547
      %684 = vmatprep.subr.bf16.mxu0 %v557
      %685 = vmatpush1.bf16.msra.mxu0 %v556
      %686 = vmatprep.subr.bf16.mxu0 %v565
      %687 = vmatpush1.bf16.msra.mxu0 %v564
      %688 = vmatprep.subr.bf16.mxu0 %v573
      %689 = vmatpush1.bf16.msra.mxu0 %v572
      %690 = vmatprep.subr.bf16.mxu0 %v581
      %691 = vmatpush1.bf16.msra.mxu0 %v580
      %692 = vmatprep.subr.bf16.mxu0 %v589
      %693 = vmatpush1.bf16.msra.mxu0 %v588
      %694 = vmatprep.subr.bf16.mxu0 %v597
      %695 = vmatpush1.bf16.msra.mxu0 %v596
      %696 = vmatprep.subr.bf16.mxu0 %v605
      %697 = vmatpush1.bf16.msra.mxu0 %v604
      %698 = vmatprep.subr.bf16.mxu0 %v613
      %699 = vmatpush1.bf16.msra.mxu0 %v612
      %700 = vmatprep.subr.bf16.mxu0 0
      %701 = vmatpush1.bf16.msra.mxu0 0
      %702 = vmatprep.subr.bf16.mxu0 0
      %703 = vmatpush1.bf16.msra.mxu0 0
      %704 = vmatprep.subr.bf16.mxu0 0
      %705 = vmatpush1.bf16.msra.mxu0 0
      %706 = vmatprep.subr.bf16.mxu0 0
      %707 = vmatpush1.bf16.msra.mxu0 0
      %708 = vmatprep.subr.bf16.mxu0 0
      %709 = vmatpush1.bf16.msra.mxu0 0
      %710 = vmatprep.subr.bf16.mxu0 0
      %711 = vmatpush1.bf16.msra.mxu0 0
      %712 = vmatprep.subr.bf16.mxu0 0
      %713 = vmatpush1.bf16.msra.mxu0 0
      %714 = vmatprep.subr.bf16.mxu0 0
      %715 = vmatpush1.bf16.msra.mxu0 0
      %716 = vmatprep.mubr.bf16.mxu0 0
      %717 = vmatmul.mubr.bf16.gmra.mrb[0].mxu0 %v256
      %v718 = vpop.f32.mrb[0].mxu0
      %v719 = vadd.f32 %v327, %v718
      %v720 = vpop.f32.mrb[0].mxu0
      %v721 = vadd.f32 %v331, %v720
      %v722 = vpop.f32.mrb[0].mxu0
      %v723 = vadd.f32 %v327, %v722
      %v724 = vpop.f32.mrb[0].mxu0
      %v725 = vadd.f32 %v331, %v724
      %726 = vmatprep.mubr.bf16.mxu0 0
      %727 = vmatmul.mubr.bf16.gmra.mrb[0].mxu0 %v257
      %v728 = vpop.f32.mrb[0].mxu0
      %v729 = vadd.f32 %v327, %v728
      %v730 = vpop.f32.mrb[0].mxu0
      %v731 = vadd.f32 %v331, %v730
      %v732 = vpop.f32.mrb[0].mxu0
      %v733 = vadd.f32 %v327, %v732
      %v734 = vpop.f32.mrb[0].mxu0
      %v735 = vadd.f32 %v331, %v734
      %736 = vdwg.mxu0
      %737 = vmatprep.subr.bf16.mxu0 %v559
      %738 = vmatpush1.bf16.msra.mxu0 %v558
      %739 = vmatprep.subr.bf16.mxu0 %v567
      %740 = vmatpush1.bf16.msra.mxu0 %v566
      %741 = vmatprep.subr.bf16.mxu0 %v575
      %742 = vmatpush1.bf16.msra.mxu0 %v574
      %743 = vmatprep.subr.bf16.mxu0 %v583
      %744 = vmatpush1.bf16.msra.mxu0 %v582
      %745 = vmatprep.subr.bf16.mxu0 %v591
      %746 = vmatpush1.bf16.msra.mxu0 %v590
      %747 = vmatprep.subr.bf16.mxu0 %v599
      %748 = vmatpush1.bf16.msra.mxu0 %v598
      %749 = vmatprep.subr.bf16.mxu0 %v607
      %750 = vmatpush1.bf16.msra.mxu0 %v606
      %751 = vmatprep.subr.bf16.mxu0 %v615
      %752 = vmatpush1.bf16.msra.mxu0 %v614
      %753 = vmatprep.subr.bf16.mxu0 0
      %754 = vmatpush1.bf16.msra.mxu0 0
      %755 = vmatprep.subr.bf16.mxu0 0
      %756 = vmatpush1.bf16.msra.mxu0 0
      %757 = vmatprep.subr.bf16.mxu0 0
      %758 = vmatpush1.bf16.msra.mxu0 0
      %759 = vmatprep.subr.bf16.mxu0 0
      %760 = vmatpush1.bf16.msra.mxu0 0
      %761 = vmatprep.subr.bf16.mxu0 0
      %762 = vmatpush1.bf16.msra.mxu0 0
      %763 = vmatprep.subr.bf16.mxu0 0
      %764 = vmatpush1.bf16.msra.mxu0 0
      %765 = vmatprep.subr.bf16.mxu0 0
      %766 = vmatpush1.bf16.msra.mxu0 0
      %767 = vmatprep.subr.bf16.mxu0 0
      %768 = vmatpush1.bf16.msra.mxu0 0
      %769 = vmatprep.mubr.bf16.mxu0 0
      %770 = vmatmul.mubr.bf16.gmra.mrb[0].mxu0 %v256
      %v771 = vpop.f32.mrb[0].mxu0
      %v772 = vadd.f32 %v335, %v771
      %v773 = vpop.f32.mrb[0].mxu0
      %v774 = vadd.f32 %v339, %v773
      %v775 = vpop.f32.mrb[0].mxu0
      %v776 = vadd.f32 %v335, %v775
      %v777 = vpop.f32.mrb[0].mxu0
      %v778 = vadd.f32 %v339, %v777
      %779 = vmatprep.mubr.bf16.mxu0 0
      %780 = vmatmul.mubr.bf16.gmra.mrb[0].mxu0 %v257
      %v781 = vpop.f32.mrb[0].mxu0
      %v782 = vadd.f32 %v335, %v781
      %v783 = vpop.f32.mrb[0].mxu0
      %v784 = vadd.f32 %v339, %v783
      %v785 = vpop.f32.mrb[0].mxu0
      %v786 = vadd.f32 %v335, %v785
      %v787 = vpop.f32.mrb[0].mxu0
      %v788 = vadd.f32 %v339, %v787
      %789 = vdwg.mxu0
      %790 = vmatprep.subr.bf16.mxu0 %v561
      %791 = vmatpush1.bf16.msra.mxu0 %v560
      %792 = vmatprep.subr.bf16.mxu0 %v569
      %793 = vmatpush1.bf16.msra.mxu0 %v568
      %794 = vmatprep.subr.bf16.mxu0 %v577
      %795 = vmatpush1.bf16.msra.mxu0 %v576
      %796 = vmatprep.subr.bf16.mxu0 %v585
      %797 = vmatpush1.bf16.msra.mxu0 %v584
      %798 = vmatprep.subr.bf16.mxu0 %v593
      %799 = vmatpush1.bf16.msra.mxu0 %v592
      %800 = vmatprep.subr.bf16.mxu0 %v601
      %801 = vmatpush1.bf16.msra.mxu0 %v600
      %802 = vmatprep.subr.bf16.mxu0 %v609
      %803 = vmatpush1.bf16.msra.mxu0 %v608
      %804 = vmatprep.subr.bf16.mxu0 %v617
      %805 = vmatpush1.bf16.msra.mxu0 %v616
      %806 = vmatprep.subr.bf16.mxu0 0
      %807 = vmatpush1.bf16.msra.mxu0 0
      %808 = vmatprep.subr.bf16.mxu0 0
      %809 = vmatpush1.bf16.msra.mxu0 0
      %810 = vmatprep.subr.bf16.mxu0 0
      %811 = vmatpush1.bf16.msra.mxu0 0
      %812 = vmatprep.subr.bf16.mxu0 0
      %813 = vmatpush1.bf16.msra.mxu0 0
      %814 = vmatprep.subr.bf16.mxu0 0
      %815 = vmatpush1.bf16.msra.mxu0 0
      %816 = vmatprep.subr.bf16.mxu0 0
      %817 = vmatpush1.bf16.msra.mxu0 0
      %818 = vmatprep.subr.bf16.mxu0 0
      %819 = vmatpush1.bf16.msra.mxu0 0
      %820 = vmatprep.subr.bf16.mxu0 0
      %821 = vmatpush1.bf16.msra.mxu0 0
      %822 = vmatprep.mubr.bf16.mxu0 0
      %823 = vmatmul.mubr.bf16.gmra.mrb[0].mxu0 %v256
      %v824 = vpop.f32.mrb[0].mxu0
      %v825 = vadd.f32 %v343, %v824
      %v826 = vpop.f32.mrb[0].mxu0
      %v827 = vadd.f32 %v347, %v826
      %v828 = vpop.f32.mrb[0].mxu0
      %v829 = vadd.f32 %v343, %v828
      %v830 = vpop.f32.mrb[0].mxu0
      %v831 = vadd.f32 %v347, %v830
      %832 = vmatprep.mubr.bf16.mxu0 0
      %833 = vmatmul.mubr.bf16.gmra.mrb[0].mxu0 %v257
      %v834 = vpop.f32.mrb[0].mxu0
      %v835 = vadd.f32 %v343, %v834
      %v836 = vpop.f32.mrb[0].mxu0
      %v837 = vadd.f32 %v347, %v836
      %v838 = vpop.f32.mrb[0].mxu0
      %v839 = vadd.f32 %v343, %v838
      %v840 = vpop.f32.mrb[0].mxu0
      %v841 = vadd.f32 %v347, %v840
      %842 = vdwg.mxu0
      %843 = vmatprep.subr.bf16.mxu0 %v563
      %844 = vmatpush1.bf16.msra.mxu0 %v562
      %845 = vmatprep.subr.bf16.mxu0 %v571
      %846 = vmatpush1.bf16.msra.mxu0 %v570
      %847 = vmatprep.subr.bf16.mxu0 %v579
      %848 = vmatpush1.bf16.msra.mxu0 %v578
      %849 = vmatprep.subr.bf16.mxu0 %v587
      %850 = vmatpush1.bf16.msra.mxu0 %v586
      %851 = vmatprep.subr.bf16.mxu0 %v595
      %852 = vmatpush1.bf16.msra.mxu0 %v594
      %853 = vmatprep.subr.bf16.mxu0 %v603
      %854 = vmatpush1.bf16.msra.mxu0 %v602
      %855 = vmatprep.subr.bf16.mxu0 %v611
      %856 = vmatpush1.bf16.msra.mxu0 %v610
      %857 = vmatprep.subr.bf16.mxu0 %v619
      %858 = vmatpush1.bf16.msra.mxu0 %v618
      %859 = vmatprep.subr.bf16.mxu0 0
      %860 = vmatpush1.bf16.msra.mxu0 0
      %861 = vmatprep.subr.bf16.mxu0 0
      %862 = vmatpush1.bf16.msra.mxu0 0
      %863 = vmatprep.subr.bf16.mxu0 0
      %864 = vmatpush1.bf16.msra.mxu0 0
      %865 = vmatprep.subr.bf16.mxu0 0
      %866 = vmatpush1.bf16.msra.mxu0 0
      %867 = vmatprep.subr.bf16.mxu0 0
      %868 = vmatpush1.bf16.msra.mxu0 0
      %869 = vmatprep.subr.bf16.mxu0 0
      %870 = vmatpush1.bf16.msra.mxu0 0
      %871 = vmatprep.subr.bf16.mxu0 0
      %872 = vmatpush1.bf16.msra.mxu0 0
      %873 = vmatprep.subr.bf16.mxu0 0
      %874 = vmatpush1.bf16.msra.mxu0 0
      %875 = vmatprep.mubr.bf16.mxu0 0
      %876 = vmatmul.mubr.bf16.gmra.mrb[0].mxu0 %v256
      %v877 = vpop.f32.mrb[0].mxu0
      %v878 = vadd.f32 %v351, %v877
      %v879 = vpop.f32.mrb[0].mxu0
      %v880 = vadd.f32 %v355, %v879
      %v881 = vpop.f32.mrb[0].mxu0
      %v882 = vadd.f32 %v351, %v881
      %v883 = vpop.f32.mrb[0].mxu0
      %v884 = vadd.f32 %v355, %v883
      %885 = vmatprep.mubr.bf16.mxu0 0
      %886 = vmatmul.mubr.bf16.gmra.mrb[0].mxu0 %v257
      %v887 = vpop.f32.mrb[0].mxu0
      %v888 = vadd.f32 %v351, %v887
      %v889 = vpop.f32.mrb[0].mxu0
      %v890 = vadd.f32 %v355, %v889
      %v891 = vpop.f32.mrb[0].mxu0
      %v892 = vadd.f32 %v351, %v891
      %v893 = vpop.f32.mrb[0].mxu0
      %v894 = vadd.f32 %v355, %v893
      %895 = vdwg.mxu0
      %v896 = vmax.f32 %v719, 0.0
      %v897 = vmax.f32 %v721, 0.0
      %v898 = vmax.f32 %v772, 0.0
      %v899 = vmax.f32 %v774, 0.0
      %v900 = vmax.f32 %v825, 0.0
      %v901 = vmax.f32 %v827, 0.0
      %v902 = vmax.f32 %v878, 0.0
      %v903 = vmax.f32 %v880, 0.0
      %v904 = vmax.f32 %v723, 0.0
      %v905 = vmax.f32 %v725, 0.0
      %v906 = vmax.f32 %v776, 0.0
      %v907 = vmax.f32 %v778, 0.0
      %v908 = vmax.f32 %v829, 0.0
      %v909 = vmax.f32 %v831, 0.0
      %v910 = vmax.f32 %v882, 0.0
      %v911 = vmax.f32 %v884, 0.0
      %v912 = vmax.f32 %v729, 0.0
      %v913 = vmax.f32 %v731, 0.0
      %v914 = vmax.f32 %v782, 0.0
      %v915 = vmax.f32 %v784, 0.0
      %v916 = vmax.f32 %v835, 0.0
      %v917 = vmax.f32 %v837, 0.0
      %v918 = vmax.f32 %v888, 0.0
      %v919 = vmax.f32 %v890, 0.0
      %v920 = vmax.f32 %v733, 0.0
      %v921 = vmax.f32 %v735, 0.0
      %v922 = vmax.f32 %v786, 0.0
      %v923 = vmax.f32 %v788, 0.0
      %v924 = vmax.f32 %v839, 0.0
      %v925 = vmax.f32 %v841, 0.0
      %v926 = vmax.f32 %v892, 0.0
      %v927 = vmax.f32 %v894, 0.0
      %v928 = vmax.f32 %v896, %v904
      %v929 = vmax.f32 %v928, %v912
      %v930 = vmax.f32 %v929, %v920
      %v931 = vrot.slane %v930, 4
      %v932 = vmax.f32 %v930, %v931
      %v933 = vrot.slane %v932, 2
      %v934 = vmax.f32 %v932, %v933
      %v935 = vrot.slane %v934, 1
      %v936 = vmax.f32 %v934, %v935
      %v937 = vmax.f32 %v897, %v905
      %v938 = vmax.f32 %v937, %v913
      %v939 = vmax.f32 %v938, %v921
      %v940 = vrot.slane %v939, 4
      %v941 = vmax.f32 %v939, %v940
      %v942 = vrot.slane %v941, 2
      %v943 = vmax.f32 %v941, %v942
      %v944 = vrot.slane %v943, 1
      %v945 = vmax.f32 %v943, %v944
      %v946 = vmax.f32 %v898, %v906
      %v947 = vmax.f32 %v946, %v914
      %v948 = vmax.f32 %v947, %v922
      %v949 = vrot.slane %v948, 4
      %v950 = vmax.f32 %v948, %v949
      %v951 = vrot.slane %v950, 2
      %v952 = vmax.f32 %v950, %v951
      %v953 = vrot.slane %v952, 1
      %v954 = vmax.f32 %v952, %v953
      %v955 = vmax.f32 %v899, %v907
      %v956 = vmax.f32 %v955, %v915
      %v957 = vmax.f32 %v956, %v923
      %v958 = vrot.slane %v957, 4
      %v959 = vmax.f32 %v957, %v958
      %v960 = vrot.slane %v959, 2
      %v961 = vmax.f32 %v959, %v960
      %v962 = vrot.slane %v961, 1
      %v963 = vmax.f32 %v961, %v962
      %v964 = vmax.f32 %v900, %v908
      %v965 = vmax.f32 %v964, %v916
      %v966 = vmax.f32 %v965, %v924
      %v967 = vrot.slane %v966, 4
      %v968 = vmax.f32 %v966, %v967
      %v969 = vrot.slane %v968, 2
      %v970 = vmax.f32 %v968, %v969
      %v971 = vrot.slane %v970, 1
      %v972 = vmax.f32 %v970, %v971
      %v973 = vmax.f32 %v901, %v909
      %v974 = vmax.f32 %v973, %v917
      %v975 = vmax.f32 %v974, %v925
      %v976 = vrot.slane %v975, 4
      %v977 = vmax.f32 %v975, %v976
      %v978 = vrot.slane %v977, 2
      %v979 = vmax.f32 %v977, %v978
      %v980 = vrot.slane %v979, 1
      %v981 = vmax.f32 %v979, %v980
      %v982 = vmax.f32 %v902, %v910
      %v983 = vmax.f32 %v982, %v918
      %v984 = vmax.f32 %v983, %v926
      %v985 = vrot.slane %v984, 4
      %v986 = vmax.f32 %v984, %v985
      %v987 = vrot.slane %v986, 2
      %v988 = vmax.f32 %v986, %v987
      %v989 = vrot.slane %v988, 1
      %v990 = vmax.f32 %v988, %v989
      %v991 = vmax.f32 %v903, %v911
      %v992 = vmax.f32 %v991, %v919
      %v993 = vmax.f32 %v992, %v927
      %v994 = vrot.slane %v993, 4
      %v995 = vmax.f32 %v993, %v994
      %v996 = vrot.slane %v995, 2
      %v997 = vmax.f32 %v995, %v996
      %v998 = vrot.slane %v997, 1
      %v999 = vmax.f32 %v997, %v998
      %p1000 = scmp.eq.s32.totalorder %s21, 0
      // Predicated region
      $region41: #{forward.13} parent=39 // pred_check
        %p1001 = pneg %p1000
      $region42: #{forward.13} parent=39 // pred_check_branch
        %1003 = sbr.rel (%p1001) target = $region44
      $region43: #{forward.13} parent=39 // pred_region
        %v1012 = vcombine.low %v936, %v945
        %v1013 = vcombine.low %v954, %v963
        %v1014 = vcombine.low %v972, %v981
        %v1015 = vcombine.low %v990, %v999
        %v1017 = vunpack.c.l.s4 1966171168
        %v1018 = vunpack.c.0.s8 %v1017
        %v1019 = vlaneseq
        %v1020 = vshrl.u32 %v1019, 7
        %v1021 = vsub.s32 %v1018, %v1020
        %v1022 = vrot.slane %v1012, %v1021
        %v1024 = vunpack.c.l.s4 1966171168
        %v1025 = vunpack.c.0.s8 %v1024
        %v1026 = vlaneseq
        %v1027 = vshrl.u32 %v1026, 7
        %v1028 = vsub.s32 %v1025, %v1027
        %v1029 = vrot.slane %v1013, %v1028
        %v1031 = vunpack.c.l.s4 1966171168
        %v1032 = vunpack.c.0.s8 %v1031
        %v1033 = vlaneseq
        %v1034 = vshrl.u32 %v1033, 7
        %v1035 = vsub.s32 %v1032, %v1034
        %v1036 = vrot.slane %v1014, %v1035
        %v1038 = vunpack.c.l.s4 1966171168
        %v1039 = vunpack.c.0.s8 %v1038
        %v1040 = vlaneseq
        %v1041 = vshrl.u32 %v1040, 7
        %v1042 = vsub.s32 %v1039, %v1041
        %v1043 = vrot.slane %v1015, %v1042
        %v1044 = vcombine.low %v1022, %v1029
        %v1045 = vcombine.low %v1036, %v1043
        %v1047 = vunpack.c.l.s4 1966171168
        %v1048 = vunpack.c.0.s8 %v1047
        %v1049 = vlaneseq
        %v1050 = vshrl.u32 %v1049, 7
        %v1051 = vsub.s32 %v1048, %v1050
        %v1052 = vrot.slane %v1044, %v1051
        %v1054 = vunpack.c.l.s4 1966171168
        %v1055 = vunpack.c.0.s8 %v1054
        %v1056 = vlaneseq
        %v1057 = vshrl.u32 %v1056, 7
        %v1058 = vsub.s32 %v1055, %v1057
        %v1059 = vrot.slane %v1045, %v1058
        %v1060 = vcombine.low %v1052, %v1059
        %1062 = vst [vmem:[%s250] sm:$0xff] %v1060
      $region44: #{forward.13} parent=39 // pred_fallthru
        _
      %p1063 = scmp.ne.s32.totalorder %s21, 0
      // Predicated region
      $region45: #{forward.13} parent=39 // pred_check
        %p1064 = pneg %p1063
      $region46: #{forward.13} parent=39 // pred_check_branch
        %1066 = sbr.rel (%p1064) target = $region48
      $region47: #{forward.13} parent=39 // pred_region
        %v1067 = vld [vmem:[%s250] sm:$0xff]
        %v1076 = vcombine.low %v936, %v945
        %v1077 = vcombine.low %v954, %v963
        %v1078 = vcombine.low %v972, %v981
        %v1079 = vcombine.low %v990, %v999
        %v1081 = vunpack.c.l.s4 1966171168
        %v1082 = vunpack.c.0.s8 %v1081
        %v1083 = vlaneseq
        %v1084 = vshrl.u32 %v1083, 7
        %v1085 = vsub.s32 %v1082, %v1084
        %v1086 = vrot.slane %v1076, %v1085
        %v1088 = vunpack.c.l.s4 1966171168
        %v1089 = vunpack.c.0.s8 %v1088
        %v1090 = vlaneseq
        %v1091 = vshrl.u32 %v1090, 7
        %v1092 = vsub.s32 %v1089, %v1091
        %v1093 = vrot.slane %v1077, %v1092
        %v1095 = vunpack.c.l.s4 1966171168
        %v1096 = vunpack.c.0.s8 %v1095
        %v1097 = vlaneseq
        %v1098 = vshrl.u32 %v1097, 7
        %v1099 = vsub.s32 %v1096, %v1098
        %v1100 = vrot.slane %v1078, %v1099
        %v1102 = vunpack.c.l.s4 1966171168
        %v1103 = vunpack.c.0.s8 %v1102
        %v1104 = vlaneseq
        %v1105 = vshrl.u32 %v1104, 7
        %v1106 = vsub.s32 %v1103, %v1105
        %v1107 = vrot.slane %v1079, %v1106
        %v1108 = vcombine.low %v1086, %v1093
        %v1109 = vcombine.low %v1100, %v1107
        %v1111 = vunpack.c.l.s4 1966171168
        %v1112 = vunpack.c.0.s8 %v1111
        %v1113 = vlaneseq
        %v1114 = vshrl.u32 %v1113, 7
        %v1115 = vsub.s32 %v1112, %v1114
        %v1116 = vrot.slane %v1108, %v1115
        %v1118 = vunpack.c.l.s4 1966171168
        %v1119 = vunpack.c.0.s8 %v1118
        %v1120 = vlaneseq
        %v1121 = vshrl.u32 %v1120, 7
        %v1122 = vsub.s32 %v1119, %v1121
        %v1123 = vrot.slane %v1109, %v1122
        %v1124 = vcombine.low %v1116, %v1123
        %v1126 = vmax.f32 %v1067, %v1124
        %1127 = vst [vmem:[%s250] sm:$0xff] %v1126
      $region48: #{forward.13} parent=39 // pred_fallthru
        _
      %p1128 = scmp.lt.s32.totalorder %s20, 1
      %s1129 = scalar_select %p1128, %s20, 1
      %s1130 = smul.addr %s1129, 8
      %s1131 = scalar_lea.vmem %s5, %s1130
      // Predicated region
      $region49: #{forward.13} parent=39 // pred_check
        %p1132 = pneg %p158
      $region50: #{forward.13} parent=39 // pred_check_branch
        %1134 = sbr.rel (%p1132) target = $region52
      $region51: #{forward.13} parent=39 // pred_region
        _
      $region52: #{forward.13} parent=39 // pred_fallthru
        _
    $region40: #{forward.13} parent=5 // pred_fallthru
      _
    %p1135 = scmp.le.s32.totalorder 2, %s11
    // Predicated region
    $region53: #{forward.13} parent=5 // pred_check
      %p1136 = pneg %p1135
    $region54: #{forward.13} parent=5 // pred_check_branch
      %1138 = sbr.rel (%p1136) target = $region56
    $region55: #{forward.13} parent=5 // pred_region
      %s1139 = ssub.s32 %s11, 2
      // Predicated region
      $region57: #{forward.13} parent=55 // pred_check
        %p1140 = pneg %p164
      $region58: #{forward.13} parent=55 // pred_check_branch
        %1142 = sbr.rel (%p1140) target = $region60
      $region59: #{forward.13} parent=55 // pred_region
        %p1143 = scmp.lt.s32.totalorder %s22, 1
        %s1144 = scalar_select %p1143, %s22, 1
        %s1145 = smul.addr %s1144, 8
        %s1146 = scalar_lea.vmem %s5, %s1145
      $region60: #{forward.13} parent=55 // pred_fallthru
        _
    $region56: #{forward.13} parent=5 // pred_fallthru
      _
  $region6: #{forward.13} parent=0 // loop_footer
    %s15 = sadd.s32 1, %s11
  $region7: #{forward.13} parent=0 // loop_footer_branch
    %10 = sbr.rel target = $region3
  $region8: #{forward.13} parent=0 // loop_exit
    _

// kernel: forward.15
$region0: #{forward.15}
  #allocation0 [shape = 'u32[]', space=smem, size = 0x4, offset = 0x4, fixed_abs, tag = 'smem constant byte address 0x4 - core index']
  #allocation1 [shape = 'u32[144,128]{1,0:T(1,128)}', space=vmem, size = 0x12000, scoped, tag = 'internal scratch']
  %s0 = inlined_call_operand.vmem [shape: f32[2,512], index: 0, kind: input, shape index: {}]
  %s1 = inlined_call_operand.vmem [shape: bf16[512,256], index: 1, kind: input, shape index: {}]
  %s2 = inlined_call_operand.vmem [shape: f32[1,256], index: 2, kind: input, shape index: {}]
  %s3 = inlined_call_operand.vmem [shape: f32[1,512], index: 3, kind: input, shape index: {}]
  %s4 = inlined_call_operand.vmem [shape: f32[1,512], index: 4, kind: input, shape index: {}]
  %s5 = inlined_call_operand.vmem [shape: f32[2,256], index: 5, kind: output, shape index: {}]
  %s6 = sld [smem:[#allocation0]]
  $region30: #{forward.15} parent=0
    _
  %s8 = ssub.s32 1, %s6
  %s9 = scalar_select 0, %s8, %s6
  // Predicated region
  $region2: #{forward.15} parent=0 // pred_check
    _
  $region3: #{forward.15} parent=0 // pred_check_branch
    %11 = sbr.rel (0) target = $region5
  $region4: #{forward.15} parent=0 // pred_region
    _
  $region5: #{forward.15} parent=0 // pred_fallthru
    _
  // Predicated region
  $region6: #{forward.15} parent=0 // pred_check
    _
  $region7: #{forward.15} parent=0 // pred_check_branch
    %13 = sbr.rel (0) target = $region9
  $region8: #{forward.15} parent=0 // pred_region
    _
  $region9: #{forward.15} parent=0 // pred_fallthru
    _
  // Predicated region
  $region10: #{forward.15} parent=0 // pred_check
    _
  $region11: #{forward.15} parent=0 // pred_check_branch
    %15 = sbr.rel (0) target = $region13
  $region12: #{forward.15} parent=0 // pred_region
    _
  $region13: #{forward.15} parent=0 // pred_fallthru
    _
  // Predicated region
  $region14: #{forward.15} parent=0 // pred_check
    _
  $region15: #{forward.15} parent=0 // pred_check_branch
    %17 = sbr.rel (0) target = $region17
  $region16: #{forward.15} parent=0 // pred_region
    _
  $region17: #{forward.15} parent=0 // pred_fallthru
    _
  // Predicated region
  $region18: #{forward.15} parent=0 // pred_check
    _
  $region19: #{forward.15} parent=0 // pred_check_branch
    %19 = sbr.rel (0) target = $region21
  $region20: #{forward.15} parent=0 // pred_region
    _
  $region21: #{forward.15} parent=0 // pred_fallthru
    _
  %v20 = vld [vmem:[%s0] sm:$0xff]
  %v22 = vcombine.high %v20, %v20
  %v24 = vunpack.c.l.s4 1983009808
  %v25 = vunpack.c.0.s8 %v24
  %v26 = vlaneseq
  %v27 = vshrl.u32 %v26, 7
  %v28 = vsub.s32 %v25, %v27
  %v29 = vrot.slane %v20, %v28
  %v31 = vunpack.c.l.s4 1983009808
  %v32 = vunpack.c.0.s8 %v31
  %v33 = vlaneseq
  %v34 = vshrl.u32 %v33, 7
  %v35 = vsub.s32 %v32, %v34
  %v36 = vrot.slane %v22, %v35
  %v37 = vcombine.high %v29, %v29
  %v38 = vcombine.high %v36, %v36
  %v43 = vpack.c.bf16 %v29, %v29
  %v44 = vpack.c.bf16 %v37, %v37
  %v45 = vpack.c.bf16 %v36, %v36
  %v46 = vpack.c.bf16 %v38, %v38
  %v47 = vld [vmem:[%s1] sm:$0xff]
  %v48 = vld [vmem:[%s1 + $0x8] sm:$0xff]
  %v49 = vld [vmem:[%s1 + $0x10] sm:$0xff]
  %v50 = vld [vmem:[%s1 + $0x18] sm:$0xff]
  %v51 = vld [vmem:[%s1 + $0x20] sm:$0xff]
  %v52 = vld [vmem:[%s1 + $0x28] sm:$0xff]
  %v53 = vld [vmem:[%s1 + $0x30] sm:$0xff]
  %v54 = vld [vmem:[%s1 + $0x38] sm:$0xff]
  %v55 = vld [vmem:[%s1 + $0x40] sm:$0xff]
  %v56 = vld [vmem:[%s1 + $0x48] sm:$0xff]
  %v57 = vld [vmem:[%s1 + $0x50] sm:$0xff]
  %v58 = vld [vmem:[%s1 + $0x58] sm:$0xff]
  %v59 = vld [vmem:[%s1 + $0x60] sm:$0xff]
  %v60 = vld [vmem:[%s1 + $0x68] sm:$0xff]
  %v61 = vld [vmem:[%s1 + $0x70] sm:$0xff]
  %v62 = vld [vmem:[%s1 + $0x78] sm:$0xff]
  %v63 = vld [vmem:[%s1 + $0x80] sm:$0xff]
  %v64 = vld [vmem:[%s1 + $0x88] sm:$0xff]
  %v65 = vld [vmem:[%s1 + $0x90] sm:$0xff]
  %v66 = vld [vmem:[%s1 + $0x98] sm:$0xff]
  %v67 = vld [vmem:[%s1 + $0xa0] sm:$0xff]
  %v68 = vld [vmem:[%s1 + $0xa8] sm:$0xff]
  %v69 = vld [vmem:[%s1 + $0xb0] sm:$0xff]
  %v70 = vld [vmem:[%s1 + $0xb8] sm:$0xff]
  %v71 = vld [vmem:[%s1 + $0xc0] sm:$0xff]
  %v72 = vld [vmem:[%s1 + $0xc8] sm:$0xff]
  %v73 = vld [vmem:[%s1 + $0xd0] sm:$0xff]
  %v74 = vld [vmem:[%s1 + $0xd8] sm:$0xff]
  %v75 = vld [vmem:[%s1 + $0xe0] sm:$0xff]
  %v76 = vld [vmem:[%s1 + $0xe8] sm:$0xff]
  %v77 = vld [vmem:[%s1 + $0xf0] sm:$0xff]
  %v78 = vld [vmem:[%s1 + $0xf8] sm:$0xff]
  %v79 = vld [vmem:[%s1 + $0x100] sm:$0xff]
  %v80 = vld [vmem:[%s1 + $0x108] sm:$0xff]
  %v81 = vld [vmem:[%s1 + $0x110] sm:$0xff]
  %v82 = vld [vmem:[%s1 + $0x118] sm:$0xff]
  %v83 = vld [vmem:[%s1 + $0x120] sm:$0xff]
  %v84 = vld [vmem:[%s1 + $0x128] sm:$0xff]
  %v85 = vld [vmem:[%s1 + $0x130] sm:$0xff]
  %v86 = vld [vmem:[%s1 + $0x138] sm:$0xff]
  %v87 = vld [vmem:[%s1 + $0x140] sm:$0xff]
  %v88 = vld [vmem:[%s1 + $0x148] sm:$0xff]
  %v89 = vld [vmem:[%s1 + $0x150] sm:$0xff]
  %v90 = vld [vmem:[%s1 + $0x158] sm:$0xff]
  %v91 = vld [vmem:[%s1 + $0x160] sm:$0xff]
  %v92 = vld [vmem:[%s1 + $0x168] sm:$0xff]
  %v93 = vld [vmem:[%s1 + $0x170] sm:$0xff]
  %v94 = vld [vmem:[%s1 + $0x178] sm:$0xff]
  %v95 = vld [vmem:[%s1 + $0x180] sm:$0xff]
  %v96 = vld [vmem:[%s1 + $0x188] sm:$0xff]
  %v97 = vld [vmem:[%s1 + $0x190] sm:$0xff]
  %v98 = vld [vmem:[%s1 + $0x198] sm:$0xff]
  %v99 = vld [vmem:[%s1 + $0x1a0] sm:$0xff]
  %v100 = vld [vmem:[%s1 + $0x1a8] sm:$0xff]
  %v101 = vld [vmem:[%s1 + $0x1b0] sm:$0xff]
  %v102 = vld [vmem:[%s1 + $0x1b8] sm:$0xff]
  %v103 = vld [vmem:[%s1 + $0x1c0] sm:$0xff]
  %v104 = vld [vmem:[%s1 + $0x1c8] sm:$0xff]
  %v105 = vld [vmem:[%s1 + $0x1d0] sm:$0xff]
  %v106 = vld [vmem:[%s1 + $0x1d8] sm:$0xff]
  %v107 = vld [vmem:[%s1 + $0x1e0] sm:$0xff]
  %v108 = vld [vmem:[%s1 + $0x1e8] sm:$0xff]
  %v109 = vld [vmem:[%s1 + $0x1f0] sm:$0xff]
  %v110 = vld [vmem:[%s1 + $0x1f8] sm:$0xff]
  %v111 = vld [vmem:[%s2] sm:$0x3]
  %v113 = vlaneseq
  %v114 = vshrl.u32 %v113, 7
  %v115 = vsub.s32 0, %v114
  %v116 = vrot.slane %v111, %v115
  %v117 = vlaneseq
  %v118 = vshrl.u32 %v117, 7
  %v119 = vsub.s32 1, %v118
  %v120 = vrot.slane %v111, %v119
  %v187 = vunpack.c.l.b16 %v47
  %v188 = vunpack.c.h.b16 %v47
  %v189 = vunpack.c.l.b16 %v48
  %v190 = vunpack.c.h.b16 %v48
  %v191 = vunpack.c.l.b16 %v49
  %v192 = vunpack.c.h.b16 %v49
  %v193 = vunpack.c.l.b16 %v50
  %v194 = vunpack.c.h.b16 %v50
  %v195 = vunpack.c.l.b16 %v51
  %v196 = vunpack.c.h.b16 %v51
  %v197 = vunpack.c.l.b16 %v52
  %v198 = vunpack.c.h.b16 %v52
  %v199 = vunpack.c.l.b16 %v53
  %v200 = vunpack.c.h.b16 %v53
  %v201 = vunpack.c.l.b16 %v54
  %v202 = vunpack.c.h.b16 %v54
  %v203 = vunpack.c.l.b16 %v55
  %v204 = vunpack.c.h.b16 %v55
  %v205 = vunpack.c.l.b16 %v56
  %v206 = vunpack.c.h.b16 %v56
  %v207 = vunpack.c.l.b16 %v57
  %v208 = vunpack.c.h.b16 %v57
  %v209 = vunpack.c.l.b16 %v58
  %v210 = vunpack.c.h.b16 %v58
  %v211 = vunpack.c.l.b16 %v59
  %v212 = vunpack.c.h.b16 %v59
  %v213 = vunpack.c.l.b16 %v60
  %v214 = vunpack.c.h.b16 %v60
  %v215 = vunpack.c.l.b16 %v61
  %v216 = vunpack.c.h.b16 %v61
  %v217 = vunpack.c.l.b16 %v62
  %v218 = vunpack.c.h.b16 %v62
  %v219 = vunpack.c.l.b16 %v63
  %v220 = vunpack.c.h.b16 %v63
  %v221 = vunpack.c.l.b16 %v64
  %v222 = vunpack.c.h.b16 %v64
  %v223 = vunpack.c.l.b16 %v65
  %v224 = vunpack.c.h.b16 %v65
  %v225 = vunpack.c.l.b16 %v66
  %v226 = vunpack.c.h.b16 %v66
  %v227 = vunpack.c.l.b16 %v67
  %v228 = vunpack.c.h.b16 %v67
  %v229 = vunpack.c.l.b16 %v68
  %v230 = vunpack.c.h.b16 %v68
  %v231 = vunpack.c.l.b16 %v69
  %v232 = vunpack.c.h.b16 %v69
  %v233 = vunpack.c.l.b16 %v70
  %v234 = vunpack.c.h.b16 %v70
  %v235 = vunpack.c.l.b16 %v71
  %v236 = vunpack.c.h.b16 %v71
  %v237 = vunpack.c.l.b16 %v72
  %v238 = vunpack.c.h.b16 %v72
  %v239 = vunpack.c.l.b16 %v73
  %v240 = vunpack.c.h.b16 %v73
  %v241 = vunpack.c.l.b16 %v74
  %v242 = vunpack.c.h.b16 %v74
  %v243 = vunpack.c.l.b16 %v75
  %v244 = vunpack.c.h.b16 %v75
  %v245 = vunpack.c.l.b16 %v76
  %v246 = vunpack.c.h.b16 %v76
  %v247 = vunpack.c.l.b16 %v77
  %v248 = vunpack.c.h.b16 %v77
  %v249 = vunpack.c.l.b16 %v78
  %v250 = vunpack.c.h.b16 %v78
  %v251 = vunpack.c.l.b16 %v79
  %v252 = vunpack.c.h.b16 %v79
  %v253 = vunpack.c.l.b16 %v80
  %v254 = vunpack.c.h.b16 %v80
  %v255 = vunpack.c.l.b16 %v81
  %v256 = vunpack.c.h.b16 %v81
  %v257 = vunpack.c.l.b16 %v82
  %v258 = vunpack.c.h.b16 %v82
  %v259 = vunpack.c.l.b16 %v83
  %v260 = vunpack.c.h.b16 %v83
  %v261 = vunpack.c.l.b16 %v84
  %v262 = vunpack.c.h.b16 %v84
  %v263 = vunpack.c.l.b16 %v85
  %v264 = vunpack.c.h.b16 %v85
  %v265 = vunpack.c.l.b16 %v86
  %v266 = vunpack.c.h.b16 %v86
  %v267 = vunpack.c.l.b16 %v87
  %v268 = vunpack.c.h.b16 %v87
  %v269 = vunpack.c.l.b16 %v88
  %v270 = vunpack.c.h.b16 %v88
  %v271 = vunpack.c.l.b16 %v89
  %v272 = vunpack.c.h.b16 %v89
  %v273 = vunpack.c.l.b16 %v90
  %v274 = vunpack.c.h.b16 %v90
  %v275 = vunpack.c.l.b16 %v91
  %v276 = vunpack.c.h.b16 %v91
  %v277 = vunpack.c.l.b16 %v92
  %v278 = vunpack.c.h.b16 %v92
  %v279 = vunpack.c.l.b16 %v93
  %v280 = vunpack.c.h.b16 %v93
  %v281 = vunpack.c.l.b16 %v94
  %v282 = vunpack.c.h.b16 %v94
  %v283 = vunpack.c.l.b16 %v95
  %v284 = vunpack.c.h.b16 %v95
  %v285 = vunpack.c.l.b16 %v96
  %v286 = vunpack.c.h.b16 %v96
  %v287 = vunpack.c.l.b16 %v97
  %v288 = vunpack.c.h.b16 %v97
  %v289 = vunpack.c.l.b16 %v98
  %v290 = vunpack.c.h.b16 %v98
  %v291 = vunpack.c.l.b16 %v99
  %v292 = vunpack.c.h.b16 %v99
  %v293 = vunpack.c.l.b16 %v100
  %v294 = vunpack.c.h.b16 %v100
  %v295 = vunpack.c.l.b16 %v101
  %v296 = vunpack.c.h.b16 %v101
  %v297 = vunpack.c.l.b16 %v102
  %v298 = vunpack.c.h.b16 %v102
  %v299 = vunpack.c.l.b16 %v103
  %v300 = vunpack.c.h.b16 %v103
  %v301 = vunpack.c.l.b16 %v104
  %v302 = vunpack.c.h.b16 %v104
  %v303 = vunpack.c.l.b16 %v105
  %v304 = vunpack.c.h.b16 %v105
  %v305 = vunpack.c.l.b16 %v106
  %v306 = vunpack.c.h.b16 %v106
  %v307 = vunpack.c.l.b16 %v107
  %v308 = vunpack.c.h.b16 %v107
  %v309 = vunpack.c.l.b16 %v108
  %v310 = vunpack.c.h.b16 %v108
  %v311 = vunpack.c.l.b16 %v109
  %v312 = vunpack.c.h.b16 %v109
  %v313 = vunpack.c.l.b16 %v110
  %v314 = vunpack.c.h.b16 %v110
  %v315 = vpack.c.b16 %v189, %v187
  %v316 = vpack.c.b16 %v190, %v188
  %v317 = vpack.c.b16 %v193, %v191
  %v318 = vpack.c.b16 %v194, %v192
  %v319 = vpack.c.b16 %v197, %v195
  %v320 = vpack.c.b16 %v198, %v196
  %v321 = vpack.c.b16 %v201, %v199
  %v322 = vpack.c.b16 %v202, %v200
  %v323 = vpack.c.b16 %v205, %v203
  %v324 = vpack.c.b16 %v206, %v204
  %v325 = vpack.c.b16 %v209, %v207
  %v326 = vpack.c.b16 %v210, %v208
  %v327 = vpack.c.b16 %v213, %v211
  %v328 = vpack.c.b16 %v214, %v212
  %v329 = vpack.c.b16 %v217, %v215
  %v330 = vpack.c.b16 %v218, %v216
  %v331 = vpack.c.b16 %v221, %v219
  %v332 = vpack.c.b16 %v222, %v220
  %v333 = vpack.c.b16 %v225, %v223
  %v334 = vpack.c.b16 %v226, %v224
  %v335 = vpack.c.b16 %v229, %v227
  %v336 = vpack.c.b16 %v230, %v228
  %v337 = vpack.c.b16 %v233, %v231
  %v338 = vpack.c.b16 %v234, %v232
  %v339 = vpack.c.b16 %v237, %v235
  %v340 = vpack.c.b16 %v238, %v236
  %v341 = vpack.c.b16 %v241, %v239
  %v342 = vpack.c.b16 %v242, %v240
  %v343 = vpack.c.b16 %v245, %v243
  %v344 = vpack.c.b16 %v246, %v244
  %v345 = vpack.c.b16 %v249, %v247
  %v346 = vpack.c.b16 %v250, %v248
  %v347 = vpack.c.b16 %v253, %v251
  %v348 = vpack.c.b16 %v254, %v252
  %v349 = vpack.c.b16 %v257, %v255
  %v350 = vpack.c.b16 %v258, %v256
  %v351 = vpack.c.b16 %v261, %v259
  %v352 = vpack.c.b16 %v262, %v260
  %v353 = vpack.c.b16 %v265, %v263
  %v354 = vpack.c.b16 %v266, %v264
  %v355 = vpack.c.b16 %v269, %v267
  %v356 = vpack.c.b16 %v270, %v268
  %v357 = vpack.c.b16 %v273, %v271
  %v358 = vpack.c.b16 %v274, %v272
  %v359 = vpack.c.b16 %v277, %v275
  %v360 = vpack.c.b16 %v278, %v276
  %v361 = vpack.c.b16 %v281, %v279
  %v362 = vpack.c.b16 %v282, %v280
  %v363 = vpack.c.b16 %v285, %v283
  %v364 = vpack.c.b16 %v286, %v284
  %v365 = vpack.c.b16 %v289, %v287
  %v366 = vpack.c.b16 %v290, %v288
  %v367 = vpack.c.b16 %v293, %v291
  %v368 = vpack.c.b16 %v294, %v292
  %v369 = vpack.c.b16 %v297, %v295
  %v370 = vpack.c.b16 %v298, %v296
  %v371 = vpack.c.b16 %v301, %v299
  %v372 = vpack.c.b16 %v302, %v300
  %v373 = vpack.c.b16 %v305, %v303
  %v374 = vpack.c.b16 %v306, %v304
  %v375 = vpack.c.b16 %v309, %v307
  %v376 = vpack.c.b16 %v310, %v308
  %v377 = vpack.c.b16 %v313, %v311
  %v378 = vpack.c.b16 %v314, %v312
  %443 = vmatprep.subr.bf16.mxu0 %v316
  %444 = vmatpush1.bf16.msra.mxu0 %v315
  %445 = vmatprep.subr.bf16.mxu0 %v318
  %446 = vmatpush1.bf16.msra.mxu0 %v317
  %447 = vmatprep.subr.bf16.mxu0 %v320
  %448 = vmatpush1.bf16.msra.mxu0 %v319
  %449 = vmatprep.subr.bf16.mxu0 %v322
  %450 = vmatpush1.bf16.msra.mxu0 %v321
  %451 = vmatprep.subr.bf16.mxu0 %v324
  %452 = vmatpush1.bf16.msra.mxu0 %v323
  %453 = vmatprep.subr.bf16.mxu0 %v326
  %454 = vmatpush1.bf16.msra.mxu0 %v325
  %455 = vmatprep.subr.bf16.mxu0 %v328
  %456 = vmatpush1.bf16.msra.mxu0 %v327
  %457 = vmatprep.subr.bf16.mxu0 %v330
  %458 = vmatpush1.bf16.msra.mxu0 %v329
  %459 = vmatprep.subr.bf16.mxu0 %v332
  %460 = vmatpush1.bf16.msra.mxu0 %v331
  %461 = vmatprep.subr.bf16.mxu0 %v334
  %462 = vmatpush1.bf16.msra.mxu0 %v333
  %463 = vmatprep.subr.bf16.mxu0 %v336
  %464 = vmatpush1.bf16.msra.mxu0 %v335
  %465 = vmatprep.subr.bf16.mxu0 %v338
  %466 = vmatpush1.bf16.msra.mxu0 %v337
  %467 = vmatprep.subr.bf16.mxu0 %v340
  %468 = vmatpush1.bf16.msra.mxu0 %v339
  %469 = vmatprep.subr.bf16.mxu0 %v342
  %470 = vmatpush1.bf16.msra.mxu0 %v341
  %471 = vmatprep.subr.bf16.mxu0 %v344
  %472 = vmatpush1.bf16.msra.mxu0 %v343
  %473 = vmatprep.subr.bf16.mxu0 %v346
  %474 = vmatpush1.bf16.msra.mxu0 %v345
  %475 = vmatprep.mubr.bf16.mxu0 %v44
  %476 = vmatmul.mubr.bf16.gmra.mrb[0].mxu0 %v43
  %v477 = vpop.f32.mrb[0].mxu0
  %v478 = vadd.f32 %v116, %v477
  %v479 = vpop.f32.mrb[0].mxu0
  %v480 = vadd.f32 %v120, %v479
  %v481 = vpop.f32.mrb[0].mxu0
  %v482 = vpop.f32.mrb[0].mxu0
  %483 = vdwg.mxu0
  %484 = vmatprep.subr.bf16.mxu0 %v348
  %485 = vmatpush1.bf16.msra.mxu0 %v347
  %486 = vmatprep.subr.bf16.mxu0 %v350
  %487 = vmatpush1.bf16.msra.mxu0 %v349
  %488 = vmatprep.subr.bf16.mxu0 %v352
  %489 = vmatpush1.bf16.msra.mxu0 %v351
  %490 = vmatprep.subr.bf16.mxu0 %v354
  %491 = vmatpush1.bf16.msra.mxu0 %v353
  %492 = vmatprep.subr.bf16.mxu0 %v356
  %493 = vmatpush1.bf16.msra.mxu0 %v355
  %494 = vmatprep.subr.bf16.mxu0 %v358
  %495 = vmatpush1.bf16.msra.mxu0 %v357
  %496 = vmatprep.subr.bf16.mxu0 %v360
  %497 = vmatpush1.bf16.msra.mxu0 %v359
  %498 = vmatprep.subr.bf16.mxu0 %v362
  %499 = vmatpush1.bf16.msra.mxu0 %v361
  %500 = vmatprep.subr.bf16.mxu0 %v364
  %501 = vmatpush1.bf16.msra.mxu0 %v363
  %502 = vmatprep.subr.bf16.mxu0 %v366
  %503 = vmatpush1.bf16.msra.mxu0 %v365
  %504 = vmatprep.subr.bf16.mxu0 %v368
  %505 = vmatpush1.bf16.msra.mxu0 %v367
  %506 = vmatprep.subr.bf16.mxu0 %v370
  %507 = vmatpush1.bf16.msra.mxu0 %v369
  %508 = vmatprep.subr.bf16.mxu0 %v372
  %509 = vmatpush1.bf16.msra.mxu0 %v371
  %510 = vmatprep.subr.bf16.mxu0 %v374
  %511 = vmatpush1.bf16.msra.mxu0 %v373
  %512 = vmatprep.subr.bf16.mxu0 %v376
  %513 = vmatpush1.bf16.msra.mxu0 %v375
  %514 = vmatprep.subr.bf16.mxu0 %v378
  %515 = vmatpush1.bf16.msra.mxu0 %v377
  %516 = vmatprep.mubr.bf16.mxu0 %v46
  %517 = vmatmul.mubr.bf16.gmra.mrb[0].mxu0 %v45
  %v518 = vpop.f32.mrb[0].mxu0
  %v519 = vadd.f32 %v478, %v518
  %v520 = vpop.f32.mrb[0].mxu0
  %v521 = vadd.f32 %v480, %v520
  %v522 = vpop.f32.mrb[0].mxu0
  %v523 = vpop.f32.mrb[0].mxu0
  %524 = vdwg.mxu0
  %v525 = vmax.f32 %v519, 0.0
  %v526 = vmax.f32 %v521, 0.0
  %v529 = vcombine.low %v525, %v526
  %v531 = vunpack.c.l.s4 1983009808
  %v532 = vunpack.c.0.s8 %v531
  %v533 = vlaneseq
  %v534 = vshrl.u32 %v533, 7
  %v535 = vsub.s32 %v532, %v534
  %v536 = vrot.slane %v529, %v535
  %538 = vst [vmem:[%s5] sm:$0xf] %v536
  // Predicated region
  $region22: #{forward.15} parent=0 // pred_check
    _
  $region23: #{forward.15} parent=0 // pred_check_branch
    %540 = sbr.rel (0) target = $region25
  $region24: #{forward.15} parent=0 // pred_region
    _
  $region25: #{forward.15} parent=0 // pred_fallthru
    _
  // Predicated region
  $region26: #{forward.15} parent=0 // pred_check
    _
  $region27: #{forward.15} parent=0 // pred_check_branch
    %542 = sbr.rel (0) target = $region29
  $region28: #{forward.15} parent=0 // pred_region
    _
  $region29: #{forward.15} parent=0 // pred_fallthru
    _

// kernel: forward.16
$region0: #{forward.16}
  #allocation0 [shape = 'u32[]', space=smem, size = 0x4, offset = 0x4, fixed_abs, tag = 'smem constant byte address 0x4 - core index']
  #allocation1 [shape = 'u32[144,128]{1,0:T(1,128)}', space=vmem, size = 0x12000, scoped, tag = 'internal scratch']
  %s0 = inlined_call_operand.vmem [shape: f32[2,256], index: 0, kind: input, shape index: {}]
  %s1 = inlined_call_operand.vmem [shape: bf16[256,9], index: 1, kind: input, shape index: {}]
  %s2 = inlined_call_operand.vmem [shape: f32[1,9], index: 2, kind: input, shape index: {}]
  %s3 = inlined_call_operand.vmem [shape: f32[1,256], index: 3, kind: input, shape index: {}]
  %s4 = inlined_call_operand.vmem [shape: f32[1,256], index: 4, kind: input, shape index: {}]
  %s5 = inlined_call_operand.vmem [shape: f32[2,9], index: 5, kind: output, shape index: {}]
  %s6 = sld [smem:[#allocation0]]
  $region30: #{forward.16} parent=0
    _
  %s8 = ssub.s32 1, %s6
  %s9 = scalar_select 0, %s8, %s6
  // Predicated region
  $region2: #{forward.16} parent=0 // pred_check
    _
  $region3: #{forward.16} parent=0 // pred_check_branch
    %11 = sbr.rel (0) target = $region5
  $region4: #{forward.16} parent=0 // pred_region
    _
  $region5: #{forward.16} parent=0 // pred_fallthru
    _
  // Predicated region
  $region6: #{forward.16} parent=0 // pred_check
    _
  $region7: #{forward.16} parent=0 // pred_check_branch
    %13 = sbr.rel (0) target = $region9
  $region8: #{forward.16} parent=0 // pred_region
    _
  $region9: #{forward.16} parent=0 // pred_fallthru
    _
  // Predicated region
  $region10: #{forward.16} parent=0 // pred_check
    _
  $region11: #{forward.16} parent=0 // pred_check_branch
    %15 = sbr.rel (0) target = $region13
  $region12: #{forward.16} parent=0 // pred_region
    _
  $region13: #{forward.16} parent=0 // pred_fallthru
    _
  // Predicated region
  $region14: #{forward.16} parent=0 // pred_check
    _
  $region15: #{forward.16} parent=0 // pred_check_branch
    %17 = sbr.rel (0) target = $region17
  $region16: #{forward.16} parent=0 // pred_region
    _
  $region17: #{forward.16} parent=0 // pred_fallthru
    _
  // Predicated region
  $region18: #{forward.16} parent=0 // pred_check
    _
  $region19: #{forward.16} parent=0 // pred_check_branch
    %19 = sbr.rel (0) target = $region21
  $region20: #{forward.16} parent=0 // pred_region
    _
  $region21: #{forward.16} parent=0 // pred_fallthru
    _
  %v21 = vld [vmem:[%s0] sm:$0xf]
  %v24 = vunpack.c.l.s4 1983009808
  %v25 = vunpack.c.0.s8 %v24
  %v26 = vlaneseq
  %v27 = vshrl.u32 %v26, 7
  %v28 = vsub.s32 %v25, %v27
  %v29 = vrot.slane %v21, %v28
  %v30 = vcombine.high %v29, %v29
  %v33 = vpack.c.bf16 %v29, %v29
  %v34 = vpack.c.bf16 %v30, %v30
  %v35 = vld [vmem:[%s1] sm:$0xf]
  %v36 = vld [vmem:[%s1 + $0x4] sm:$0xf]
  %v37 = vld [vmem:[%s1 + $0x8] sm:$0xf]
  %v38 = vld [vmem:[%s1 + $0xc] sm:$0xf]
  %v39 = vld [vmem:[%s1 + $0x10] sm:$0xf]
  %v40 = vld [vmem:[%s1 + $0x14] sm:$0xf]
  %v41 = vld [vmem:[%s1 + $0x18] sm:$0xf]
  %v42 = vld [vmem:[%s1 + $0x1c] sm:$0xf]
  %v43 = vld [vmem:[%s1 + $0x20] sm:$0xf]
  %v44 = vld [vmem:[%s1 + $0x24] sm:$0xf]
  %v45 = vld [vmem:[%s1 + $0x28] sm:$0xf]
  %v46 = vld [vmem:[%s1 + $0x2c] sm:$0xf]
  %v47 = vld [vmem:[%s1 + $0x30] sm:$0xf]
  %v48 = vld [vmem:[%s1 + $0x34] sm:$0xf]
  %v49 = vld [vmem:[%s1 + $0x38] sm:$0xf]
  %v50 = vld [vmem:[%s1 + $0x3c] sm:$0xf]
  %v51 = vld [vmem:[%s1 + $0x40] sm:$0xf]
  %v52 = vld [vmem:[%s1 + $0x44] sm:$0xf]
  %v53 = vld [vmem:[%s1 + $0x48] sm:$0xf]
  %v54 = vld [vmem:[%s1 + $0x4c] sm:$0xf]
  %v55 = vld [vmem:[%s1 + $0x50] sm:$0xf]
  %v56 = vld [vmem:[%s1 + $0x54] sm:$0xf]
  %v57 = vld [vmem:[%s1 + $0x58] sm:$0xf]
  %v58 = vld [vmem:[%s1 + $0x5c] sm:$0xf]
  %v59 = vld [vmem:[%s1 + $0x60] sm:$0xf]
  %v60 = vld [vmem:[%s1 + $0x64] sm:$0xf]
  %v61 = vld [vmem:[%s1 + $0x68] sm:$0xf]
  %v62 = vld [vmem:[%s1 + $0x6c] sm:$0xf]
  %v63 = vld [vmem:[%s1 + $0x70] sm:$0xf]
  %v64 = vld [vmem:[%s1 + $0x74] sm:$0xf]
  %v65 = vld [vmem:[%s1 + $0x78] sm:$0xf]
  %v66 = vld [vmem:[%s1 + $0x7c] sm:$0xf]
  %v67 = vld [vmem:[%s2] sm:$0x1]
  %v69 = vlaneseq
  %v70 = vshrl.u32 %v69, 7
  %v71 = vsub.s32 0, %v70
  %v72 = vrot.slane %v67, %v71
  %v106 = vunpack.c.l.b16 %v35
  %v107 = vunpack.c.l.b16 %v36
  %v108 = vunpack.c.l.b16 %v37
  %v109 = vunpack.c.l.b16 %v38
  %v110 = vunpack.c.l.b16 %v39
  %v111 = vunpack.c.l.b16 %v40
  %v112 = vunpack.c.l.b16 %v41
  %v113 = vunpack.c.l.b16 %v42
  %v114 = vunpack.c.l.b16 %v43
  %v115 = vunpack.c.l.b16 %v44
  %v116 = vunpack.c.l.b16 %v45
  %v117 = vunpack.c.l.b16 %v46
  %v118 = vunpack.c.l.b16 %v47
  %v119 = vunpack.c.l.b16 %v48
  %v120 = vunpack.c.l.b16 %v49
  %v121 = vunpack.c.l.b16 %v50
  %v122 = vunpack.c.l.b16 %v51
  %v123 = vunpack.c.l.b16 %v52
  %v124 = vunpack.c.l.b16 %v53
  %v125 = vunpack.c.l.b16 %v54
  %v126 = vunpack.c.l.b16 %v55
  %v127 = vunpack.c.l.b16 %v56
  %v128 = vunpack.c.l.b16 %v57
  %v129 = vunpack.c.l.b16 %v58
  %v130 = vunpack.c.l.b16 %v59
  %v131 = vunpack.c.l.b16 %v60
  %v132 = vunpack.c.l.b16 %v61
  %v133 = vunpack.c.l.b16 %v62
  %v134 = vunpack.c.l.b16 %v63
  %v135 = vunpack.c.l.b16 %v64
  %v136 = vunpack.c.l.b16 %v65
  %v137 = vunpack.c.l.b16 %v66
  %v138 = vpack.c.b16 %v107, %v106
  %v139 = vpack.c.b16 %v109, %v108
  %v140 = vpack.c.b16 %v111, %v110
  %v141 = vpack.c.b16 %v113, %v112
  %v142 = vpack.c.b16 %v115, %v114
  %v143 = vpack.c.b16 %v117, %v116
  %v144 = vpack.c.b16 %v119, %v118
  %v145 = vpack.c.b16 %v121, %v120
  %v146 = vpack.c.b16 %v123, %v122
  %v147 = vpack.c.b16 %v125, %v124
  %v148 = vpack.c.b16 %v127, %v126
  %v149 = vpack.c.b16 %v129, %v128
  %v150 = vpack.c.b16 %v131, %v130
  %v151 = vpack.c.b16 %v133, %v132
  %v152 = vpack.c.b16 %v135, %v134
  %v153 = vpack.c.b16 %v137, %v136
  %170 = vmatprep.subr.bf16.mxu0 0
  %171 = vmatpush1.bf16.msra.mxu0 %v138
  %172 = vmatprep.subr.bf16.mxu0 0
  %173 = vmatpush1.bf16.msra.mxu0 %v139
  %174 = vmatprep.subr.bf16.mxu0 0
  %175 = vmatpush1.bf16.msra.mxu0 %v140
  %176 = vmatprep.subr.bf16.mxu0 0
  %177 = vmatpush1.bf16.msra.mxu0 %v141
  %178 = vmatprep.subr.bf16.mxu0 0
  %179 = vmatpush1.bf16.msra.mxu0 %v142
  %180 = vmatprep.subr.bf16.mxu0 0
  %181 = vmatpush1.bf16.msra.mxu0 %v143
  %182 = vmatprep.subr.bf16.mxu0 0
  %183 = vmatpush1.bf16.msra.mxu0 %v144
  %184 = vmatprep.subr.bf16.mxu0 0
  %185 = vmatpush1.bf16.msra.mxu0 %v145
  %186 = vmatprep.subr.bf16.mxu0 0
  %187 = vmatpush1.bf16.msra.mxu0 %v146
  %188 = vmatprep.subr.bf16.mxu0 0
  %189 = vmatpush1.bf16.msra.mxu0 %v147
  %190 = vmatprep.subr.bf16.mxu0 0
  %191 = vmatpush1.bf16.msra.mxu0 %v148
  %192 = vmatprep.subr.bf16.mxu0 0
  %193 = vmatpush1.bf16.msra.mxu0 %v149
  %194 = vmatprep.subr.bf16.mxu0 0
  %195 = vmatpush1.bf16.msra.mxu0 %v150
  %196 = vmatprep.subr.bf16.mxu0 0
  %197 = vmatpush1.bf16.msra.mxu0 %v151
  %198 = vmatprep.subr.bf16.mxu0 0
  %199 = vmatpush1.bf16.msra.mxu0 %v152
  %200 = vmatprep.subr.bf16.mxu0 0
  %201 = vmatpush1.bf16.msra.mxu0 %v153
  %202 = vmatprep.mubr.bf16.mxu0 %v34
  %203 = vmatmul.mubr.bf16.gmra.mrb[0].mxu0 %v33
  %v204 = vpop.f32.mrb[0].mxu0
  %v205 = vadd.f32 %v72, %v204
  %v206 = vpop.f32.mrb[0].mxu0
  %v207 = vpop.f32.mrb[0].mxu0
  %v208 = vpop.f32.mrb[0].mxu0
  %209 = vdwg.mxu0
  %vm210 = vcmask 66560
  %211 = vst.msk [vmem:[%s5] sm:$0x3] %vm210, %v205
  // Predicated region
  $region22: #{forward.16} parent=0 // pred_check
    _
  $region23: #{forward.16} parent=0 // pred_check_branch
    %213 = sbr.rel (0) target = $region25
  $region24: #{forward.16} parent=0 // pred_region
    _
  $region25: #{forward.16} parent=0 // pred_fallthru
    _
  // Predicated region
  $region26: #{forward.16} parent=0 // pred_check
    _
  $region27: #{forward.16} parent=0 // pred_check_branch
    %215 = sbr.rel (0) target = $region29
  $region28: #{forward.16} parent=0 // pred_region
    _
  $region29: #{forward.16} parent=0 // pred_fallthru
    _

// kernel: forward.14
$region0: #{forward.14}
  #allocation0 [shape = 'u32[]', space=smem, size = 0x4, offset = 0x4, fixed_abs, tag = 'smem constant byte address 0x4 - core index']
  #allocation1 [shape = 'u32[144,128]{1,0:T(1,128)}', space=vmem, size = 0x12000, scoped, tag = 'internal scratch']
  %s0 = inlined_call_operand.vmem [shape: f32[2,1024], index: 0, kind: input, shape index: {}]
  %s1 = inlined_call_operand.vmem [shape: bf16[1024,512], index: 1, kind: input, shape index: {}]
  %s2 = inlined_call_operand.vmem [shape: f32[1,512], index: 2, kind: input, shape index: {}]
  %s3 = inlined_call_operand.vmem [shape: f32[1,1024], index: 3, kind: input, shape index: {}]
  %s4 = inlined_call_operand.vmem [shape: f32[1,1024], index: 4, kind: input, shape index: {}]
  %s5 = inlined_call_operand.vmem [shape: f32[2,512], index: 5, kind: output, shape index: {}]
  %s6 = sld [smem:[#allocation0]]
  $region30: #{forward.14} parent=0
    _
  %s8 = ssub.s32 1, %s6
  %s9 = scalar_select 0, %s8, %s6
  // Predicated region
  $region2: #{forward.14} parent=0 // pred_check
    _
  $region3: #{forward.14} parent=0 // pred_check_branch
    %11 = sbr.rel (0) target = $region5
  $region4: #{forward.14} parent=0 // pred_region
    _
  $region5: #{forward.14} parent=0 // pred_fallthru
    _
  // Predicated region
  $region6: #{forward.14} parent=0 // pred_check
    _
  $region7: #{forward.14} parent=0 // pred_check_branch
    %13 = sbr.rel (0) target = $region9
  $region8: #{forward.14} parent=0 // pred_region
    _
  $region9: #{forward.14} parent=0 // pred_fallthru
    _
  // Predicated region
  $region10: #{forward.14} parent=0 // pred_check
    _
  $region11: #{forward.14} parent=0 // pred_check_branch
    %15 = sbr.rel (0) target = $region13
  $region12: #{forward.14} parent=0 // pred_region
    _
  $region13: #{forward.14} parent=0 // pred_fallthru
    _
  // Predicated region
  $region14: #{forward.14} parent=0 // pred_check
    _
  $region15: #{forward.14} parent=0 // pred_check_branch
    %17 = sbr.rel (0) target = $region17
  $region16: #{forward.14} parent=0 // pred_region
    _
  $region17: #{forward.14} parent=0 // pred_fallthru
    _
  // Predicated region
  $region18: #{forward.14} parent=0 // pred_check
    _
  $region19: #{forward.14} parent=0 // pred_check_branch
    %19 = sbr.rel (0) target = $region21
  $region20: #{forward.14} parent=0 // pred_region
    _
  $region21: #{forward.14} parent=0 // pred_fallthru
    _
  %v20 = vld [vmem:[%s0] sm:$0xff]
  %v21 = vld [vmem:[%s0 + $0x8] sm:$0xff]
  %v24 = vcombine.high %v20, %v20
  %v26 = vunpack.c.l.s4 1983009808
  %v27 = vunpack.c.0.s8 %v26
  %v28 = vlaneseq
  %v29 = vshrl.u32 %v28, 7
  %v30 = vsub.s32 %v27, %v29
  %v31 = vrot.slane %v20, %v30
  %v33 = vunpack.c.l.s4 1983009808
  %v34 = vunpack.c.0.s8 %v33
  %v35 = vlaneseq
  %v36 = vshrl.u32 %v35, 7
  %v37 = vsub.s32 %v34, %v36
  %v38 = vrot.slane %v24, %v37
  %v39 = vcombine.high %v31, %v31
  %v40 = vcombine.high %v38, %v38
  %v41 = vcombine.high %v21, %v21
  %v43 = vunpack.c.l.s4 1983009808
  %v44 = vunpack.c.0.s8 %v43
  %v45 = vlaneseq
  %v46 = vshrl.u32 %v45, 7
  %v47 = vsub.s32 %v44, %v46
  %v48 = vrot.slane %v21, %v47
  %v50 = vunpack.c.l.s4 1983009808
  %v51 = vunpack.c.0.s8 %v50
  %v52 = vlaneseq
  %v53 = vshrl.u32 %v52, 7
  %v54 = vsub.s32 %v51, %v53
  %v55 = vrot.slane %v41, %v54
  %v56 = vcombine.high %v48, %v48
  %v57 = vcombine.high %v55, %v55
  %v66 = vpack.c.bf16 %v31, %v31
  %v67 = vpack.c.bf16 %v39, %v39
  %v68 = vpack.c.bf16 %v38, %v38
  %v69 = vpack.c.bf16 %v40, %v40
  %v70 = vpack.c.bf16 %v48, %v48
  %v71 = vpack.c.bf16 %v56, %v56
  %v72 = vpack.c.bf16 %v55, %v55
  %v73 = vpack.c.bf16 %v57, %v57
  %v74 = vld [vmem:[%s1] sm:$0xff]
  %v75 = vld [vmem:[%s1 + $0x8] sm:$0xff]
  %v76 = vld [vmem:[%s1 + $0x10] sm:$0xff]
  %v77 = vld [vmem:[%s1 + $0x18] sm:$0xff]
  %v78 = vld [vmem:[%s1 + $0x20] sm:$0xff]
  %v79 = vld [vmem:[%s1 + $0x28] sm:$0xff]
  %v80 = vld [vmem:[%s1 + $0x30] sm:$0xff]
  %v81 = vld [vmem:[%s1 + $0x38] sm:$0xff]
  %v82 = vld [vmem:[%s1 + $0x40] sm:$0xff]
  %v83 = vld [vmem:[%s1 + $0x48] sm:$0xff]
  %v84 = vld [vmem:[%s1 + $0x50] sm:$0xff]
  %v85 = vld [vmem:[%s1 + $0x58] sm:$0xff]
  %v86 = vld [vmem:[%s1 + $0x60] sm:$0xff]
  %v87 = vld [vmem:[%s1 + $0x68] sm:$0xff]
  %v88 = vld [vmem:[%s1 + $0x70] sm:$0xff]
  %v89 = vld [vmem:[%s1 + $0x78] sm:$0xff]
  %v90 = vld [vmem:[%s1 + $0x80] sm:$0xff]
  %v91 = vld [vmem:[%s1 + $0x88] sm:$0xff]
  %v92 = vld [vmem:[%s1 + $0x90] sm:$0xff]
  %v93 = vld [vmem:[%s1 + $0x98] sm:$0xff]
  %v94 = vld [vmem:[%s1 + $0xa0] sm:$0xff]
  %v95 = vld [vmem:[%s1 + $0xa8] sm:$0xff]
  %v96 = vld [vmem:[%s1 + $0xb0] sm:$0xff]
  %v97 = vld [vmem:[%s1 + $0xb8] sm:$0xff]
  %v98 = vld [vmem:[%s1 + $0xc0] sm:$0xff]
  %v99 = vld [vmem:[%s1 + $0xc8] sm:$0xff]
  %v100 = vld [vmem:[%s1 + $0xd0] sm:$0xff]
  %v101 = vld [vmem:[%s1 + $0xd8] sm:$0xff]
  %v102 = vld [vmem:[%s1 + $0xe0] sm:$0xff]
  %v103 = vld [vmem:[%s1 + $0xe8] sm:$0xff]
  %v104 = vld [vmem:[%s1 + $0xf0] sm:$0xff]
  %v105 = vld [vmem:[%s1 + $0xf8] sm:$0xff]
  %v106 = vld [vmem:[%s1 + $0x100] sm:$0xff]
  %v107 = vld [vmem:[%s1 + $0x108] sm:$0xff]
  %v108 = vld [vmem:[%s1 + $0x110] sm:$0xff]
  %v109 = vld [vmem:[%s1 + $0x118] sm:$0xff]
  %v110 = vld [vmem:[%s1 + $0x120] sm:$0xff]
  %v111 = vld [vmem:[%s1 + $0x128] sm:$0xff]
  %v112 = vld [vmem:[%s1 + $0x130] sm:$0xff]
  %v113 = vld [vmem:[%s1 + $0x138] sm:$0xff]
  %v114 = vld [vmem:[%s1 + $0x140] sm:$0xff]
  %v115 = vld [vmem:[%s1 + $0x148] sm:$0xff]
  %v116 = vld [vmem:[%s1 + $0x150] sm:$0xff]
  %v117 = vld [vmem:[%s1 + $0x158] sm:$0xff]
  %v118 = vld [vmem:[%s1 + $0x160] sm:$0xff]
  %v119 = vld [vmem:[%s1 + $0x168] sm:$0xff]
  %v120 = vld [vmem:[%s1 + $0x170] sm:$0xff]
  %v121 = vld [vmem:[%s1 + $0x178] sm:$0xff]
  %v122 = vld [vmem:[%s1 + $0x180] sm:$0xff]
  %v123 = vld [vmem:[%s1 + $0x188] sm:$0xff]
  %v124 = vld [vmem:[%s1 + $0x190] sm:$0xff]
  %v125 = vld [vmem:[%s1 + $0x198] sm:$0xff]
  %v126 = vld [vmem:[%s1 + $0x1a0] sm:$0xff]
  %v127 = vld [vmem:[%s1 + $0x1a8] sm:$0xff]
  %v128 = vld [vmem:[%s1 + $0x1b0] sm:$0xff]
  %v129 = vld [vmem:[%s1 + $0x1b8] sm:$0xff]
  %v130 = vld [vmem:[%s1 + $0x1c0] sm:$0xff]
  %v131 = vld [vmem:[%s1 + $0x1c8] sm:$0xff]
  %v132 = vld [vmem:[%s1 + $0x1d0] sm:$0xff]
  %v133 = vld [vmem:[%s1 + $0x1d8] sm:$0xff]
  %v134 = vld [vmem:[%s1 + $0x1e0] sm:$0xff]
  %v135 = vld [vmem:[%s1 + $0x1e8] sm:$0xff]
  %v136 = vld [vmem:[%s1 + $0x1f0] sm:$0xff]
  %v137 = vld [vmem:[%s1 + $0x1f8] sm:$0xff]
  %v138 = vld [vmem:[%s1 + $0x200] sm:$0xff]
  %v139 = vld [vmem:[%s1 + $0x208] sm:$0xff]
  %v140 = vld [vmem:[%s1 + $0x210] sm:$0xff]
  %v141 = vld [vmem:[%s1 + $0x218] sm:$0xff]
  %v142 = vld [vmem:[%s1 + $0x220] sm:$0xff]
  %v143 = vld [vmem:[%s1 + $0x228] sm:$0xff]
  %v144 = vld [vmem:[%s1 + $0x230] sm:$0xff]
  %v145 = vld [vmem:[%s1 + $0x238] sm:$0xff]
  %v146 = vld [vmem:[%s1 + $0x240] sm:$0xff]
  %v147 = vld [vmem:[%s1 + $0x248] sm:$0xff]
  %v148 = vld [vmem:[%s1 + $0x250] sm:$0xff]
  %v149 = vld [vmem:[%s1 + $0x258] sm:$0xff]
  %v150 = vld [vmem:[%s1 + $0x260] sm:$0xff]
  %v151 = vld [vmem:[%s1 + $0x268] sm:$0xff]
  %v152 = vld [vmem:[%s1 + $0x270] sm:$0xff]
  %v153 = vld [vmem:[%s1 + $0x278] sm:$0xff]
  %v154 = vld [vmem:[%s1 + $0x280] sm:$0xff]
  %v155 = vld [vmem:[%s1 + $0x288] sm:$0xff]
  %v156 = vld [vmem:[%s1 + $0x290] sm:$0xff]
  %v157 = vld [vmem:[%s1 + $0x298] sm:$0xff]
  %v158 = vld [vmem:[%s1 + $0x2a0] sm:$0xff]
  %v159 = vld [vmem:[%s1 + $0x2a8] sm:$0xff]
  %v160 = vld [vmem:[%s1 + $0x2b0] sm:$0xff]
  %v161 = vld [vmem:[%s1 + $0x2b8] sm:$0xff]
  %v162 = vld [vmem:[%s1 + $0x2c0] sm:$0xff]
  %v163 = vld [vmem:[%s1 + $0x2c8] sm:$0xff]
  %v164 = vld [vmem:[%s1 + $0x2d0] sm:$0xff]
  %v165 = vld [vmem:[%s1 + $0x2d8] sm:$0xff]
  %v166 = vld [vmem:[%s1 + $0x2e0] sm:$0xff]
  %v167 = vld [vmem:[%s1 + $0x2e8] sm:$0xff]
  %v168 = vld [vmem:[%s1 + $0x2f0] sm:$0xff]
  %v169 = vld [vmem:[%s1 + $0x2f8] sm:$0xff]
  %v170 = vld [vmem:[%s1 + $0x300] sm:$0xff]
  %v171 = vld [vmem:[%s1 + $0x308] sm:$0xff]
  %v172 = vld [vmem:[%s1 + $0x310] sm:$0xff]
  %v173 = vld [vmem:[%s1 + $0x318] sm:$0xff]
  %v174 = vld [vmem:[%s1 + $0x320] sm:$0xff]
  %v175 = vld [vmem:[%s1 + $0x328] sm:$0xff]
  %v176 = vld [vmem:[%s1 + $0x330] sm:$0xff]
  %v177 = vld [vmem:[%s1 + $0x338] sm:$0xff]
  %v178 = vld [vmem:[%s1 + $0x340] sm:$0xff]
  %v179 = vld [vmem:[%s1 + $0x348] sm:$0xff]
  %v180 = vld [vmem:[%s1 + $0x350] sm:$0xff]
  %v181 = vld [vmem:[%s1 + $0x358] sm:$0xff]
  %v182 = vld [vmem:[%s1 + $0x360] sm:$0xff]
  %v183 = vld [vmem:[%s1 + $0x368] sm:$0xff]
  %v184 = vld [vmem:[%s1 + $0x370] sm:$0xff]
  %v185 = vld [vmem:[%s1 + $0x378] sm:$0xff]
  %v186 = vld [vmem:[%s1 + $0x380] sm:$0xff]
  %v187 = vld [vmem:[%s1 + $0x388] sm:$0xff]
  %v188 = vld [vmem:[%s1 + $0x390] sm:$0xff]
  %v189 = vld [vmem:[%s1 + $0x398] sm:$0xff]
  %v190 = vld [vmem:[%s1 + $0x3a0] sm:$0xff]
  %v191 = vld [vmem:[%s1 + $0x3a8] sm:$0xff]
  %v192 = vld [vmem:[%s1 + $0x3b0] sm:$0xff]
  %v193 = vld [vmem:[%s1 + $0x3b8] sm:$0xff]
  %v194 = vld [vmem:[%s1 + $0x3c0] sm:$0xff]
  %v195 = vld [vmem:[%s1 + $0x3c8] sm:$0xff]
  %v196 = vld [vmem:[%s1 + $0x3d0] sm:$0xff]
  %v197 = vld [vmem:[%s1 + $0x3d8] sm:$0xff]
  %v198 = vld [vmem:[%s1 + $0x3e0] sm:$0xff]
  %v199 = vld [vmem:[%s1 + $0x3e8] sm:$0xff]
  %v200 = vld [vmem:[%s1 + $0x3f0] sm:$0xff]
  %v201 = vld [vmem:[%s1 + $0x3f8] sm:$0xff]
  %v202 = vld [vmem:[%s1 + $0x400] sm:$0xff]
  %v203 = vld [vmem:[%s1 + $0x408] sm:$0xff]
  %v204 = vld [vmem:[%s1 + $0x410] sm:$0xff]
  %v205 = vld [vmem:[%s1 + $0x418] sm:$0xff]
  %v206 = vld [vmem:[%s1 + $0x420] sm:$0xff]
  %v207 = vld [vmem:[%s1 + $0x428] sm:$0xff]
  %v208 = vld [vmem:[%s1 + $0x430] sm:$0xff]
  %v209 = vld [vmem:[%s1 + $0x438] sm:$0xff]
  %v210 = vld [vmem:[%s1 + $0x440] sm:$0xff]
  %v211 = vld [vmem:[%s1 + $0x448] sm:$0xff]
  %v212 = vld [vmem:[%s1 + $0x450] sm:$0xff]
  %v213 = vld [vmem:[%s1 + $0x458] sm:$0xff]
  %v214 = vld [vmem:[%s1 + $0x460] sm:$0xff]
  %v215 = vld [vmem:[%s1 + $0x468] sm:$0xff]
  %v216 = vld [vmem:[%s1 + $0x470] sm:$0xff]
  %v217 = vld [vmem:[%s1 + $0x478] sm:$0xff]
  %v218 = vld [vmem:[%s1 + $0x480] sm:$0xff]
  %v219 = vld [vmem:[%s1 + $0x488] sm:$0xff]
  %v220 = vld [vmem:[%s1 + $0x490] sm:$0xff]
  %v221 = vld [vmem:[%s1 + $0x498] sm:$0xff]
  %v222 = vld [vmem:[%s1 + $0x4a0] sm:$0xff]
  %v223 = vld [vmem:[%s1 + $0x4a8] sm:$0xff]
  %v224 = vld [vmem:[%s1 + $0x4b0] sm:$0xff]
  %v225 = vld [vmem:[%s1 + $0x4b8] sm:$0xff]
  %v226 = vld [vmem:[%s1 + $0x4c0] sm:$0xff]
  %v227 = vld [vmem:[%s1 + $0x4c8] sm:$0xff]
  %v228 = vld [vmem:[%s1 + $0x4d0] sm:$0xff]
  %v229 = vld [vmem:[%s1 + $0x4d8] sm:$0xff]
  %v230 = vld [vmem:[%s1 + $0x4e0] sm:$0xff]
  %v231 = vld [vmem:[%s1 + $0x4e8] sm:$0xff]
  %v232 = vld [vmem:[%s1 + $0x4f0] sm:$0xff]
  %v233 = vld [vmem:[%s1 + $0x4f8] sm:$0xff]
  %v234 = vld [vmem:[%s1 + $0x500] sm:$0xff]
  %v235 = vld [vmem:[%s1 + $0x508] sm:$0xff]
  %v236 = vld [vmem:[%s1 + $0x510] sm:$0xff]
  %v237 = vld [vmem:[%s1 + $0x518] sm:$0xff]
  %v238 = vld [vmem:[%s1 + $0x520] sm:$0xff]
  %v239 = vld [vmem:[%s1 + $0x528] sm:$0xff]
  %v240 = vld [vmem:[%s1 + $0x530] sm:$0xff]
  %v241 = vld [vmem:[%s1 + $0x538] sm:$0xff]
  %v242 = vld [vmem:[%s1 + $0x540] sm:$0xff]
  %v243 = vld [vmem:[%s1 + $0x548] sm:$0xff]
  %v244 = vld [vmem:[%s1 + $0x550] sm:$0xff]
  %v245 = vld [vmem:[%s1 + $0x558] sm:$0xff]
  %v246 = vld [vmem:[%s1 + $0x560] sm:$0xff]
  %v247 = vld [vmem:[%s1 + $0x568] sm:$0xff]
  %v248 = vld [vmem:[%s1 + $0x570] sm:$0xff]
  %v249 = vld [vmem:[%s1 + $0x578] sm:$0xff]
  %v250 = vld [vmem:[%s1 + $0x580] sm:$0xff]
  %v251 = vld [vmem:[%s1 + $0x588] sm:$0xff]
  %v252 = vld [vmem:[%s1 + $0x590] sm:$0xff]
  %v253 = vld [vmem:[%s1 + $0x598] sm:$0xff]
  %v254 = vld [vmem:[%s1 + $0x5a0] sm:$0xff]
  %v255 = vld [vmem:[%s1 + $0x5a8] sm:$0xff]
  %v256 = vld [vmem:[%s1 + $0x5b0] sm:$0xff]
  %v257 = vld [vmem:[%s1 + $0x5b8] sm:$0xff]
  %v258 = vld [vmem:[%s1 + $0x5c0] sm:$0xff]
  %v259 = vld [vmem:[%s1 + $0x5c8] sm:$0xff]
  %v260 = vld [vmem:[%s1 + $0x5d0] sm:$0xff]
  %v261 = vld [vmem:[%s1 + $0x5d8] sm:$0xff]
  %v262 = vld [vmem:[%s1 + $0x5e0] sm:$0xff]
  %v263 = vld [vmem:[%s1 + $0x5e8] sm:$0xff]
  %v264 = vld [vmem:[%s1 + $0x5f0] sm:$0xff]
  %v265 = vld [vmem:[%s1 + $0x5f8] sm:$0xff]
  %v266 = vld [vmem:[%s1 + $0x600] sm:$0xff]
  %v267 = vld [vmem:[%s1 + $0x608] sm:$0xff]
  %v268 = vld [vmem:[%s1 + $0x610] sm:$0xff]
  %v269 = vld [vmem:[%s1 + $0x618] sm:$0xff]
  %v270 = vld [vmem:[%s1 + $0x620] sm:$0xff]
  %v271 = vld [vmem:[%s1 + $0x628] sm:$0xff]
  %v272 = vld [vmem:[%s1 + $0x630] sm:$0xff]
  %v273 = vld [vmem:[%s1 + $0x638] sm:$0xff]
  %v274 = vld [vmem:[%s1 + $0x640] sm:$0xff]
  %v275 = vld [vmem:[%s1 + $0x648] sm:$0xff]
  %v276 = vld [vmem:[%s1 + $0x650] sm:$0xff]
  %v277 = vld [vmem:[%s1 + $0x658] sm:$0xff]
  %v278 = vld [vmem:[%s1 + $0x660] sm:$0xff]
  %v279 = vld [vmem:[%s1 + $0x668] sm:$0xff]
  %v280 = vld [vmem:[%s1 + $0x670] sm:$0xff]
  %v281 = vld [vmem:[%s1 + $0x678] sm:$0xff]
  %v282 = vld [vmem:[%s1 + $0x680] sm:$0xff]
  %v283 = vld [vmem:[%s1 + $0x688] sm:$0xff]
  %v284 = vld [vmem:[%s1 + $0x690] sm:$0xff]
  %v285 = vld [vmem:[%s1 + $0x698] sm:$0xff]
  %v286 = vld [vmem:[%s1 + $0x6a0] sm:$0xff]
  %v287 = vld [vmem:[%s1 + $0x6a8] sm:$0xff]
  %v288 = vld [vmem:[%s1 + $0x6b0] sm:$0xff]
  %v289 = vld [vmem:[%s1 + $0x6b8] sm:$0xff]
  %v290 = vld [vmem:[%s1 + $0x6c0] sm:$0xff]
  %v291 = vld [vmem:[%s1 + $0x6c8] sm:$0xff]
  %v292 = vld [vmem:[%s1 + $0x6d0] sm:$0xff]
  %v293 = vld [vmem:[%s1 + $0x6d8] sm:$0xff]
  %v294 = vld [vmem:[%s1 + $0x6e0] sm:$0xff]
  %v295 = vld [vmem:[%s1 + $0x6e8] sm:$0xff]
  %v296 = vld [vmem:[%s1 + $0x6f0] sm:$0xff]
  %v297 = vld [vmem:[%s1 + $0x6f8] sm:$0xff]
  %v298 = vld [vmem:[%s1 + $0x700] sm:$0xff]
  %v299 = vld [vmem:[%s1 + $0x708] sm:$0xff]
  %v300 = vld [vmem:[%s1 + $0x710] sm:$0xff]
  %v301 = vld [vmem:[%s1 + $0x718] sm:$0xff]
  %v302 = vld [vmem:[%s1 + $0x720] sm:$0xff]
  %v303 = vld [vmem:[%s1 + $0x728] sm:$0xff]
  %v304 = vld [vmem:[%s1 + $0x730] sm:$0xff]
  %v305 = vld [vmem:[%s1 + $0x738] sm:$0xff]
  %v306 = vld [vmem:[%s1 + $0x740] sm:$0xff]
  %v307 = vld [vmem:[%s1 + $0x748] sm:$0xff]
  %v308 = vld [vmem:[%s1 + $0x750] sm:$0xff]
  %v309 = vld [vmem:[%s1 + $0x758] sm:$0xff]
  %v310 = vld [vmem:[%s1 + $0x760] sm:$0xff]
  %v311 = vld [vmem:[%s1 + $0x768] sm:$0xff]
  %v312 = vld [vmem:[%s1 + $0x770] sm:$0xff]
  %v313 = vld [vmem:[%s1 + $0x778] sm:$0xff]
  %v314 = vld [vmem:[%s1 + $0x780] sm:$0xff]
  %v315 = vld [vmem:[%s1 + $0x788] sm:$0xff]
  %v316 = vld [vmem:[%s1 + $0x790] sm:$0xff]
  %v317 = vld [vmem:[%s1 + $0x798] sm:$0xff]
  %v318 = vld [vmem:[%s1 + $0x7a0] sm:$0xff]
  %v319 = vld [vmem:[%s1 + $0x7a8] sm:$0xff]
  %v320 = vld [vmem:[%s1 + $0x7b0] sm:$0xff]
  %v321 = vld [vmem:[%s1 + $0x7b8] sm:$0xff]
  %v322 = vld [vmem:[%s1 + $0x7c0] sm:$0xff]
  %v323 = vld [vmem:[%s1 + $0x7c8] sm:$0xff]
  %v324 = vld [vmem:[%s1 + $0x7d0] sm:$0xff]
  %v325 = vld [vmem:[%s1 + $0x7d8] sm:$0xff]
  %v326 = vld [vmem:[%s1 + $0x7e0] sm:$0xff]
  %v327 = vld [vmem:[%s1 + $0x7e8] sm:$0xff]
  %v328 = vld [vmem:[%s1 + $0x7f0] sm:$0xff]
  %v329 = vld [vmem:[%s1 + $0x7f8] sm:$0xff]
  %v330 = vld [vmem:[%s2] sm:$0xf]
  %v332 = vlaneseq
  %v333 = vshrl.u32 %v332, 7
  %v334 = vsub.s32 0, %v333
  %v335 = vrot.slane %v330, %v334
  %v336 = vlaneseq
  %v337 = vshrl.u32 %v336, 7
  %v338 = vsub.s32 1, %v337
  %v339 = vrot.slane %v330, %v338
  %v340 = vlaneseq
  %v341 = vshrl.u32 %v340, 7
  %v342 = vsub.s32 2, %v341
  %v343 = vrot.slane %v330, %v342
  %v344 = vlaneseq
  %v345 = vshrl.u32 %v344, 7
  %v346 = vsub.s32 3, %v345
  %v347 = vrot.slane %v330, %v346
  %v608 = vunpack.c.l.b16 %v74
  %v609 = vunpack.c.h.b16 %v74
  %v610 = vunpack.c.l.b16 %v75
  %v611 = vunpack.c.h.b16 %v75
  %v612 = vunpack.c.l.b16 %v76
  %v613 = vunpack.c.h.b16 %v76
  %v614 = vunpack.c.l.b16 %v77
  %v615 = vunpack.c.h.b16 %v77
  %v616 = vunpack.c.l.b16 %v78
  %v617 = vunpack.c.h.b16 %v78
  %v618 = vunpack.c.l.b16 %v79
  %v619 = vunpack.c.h.b16 %v79
  %v620 = vunpack.c.l.b16 %v80
  %v621 = vunpack.c.h.b16 %v80
  %v622 = vunpack.c.l.b16 %v81
  %v623 = vunpack.c.h.b16 %v81
  %v624 = vunpack.c.l.b16 %v82
  %v625 = vunpack.c.h.b16 %v82
  %v626 = vunpack.c.l.b16 %v83
  %v627 = vunpack.c.h.b16 %v83
  %v628 = vunpack.c.l.b16 %v84
  %v629 = vunpack.c.h.b16 %v84
  %v630 = vunpack.c.l.b16 %v85
  %v631 = vunpack.c.h.b16 %v85
  %v632 = vunpack.c.l.b16 %v86
  %v633 = vunpack.c.h.b16 %v86
  %v634 = vunpack.c.l.b16 %v87
  %v635 = vunpack.c.h.b16 %v87
  %v636 = vunpack.c.l.b16 %v88
  %v637 = vunpack.c.h.b16 %v88
  %v638 = vunpack.c.l.b16 %v89
  %v639 = vunpack.c.h.b16 %v89
  %v640 = vunpack.c.l.b16 %v90
  %v641 = vunpack.c.h.b16 %v90
  %v642 = vunpack.c.l.b16 %v91
  %v643 = vunpack.c.h.b16 %v91
  %v644 = vunpack.c.l.b16 %v92
  %v645 = vunpack.c.h.b16 %v92
  %v646 = vunpack.c.l.b16 %v93
  %v647 = vunpack.c.h.b16 %v93
  %v648 = vunpack.c.l.b16 %v94
  %v649 = vunpack.c.h.b16 %v94
  %v650 = vunpack.c.l.b16 %v95
  %v651 = vunpack.c.h.b16 %v95
  %v652 = vunpack.c.l.b16 %v96
  %v653 = vunpack.c.h.b16 %v96
  %v654 = vunpack.c.l.b16 %v97
  %v655 = vunpack.c.h.b16 %v97
  %v656 = vunpack.c.l.b16 %v98
  %v657 = vunpack.c.h.b16 %v98
  %v658 = vunpack.c.l.b16 %v99
  %v659 = vunpack.c.h.b16 %v99
  %v660 = vunpack.c.l.b16 %v100
  %v661 = vunpack.c.h.b16 %v100
  %v662 = vunpack.c.l.b16 %v101
  %v663 = vunpack.c.h.b16 %v101
  %v664 = vunpack.c.l.b16 %v102
  %v665 = vunpack.c.h.b16 %v102
  %v666 = vunpack.c.l.b16 %v103
  %v667 = vunpack.c.h.b16 %v103
  %v668 = vunpack.c.l.b16 %v104
  %v669 = vunpack.c.h.b16 %v104
  %v670 = vunpack.c.l.b16 %v105
  %v671 = vunpack.c.h.b16 %v105
  %v672 = vunpack.c.l.b16 %v106
  %v673 = vunpack.c.h.b16 %v106
  %v674 = vunpack.c.l.b16 %v107
  %v675 = vunpack.c.h.b16 %v107
  %v676 = vunpack.c.l.b16 %v108
  %v677 = vunpack.c.h.b16 %v108
  %v678 = vunpack.c.l.b16 %v109
  %v679 = vunpack.c.h.b16 %v109
  %v680 = vunpack.c.l.b16 %v110
  %v681 = vunpack.c.h.b16 %v110
  %v682 = vunpack.c.l.b16 %v111
  %v683 = vunpack.c.h.b16 %v111
  %v684 = vunpack.c.l.b16 %v112
  %v685 = vunpack.c.h.b16 %v112
  %v686 = vunpack.c.l.b16 %v113
  %v687 = vunpack.c.h.b16 %v113
  %v688 = vunpack.c.l.b16 %v114
  %v689 = vunpack.c.h.b16 %v114
  %v690 = vunpack.c.l.b16 %v115
  %v691 = vunpack.c.h.b16 %v115
  %v692 = vunpack.c.l.b16 %v116
  %v693 = vunpack.c.h.b16 %v116
  %v694 = vunpack.c.l.b16 %v117
  %v695 = vunpack.c.h.b16 %v117
  %v696 = vunpack.c.l.b16 %v118
  %v697 = vunpack.c.h.b16 %v118
  %v698 = vunpack.c.l.b16 %v119
  %v699 = vunpack.c.h.b16 %v119
  %v700 = vunpack.c.l.b16 %v120
  %v701 = vunpack.c.h.b16 %v120
  %v702 = vunpack.c.l.b16 %v121
  %v703 = vunpack.c.h.b16 %v121
  %v704 = vunpack.c.l.b16 %v122
  %v705 = vunpack.c.h.b16 %v122
  %v706 = vunpack.c.l.b16 %v123
  %v707 = vunpack.c.h.b16 %v123
  %v708 = vunpack.c.l.b16 %v124
  %v709 = vunpack.c.h.b16 %v124
  %v710 = vunpack.c.l.b16 %v125
  %v711 = vunpack.c.h.b16 %v125
  %v712 = vunpack.c.l.b16 %v126
  %v713 = vunpack.c.h.b16 %v126
  %v714 = vunpack.c.l.b16 %v127
  %v715 = vunpack.c.h.b16 %v127
  %v716 = vunpack.c.l.b16 %v128
  %v717 = vunpack.c.h.b16 %v128
  %v718 = vunpack.c.l.b16 %v129
  %v719 = vunpack.c.h.b16 %v129
  %v720 = vunpack.c.l.b16 %v130
  %v721 = vunpack.c.h.b16 %v130
  %v722 = vunpack.c.l.b16 %v131
  %v723 = vunpack.c.h.b16 %v131
  %v724 = vunpack.c.l.b16 %v132
  %v725 = vunpack.c.h.b16 %v132
  %v726 = vunpack.c.l.b16 %v133
  %v727 = vunpack.c.h.b16 %v133
  %v728 = vunpack.c.l.b16 %v134
  %v729 = vunpack.c.h.b16 %v134
  %v730 = vunpack.c.l.b16 %v135
  %v731 = vunpack.c.h.b16 %v135
  %v732 = vunpack.c.l.b16 %v136
  %v733 = vunpack.c.h.b16 %v136
  %v734 = vunpack.c.l.b16 %v137
  %v735 = vunpack.c.h.b16 %v137
  %v736 = vunpack.c.l.b16 %v138
  %v737 = vunpack.c.h.b16 %v138
  %v738 = vunpack.c.l.b16 %v139
  %v739 = vunpack.c.h.b16 %v139
  %v740 = vunpack.c.l.b16 %v140
  %v741 = vunpack.c.h.b16 %v140
  %v742 = vunpack.c.l.b16 %v141
  %v743 = vunpack.c.h.b16 %v141
  %v744 = vunpack.c.l.b16 %v142
  %v745 = vunpack.c.h.b16 %v142
  %v746 = vunpack.c.l.b16 %v143
  %v747 = vunpack.c.h.b16 %v143
  %v748 = vunpack.c.l.b16 %v144
  %v749 = vunpack.c.h.b16 %v144
  %v750 = vunpack.c.l.b16 %v145
  %v751 = vunpack.c.h.b16 %v145
  %v752 = vunpack.c.l.b16 %v146
  %v753 = vunpack.c.h.b16 %v146
  %v754 = vunpack.c.l.b16 %v147
  %v755 = vunpack.c.h.b16 %v147
  %v756 = vunpack.c.l.b16 %v148
  %v757 = vunpack.c.h.b16 %v148
  %v758 = vunpack.c.l.b16 %v149
  %v759 = vunpack.c.h.b16 %v149
  %v760 = vunpack.c.l.b16 %v150
  %v761 = vunpack.c.h.b16 %v150
  %v762 = vunpack.c.l.b16 %v151
  %v763 = vunpack.c.h.b16 %v151
  %v764 = vunpack.c.l.b16 %v152
  %v765 = vunpack.c.h.b16 %v152
  %v766 = vunpack.c.l.b16 %v153
  %v767 = vunpack.c.h.b16 %v153
  %v768 = vunpack.c.l.b16 %v154
  %v769 = vunpack.c.h.b16 %v154
  %v770 = vunpack.c.l.b16 %v155
  %v771 = vunpack.c.h.b16 %v155
  %v772 = vunpack.c.l.b16 %v156
  %v773 = vunpack.c.h.b16 %v156
  %v774 = vunpack.c.l.b16 %v157
  %v775 = vunpack.c.h.b16 %v157
  %v776 = vunpack.c.l.b16 %v158
  %v777 = vunpack.c.h.b16 %v158
  %v778 = vunpack.c.l.b16 %v159
  %v779 = vunpack.c.h.b16 %v159
  %v780 = vunpack.c.l.b16 %v160
  %v781 = vunpack.c.h.b16 %v160
  %v782 = vunpack.c.l.b16 %v161
  %v783 = vunpack.c.h.b16 %v161
  %v784 = vunpack.c.l.b16 %v162
  %v785 = vunpack.c.h.b16 %v162
  %v786 = vunpack.c.l.b16 %v163
  %v787 = vunpack.c.h.b16 %v163
  %v788 = vunpack.c.l.b16 %v164
  %v789 = vunpack.c.h.b16 %v164
  %v790 = vunpack.c.l.b16 %v165
  %v791 = vunpack.c.h.b16 %v165
  %v792 = vunpack.c.l.b16 %v166
  %v793 = vunpack.c.h.b16 %v166
  %v794 = vunpack.c.l.b16 %v167
  %v795 = vunpack.c.h.b16 %v167
  %v796 = vunpack.c.l.b16 %v168
  %v797 = vunpack.c.h.b16 %v168
  %v798 = vunpack.c.l.b16 %v169
  %v799 = vunpack.c.h.b16 %v169
  %v800 = vunpack.c.l.b16 %v170
  %v801 = vunpack.c.h.b16 %v170
  %v802 = vunpack.c.l.b16 %v171
  %v803 = vunpack.c.h.b16 %v171
  %v804 = vunpack.c.l.b16 %v172
  %v805 = vunpack.c.h.b16 %v172
  %v806 = vunpack.c.l.b16 %v173
  %v807 = vunpack.c.h.b16 %v173
  %v808 = vunpack.c.l.b16 %v174
  %v809 = vunpack.c.h.b16 %v174
  %v810 = vunpack.c.l.b16 %v175
  %v811 = vunpack.c.h.b16 %v175
  %v812 = vunpack.c.l.b16 %v176
  %v813 = vunpack.c.h.b16 %v176
  %v814 = vunpack.c.l.b16 %v177
  %v815 = vunpack.c.h.b16 %v177
  %v816 = vunpack.c.l.b16 %v178
  %v817 = vunpack.c.h.b16 %v178
  %v818 = vunpack.c.l.b16 %v179
  %v819 = vunpack.c.h.b16 %v179
  %v820 = vunpack.c.l.b16 %v180
  %v821 = vunpack.c.h.b16 %v180
  %v822 = vunpack.c.l.b16 %v181
  %v823 = vunpack.c.h.b16 %v181
  %v824 = vunpack.c.l.b16 %v182
  %v825 = vunpack.c.h.b16 %v182
  %v826 = vunpack.c.l.b16 %v183
  %v827 = vunpack.c.h.b16 %v183
  %v828 = vunpack.c.l.b16 %v184
  %v829 = vunpack.c.h.b16 %v184
  %v830 = vunpack.c.l.b16 %v185
  %v831 = vunpack.c.h.b16 %v185
  %v832 = vunpack.c.l.b16 %v186
  %v833 = vunpack.c.h.b16 %v186
  %v834 = vunpack.c.l.b16 %v187
  %v835 = vunpack.c.h.b16 %v187
  %v836 = vunpack.c.l.b16 %v188
  %v837 = vunpack.c.h.b16 %v188
  %v838 = vunpack.c.l.b16 %v189
  %v839 = vunpack.c.h.b16 %v189
  %v840 = vunpack.c.l.b16 %v190
  %v841 = vunpack.c.h.b16 %v190
  %v842 = vunpack.c.l.b16 %v191
  %v843 = vunpack.c.h.b16 %v191
  %v844 = vunpack.c.l.b16 %v192
  %v845 = vunpack.c.h.b16 %v192
  %v846 = vunpack.c.l.b16 %v193
  %v847 = vunpack.c.h.b16 %v193
  %v848 = vunpack.c.l.b16 %v194
  %v849 = vunpack.c.h.b16 %v194
  %v850 = vunpack.c.l.b16 %v195
  %v851 = vunpack.c.h.b16 %v195
  %v852 = vunpack.c.l.b16 %v196
  %v853 = vunpack.c.h.b16 %v196
  %v854 = vunpack.c.l.b16 %v197
  %v855 = vunpack.c.h.b16 %v197
  %v856 = vunpack.c.l.b16 %v198
  %v857 = vunpack.c.h.b16 %v198
  %v858 = vunpack.c.l.b16 %v199
  %v859 = vunpack.c.h.b16 %v199
  %v860 = vunpack.c.l.b16 %v200
  %v861 = vunpack.c.h.b16 %v200
  %v862 = vunpack.c.l.b16 %v201
  %v863 = vunpack.c.h.b16 %v201
  %v864 = vunpack.c.l.b16 %v202
  %v865 = vunpack.c.h.b16 %v202
  %v866 = vunpack.c.l.b16 %v203
  %v867 = vunpack.c.h.b16 %v203
  %v868 = vunpack.c.l.b16 %v204
  %v869 = vunpack.c.h.b16 %v204
  %v870 = vunpack.c.l.b16 %v205
  %v871 = vunpack.c.h.b16 %v205
  %v872 = vunpack.c.l.b16 %v206
  %v873 = vunpack.c.h.b16 %v206
  %v874 = vunpack.c.l.b16 %v207
  %v875 = vunpack.c.h.b16 %v207
  %v876 = vunpack.c.l.b16 %v208
  %v877 = vunpack.c.h.b16 %v208
  %v878 = vunpack.c.l.b16 %v209
  %v879 = vunpack.c.h.b16 %v209
  %v880 = vunpack.c.l.b16 %v210
  %v881 = vunpack.c.h.b16 %v210
  %v882 = vunpack.c.l.b16 %v211
  %v883 = vunpack.c.h.b16 %v211
  %v884 = vunpack.c.l.b16 %v212
  %v885 = vunpack.c.h.b16 %v212
  %v886 = vunpack.c.l.b16 %v213
  %v887 = vunpack.c.h.b16 %v213
  %v888 = vunpack.c.l.b16 %v214
  %v889 = vunpack.c.h.b16 %v214
  %v890 = vunpack.c.l.b16 %v215
  %v891 = vunpack.c.h.b16 %v215
  %v892 = vunpack.c.l.b16 %v216
  %v893 = vunpack.c.h.b16 %v216
  %v894 = vunpack.c.l.b16 %v217
  %v895 = vunpack.c.h.b16 %v217
  %v896 = vunpack.c.l.b16 %v218
  %v897 = vunpack.c.h.b16 %v218
  %v898 = vunpack.c.l.b16 %v219
  %v899 = vunpack.c.h.b16 %v219
  %v900 = vunpack.c.l.b16 %v220
  %v901 = vunpack.c.h.b16 %v220
  %v902 = vunpack.c.l.b16 %v221
  %v903 = vunpack.c.h.b16 %v221
  %v904 = vunpack.c.l.b16 %v222
  %v905 = vunpack.c.h.b16 %v222
  %v906 = vunpack.c.l.b16 %v223
  %v907 = vunpack.c.h.b16 %v223
  %v908 = vunpack.c.l.b16 %v224
  %v909 = vunpack.c.h.b16 %v224
  %v910 = vunpack.c.l.b16 %v225
  %v911 = vunpack.c.h.b16 %v225
  %v912 = vunpack.c.l.b16 %v226
  %v913 = vunpack.c.h.b16 %v226
  %v914 = vunpack.c.l.b16 %v227
  %v915 = vunpack.c.h.b16 %v227
  %v916 = vunpack.c.l.b16 %v228
  %v917 = vunpack.c.h.b16 %v228
  %v918 = vunpack.c.l.b16 %v229
  %v919 = vunpack.c.h.b16 %v229
  %v920 = vunpack.c.l.b16 %v230
  %v921 = vunpack.c.h.b16 %v230
  %v922 = vunpack.c.l.b16 %v231
  %v923 = vunpack.c.h.b16 %v231
  %v924 = vunpack.c.l.b16 %v232
  %v925 = vunpack.c.h.b16 %v232
  %v926 = vunpack.c.l.b16 %v233
  %v927 = vunpack.c.h.b16 %v233
  %v928 = vunpack.c.l.b16 %v234
  %v929 = vunpack.c.h.b16 %v234
  %v930 = vunpack.c.l.b16 %v235
  %v931 = vunpack.c.h.b16 %v235
  %v932 = vunpack.c.l.b16 %v236
  %v933 = vunpack.c.h.b16 %v236
  %v934 = vunpack.c.l.b16 %v237
  %v935 = vunpack.c.h.b16 %v237
  %v936 = vunpack.c.l.b16 %v238
  %v937 = vunpack.c.h.b16 %v238
  %v938 = vunpack.c.l.b16 %v239
  %v939 = vunpack.c.h.b16 %v239
  %v940 = vunpack.c.l.b16 %v240
  %v941 = vunpack.c.h.b16 %v240
  %v942 = vunpack.c.l.b16 %v241
  %v943 = vunpack.c.h.b16 %v241
  %v944 = vunpack.c.l.b16 %v242
  %v945 = vunpack.c.h.b16 %v242
  %v946 = vunpack.c.l.b16 %v243
  %v947 = vunpack.c.h.b16 %v243
  %v948 = vunpack.c.l.b16 %v244
  %v949 = vunpack.c.h.b16 %v244
  %v950 = vunpack.c.l.b16 %v245
  %v951 = vunpack.c.h.b16 %v245
  %v952 = vunpack.c.l.b16 %v246
  %v953 = vunpack.c.h.b16 %v246
  %v954 = vunpack.c.l.b16 %v247
  %v955 = vunpack.c.h.b16 %v247
  %v956 = vunpack.c.l.b16 %v248
  %v957 = vunpack.c.h.b16 %v248
  %v958 = vunpack.c.l.b16 %v249
  %v959 = vunpack.c.h.b16 %v249
  %v960 = vunpack.c.l.b16 %v250
  %v961 = vunpack.c.h.b16 %v250
  %v962 = vunpack.c.l.b16 %v251
  %v963 = vunpack.c.h.b16 %v251
  %v964 = vunpack.c.l.b16 %v252
  %v965 = vunpack.c.h.b16 %v252
  %v966 = vunpack.c.l.b16 %v253
  %v967 = vunpack.c.h.b16 %v253
  %v968 = vunpack.c.l.b16 %v254
  %v969 = vunpack.c.h.b16 %v254
  %v970 = vunpack.c.l.b16 %v255
  %v971 = vunpack.c.h.b16 %v255
  %v972 = vunpack.c.l.b16 %v256
  %v973 = vunpack.c.h.b16 %v256
  %v974 = vunpack.c.l.b16 %v257
  %v975 = vunpack.c.h.b16 %v257
  %v976 = vunpack.c.l.b16 %v258
  %v977 = vunpack.c.h.b16 %v258
  %v978 = vunpack.c.l.b16 %v259
  %v979 = vunpack.c.h.b16 %v259
  %v980 = vunpack.c.l.b16 %v260
  %v981 = vunpack.c.h.b16 %v260
  %v982 = vunpack.c.l.b16 %v261
  %v983 = vunpack.c.h.b16 %v261
  %v984 = vunpack.c.l.b16 %v262
  %v985 = vunpack.c.h.b16 %v262
  %v986 = vunpack.c.l.b16 %v263
  %v987 = vunpack.c.h.b16 %v263
  %v988 = vunpack.c.l.b16 %v264
  %v989 = vunpack.c.h.b16 %v264
  %v990 = vunpack.c.l.b16 %v265
  %v991 = vunpack.c.h.b16 %v265
  %v992 = vunpack.c.l.b16 %v266
  %v993 = vunpack.c.h.b16 %v266
  %v994 = vunpack.c.l.b16 %v267
  %v995 = vunpack.c.h.b16 %v267
  %v996 = vunpack.c.l.b16 %v268
  %v997 = vunpack.c.h.b16 %v268
  %v998 = vunpack.c.l.b16 %v269
  %v999 = vunpack.c.h.b16 %v269
  %v1000 = vunpack.c.l.b16 %v270
  %v1001 = vunpack.c.h.b16 %v270
  %v1002 = vunpack.c.l.b16 %v271
  %v1003 = vunpack.c.h.b16 %v271
  %v1004 = vunpack.c.l.b16 %v272
  %v1005 = vunpack.c.h.b16 %v272
  %v1006 = vunpack.c.l.b16 %v273
  %v1007 = vunpack.c.h.b16 %v273
  %v1008 = vunpack.c.l.b16 %v274
  %v1009 = vunpack.c.h.b16 %v274
  %v1010 = vunpack.c.l.b16 %v275
  %v1011 = vunpack.c.h.b16 %v275
  %v1012 = vunpack.c.l.b16 %v276
  %v1013 = vunpack.c.h.b16 %v276
  %v1014 = vunpack.c.l.b16 %v277
  %v1015 = vunpack.c.h.b16 %v277
  %v1016 = vunpack.c.l.b16 %v278
  %v1017 = vunpack.c.h.b16 %v278
  %v1018 = vunpack.c.l.b16 %v279
  %v1019 = vunpack.c.h.b16 %v279
  %v1020 = vunpack.c.l.b16 %v280
  %v1021 = vunpack.c.h.b16 %v280
  %v1022 = vunpack.c.l.b16 %v281
  %v1023 = vunpack.c.h.b16 %v281
  %v1024 = vunpack.c.l.b16 %v282
  %v1025 = vunpack.c.h.b16 %v282
  %v1026 = vunpack.c.l.b16 %v283
  %v1027 = vunpack.c.h.b16 %v283
  %v1028 = vunpack.c.l.b16 %v284
  %v1029 = vunpack.c.h.b16 %v284
  %v1030 = vunpack.c.l.b16 %v285
  %v1031 = vunpack.c.h.b16 %v285
  %v1032 = vunpack.c.l.b16 %v286
  %v1033 = vunpack.c.h.b16 %v286
  %v1034 = vunpack.c.l.b16 %v287
  %v1035 = vunpack.c.h.b16 %v287
  %v1036 = vunpack.c.l.b16 %v288
  %v1037 = vunpack.c.h.b16 %v288
  %v1038 = vunpack.c.l.b16 %v289
  %v1039 = vunpack.c.h.b16 %v289
  %v1040 = vunpack.c.l.b16 %v290
  %v1041 = vunpack.c.h.b16 %v290
  %v1042 = vunpack.c.l.b16 %v291
  %v1043 = vunpack.c.h.b16 %v291
  %v1044 = vunpack.c.l.b16 %v292
  %v1045 = vunpack.c.h.b16 %v292
  %v1046 = vunpack.c.l.b16 %v293
  %v1047 = vunpack.c.h.b16 %v293
  %v1048 = vunpack.c.l.b16 %v294
  %v1049 = vunpack.c.h.b16 %v294
  %v1050 = vunpack.c.l.b16 %v295
  %v1051 = vunpack.c.h.b16 %v295
  %v1052 = vunpack.c.l.b16 %v296
  %v1053 = vunpack.c.h.b16 %v296
  %v1054 = vunpack.c.l.b16 %v297
  %v1055 = vunpack.c.h.b16 %v297
  %v1056 = vunpack.c.l.b16 %v298
  %v1057 = vunpack.c.h.b16 %v298
  %v1058 = vunpack.c.l.b16 %v299
  %v1059 = vunpack.c.h.b16 %v299
  %v1060 = vunpack.c.l.b16 %v300
  %v1061 = vunpack.c.h.b16 %v300
  %v1062 = vunpack.c.l.b16 %v301
  %v1063 = vunpack.c.h.b16 %v301
  %v1064 = vunpack.c.l.b16 %v302
  %v1065 = vunpack.c.h.b16 %v302
  %v1066 = vunpack.c.l.b16 %v303
  %v1067 = vunpack.c.h.b16 %v303
  %v1068 = vunpack.c.l.b16 %v304
  %v1069 = vunpack.c.h.b16 %v304
  %v1070 = vunpack.c.l.b16 %v305
  %v1071 = vunpack.c.h.b16 %v305
  %v1072 = vunpack.c.l.b16 %v306
  %v1073 = vunpack.c.h.b16 %v306
  %v1074 = vunpack.c.l.b16 %v307
  %v1075 = vunpack.c.h.b16 %v307
  %v1076 = vunpack.c.l.b16 %v308
  %v1077 = vunpack.c.h.b16 %v308
  %v1078 = vunpack.c.l.b16 %v309
  %v1079 = vunpack.c.h.b16 %v309
  %v1080 = vunpack.c.l.b16 %v310
  %v1081 = vunpack.c.h.b16 %v310
  %v1082 = vunpack.c.l.b16 %v311
  %v1083 = vunpack.c.h.b16 %v311
  %v1084 = vunpack.c.l.b16 %v312
  %v1085 = vunpack.c.h.b16 %v312
  %v1086 = vunpack.c.l.b16 %v313
  %v1087 = vunpack.c.h.b16 %v313
  %v1088 = vunpack.c.l.b16 %v314
  %v1089 = vunpack.c.h.b16 %v314
  %v1090 = vunpack.c.l.b16 %v315
  %v1091 = vunpack.c.h.b16 %v315
  %v1092 = vunpack.c.l.b16 %v316
  %v1093 = vunpack.c.h.b16 %v316
  %v1094 = vunpack.c.l.b16 %v317
  %v1095 = vunpack.c.h.b16 %v317
  %v1096 = vunpack.c.l.b16 %v318
  %v1097 = vunpack.c.h.b16 %v318
  %v1098 = vunpack.c.l.b16 %v319
  %v1099 = vunpack.c.h.b16 %v319
  %v1100 = vunpack.c.l.b16 %v320
  %v1101 = vunpack.c.h.b16 %v320
  %v1102 = vunpack.c.l.b16 %v321
  %v1103 = vunpack.c.h.b16 %v321
  %v1104 = vunpack.c.l.b16 %v322
  %v1105 = vunpack.c.h.b16 %v322
  %v1106 = vunpack.c.l.b16 %v323
  %v1107 = vunpack.c.h.b16 %v323
  %v1108 = vunpack.c.l.b16 %v324
  %v1109 = vunpack.c.h.b16 %v324
  %v1110 = vunpack.c.l.b16 %v325
  %v1111 = vunpack.c.h.b16 %v325
  %v1112 = vunpack.c.l.b16 %v326
  %v1113 = vunpack.c.h.b16 %v326
  %v1114 = vunpack.c.l.b16 %v327
  %v1115 = vunpack.c.h.b16 %v327
  %v1116 = vunpack.c.l.b16 %v328
  %v1117 = vunpack.c.h.b16 %v328
  %v1118 = vunpack.c.l.b16 %v329
  %v1119 = vunpack.c.h.b16 %v329
  %v1120 = vpack.c.b16 %v612, %v608
  %v1121 = vpack.c.b16 %v613, %v609
  %v1122 = vpack.c.b16 %v614, %v610
  %v1123 = vpack.c.b16 %v615, %v611
  %v1124 = vpack.c.b16 %v620, %v616
  %v1125 = vpack.c.b16 %v621, %v617
  %v1126 = vpack.c.b16 %v622, %v618
  %v1127 = vpack.c.b16 %v623, %v619
  %v1128 = vpack.c.b16 %v628, %v624
  %v1129 = vpack.c.b16 %v629, %v625
  %v1130 = vpack.c.b16 %v630, %v626
  %v1131 = vpack.c.b16 %v631, %v627
  %v1132 = vpack.c.b16 %v636, %v632
  %v1133 = vpack.c.b16 %v637, %v633
  %v1134 = vpack.c.b16 %v638, %v634
  %v1135 = vpack.c.b16 %v639, %v635
  %v1136 = vpack.c.b16 %v644, %v640
  %v1137 = vpack.c.b16 %v645, %v641
  %v1138 = vpack.c.b16 %v646, %v642
  %v1139 = vpack.c.b16 %v647, %v643
  %v1140 = vpack.c.b16 %v652, %v648
  %v1141 = vpack.c.b16 %v653, %v649
  %v1142 = vpack.c.b16 %v654, %v650
  %v1143 = vpack.c.b16 %v655, %v651
  %v1144 = vpack.c.b16 %v660, %v656
  %v1145 = vpack.c.b16 %v661, %v657
  %v1146 = vpack.c.b16 %v662, %v658
  %v1147 = vpack.c.b16 %v663, %v659
  %v1148 = vpack.c.b16 %v668, %v664
  %v1149 = vpack.c.b16 %v669, %v665
  %v1150 = vpack.c.b16 %v670, %v666
  %v1151 = vpack.c.b16 %v671, %v667
  %v1152 = vpack.c.b16 %v676, %v672
  %v1153 = vpack.c.b16 %v677, %v673
  %v1154 = vpack.c.b16 %v678, %v674
  %v1155 = vpack.c.b16 %v679, %v675
  %v1156 = vpack.c.b16 %v684, %v680
  %v1157 = vpack.c.b16 %v685, %v681
  %v1158 = vpack.c.b16 %v686, %v682
  %v1159 = vpack.c.b16 %v687, %v683
  %v1160 = vpack.c.b16 %v692, %v688
  %v1161 = vpack.c.b16 %v693, %v689
  %v1162 = vpack.c.b16 %v694, %v690
  %v1163 = vpack.c.b16 %v695, %v691
  %v1164 = vpack.c.b16 %v700, %v696
  %v1165 = vpack.c.b16 %v701, %v697
  %v1166 = vpack.c.b16 %v702, %v698
  %v1167 = vpack.c.b16 %v703, %v699
  %v1168 = vpack.c.b16 %v708, %v704
  %v1169 = vpack.c.b16 %v709, %v705
  %v1170 = vpack.c.b16 %v710, %v706
  %v1171 = vpack.c.b16 %v711, %v707
  %v1172 = vpack.c.b16 %v716, %v712
  %v1173 = vpack.c.b16 %v717, %v713
  %v1174 = vpack.c.b16 %v718, %v714
  %v1175 = vpack.c.b16 %v719, %v715
  %v1176 = vpack.c.b16 %v724, %v720
  %v1177 = vpack.c.b16 %v725, %v721
  %v1178 = vpack.c.b16 %v726, %v722
  %v1179 = vpack.c.b16 %v727, %v723
  %v1180 = vpack.c.b16 %v732, %v728
  %v1181 = vpack.c.b16 %v733, %v729
  %v1182 = vpack.c.b16 %v734, %v730
  %v1183 = vpack.c.b16 %v735, %v731
  %v1184 = vpack.c.b16 %v740, %v736
  %v1185 = vpack.c.b16 %v741, %v737
  %v1186 = vpack.c.b16 %v742, %v738
  %v1187 = vpack.c.b16 %v743, %v739
  %v1188 = vpack.c.b16 %v748, %v744
  %v1189 = vpack.c.b16 %v749, %v745
  %v1190 = vpack.c.b16 %v750, %v746
  %v1191 = vpack.c.b16 %v751, %v747
  %v1192 = vpack.c.b16 %v756, %v752
  %v1193 = vpack.c.b16 %v757, %v753
  %v1194 = vpack.c.b16 %v758, %v754
  %v1195 = vpack.c.b16 %v759, %v755
  %v1196 = vpack.c.b16 %v764, %v760
  %v1197 = vpack.c.b16 %v765, %v761
  %v1198 = vpack.c.b16 %v766, %v762
  %v1199 = vpack.c.b16 %v767, %v763
  %v1200 = vpack.c.b16 %v772, %v768
  %v1201 = vpack.c.b16 %v773, %v769
  %v1202 = vpack.c.b16 %v774, %v770
  %v1203 = vpack.c.b16 %v775, %v771
  %v1204 = vpack.c.b16 %v780, %v776
  %v1205 = vpack.c.b16 %v781, %v777
  %v1206 = vpack.c.b16 %v782, %v778
  %v1207 = vpack.c.b16 %v783, %v779
  %v1208 = vpack.c.b16 %v788, %v784
  %v1209 = vpack.c.b16 %v789, %v785
  %v1210 = vpack.c.b16 %v790, %v786
  %v1211 = vpack.c.b16 %v791, %v787
  %v1212 = vpack.c.b16 %v796, %v792
  %v1213 = vpack.c.b16 %v797, %v793
  %v1214 = vpack.c.b16 %v798, %v794
  %v1215 = vpack.c.b16 %v799, %v795
  %v1216 = vpack.c.b16 %v804, %v800
  %v1217 = vpack.c.b16 %v805, %v801
  %v1218 = vpack.c.b16 %v806, %v802
  %v1219 = vpack.c.b16 %v807, %v803
  %v1220 = vpack.c.b16 %v812, %v808
  %v1221 = vpack.c.b16 %v813, %v809
  %v1222 = vpack.c.b16 %v814, %v810
  %v1223 = vpack.c.b16 %v815, %v811
  %v1224 = vpack.c.b16 %v820, %v816
  %v1225 = vpack.c.b16 %v821, %v817
  %v1226 = vpack.c.b16 %v822, %v818
  %v1227 = vpack.c.b16 %v823, %v819
  %v1228 = vpack.c.b16 %v828, %v824
  %v1229 = vpack.c.b16 %v829, %v825
  %v1230 = vpack.c.b16 %v830, %v826
  %v1231 = vpack.c.b16 %v831, %v827
  %v1232 = vpack.c.b16 %v836, %v832
  %v1233 = vpack.c.b16 %v837, %v833
  %v1234 = vpack.c.b16 %v838, %v834
  %v1235 = vpack.c.b16 %v839, %v835
  %v1236 = vpack.c.b16 %v844, %v840
  %v1237 = vpack.c.b16 %v845, %v841
  %v1238 = vpack.c.b16 %v846, %v842
  %v1239 = vpack.c.b16 %v847, %v843
  %v1240 = vpack.c.b16 %v852, %v848
  %v1241 = vpack.c.b16 %v853, %v849
  %v1242 = vpack.c.b16 %v854, %v850
  %v1243 = vpack.c.b16 %v855, %v851
  %v1244 = vpack.c.b16 %v860, %v856
  %v1245 = vpack.c.b16 %v861, %v857
  %v1246 = vpack.c.b16 %v862, %v858
  %v1247 = vpack.c.b16 %v863, %v859
  %v1248 = vpack.c.b16 %v868, %v864
  %v1249 = vpack.c.b16 %v869, %v865
  %v1250 = vpack.c.b16 %v870, %v866
  %v1251 = vpack.c.b16 %v871, %v867
  %v1252 = vpack.c.b16 %v876, %v872
  %v1253 = vpack.c.b16 %v877, %v873
  %v1254 = vpack.c.b16 %v878, %v874
  %v1255 = vpack.c.b16 %v879, %v875
  %v1256 = vpack.c.b16 %v884, %v880
  %v1257 = vpack.c.b16 %v885, %v881
  %v1258 = vpack.c.b16 %v886, %v882
  %v1259 = vpack.c.b16 %v887, %v883
  %v1260 = vpack.c.b16 %v892, %v888
  %v1261 = vpack.c.b16 %v893, %v889
  %v1262 = vpack.c.b16 %v894, %v890
  %v1263 = vpack.c.b16 %v895, %v891
  %v1264 = vpack.c.b16 %v900, %v896
  %v1265 = vpack.c.b16 %v901, %v897
  %v1266 = vpack.c.b16 %v902, %v898
  %v1267 = vpack.c.b16 %v903, %v899
  %v1268 = vpack.c.b16 %v908, %v904
  %v1269 = vpack.c.b16 %v909, %v905
  %v1270 = vpack.c.b16 %v910, %v906
  %v1271 = vpack.c.b16 %v911, %v907
  %v1272 = vpack.c.b16 %v916, %v912
  %v1273 = vpack.c.b16 %v917, %v913
  %v1274 = vpack.c.b16 %v918, %v914
  %v1275 = vpack.c.b16 %v919, %v915
  %v1276 = vpack.c.b16 %v924, %v920
  %v1277 = vpack.c.b16 %v925, %v921
  %v1278 = vpack.c.b16 %v926, %v922
  %v1279 = vpack.c.b16 %v927, %v923
  %v1280 = vpack.c.b16 %v932, %v928
  %v1281 = vpack.c.b16 %v933, %v929
  %v1282 = vpack.c.b16 %v934, %v930
  %v1283 = vpack.c.b16 %v935, %v931
  %v1284 = vpack.c.b16 %v940, %v936
  %v1285 = vpack.c.b16 %v941, %v937
  %v1286 = vpack.c.b16 %v942, %v938
  %v1287 = vpack.c.b16 %v943, %v939
  %v1288 = vpack.c.b16 %v948, %v944
  %v1289 = vpack.c.b16 %v949, %v945
  %v1290 = vpack.c.b16 %v950, %v946
  %v1291 = vpack.c.b16 %v951, %v947
  %v1292 = vpack.c.b16 %v956, %v952
  %v1293 = vpack.c.b16 %v957, %v953
  %v1294 = vpack.c.b16 %v958, %v954
  %v1295 = vpack.c.b16 %v959, %v955
  %v1296 = vpack.c.b16 %v964, %v960
  %v1297 = vpack.c.b16 %v965, %v961
  %v1298 = vpack.c.b16 %v966, %v962
  %v1299 = vpack.c.b16 %v967, %v963
  %v1300 = vpack.c.b16 %v972, %v968
  %v1301 = vpack.c.b16 %v973, %v969
  %v1302 = vpack.c.b16 %v974, %v970
  %v1303 = vpack.c.b16 %v975, %v971
  %v1304 = vpack.c.b16 %v980, %v976
  %v1305 = vpack.c.b16 %v981, %v977
  %v1306 = vpack.c.b16 %v982, %v978
  %v1307 = vpack.c.b16 %v983, %v979
  %v1308 = vpack.c.b16 %v988, %v984
  %v1309 = vpack.c.b16 %v989, %v985
  %v1310 = vpack.c.b16 %v990, %v986
  %v1311 = vpack.c.b16 %v991, %v987
  %v1312 = vpack.c.b16 %v996, %v992
  %v1313 = vpack.c.b16 %v997, %v993
  %v1314 = vpack.c.b16 %v998, %v994
  %v1315 = vpack.c.b16 %v999, %v995
  %v1316 = vpack.c.b16 %v1004, %v1000
  %v1317 = vpack.c.b16 %v1005, %v1001
  %v1318 = vpack.c.b16 %v1006, %v1002
  %v1319 = vpack.c.b16 %v1007, %v1003
  %v1320 = vpack.c.b16 %v1012, %v1008
  %v1321 = vpack.c.b16 %v1013, %v1009
  %v1322 = vpack.c.b16 %v1014, %v1010
  %v1323 = vpack.c.b16 %v1015, %v1011
  %v1324 = vpack.c.b16 %v1020, %v1016
  %v1325 = vpack.c.b16 %v1021, %v1017
  %v1326 = vpack.c.b16 %v1022, %v1018
  %v1327 = vpack.c.b16 %v1023, %v1019
  %v1328 = vpack.c.b16 %v1028, %v1024
  %v1329 = vpack.c.b16 %v1029, %v1025
  %v1330 = vpack.c.b16 %v1030, %v1026
  %v1331 = vpack.c.b16 %v1031, %v1027
  %v1332 = vpack.c.b16 %v1036, %v1032
  %v1333 = vpack.c.b16 %v1037, %v1033
  %v1334 = vpack.c.b16 %v1038, %v1034
  %v1335 = vpack.c.b16 %v1039, %v1035
  %v1336 = vpack.c.b16 %v1044, %v1040
  %v1337 = vpack.c.b16 %v1045, %v1041
  %v1338 = vpack.c.b16 %v1046, %v1042
  %v1339 = vpack.c.b16 %v1047, %v1043
  %v1340 = vpack.c.b16 %v1052, %v1048
  %v1341 = vpack.c.b16 %v1053, %v1049
  %v1342 = vpack.c.b16 %v1054, %v1050
  %v1343 = vpack.c.b16 %v1055, %v1051
  %v1344 = vpack.c.b16 %v1060, %v1056
  %v1345 = vpack.c.b16 %v1061, %v1057
  %v1346 = vpack.c.b16 %v1062, %v1058
  %v1347 = vpack.c.b16 %v1063, %v1059
  %v1348 = vpack.c.b16 %v1068, %v1064
  %v1349 = vpack.c.b16 %v1069, %v1065
  %v1350 = vpack.c.b16 %v1070, %v1066
  %v1351 = vpack.c.b16 %v1071, %v1067
  %v1352 = vpack.c.b16 %v1076, %v1072
  %v1353 = vpack.c.b16 %v1077, %v1073
  %v1354 = vpack.c.b16 %v1078, %v1074
  %v1355 = vpack.c.b16 %v1079, %v1075
  %v1356 = vpack.c.b16 %v1084, %v1080
  %v1357 = vpack.c.b16 %v1085, %v1081
  %v1358 = vpack.c.b16 %v1086, %v1082
  %v1359 = vpack.c.b16 %v1087, %v1083
  %v1360 = vpack.c.b16 %v1092, %v1088
  %v1361 = vpack.c.b16 %v1093, %v1089
  %v1362 = vpack.c.b16 %v1094, %v1090
  %v1363 = vpack.c.b16 %v1095, %v1091
  %v1364 = vpack.c.b16 %v1100, %v1096
  %v1365 = vpack.c.b16 %v1101, %v1097
  %v1366 = vpack.c.b16 %v1102, %v1098
  %v1367 = vpack.c.b16 %v1103, %v1099
  %v1368 = vpack.c.b16 %v1108, %v1104
  %v1369 = vpack.c.b16 %v1109, %v1105
  %v1370 = vpack.c.b16 %v1110, %v1106
  %v1371 = vpack.c.b16 %v1111, %v1107
  %v1372 = vpack.c.b16 %v1116, %v1112
  %v1373 = vpack.c.b16 %v1117, %v1113
  %v1374 = vpack.c.b16 %v1118, %v1114
  %v1375 = vpack.c.b16 %v1119, %v1115
  %1632 = vmatprep.subr.bf16.mxu0 %v1121
  %1633 = vmatpush1.bf16.msra.mxu0 %v1120
  %1634 = vmatprep.subr.bf16.mxu0 %v1125
  %1635 = vmatpush1.bf16.msra.mxu0 %v1124
  %1636 = vmatprep.subr.bf16.mxu0 %v1129
  %1637 = vmatpush1.bf16.msra.mxu0 %v1128
  %1638 = vmatprep.subr.bf16.mxu0 %v1133
  %1639 = vmatpush1.bf16.msra.mxu0 %v1132
  %1640 = vmatprep.subr.bf16.mxu0 %v1137
  %1641 = vmatpush1.bf16.msra.mxu0 %v1136
  %1642 = vmatprep.subr.bf16.mxu0 %v1141
  %1643 = vmatpush1.bf16.msra.mxu0 %v1140
  %1644 = vmatprep.subr.bf16.mxu0 %v1145
  %1645 = vmatpush1.bf16.msra.mxu0 %v1144
  %1646 = vmatprep.subr.bf16.mxu0 %v1149
  %1647 = vmatpush1.bf16.msra.mxu0 %v1148
  %1648 = vmatprep.subr.bf16.mxu0 %v1153
  %1649 = vmatpush1.bf16.msra.mxu0 %v1152
  %1650 = vmatprep.subr.bf16.mxu0 %v1157
  %1651 = vmatpush1.bf16.msra.mxu0 %v1156
  %1652 = vmatprep.subr.bf16.mxu0 %v1161
  %1653 = vmatpush1.bf16.msra.mxu0 %v1160
  %1654 = vmatprep.subr.bf16.mxu0 %v1165
  %1655 = vmatpush1.bf16.msra.mxu0 %v1164
  %1656 = vmatprep.subr.bf16.mxu0 %v1169
  %1657 = vmatpush1.bf16.msra.mxu0 %v1168
  %1658 = vmatprep.subr.bf16.mxu0 %v1173
  %1659 = vmatpush1.bf16.msra.mxu0 %v1172
  %1660 = vmatprep.subr.bf16.mxu0 %v1177
  %1661 = vmatpush1.bf16.msra.mxu0 %v1176
  %1662 = vmatprep.subr.bf16.mxu0 %v1181
  %1663 = vmatpush1.bf16.msra.mxu0 %v1180
  %1664 = vmatprep.mubr.bf16.mxu0 %v67
  %1665 = vmatmul.mubr.bf16.gmra.mrb[0].mxu0 %v66
  %v1666 = vpop.f32.mrb[0].mxu0
  %v1667 = vadd.f32 %v335, %v1666
  %v1668 = vpop.f32.mrb[0].mxu0
  %v1669 = vadd.f32 %v339, %v1668
  %v1670 = vpop.f32.mrb[0].mxu0
  %v1671 = vpop.f32.mrb[0].mxu0
  %1672 = vdwg.mxu0
  %1673 = vmatprep.subr.bf16.mxu0 %v1185
  %1674 = vmatpush1.bf16.msra.mxu0 %v1184
  %1675 = vmatprep.subr.bf16.mxu0 %v1189
  %1676 = vmatpush1.bf16.msra.mxu0 %v1188
  %1677 = vmatprep.subr.bf16.mxu0 %v1193
  %1678 = vmatpush1.bf16.msra.mxu0 %v1192
  %1679 = vmatprep.subr.bf16.mxu0 %v1197
  %1680 = vmatpush1.bf16.msra.mxu0 %v1196
  %1681 = vmatprep.subr.bf16.mxu0 %v1201
  %1682 = vmatpush1.bf16.msra.mxu0 %v1200
  %1683 = vmatprep.subr.bf16.mxu0 %v1205
  %1684 = vmatpush1.bf16.msra.mxu0 %v1204
  %1685 = vmatprep.subr.bf16.mxu0 %v1209
  %1686 = vmatpush1.bf16.msra.mxu0 %v1208
  %1687 = vmatprep.subr.bf16.mxu0 %v1213
  %1688 = vmatpush1.bf16.msra.mxu0 %v1212
  %1689 = vmatprep.subr.bf16.mxu0 %v1217
  %1690 = vmatpush1.bf16.msra.mxu0 %v1216
  %1691 = vmatprep.subr.bf16.mxu0 %v1221
  %1692 = vmatpush1.bf16.msra.mxu0 %v1220
  %1693 = vmatprep.subr.bf16.mxu0 %v1225
  %1694 = vmatpush1.bf16.msra.mxu0 %v1224
  %1695 = vmatprep.subr.bf16.mxu0 %v1229
  %1696 = vmatpush1.bf16.msra.mxu0 %v1228
  %1697 = vmatprep.subr.bf16.mxu0 %v1233
  %1698 = vmatpush1.bf16.msra.mxu0 %v1232
  %1699 = vmatprep.subr.bf16.mxu0 %v1237
  %1700 = vmatpush1.bf16.msra.mxu0 %v1236
  %1701 = vmatprep.subr.bf16.mxu0 %v1241
  %1702 = vmatpush1.bf16.msra.mxu0 %v1240
  %1703 = vmatprep.subr.bf16.mxu0 %v1245
  %1704 = vmatpush1.bf16.msra.mxu0 %v1244
  %1705 = vmatprep.mubr.bf16.mxu0 %v69
  %1706 = vmatmul.mubr.bf16.gmra.mrb[0].mxu0 %v68
  %v1707 = vpop.f32.mrb[0].mxu0
  %v1708 = vadd.f32 %v1667, %v1707
  %v1709 = vpop.f32.mrb[0].mxu0
  %v1710 = vadd.f32 %v1669, %v1709
  %v1711 = vpop.f32.mrb[0].mxu0
  %v1712 = vpop.f32.mrb[0].mxu0
  %1713 = vdwg.mxu0
  %1714 = vmatprep.subr.bf16.mxu0 %v1249
  %1715 = vmatpush1.bf16.msra.mxu0 %v1248
  %1716 = vmatprep.subr.bf16.mxu0 %v1253
  %1717 = vmatpush1.bf16.msra.mxu0 %v1252
  %1718 = vmatprep.subr.bf16.mxu0 %v1257
  %1719 = vmatpush1.bf16.msra.mxu0 %v1256
  %1720 = vmatprep.subr.bf16.mxu0 %v1261
  %1721 = vmatpush1.bf16.msra.mxu0 %v1260
  %1722 = vmatprep.subr.bf16.mxu0 %v1265
  %1723 = vmatpush1.bf16.msra.mxu0 %v1264
  %1724 = vmatprep.subr.bf16.mxu0 %v1269
  %1725 = vmatpush1.bf16.msra.mxu0 %v1268
  %1726 = vmatprep.subr.bf16.mxu0 %v1273
  %1727 = vmatpush1.bf16.msra.mxu0 %v1272
  %1728 = vmatprep.subr.bf16.mxu0 %v1277
  %1729 = vmatpush1.bf16.msra.mxu0 %v1276
  %1730 = vmatprep.subr.bf16.mxu0 %v1281
  %1731 = vmatpush1.bf16.msra.mxu0 %v1280
  %1732 = vmatprep.subr.bf16.mxu0 %v1285
  %1733 = vmatpush1.bf16.msra.mxu0 %v1284
  %1734 = vmatprep.subr.bf16.mxu0 %v1289
  %1735 = vmatpush1.bf16.msra.mxu0 %v1288
  %1736 = vmatprep.subr.bf16.mxu0 %v1293
  %1737 = vmatpush1.bf16.msra.mxu0 %v1292
  %1738 = vmatprep.subr.bf16.mxu0 %v1297
  %1739 = vmatpush1.bf16.msra.mxu0 %v1296
  %1740 = vmatprep.subr.bf16.mxu0 %v1301
  %1741 = vmatpush1.bf16.msra.mxu0 %v1300
  %1742 = vmatprep.subr.bf16.mxu0 %v1305
  %1743 = vmatpush1.bf16.msra.mxu0 %v1304
  %1744 = vmatprep.subr.bf16.mxu0 %v1309
  %1745 = vmatpush1.bf16.msra.mxu0 %v1308
  %1746 = vmatprep.mubr.bf16.mxu0 %v71
  %1747 = vmatmul.mubr.bf16.gmra.mrb[0].mxu0 %v70
  %v1748 = vpop.f32.mrb[0].mxu0
  %v1749 = vadd.f32 %v1708, %v1748
  %v1750 = vpop.f32.mrb[0].mxu0
  %v1751 = vadd.f32 %v1710, %v1750
  %v1752 = vpop.f32.mrb[0].mxu0
  %v1753 = vpop.f32.mrb[0].mxu0
  %1754 = vdwg.mxu0
  %1755 = vmatprep.subr.bf16.mxu0 %v1313
  %1756 = vmatpush1.bf16.msra.mxu0 %v1312
  %1757 = vmatprep.subr.bf16.mxu0 %v1317
  %1758 = vmatpush1.bf16.msra.mxu0 %v1316
  %1759 = vmatprep.subr.bf16.mxu0 %v1321
  %1760 = vmatpush1.bf16.msra.mxu0 %v1320
  %1761 = vmatprep.subr.bf16.mxu0 %v1325
  %1762 = vmatpush1.bf16.msra.mxu0 %v1324
  %1763 = vmatprep.subr.bf16.mxu0 %v1329
  %1764 = vmatpush1.bf16.msra.mxu0 %v1328
  %1765 = vmatprep.subr.bf16.mxu0 %v1333
  %1766 = vmatpush1.bf16.msra.mxu0 %v1332
  %1767 = vmatprep.subr.bf16.mxu0 %v1337
  %1768 = vmatpush1.bf16.msra.mxu0 %v1336
  %1769 = vmatprep.subr.bf16.mxu0 %v1341
  %1770 = vmatpush1.bf16.msra.mxu0 %v1340
  %1771 = vmatprep.subr.bf16.mxu0 %v1345
  %1772 = vmatpush1.bf16.msra.mxu0 %v1344
  %1773 = vmatprep.subr.bf16.mxu0 %v1349
  %1774 = vmatpush1.bf16.msra.mxu0 %v1348
  %1775 = vmatprep.subr.bf16.mxu0 %v1353
  %1776 = vmatpush1.bf16.msra.mxu0 %v1352
  %1777 = vmatprep.subr.bf16.mxu0 %v1357
  %1778 = vmatpush1.bf16.msra.mxu0 %v1356
  %1779 = vmatprep.subr.bf16.mxu0 %v1361
  %1780 = vmatpush1.bf16.msra.mxu0 %v1360
  %1781 = vmatprep.subr.bf16.mxu0 %v1365
  %1782 = vmatpush1.bf16.msra.mxu0 %v1364
  %1783 = vmatprep.subr.bf16.mxu0 %v1369
  %1784 = vmatpush1.bf16.msra.mxu0 %v1368
  %1785 = vmatprep.subr.bf16.mxu0 %v1373
  %1786 = vmatpush1.bf16.msra.mxu0 %v1372
  %1787 = vmatprep.mubr.bf16.mxu0 %v73
  %1788 = vmatmul.mubr.bf16.gmra.mrb[0].mxu0 %v72
  %v1789 = vpop.f32.mrb[0].mxu0
  %v1790 = vadd.f32 %v1749, %v1789
  %v1791 = vpop.f32.mrb[0].mxu0
  %v1792 = vadd.f32 %v1751, %v1791
  %v1793 = vpop.f32.mrb[0].mxu0
  %v1794 = vpop.f32.mrb[0].mxu0
  %1795 = vdwg.mxu0
  %1796 = vmatprep.subr.bf16.mxu0 %v1123
  %1797 = vmatpush1.bf16.msra.mxu0 %v1122
  %1798 = vmatprep.subr.bf16.mxu0 %v1127
  %1799 = vmatpush1.bf16.msra.mxu0 %v1126
  %1800 = vmatprep.subr.bf16.mxu0 %v1131
  %1801 = vmatpush1.bf16.msra.mxu0 %v1130
  %1802 = vmatprep.subr.bf16.mxu0 %v1135
  %1803 = vmatpush1.bf16.msra.mxu0 %v1134
  %1804 = vmatprep.subr.bf16.mxu0 %v1139
  %1805 = vmatpush1.bf16.msra.mxu0 %v1138
  %1806 = vmatprep.subr.bf16.mxu0 %v1143
  %1807 = vmatpush1.bf16.msra.mxu0 %v1142
  %1808 = vmatprep.subr.bf16.mxu0 %v1147
  %1809 = vmatpush1.bf16.msra.mxu0 %v1146
  %1810 = vmatprep.subr.bf16.mxu0 %v1151
  %1811 = vmatpush1.bf16.msra.mxu0 %v1150
  %1812 = vmatprep.subr.bf16.mxu0 %v1155
  %1813 = vmatpush1.bf16.msra.mxu0 %v1154
  %1814 = vmatprep.subr.bf16.mxu0 %v1159
  %1815 = vmatpush1.bf16.msra.mxu0 %v1158
  %1816 = vmatprep.subr.bf16.mxu0 %v1163
  %1817 = vmatpush1.bf16.msra.mxu0 %v1162
  %1818 = vmatprep.subr.bf16.mxu0 %v1167
  %1819 = vmatpush1.bf16.msra.mxu0 %v1166
  %1820 = vmatprep.subr.bf16.mxu0 %v1171
  %1821 = vmatpush1.bf16.msra.mxu0 %v1170
  %1822 = vmatprep.subr.bf16.mxu0 %v1175
  %1823 = vmatpush1.bf16.msra.mxu0 %v1174
  %1824 = vmatprep.subr.bf16.mxu0 %v1179
  %1825 = vmatpush1.bf16.msra.mxu0 %v1178
  %1826 = vmatprep.subr.bf16.mxu0 %v1183
  %1827 = vmatpush1.bf16.msra.mxu0 %v1182
  %1828 = vmatprep.mubr.bf16.mxu0 %v67
  %1829 = vmatmul.mubr.bf16.gmra.mrb[0].mxu0 %v66
  %v1830 = vpop.f32.mrb[0].mxu0
  %v1831 = vadd.f32 %v343, %v1830
  %v1832 = vpop.f32.mrb[0].mxu0
  %v1833 = vadd.f32 %v347, %v1832
  %v1834 = vpop.f32.mrb[0].mxu0
  %v1835 = vpop.f32.mrb[0].mxu0
  %1836 = vdwg.mxu0
  %1837 = vmatprep.subr.bf16.mxu0 %v1187
  %1838 = vmatpush1.bf16.msra.mxu0 %v1186
  %1839 = vmatprep.subr.bf16.mxu0 %v1191
  %1840 = vmatpush1.bf16.msra.mxu0 %v1190
  %1841 = vmatprep.subr.bf16.mxu0 %v1195
  %1842 = vmatpush1.bf16.msra.mxu0 %v1194
  %1843 = vmatprep.subr.bf16.mxu0 %v1199
  %1844 = vmatpush1.bf16.msra.mxu0 %v1198
  %1845 = vmatprep.subr.bf16.mxu0 %v1203
  %1846 = vmatpush1.bf16.msra.mxu0 %v1202
  %1847 = vmatprep.subr.bf16.mxu0 %v1207
  %1848 = vmatpush1.bf16.msra.mxu0 %v1206
  %1849 = vmatprep.subr.bf16.mxu0 %v1211
  %1850 = vmatpush1.bf16.msra.mxu0 %v1210
  %1851 = vmatprep.subr.bf16.mxu0 %v1215
  %1852 = vmatpush1.bf16.msra.mxu0 %v1214
  %1853 = vmatprep.subr.bf16.mxu0 %v1219
  %1854 = vmatpush1.bf16.msra.mxu0 %v1218
  %1855 = vmatprep.subr.bf16.mxu0 %v1223
  %1856 = vmatpush1.bf16.msra.mxu0 %v1222
  %1857 = vmatprep.subr.bf16.mxu0 %v1227
  %1858 = vmatpush1.bf16.msra.mxu0 %v1226
  %1859 = vmatprep.subr.bf16.mxu0 %v1231
  %1860 = vmatpush1.bf16.msra.mxu0 %v1230
  %1861 = vmatprep.subr.bf16.mxu0 %v1235
  %1862 = vmatpush1.bf16.msra.mxu0 %v1234
  %1863 = vmatprep.subr.bf16.mxu0 %v1239
  %1864 = vmatpush1.bf16.msra.mxu0 %v1238
  %1865 = vmatprep.subr.bf16.mxu0 %v1243
  %1866 = vmatpush1.bf16.msra.mxu0 %v1242
  %1867 = vmatprep.subr.bf16.mxu0 %v1247
  %1868 = vmatpush1.bf16.msra.mxu0 %v1246
  %1869 = vmatprep.mubr.bf16.mxu0 %v69
  %1870 = vmatmul.mubr.bf16.gmra.mrb[0].mxu0 %v68
  %v1871 = vpop.f32.mrb[0].mxu0
  %v1872 = vadd.f32 %v1831, %v1871
  %v1873 = vpop.f32.mrb[0].mxu0
  %v1874 = vadd.f32 %v1833, %v1873
  %v1875 = vpop.f32.mrb[0].mxu0
  %v1876 = vpop.f32.mrb[0].mxu0
  %1877 = vdwg.mxu0
  %1878 = vmatprep.subr.bf16.mxu0 %v1251
  %1879 = vmatpush1.bf16.msra.mxu0 %v1250
  %1880 = vmatprep.subr.bf16.mxu0 %v1255
  %1881 = vmatpush1.bf16.msra.mxu0 %v1254
  %1882 = vmatprep.subr.bf16.mxu0 %v1259
  %1883 = vmatpush1.bf16.msra.mxu0 %v1258
  %1884 = vmatprep.subr.bf16.mxu0 %v1263
  %1885 = vmatpush1.bf16.msra.mxu0 %v1262
  %1886 = vmatprep.subr.bf16.mxu0 %v1267
  %1887 = vmatpush1.bf16.msra.mxu0 %v1266
  %1888 = vmatprep.subr.bf16.mxu0 %v1271
  %1889 = vmatpush1.bf16.msra.mxu0 %v1270
  %1890 = vmatprep.subr.bf16.mxu0 %v1275
  %1891 = vmatpush1.bf16.msra.mxu0 %v1274
  %1892 = vmatprep.subr.bf16.mxu0 %v1279
  %1893 = vmatpush1.bf16.msra.mxu0 %v1278
  %1894 = vmatprep.subr.bf16.mxu0 %v1283
  %1895 = vmatpush1.bf16.msra.mxu0 %v1282
  %1896 = vmatprep.subr.bf16.mxu0 %v1287
  %1897 = vmatpush1.bf16.msra.mxu0 %v1286
  %1898 = vmatprep.subr.bf16.mxu0 %v1291
  %1899 = vmatpush1.bf16.msra.mxu0 %v1290
  %1900 = vmatprep.subr.bf16.mxu0 %v1295
  %1901 = vmatpush1.bf16.msra.mxu0 %v1294
  %1902 = vmatprep.subr.bf16.mxu0 %v1299
  %1903 = vmatpush1.bf16.msra.mxu0 %v1298
  %1904 = vmatprep.subr.bf16.mxu0 %v1303
  %1905 = vmatpush1.bf16.msra.mxu0 %v1302
  %1906 = vmatprep.subr.bf16.mxu0 %v1307
  %1907 = vmatpush1.bf16.msra.mxu0 %v1306
  %1908 = vmatprep.subr.bf16.mxu0 %v1311
  %1909 = vmatpush1.bf16.msra.mxu0 %v1310
  %1910 = vmatprep.mubr.bf16.mxu0 %v71
  %1911 = vmatmul.mubr.bf16.gmra.mrb[0].mxu0 %v70
  %v1912 = vpop.f32.mrb[0].mxu0
  %v1913 = vadd.f32 %v1872, %v1912
  %v1914 = vpop.f32.mrb[0].mxu0
  %v1915 = vadd.f32 %v1874, %v1914
  %v1916 = vpop.f32.mrb[0].mxu0
  %v1917 = vpop.f32.mrb[0].mxu0
  %1918 = vdwg.mxu0
  %1919 = vmatprep.subr.bf16.mxu0 %v1315
  %1920 = vmatpush1.bf16.msra.mxu0 %v1314
  %1921 = vmatprep.subr.bf16.mxu0 %v1319
  %1922 = vmatpush1.bf16.msra.mxu0 %v1318
  %1923 = vmatprep.subr.bf16.mxu0 %v1323
  %1924 = vmatpush1.bf16.msra.mxu0 %v1322
  %1925 = vmatprep.subr.bf16.mxu0 %v1327
  %1926 = vmatpush1.bf16.msra.mxu0 %v1326
  %1927 = vmatprep.subr.bf16.mxu0 %v1331
  %1928 = vmatpush1.bf16.msra.mxu0 %v1330
  %1929 = vmatprep.subr.bf16.mxu0 %v1335
  %1930 = vmatpush1.bf16.msra.mxu0 %v1334
  %1931 = vmatprep.subr.bf16.mxu0 %v1339
  %1932 = vmatpush1.bf16.msra.mxu0 %v1338
  %1933 = vmatprep.subr.bf16.mxu0 %v1343
  %1934 = vmatpush1.bf16.msra.mxu0 %v1342
  %1935 = vmatprep.subr.bf16.mxu0 %v1347
  %1936 = vmatpush1.bf16.msra.mxu0 %v1346
  %1937 = vmatprep.subr.bf16.mxu0 %v1351
  %1938 = vmatpush1.bf16.msra.mxu0 %v1350
  %1939 = vmatprep.subr.bf16.mxu0 %v1355
  %1940 = vmatpush1.bf16.msra.mxu0 %v1354
  %1941 = vmatprep.subr.bf16.mxu0 %v1359
  %1942 = vmatpush1.bf16.msra.mxu0 %v1358
  %1943 = vmatprep.subr.bf16.mxu0 %v1363
  %1944 = vmatpush1.bf16.msra.mxu0 %v1362
  %1945 = vmatprep.subr.bf16.mxu0 %v1367
  %1946 = vmatpush1.bf16.msra.mxu0 %v1366
  %1947 = vmatprep.subr.bf16.mxu0 %v1371
  %1948 = vmatpush1.bf16.msra.mxu0 %v1370
  %1949 = vmatprep.subr.bf16.mxu0 %v1375
  %1950 = vmatpush1.bf16.msra.mxu0 %v1374
  %1951 = vmatprep.mubr.bf16.mxu0 %v73
  %1952 = vmatmul.mubr.bf16.gmra.mrb[0].mxu0 %v72
  %v1953 = vpop.f32.mrb[0].mxu0
  %v1954 = vadd.f32 %v1913, %v1953
  %v1955 = vpop.f32.mrb[0].mxu0
  %v1956 = vadd.f32 %v1915, %v1955
  %v1957 = vpop.f32.mrb[0].mxu0
  %v1958 = vpop.f32.mrb[0].mxu0
  %1959 = vdwg.mxu0
  %v1960 = vmax.f32 %v1790, 0.0
  %v1961 = vmax.f32 %v1792, 0.0
  %v1962 = vmax.f32 %v1954, 0.0
  %v1963 = vmax.f32 %v1956, 0.0
  %v1968 = vcombine.low %v1960, %v1961
  %v1969 = vcombine.low %v1962, %v1963
  %v1971 = vunpack.c.l.s4 1983009808
  %v1972 = vunpack.c.0.s8 %v1971
  %v1973 = vlaneseq
  %v1974 = vshrl.u32 %v1973, 7
  %v1975 = vsub.s32 %v1972, %v1974
  %v1976 = vrot.slane %v1968, %v1975
  %v1978 = vunpack.c.l.s4 1983009808
  %v1979 = vunpack.c.0.s8 %v1978
  %v1980 = vlaneseq
  %v1981 = vshrl.u32 %v1980, 7
  %v1982 = vsub.s32 %v1979, %v1981
  %v1983 = vrot.slane %v1969, %v1982
  %v1984 = vcombine.low %v1976, %v1983
  %1986 = vst [vmem:[%s5] sm:$0xff] %v1984
  // Predicated region
  $region22: #{forward.14} parent=0 // pred_check
    _
  $region23: #{forward.14} parent=0 // pred_check_branch
    %1988 = sbr.rel (0) target = $region25
  $region24: #{forward.14} parent=0 // pred_region
    _
  $region25: #{forward.14} parent=0 // pred_fallthru
    _
  // Predicated region
  $region26: #{forward.14} parent=0 // pred_check
    _
  $region27: #{forward.14} parent=0 // pred_check_branch
    %1990 = sbr.rel (0) target = $region29
  $region28: #{forward.14} parent=0 // pred_region
    _
  $region29: #{forward.14} parent=0 // pred_fallthru
    _

// kernel: forward.18
$region0: #{forward.18}
  #allocation0 [shape = 'u32[]', space=smem, size = 0x4, offset = 0x4, fixed_abs, tag = 'smem constant byte address 0x4 - core index']
  #allocation1 [shape = 'u32[144,128]{1,0:T(1,128)}', space=vmem, size = 0x12000, scoped, tag = 'internal scratch']
  %s0 = inlined_call_operand.vmem [shape: f32[64,64], index: 0, kind: input, shape index: {}]
  %s1 = inlined_call_operand.vmem [shape: bf16[64,64], index: 1, kind: input, shape index: {}]
  %s2 = inlined_call_operand.vmem [shape: f32[1,64], index: 2, kind: input, shape index: {}]
  %s3 = inlined_call_operand.vmem [shape: f32[1,64], index: 3, kind: input, shape index: {}]
  %s4 = inlined_call_operand.vmem [shape: f32[1,64], index: 4, kind: input, shape index: {}]
  %s5 = inlined_call_operand.vmem [shape: f32[64,64], index: 5, kind: output, shape index: {0}]
  %s6 = inlined_call_operand.vmem [shape: f32[1,1,64], index: 6, kind: output, shape index: {1}]
  %s7 = inlined_call_operand.vmem [shape: f32[1,1,64], index: 7, kind: output, shape index: {2}]
  %8 = xla_tuple %s5, %s6, %s7
  %s9 = sld [smem:[#allocation0]]
  $region46: #{forward.18} parent=0
    _
  %s11 = ssub.s32 1, %s9
  %s12 = scalar_select 0, %s11, %s9
  // Predicated region
  $region2: #{forward.18} parent=0 // pred_check
    _
  $region3: #{forward.18} parent=0 // pred_check_branch
    %14 = sbr.rel (0) target = $region5
  $region4: #{forward.18} parent=0 // pred_region
    _
  $region5: #{forward.18} parent=0 // pred_fallthru
    _
  // Predicated region
  $region6: #{forward.18} parent=0 // pred_check
    _
  $region7: #{forward.18} parent=0 // pred_check_branch
    %16 = sbr.rel (0) target = $region9
  $region8: #{forward.18} parent=0 // pred_region
    _
  $region9: #{forward.18} parent=0 // pred_fallthru
    _
  // Predicated region
  $region10: #{forward.18} parent=0 // pred_check
    _
  $region11: #{forward.18} parent=0 // pred_check_branch
    %18 = sbr.rel (0) target = $region13
  $region12: #{forward.18} parent=0 // pred_region
    _
  $region13: #{forward.18} parent=0 // pred_fallthru
    _
  // Predicated region
  $region14: #{forward.18} parent=0 // pred_check
    _
  $region15: #{forward.18} parent=0 // pred_check_branch
    %20 = sbr.rel (0) target = $region17
  $region16: #{forward.18} parent=0 // pred_region
    _
  $region17: #{forward.18} parent=0 // pred_fallthru
    _
  // Predicated region
  $region18: #{forward.18} parent=0 // pred_check
    _
  $region19: #{forward.18} parent=0 // pred_check_branch
    %22 = sbr.rel (0) target = $region21
  $region20: #{forward.18} parent=0 // pred_region
    _
  $region21: #{forward.18} parent=0 // pred_fallthru
    _
  %v24 = vld [vmem:[%s0] sm:$0xff]
  %v25 = vld [vmem:[%s0 + $0x8] sm:$0xff]
  %v26 = vld [vmem:[%s0 + $0x10] sm:$0xff]
  %v27 = vld [vmem:[%s0 + $0x18] sm:$0xff]
  %v28 = vld [vmem:[%s0 + $0x20] sm:$0xff]
  %v29 = vld [vmem:[%s0 + $0x28] sm:$0xff]
  %v30 = vld [vmem:[%s0 + $0x30] sm:$0xff]
  %v31 = vld [vmem:[%s0 + $0x38] sm:$0xff]
  %v32 = vld [vmem:[%s3] sm:$0x1]
  %v34 = vlaneseq
  %v35 = vshrl.u32 %v34, 7
  %v36 = vsub.s32 0, %v35
  %v37 = vrot.slane %v32, %v36
  %v39 = vmul.f32 %v24, %v37
  %v40 = vmul.f32 %v25, %v37
  %v41 = vmul.f32 %v26, %v37
  %v42 = vmul.f32 %v27, %v37
  %v43 = vmul.f32 %v28, %v37
  %v44 = vmul.f32 %v29, %v37
  %v45 = vmul.f32 %v30, %v37
  %v46 = vmul.f32 %v31, %v37
  %v47 = vld [vmem:[%s4] sm:$0x1]
  %v49 = vlaneseq
  %v50 = vshrl.u32 %v49, 7
  %v51 = vsub.s32 0, %v50
  %v52 = vrot.slane %v47, %v51
  %v54 = vadd.f32 %v39, %v52
  %v55 = vadd.f32 %v40, %v52
  %v56 = vadd.f32 %v41, %v52
  %v57 = vadd.f32 %v42, %v52
  %v58 = vadd.f32 %v43, %v52
  %v59 = vadd.f32 %v44, %v52
  %v60 = vadd.f32 %v45, %v52
  %v61 = vadd.f32 %v46, %v52
  %v62 = vmax.f32 %v54, 0.0
  %v63 = vmax.f32 %v55, 0.0
  %v64 = vmax.f32 %v56, 0.0
  %v65 = vmax.f32 %v57, 0.0
  %v66 = vmax.f32 %v58, 0.0
  %v67 = vmax.f32 %v59, 0.0
  %v68 = vmax.f32 %v60, 0.0
  %v69 = vmax.f32 %v61, 0.0
  %v70 = vpack.c.bf16 %v63, %v62
  %v71 = vpack.c.bf16 %v65, %v64
  %v72 = vpack.c.bf16 %v67, %v66
  %v73 = vpack.c.bf16 %v69, %v68
  %v74 = vld [vmem:[%s1] sm:$0xf]
  %v75 = vld [vmem:[%s1 + $0x4] sm:$0xf]
  %v76 = vld [vmem:[%s1 + $0x8] sm:$0xf]
  %v77 = vld [vmem:[%s1 + $0xc] sm:$0xf]
  %v78 = vld [vmem:[%s1 + $0x10] sm:$0xf]
  %v79 = vld [vmem:[%s1 + $0x14] sm:$0xf]
  %v80 = vld [vmem:[%s1 + $0x18] sm:$0xf]
  %v81 = vld [vmem:[%s1 + $0x1c] sm:$0xf]
  %v82 = vld [vmem:[%s2] sm:$0x1]
  %v84 = vlaneseq
  %v85 = vshrl.u32 %v84, 7
  %v86 = vsub.s32 0, %v85
  %v87 = vrot.slane %v82, %v86
  %v97 = vunpack.c.l.b16 %v74
  %v98 = vunpack.c.l.b16 %v75
  %v99 = vunpack.c.l.b16 %v76
  %v100 = vunpack.c.l.b16 %v77
  %v101 = vunpack.c.l.b16 %v78
  %v102 = vunpack.c.l.b16 %v79
  %v103 = vunpack.c.l.b16 %v80
  %v104 = vunpack.c.l.b16 %v81
  %v105 = vpack.c.b16 %v98, %v97
  %v106 = vpack.c.b16 %v100, %v99
  %v107 = vpack.c.b16 %v102, %v101
  %v108 = vpack.c.b16 %v104, %v103
  %vm113 = vcmask 523264
  %v115 = vsel %vm113, %v70, 0
  %v118 = vsel %vm113, %v71, 0
  %v121 = vsel %vm113, %v72, 0
  %v124 = vsel %vm113, %v73, 0
  %126 = vmatprep.subr.bf16.mxu0 0
  %127 = vmatpush1.bf16.msra.mxu0 %v105
  %128 = vmatprep.subr.bf16.mxu0 0
  %129 = vmatpush1.bf16.msra.mxu0 %v106
  %130 = vmatprep.subr.bf16.mxu0 0
  %131 = vmatpush1.bf16.msra.mxu0 %v107
  %132 = vmatprep.subr.bf16.mxu0 0
  %133 = vmatpush1.bf16.msra.mxu0 %v108
  %134 = vmatprep.subr.bf16.mxu0 0
  %135 = vmatpush1.bf16.msra.mxu0 0
  %136 = vmatprep.subr.bf16.mxu0 0
  %137 = vmatpush1.bf16.msra.mxu0 0
  %138 = vmatprep.subr.bf16.mxu0 0
  %139 = vmatpush1.bf16.msra.mxu0 0
  %140 = vmatprep.subr.bf16.mxu0 0
  %141 = vmatpush1.bf16.msra.mxu0 0
  %142 = vmatprep.subr.bf16.mxu0 0
  %143 = vmatpush1.bf16.msra.mxu0 0
  %144 = vmatprep.subr.bf16.mxu0 0
  %145 = vmatpush1.bf16.msra.mxu0 0
  %146 = vmatprep.subr.bf16.mxu0 0
  %147 = vmatpush1.bf16.msra.mxu0 0
  %148 = vmatprep.subr.bf16.mxu0 0
  %149 = vmatpush1.bf16.msra.mxu0 0
  %150 = vmatprep.subr.bf16.mxu0 0
  %151 = vmatpush1.bf16.msra.mxu0 0
  %152 = vmatprep.subr.bf16.mxu0 0
  %153 = vmatpush1.bf16.msra.mxu0 0
  %154 = vmatprep.subr.bf16.mxu0 0
  %155 = vmatpush1.bf16.msra.mxu0 0
  %156 = vmatprep.subr.bf16.mxu0 0
  %157 = vmatpush1.bf16.msra.mxu0 0
  %158 = vmatprep.mubr.bf16.mxu0 0
  %159 = vmatmul.mubr.bf16.gmra.mrb[0].mxu0 %v115
  %v160 = vpop.f32.mrb[0].mxu0
  %v161 = vadd.f32 %v87, %v160
  %v162 = vpop.f32.mrb[0].mxu0
  %v163 = vpop.f32.mrb[0].mxu0
  %v164 = vadd.f32 %v87, %v163
  %v165 = vpop.f32.mrb[0].mxu0
  %166 = vmatprep.mubr.bf16.mxu0 0
  %167 = vmatmul.mubr.bf16.gmra.mrb[0].mxu0 %v118
  %v168 = vpop.f32.mrb[0].mxu0
  %v169 = vadd.f32 %v87, %v168
  %v170 = vpop.f32.mrb[0].mxu0
  %v171 = vpop.f32.mrb[0].mxu0
  %v172 = vadd.f32 %v87, %v171
  %v173 = vpop.f32.mrb[0].mxu0
  %174 = vmatprep.mubr.bf16.mxu0 0
  %175 = vmatmul.mubr.bf16.gmra.mrb[0].mxu0 %v121
  %v176 = vpop.f32.mrb[0].mxu0
  %v177 = vadd.f32 %v87, %v176
  %v178 = vpop.f32.mrb[0].mxu0
  %v179 = vpop.f32.mrb[0].mxu0
  %v180 = vadd.f32 %v87, %v179
  %v181 = vpop.f32.mrb[0].mxu0
  %182 = vmatprep.mubr.bf16.mxu0 0
  %183 = vmatmul.mubr.bf16.gmra.mrb[0].mxu0 %v124
  %v184 = vpop.f32.mrb[0].mxu0
  %v185 = vadd.f32 %v87, %v184
  %v186 = vpop.f32.mrb[0].mxu0
  %v187 = vpop.f32.mrb[0].mxu0
  %v188 = vadd.f32 %v87, %v187
  %v189 = vpop.f32.mrb[0].mxu0
  %190 = vdwg.mxu0
  %191 = vst.msk [vmem:[%s5] sm:$0xff] %vm113, %v161
  %192 = vst.msk [vmem:[%s5 + $0x8] sm:$0xff] %vm113, %v164
  %193 = vst.msk [vmem:[%s5 + $0x10] sm:$0xff] %vm113, %v169
  %194 = vst.msk [vmem:[%s5 + $0x18] sm:$0xff] %vm113, %v172
  %195 = vst.msk [vmem:[%s5 + $0x20] sm:$0xff] %vm113, %v177
  %196 = vst.msk [vmem:[%s5 + $0x28] sm:$0xff] %vm113, %v180
  %197 = vst.msk [vmem:[%s5 + $0x30] sm:$0xff] %vm113, %v185
  %198 = vst.msk [vmem:[%s5 + $0x38] sm:$0xff] %vm113, %v188
  %v199 = vsel %vm113, %v161, 0.0
  %v200 = vsel %vm113, %v164, 0.0
  %v201 = vadd.f32 %v199, %v200
  %v202 = vsel %vm113, %v169, 0.0
  %v203 = vadd.f32 %v201, %v202
  %v204 = vsel %vm113, %v172, 0.0
  %v205 = vadd.f32 %v203, %v204
  %v206 = vsel %vm113, %v177, 0.0
  %v207 = vadd.f32 %v205, %v206
  %v208 = vsel %vm113, %v180, 0.0
  %v209 = vadd.f32 %v207, %v208
  %v210 = vsel %vm113, %v185, 0.0
  %v211 = vadd.f32 %v209, %v210
  %v212 = vsel %vm113, %v188, 0.0
  %v213 = vadd.f32 %v211, %v212
  %v214 = vrot.slane %v213, 4
  %v215 = vadd.f32 %v213, %v214
  %v216 = vrot.slane %v215, 2
  %v217 = vadd.f32 %v215, %v216
  %v218 = vrot.slane %v217, 1
  %v219 = vadd.f32 %v217, %v218
  %vm220 = vcmask 516096
  %221 = vst.msk [vmem:[%s6] sm:$0x1] %vm220, %v219
  %v222 = vmul.f32 %v161, %v161
  %v223 = vmul.f32 %v164, %v164
  %v224 = vmul.f32 %v169, %v169
  %v225 = vmul.f32 %v172, %v172
  %v226 = vmul.f32 %v177, %v177
  %v227 = vmul.f32 %v180, %v180
  %v228 = vmul.f32 %v185, %v185
  %v229 = vmul.f32 %v188, %v188
  %v230 = vsel %vm113, %v222, 0.0
  %v231 = vsel %vm113, %v223, 0.0
  %v232 = vadd.f32 %v230, %v231
  %v233 = vsel %vm113, %v224, 0.0
  %v234 = vadd.f32 %v232, %v233
  %v235 = vsel %vm113, %v225, 0.0
  %v236 = vadd.f32 %v234, %v235
  %v237 = vsel %vm113, %v226, 0.0
  %v238 = vadd.f32 %v236, %v237
  %v239 = vsel %vm113, %v227, 0.0
  %v240 = vadd.f32 %v238, %v239
  %v241 = vsel %vm113, %v228, 0.0
  %v242 = vadd.f32 %v240, %v241
  %v243 = vsel %vm113, %v229, 0.0
  %v244 = vadd.f32 %v242, %v243
  %v245 = vrot.slane %v244, 4
  %v246 = vadd.f32 %v244, %v245
  %v247 = vrot.slane %v246, 2
  %v248 = vadd.f32 %v246, %v247
  %v249 = vrot.slane %v248, 1
  %v250 = vadd.f32 %v248, %v249
  %251 = vst.msk [vmem:[%s7] sm:$0x1] %vm220, %v250
  // Predicated region
  $region22: #{forward.18} parent=0 // pred_check
    _
  $region23: #{forward.18} parent=0 // pred_check_branch
    %253 = sbr.rel (0) target = $region25
  $region24: #{forward.18} parent=0 // pred_region
    _
  $region25: #{forward.18} parent=0 // pred_fallthru
    _
  // Predicated region
  $region26: #{forward.18} parent=0 // pred_check
    _
  $region27: #{forward.18} parent=0 // pred_check_branch
    %255 = sbr.rel (0) target = $region29
  $region28: #{forward.18} parent=0 // pred_region
    _
  $region29: #{forward.18} parent=0 // pred_fallthru
    _
  // Predicated region
  $region30: #{forward.18} parent=0 // pred_check
    _
  $region31: #{forward.18} parent=0 // pred_check_branch
    %257 = sbr.rel (0) target = $region33
  $region32: #{forward.18} parent=0 // pred_region
    _
  $region33: #{forward.18} parent=0 // pred_fallthru
    _
  // Predicated region
  $region34: #{forward.18} parent=0 // pred_check
    _
  $region35: #{forward.18} parent=0 // pred_check_branch
    %259 = sbr.rel (0) target = $region37
  $region36: #{forward.18} parent=0 // pred_region
    _
  $region37: #{forward.18} parent=0 // pred_fallthru
    _
  // Predicated region
  $region38: #{forward.18} parent=0 // pred_check
    _
  $region39: #{forward.18} parent=0 // pred_check_branch
    %261 = sbr.rel (0) target = $region41
  $region40: #{forward.18} parent=0 // pred_region
    _
  $region41: #{forward.18} parent=0 // pred_fallthru
    _
  // Predicated region
  $region42: #{forward.18} parent=0 // pred_check
    _
  $region43: #{forward.18} parent=0 // pred_check_branch
    %263 = sbr.rel (0) target = $region45
  $region44: #{forward.18} parent=0 // pred_region
    _
  $region45: #{forward.18} parent=0 // pred_fallthru
    _

// kernel: forward.17
$region0: #{forward.17}
  #allocation0 [shape = 'u32[]', space=smem, size = 0x4, offset = 0x4, fixed_abs, tag = 'smem constant byte address 0x4 - core index']
  #allocation1 [shape = 'u32[144,128]{1,0:T(1,128)}', space=vmem, size = 0x12000, scoped, tag = 'internal scratch']
  %s0 = inlined_call_operand.vmem [shape: f32[2,32,3], index: 0, kind: input, shape index: {}]
  %s1 = inlined_call_operand.vmem [shape: f32[2,3,64], index: 1, kind: input, shape index: {}]
  %s2 = inlined_call_operand.vmem [shape: f32[1,64], index: 2, kind: input, shape index: {}]
  %s3 = inlined_call_operand.vmem [shape: f32[2,32,64], index: 3, kind: output, shape index: {0}]
  %s4 = inlined_call_operand.vmem [shape: f32[2,1,1,64], index: 4, kind: output, shape index: {1}]
  %s5 = inlined_call_operand.vmem [shape: f32[2,1,1,64], index: 5, kind: output, shape index: {2}]
  %6 = xla_tuple %s3, %s4, %s5
  %s7 = sld [smem:[#allocation0]]
  $region61: #{forward.17} parent=0
    _
  %s9 = ssub.s32 1, %s7
  %s10 = scalar_select 0, %s9, %s7
  loop: start=0, step=1, limit=4
  $region2: #{forward.17} parent=0 // loop_pre_header
    _
  $region3: #{forward.17} parent=0 // loop_header
    %s12 = sphi 0, %s16
    %p13 = scmp.ge.s32.totalorder %s12, 4
    %s19 = sphi 0, %s31
    %s20 = sphi 0, %s27
    %s21 = sphi 0, %s19
    %s22 = sphi 0, %s20
    %s23 = sphi 0, %s21
    %s24 = sphi 0, %s22
    %s36 = sphi 0, %s38
    %s39 = sphi 0, %s36
    %s40 = sphi 0, %s39
    %s56 = sphi 0, %s40
    %s62 = sphi 0, %s64
    %s65 = sphi 0, %s62
    %s66 = sphi 0, %s65
    %s82 = sphi 0, %s66
    %s86 = sphi 0, %s86
    %s88 = sphi 0, %s86
    %s89 = sphi 0, %s88
    %s103 = sphi 0, %s89
    %s111 = sphi 0, %s113
    %s114 = sphi 0, %s111
    %s115 = sphi 0, %s114
    %s131 = sphi 0, %s115
    %s139 = sphi 0, %s141
    %s142 = sphi 0, %s139
    %s143 = sphi 0, %s142
    %s159 = sphi 0, %s143
    %s167 = sphi 0, %s169
    %s170 = sphi 0, %s167
    %s171 = sphi 0, %s170
    %s187 = sphi 0, %s171
  $region4: #{forward.17} parent=0 // loop_header_branch
    %15 = sbr.rel (%p13) target = $region8
  $region5: #{forward.17} parent=0 // loop_body
    %s17 = ssub.s32 %s12, 1
    %s18 = ssub.s32 %s12, 2
    %s25 = sadd.s32 1, %s20
    %p26 = scmp.ge.s32.totalorder %s25, 1
    %s27 = scalar_select %p26, 0, %s25
    %s28 = sadd.s32 1, %s19
    %s29 = scalar_select %p26, %s28, %s19
    %p30 = scmp.ge.s32.totalorder %s29, 2
    %s31 = scalar_select %p30, 0, %s29
    %s32 = ssub.s32 %s19, %s31
    %s33 = ssub.s32 %s20, %s27
    %s34 = sor.u32 %s32, %s33
    %p35 = scmp.eq.s32.totalorder %s34, 0
    %s37 = sadd.s32 %s36, 1
    %s38 = scalar_select %p35, %s36, %s37
    %p41 = pneg %p35
    %p42 = scmp.eq.s32.totalorder %s12, 1
    %p43 = por %p41, %p42
    %p44 = scmp.ne.s32.totalorder %s36, %s39
    %p45 = scmp.eq.s32.totalorder %s12, 0
    %p46 = por %p44, %p45
    %p47 = scmp.ne.s32.totalorder %s36, %s39
    %p48 = scmp.eq.s32.totalorder %s17, 1
    %p49 = por %p47, %p48
    %p50 = scmp.ne.s32.totalorder %s39, %s40
    %p51 = scmp.eq.s32.totalorder %s17, 0
    %p52 = por %p50, %p51
    %p53 = scmp.ne.s32.totalorder %s39, %s40
    %p54 = scmp.eq.s32.totalorder %s18, 1
    %p55 = por %p53, %p54
    %p57 = scmp.ne.s32.totalorder %s40, %s56
    %p58 = scmp.eq.s32.totalorder %s18, 0
    %p59 = por %p57, %p58
    %s60 = ssub.s32 %s19, %s31
    %p61 = scmp.eq.s32.totalorder %s60, 0
    %s63 = sadd.s32 %s62, 1
    %s64 = scalar_select %p61, %s62, %s63
    %p67 = pneg %p61
    %p68 = scmp.eq.s32.totalorder %s12, 1
    %p69 = por %p67, %p68
    %p70 = scmp.ne.s32.totalorder %s62, %s65
    %p71 = scmp.eq.s32.totalorder %s12, 0
    %p72 = por %p70, %p71
    %p73 = scmp.ne.s32.totalorder %s62, %s65
    %p74 = scmp.eq.s32.totalorder %s17, 1
    %p75 = por %p73, %p74
    %p76 = scmp.ne.s32.totalorder %s65, %s66
    %p77 = scmp.eq.s32.totalorder %s17, 0
    %p78 = por %p76, %p77
    %p79 = scmp.ne.s32.totalorder %s65, %s66
    %p80 = scmp.eq.s32.totalorder %s18, 1
    %p81 = por %p79, %p80
    %p83 = scmp.ne.s32.totalorder %s66, %s82
    %p84 = scmp.eq.s32.totalorder %s18, 0
    %p85 = por %p83, %p84
    %s87 = sadd.s32 %s86, 1
    %p90 = scmp.eq.s32.totalorder %s12, 1
    %p91 = scmp.ne.s32.totalorder %s86, %s88
    %p92 = scmp.eq.s32.totalorder %s12, 0
    %p93 = por %p91, %p92
    %p94 = scmp.ne.s32.totalorder %s86, %s88
    %p95 = scmp.eq.s32.totalorder %s17, 1
    %p96 = por %p94, %p95
    %p97 = scmp.ne.s32.totalorder %s88, %s89
    %p98 = scmp.eq.s32.totalorder %s17, 0
    %p99 = por %p97, %p98
    %p100 = scmp.ne.s32.totalorder %s88, %s89
    %p101 = scmp.eq.s32.totalorder %s18, 1
    %p102 = por %p100, %p101
    %p104 = scmp.ne.s32.totalorder %s89, %s103
    %p105 = scmp.eq.s32.totalorder %s18, 0
    %p106 = por %p104, %p105
    %s107 = ssub.s32 %s19, %s31
    %s108 = ssub.s32 %s20, %s27
    %s109 = sor.u32 %s107, %s108
    %p110 = scmp.eq.s32.totalorder %s109, 0
    %s112 = sadd.s32 %s111, 1
    %s113 = scalar_select %p110, %s111, %s112
    %p116 = pneg %p110
    %p117 = scmp.eq.s32.totalorder %s12, 1
    %p118 = por %p116, %p117
    %p119 = scmp.ne.s32.totalorder %s111, %s114
    %p120 = scmp.eq.s32.totalorder %s12, 0
    %p121 = por %p119, %p120
    %p122 = scmp.ne.s32.totalorder %s111, %s114
    %p123 = scmp.eq.s32.totalorder %s17, 1
    %p124 = por %p122, %p123
    %p125 = scmp.ne.s32.totalorder %s114, %s115
    %p126 = scmp.eq.s32.totalorder %s17, 0
    %p127 = por %p125, %p126
    %p128 = scmp.ne.s32.totalorder %s114, %s115
    %p129 = scmp.eq.s32.totalorder %s18, 1
    %p130 = por %p128, %p129
    %p132 = scmp.ne.s32.totalorder %s115, %s131
    %p133 = scmp.eq.s32.totalorder %s18, 0
    %p134 = por %p132, %p133
    %s135 = ssub.s32 %s19, %s31
    %s136 = ssub.s32 %s20, %s27
    %s137 = sor.u32 %s135, %s136
    %p138 = scmp.eq.s32.totalorder %s137, 0
    %s140 = sadd.s32 %s139, 1
    %s141 = scalar_select %p138, %s139, %s140
    %p144 = pneg %p138
    %p145 = scmp.eq.s32.totalorder %s12, 1
    %p146 = por %p144, %p145
    %p147 = scmp.ne.s32.totalorder %s139, %s142
    %p148 = scmp.eq.s32.totalorder %s12, 0
    %p149 = por %p147, %p148
    %p150 = scmp.ne.s32.totalorder %s139, %s142
    %p151 = scmp.eq.s32.totalorder %s17, 1
    %p152 = por %p150, %p151
    %p153 = scmp.ne.s32.totalorder %s142, %s143
    %p154 = scmp.eq.s32.totalorder %s17, 0
    %p155 = por %p153, %p154
    %p156 = scmp.ne.s32.totalorder %s142, %s143
    %p157 = scmp.eq.s32.totalorder %s18, 1
    %p158 = por %p156, %p157
    %p160 = scmp.ne.s32.totalorder %s143, %s159
    %p161 = scmp.eq.s32.totalorder %s18, 0
    %p162 = por %p160, %p161
    %s163 = ssub.s32 %s19, %s31
    %s164 = ssub.s32 %s20, %s27
    %s165 = sor.u32 %s163, %s164
    %p166 = scmp.eq.s32.totalorder %s165, 0
    %s168 = sadd.s32 %s167, 1
    %s169 = scalar_select %p166, %s167, %s168
    %p172 = pneg %p166
    %p173 = scmp.eq.s32.totalorder %s12, 1
    %p174 = por %p172, %p173
    %p175 = scmp.ne.s32.totalorder %s167, %s170
    %p176 = scmp.eq.s32.totalorder %s12, 0
    %p177 = por %p175, %p176
    %p178 = scmp.ne.s32.totalorder %s167, %s170
    %p179 = scmp.eq.s32.totalorder %s17, 1
    %p180 = por %p178, %p179
    %p181 = scmp.ne.s32.totalorder %s170, %s171
    %p182 = scmp.eq.s32.totalorder %s17, 0
    %p183 = por %p181, %p182
    %p184 = scmp.ne.s32.totalorder %s170, %s171
    %p185 = scmp.eq.s32.totalorder %s18, 1
    %p186 = por %p184, %p185
    %p188 = scmp.ne.s32.totalorder %s171, %s187
    %p189 = scmp.eq.s32.totalorder %s18, 0
    %p190 = por %p188, %p189
    %p191 = scmp.le.s32.totalorder 1, %s12
    %p192 = scmp.lt.s32.totalorder %s12, 3
    %p193 = pnand %p191, %p192
    %p194 = pneg %p193
    // Predicated region
    $region9: #{forward.17} parent=5 // pred_check
      _
    $region10: #{forward.17} parent=5 // pred_check_branch
      %196 = sbr.rel (%p193) target = $region12
    $region11: #{forward.17} parent=5 // pred_region
      %s197 = ssub.s32 %s12, 1
      // Predicated region
      $region13: #{forward.17} parent=11 // pred_check
        %p198 = pneg %p99
      $region14: #{forward.17} parent=11 // pred_check_branch
        %200 = sbr.rel (%p198) target = $region16
      $region15: #{forward.17} parent=11 // pred_region
        _
      $region16: #{forward.17} parent=11 // pred_fallthru
        _
    $region12: #{forward.17} parent=5 // pred_fallthru
      _
    %p201 = scmp.lt.s32.totalorder %s12, 2
    // Predicated region
    $region17: #{forward.17} parent=5 // pred_check
      %p202 = pneg %p201
    $region18: #{forward.17} parent=5 // pred_check_branch
      %204 = sbr.rel (%p202) target = $region20
    $region19: #{forward.17} parent=5 // pred_region
      // Predicated region
      $region21: #{forward.17} parent=19 // pred_check
        %p205 = pneg %p46
      $region22: #{forward.17} parent=19 // pred_check_branch
        %207 = sbr.rel (%p205) target = $region24
      $region23: #{forward.17} parent=19 // pred_region
        %s208 = smul.u32 4, %s20
        %p209 = scmp.lt.s32.totalorder %s19, 1
        %s210 = scalar_select %p209, %s19, 1
        %p211 = scmp.lt.s32.totalorder %s208, 3
        %s212 = scalar_select %p211, %s208, 3
        %s213 = smul.addr %s210, 4
        %s214 = sadd.s32 %s212, %s213
        %s215 = smul.addr %s214, 8
        %s216 = scalar_lea.vmem %s0, %s215
        %s217 = smul.u32 4, %s20
      $region24: #{forward.17} parent=19 // pred_fallthru
        _
      // Predicated region
      $region25: #{forward.17} parent=19 // pred_check
        %p218 = pneg %p72
      $region26: #{forward.17} parent=19 // pred_check_branch
        %220 = sbr.rel (%p218) target = $region28
      $region27: #{forward.17} parent=19 // pred_region
        %p221 = scmp.lt.s32.totalorder %s19, 1
        %s222 = scalar_select %p221, %s19, 1
        %s223 = smul.addr %s222, 4
        %s224 = scalar_lea.vmem %s1, %s223
      $region28: #{forward.17} parent=19 // pred_fallthru
        _
    $region20: #{forward.17} parent=5 // pred_fallthru
      _
    %p225 = scmp.le.s32.totalorder 1, %s12
    %p226 = scmp.lt.s32.totalorder %s12, 3
    %p227 = pnand %p225, %p226
    %p228 = pneg %p227
    // Predicated region
    $region29: #{forward.17} parent=5 // pred_check
      _
    $region30: #{forward.17} parent=5 // pred_check_branch
      %230 = sbr.rel (%p227) target = $region32
    $region31: #{forward.17} parent=5 // pred_region
      %s231 = ssub.s32 %s12, 1
      %s232 = smul.u32 4, %s22
      %p233 = scmp.lt.s32.totalorder %s21, 1
      %s234 = scalar_select %p233, %s21, 1
      %p235 = scmp.lt.s32.totalorder %s232, 3
      %s236 = scalar_select %p235, %s232, 3
      %s237 = smul.addr %s234, 4
      %s238 = sadd.s32 %s236, %s237
      %s239 = smul.addr %s238, 8
      %s240 = scalar_lea.vmem %s0, %s239
      %p241 = pneg %p52
      %p242 = pneg %p49
      %p243 = scmp.lt.s32.totalorder %s21, 1
      %s244 = scalar_select %p243, %s21, 1
      %s245 = smul.addr %s244, 4
      %s246 = scalar_lea.vmem %s1, %s245
      %p247 = pneg %p78
      %p248 = pneg %p75
      %p249 = pneg %p99
      %p250 = pneg %p96
      %p251 = pneg %p127
      %p252 = pneg %p124
      %s253 = smul.u32 4, %s22
      %p254 = scmp.lt.s32.totalorder %s21, 1
      %s255 = scalar_select %p254, %s21, 1
      %p256 = scmp.lt.s32.totalorder %s253, 3
      %s257 = scalar_select %p256, %s253, 3
      %s258 = smul.addr %s255, 4
      %s259 = sadd.s32 %s257, %s258
      %s260 = smul.addr %s259, 8
      %s261 = scalar_lea.vmem %s3, %s260
      %p262 = pneg %p155
      %p263 = pneg %p152
      %p264 = scmp.lt.s32.totalorder %s21, 1
      %s265 = scalar_select %p264, %s21, 1
      %p266 = scmp.lt.s32.totalorder %s22, 0
      %s267 = scalar_select %p266, %s22, 0
      %s268 = sadd.s32 %s267, %s265
      %s269 = scalar_lea.vmem %s4, %s268
      %p270 = pneg %p183
      %p271 = pneg %p180
      %p272 = scmp.lt.s32.totalorder %s21, 1
      %s273 = scalar_select %p272, %s21, 1
      %p274 = scmp.lt.s32.totalorder %s22, 0
      %s275 = scalar_select %p274, %s22, 0
      %s276 = sadd.s32 %s275, %s273
      %s277 = scalar_lea.vmem %s5, %s276
      %s278 = smul.u32 4, %s22
      %p279 = scmp.lt.s32.totalorder %s21, 1
      %s280 = scalar_select %p279, %s21, 1
      %p281 = scmp.lt.s32.totalorder %s278, 3
      %s282 = scalar_select %p281, %s278, 3
      %s283 = smul.addr %s280, 4
      %s284 = sadd.s32 %s282, %s283
      %s285 = smul.addr %s284, 8
      %s286 = scalar_lea.vmem %s0, %s285
      %s287 = smul.u32 4, %s22
      %p288 = scmp.lt.s32.totalorder %s21, 1
      %s289 = scalar_select %p288, %s21, 1
      %s290 = smul.addr %s289, 4
      %s291 = scalar_lea.vmem %s1, %s290
      %s292 = smul.u32 4, %s22
      %p293 = scmp.lt.s32.totalorder %s21, 1
      %s294 = scalar_select %p293, %s21, 1
      %p295 = scmp.lt.s32.totalorder %s292, 3
      %s296 = scalar_select %p295, %s292, 3
      %s297 = smul.addr %s294, 4
      %s298 = sadd.s32 %s296, %s297
      %s299 = smul.addr %s298, 8
      %s300 = scalar_lea.vmem %s3, %s299
      %s301 = smul.u32 4, %s22
      %p302 = scmp.lt.s32.totalorder %s21, 1
      %s303 = scalar_select %p302, %s21, 1
      %p304 = scmp.lt.s32.totalorder %s22, 0
      %s305 = scalar_select %p304, %s22, 0
      %s306 = sadd.s32 %s305, %s303
      %s307 = scalar_lea.vmem %s4, %s306
      %p308 = scmp.lt.s32.totalorder %s21, 1
      %s309 = scalar_select %p308, %s21, 1
      %p310 = scmp.lt.s32.totalorder %s22, 0
      %s311 = scalar_select %p310, %s22, 0
      %s312 = sadd.s32 %s311, %s309
      %s313 = scalar_lea.vmem %s5, %s312
      %v314 = vld [vmem:[%s286] sm:$0xff]
      %v315 = vld [vmem:[%s286 + $0x8] sm:$0xff]
      %v316 = vld [vmem:[%s286 + $0x10] sm:$0xff]
      %v317 = vld [vmem:[%s286 + $0x18] sm:$0xff]
      %v318 = vld [vmem:[%s291] sm:$0x7]
      %v319 = vld [vmem:[%s2] sm:$0x1]
      %v321 = vlaneseq
      %v322 = vshrl.u32 %v321, 7
      %v323 = vsub.s32 0, %v322
      %v324 = vrot.slane %v319, %v323
      %vm326 = vcmask 23552
      %v328 = vsel %vm326, %v314, 0
      %v331 = vsel %vm326, %v315, 0
      %v334 = vsel %vm326, %v316, 0
      %v337 = vsel %vm326, %v317, 0
      %vm339 = vcmask 1042432
      %v341 = vsel %vm339, %v318, 0
      %343 = vmatprep.subr.mxu0 0.0
      %344 = vmatpush1.msra.mxu0 %v341
      %345 = vmatprep.subr.mxu0 0.0
      %346 = vmatpush1.msra.mxu0 0.0
      %347 = vmatprep.subr.mxu0 0.0
      %348 = vmatpush1.msra.mxu0 0.0
      %349 = vmatprep.subr.mxu0 0.0
      %350 = vmatpush1.msra.mxu0 0.0
      %351 = vmatprep.subr.mxu0 0.0
      %352 = vmatpush1.msra.mxu0 0.0
      %353 = vmatprep.subr.mxu0 0.0
      %354 = vmatpush1.msra.mxu0 0.0
      %355 = vmatprep.subr.mxu0 0.0
      %356 = vmatpush1.msra.mxu0 0.0
      %357 = vmatprep.subr.mxu0 0.0
      %358 = vmatpush1.msra.mxu0 0.0
      %359 = vmatprep.subr.mxu0 0.0
      %360 = vmatpush1.msra.mxu0 0.0
      %361 = vmatprep.subr.mxu0 0.0
      %362 = vmatpush1.msra.mxu0 0.0
      %363 = vmatprep.subr.mxu0 0.0
      %364 = vmatpush1.msra.mxu0 0.0
      %365 = vmatprep.subr.mxu0 0.0
      %366 = vmatpush1.msra.mxu0 0.0
      %367 = vmatprep.subr.mxu0 0.0
      %368 = vmatpush1.msra.mxu0 0.0
      %369 = vmatprep.subr.mxu0 0.0
      %370 = vmatpush1.msra.mxu0 0.0
      %371 = vmatprep.subr.mxu0 0.0
      %372 = vmatpush1.msra.mxu0 0.0
      %373 = vmatprep.subr.mxu0 0.0
      %374 = vmatpush1.msra.mxu0 0.0
      %375 = vmatprep.subr.mxu0 0.0
      %376 = vmatpush1.msra.mxu0 0.0
      %377 = vmatprep.subr.mxu0 0.0
      %378 = vmatpush1.msra.mxu0 0.0
      %379 = vmatprep.subr.mxu0 0.0
      %380 = vmatpush1.msra.mxu0 0.0
      %381 = vmatprep.subr.mxu0 0.0
      %382 = vmatpush1.msra.mxu0 0.0
      %383 = vmatprep.subr.mxu0 0.0
      %384 = vmatpush1.msra.mxu0 0.0
      %385 = vmatprep.subr.mxu0 0.0
      %386 = vmatpush1.msra.mxu0 0.0
      %387 = vmatprep.subr.mxu0 0.0
      %388 = vmatpush1.msra.mxu0 0.0
      %389 = vmatprep.subr.mxu0 0.0
      %390 = vmatpush1.msra.mxu0 0.0
      %391 = vmatprep.subr.mxu0 0.0
      %392 = vmatpush1.msra.mxu0 0.0
      %393 = vmatprep.subr.mxu0 0.0
      %394 = vmatpush1.msra.mxu0 0.0
      %395 = vmatprep.subr.mxu0 0.0
      %396 = vmatpush1.msra.mxu0 0.0
      %397 = vmatprep.subr.mxu0 0.0
      %398 = vmatpush1.msra.mxu0 0.0
      %399 = vmatprep.subr.mxu0 0.0
      %400 = vmatpush1.msra.mxu0 0.0
      %401 = vmatprep.subr.mxu0 0.0
      %402 = vmatpush1.msra.mxu0 0.0
      %403 = vmatprep.subr.mxu0 0.0
      %404 = vmatpush1.msra.mxu0 0.0
      %405 = vmatprep.subr.mxu0 0.0
      %406 = vmatpush1.msra.mxu0 0.0
      %407 = vmatprep.mubr.f32.mxu0 0.0
      %408 = vmatmul.mubr.f32.gmra.mrb[0].mxu0 %v328
      %v409 = vpop.f32.mrb[0].mxu0
      %v410 = vadd.f32 %v324, %v409
      %v411 = vpop.f32.mrb[0].mxu0
      %412 = vmatprep.mubr.f32.mxu0 0.0
      %413 = vmatmul.mubr.f32.gmra.mrb[0].mxu0 %v331
      %v414 = vpop.f32.mrb[0].mxu0
      %v415 = vadd.f32 %v324, %v414
      %v416 = vpop.f32.mrb[0].mxu0
      %417 = vmatprep.mubr.f32.mxu0 0.0
      %418 = vmatmul.mubr.f32.gmra.mrb[0].mxu0 %v334
      %v419 = vpop.f32.mrb[0].mxu0
      %v420 = vadd.f32 %v324, %v419
      %v421 = vpop.f32.mrb[0].mxu0
      %422 = vmatprep.mubr.f32.mxu0 0.0
      %423 = vmatmul.mubr.f32.gmra.mrb[0].mxu0 %v337
      %v424 = vpop.f32.mrb[0].mxu0
      %v425 = vadd.f32 %v324, %v424
      %v426 = vpop.f32.mrb[0].mxu0
      %427 = vdwg.mxu0
      %vm428 = vcmask 523264
      %429 = vst.msk [vmem:[%s300] sm:$0xff] %vm428, %v410
      %430 = vst.msk [vmem:[%s300 + $0x8] sm:$0xff] %vm428, %v415
      %431 = vst.msk [vmem:[%s300 + $0x10] sm:$0xff] %vm428, %v420
      %432 = vst.msk [vmem:[%s300 + $0x18] sm:$0xff] %vm428, %v425
      %v433 = vsel %vm428, %v410, 0.0
      %v434 = vsel %vm428, %v415, 0.0
      %v435 = vadd.f32 %v433, %v434
      %v436 = vsel %vm428, %v420, 0.0
      %v437 = vadd.f32 %v435, %v436
      %v438 = vsel %vm428, %v425, 0.0
      %v439 = vadd.f32 %v437, %v438
      %v440 = vrot.slane %v439, 4
      %v441 = vadd.f32 %v439, %v440
      %v442 = vrot.slane %v441, 2
      %v443 = vadd.f32 %v441, %v442
      %v444 = vrot.slane %v443, 1
      %v445 = vadd.f32 %v443, %v444
      %vm446 = vcmask 516096
      %447 = vst.msk [vmem:[%s307] sm:$0x1] %vm446, %v445
      %v448 = vmul.f32 %v410, %v410
      %v449 = vmul.f32 %v415, %v415
      %v450 = vmul.f32 %v420, %v420
      %v451 = vmul.f32 %v425, %v425
      %v452 = vsel %vm428, %v448, 0.0
      %v453 = vsel %vm428, %v449, 0.0
      %v454 = vadd.f32 %v452, %v453
      %v455 = vsel %vm428, %v450, 0.0
      %v456 = vadd.f32 %v454, %v455
      %v457 = vsel %vm428, %v451, 0.0
      %v458 = vadd.f32 %v456, %v457
      %v459 = vrot.slane %v458, 4
      %v460 = vadd.f32 %v458, %v459
      %v461 = vrot.slane %v460, 2
      %v462 = vadd.f32 %v460, %v461
      %v463 = vrot.slane %v462, 1
      %v464 = vadd.f32 %v462, %v463
      %465 = vst.msk [vmem:[%s313] sm:$0x1] %vm446, %v464
      %s466 = smul.u32 4, %s22
      %p467 = scmp.lt.s32.totalorder %s21, 1
      %s468 = scalar_select %p467, %s21, 1
      %p469 = scmp.lt.s32.totalorder %s466, 3
      %s470 = scalar_select %p469, %s466, 3
      %s471 = smul.addr %s468, 4
      %s472 = sadd.s32 %s470, %s471
      %s473 = smul.addr %s472, 8
      %s474 = scalar_lea.vmem %s3, %s473
      %p475 = scmp.lt.s32.totalorder %s21, 1
      %s476 = scalar_select %p475, %s21, 1
      %p477 = scmp.lt.s32.totalorder %s22, 0
      %s478 = scalar_select %p477, %s22, 0
      %s479 = sadd.s32 %s478, %s476
      %s480 = scalar_lea.vmem %s4, %s479
      %p481 = scmp.lt.s32.totalorder %s21, 1
      %s482 = scalar_select %p481, %s21, 1
      %p483 = scmp.lt.s32.totalorder %s22, 0
      %s484 = scalar_select %p483, %s22, 0
      %s485 = sadd.s32 %s484, %s482
      %s486 = scalar_lea.vmem %s5, %s485
      // Predicated region
      $region33: #{forward.17} parent=31 // pred_check
        %p487 = pneg %p124
      $region34: #{forward.17} parent=31 // pred_check_branch
        %489 = sbr.rel (%p487) target = $region36
      $region35: #{forward.17} parent=31 // pred_region
        %s490 = smul.u32 4, %s22
      $region36: #{forward.17} parent=31 // pred_fallthru
        _
      // Predicated region
      $region37: #{forward.17} parent=31 // pred_check
        %p491 = pneg %p152
      $region38: #{forward.17} parent=31 // pred_check_branch
        %493 = sbr.rel (%p491) target = $region40
      $region39: #{forward.17} parent=31 // pred_region
        _
      $region40: #{forward.17} parent=31 // pred_fallthru
        _
      // Predicated region
      $region41: #{forward.17} parent=31 // pred_check
        %p494 = pneg %p180
      $region42: #{forward.17} parent=31 // pred_check_branch
        %496 = sbr.rel (%p494) target = $region44
      $region43: #{forward.17} parent=31 // pred_region
        _
      $region44: #{forward.17} parent=31 // pred_fallthru
        _
    $region32: #{forward.17} parent=5 // pred_fallthru
      _
    %p497 = scmp.le.s32.totalorder 2, %s12
    // Predicated region
    $region45: #{forward.17} parent=5 // pred_check
      %p498 = pneg %p497
    $region46: #{forward.17} parent=5 // pred_check_branch
      %500 = sbr.rel (%p498) target = $region48
    $region47: #{forward.17} parent=5 // pred_region
      %s501 = ssub.s32 %s12, 2
      // Predicated region
      $region49: #{forward.17} parent=47 // pred_check
        %p502 = pneg %p130
      $region50: #{forward.17} parent=47 // pred_check_branch
        %504 = sbr.rel (%p502) target = $region52
      $region51: #{forward.17} parent=47 // pred_region
        %s505 = smul.u32 4, %s24
        %p506 = scmp.lt.s32.totalorder %s23, 1
        %s507 = scalar_select %p506, %s23, 1
        %p508 = scmp.lt.s32.totalorder %s505, 3
        %s509 = scalar_select %p508, %s505, 3
        %s510 = smul.addr %s507, 4
        %s511 = sadd.s32 %s509, %s510
        %s512 = smul.addr %s511, 8
        %s513 = scalar_lea.vmem %s3, %s512
      $region52: #{forward.17} parent=47 // pred_fallthru
        _
      // Predicated region
      $region53: #{forward.17} parent=47 // pred_check
        %p514 = pneg %p158
      $region54: #{forward.17} parent=47 // pred_check_branch
        %516 = sbr.rel (%p514) target = $region56
      $region55: #{forward.17} parent=47 // pred_region
        %p517 = scmp.lt.s32.totalorder %s23, 1
        %s518 = scalar_select %p517, %s23, 1
        %p519 = scmp.lt.s32.totalorder %s24, 0
        %s520 = scalar_select %p519, %s24, 0
        %s521 = sadd.s32 %s520, %s518
        %s522 = scalar_lea.vmem %s4, %s521
      $region56: #{forward.17} parent=47 // pred_fallthru
        _
      // Predicated region
      $region57: #{forward.17} parent=47 // pred_check
        %p523 = pneg %p186
      $region58: #{forward.17} parent=47 // pred_check_branch
        %525 = sbr.rel (%p523) target = $region60
      $region59: #{forward.17} parent=47 // pred_region
        %p526 = scmp.lt.s32.totalorder %s23, 1
        %s527 = scalar_select %p526, %s23, 1
        %p528 = scmp.lt.s32.totalorder %s24, 0
        %s529 = scalar_select %p528, %s24, 0
        %s530 = sadd.s32 %s529, %s527
        %s531 = scalar_lea.vmem %s5, %s530
      $region60: #{forward.17} parent=47 // pred_fallthru
        _
    $region48: #{forward.17} parent=5 // pred_fallthru
      _
  $region6: #{forward.17} parent=0 // loop_footer
    %s16 = sadd.s32 1, %s12
  $region7: #{forward.17} parent=0 // loop_footer_branch
    %11 = sbr.rel target = $region3
  $region8: #{forward.17} parent=0 // loop_exit
    _

// kernel: forward.20
$region0: #{forward.20}
  #allocation0 [shape = 'u32[]', space=smem, size = 0x4, offset = 0x4, fixed_abs, tag = 'smem constant byte address 0x4 - core index']
  #allocation1 [shape = 'u32[144,128]{1,0:T(1,128)}', space=vmem, size = 0x12000, scoped, tag = 'internal scratch']
  %s0 = inlined_call_operand.vmem [shape: f32[64,64], index: 0, kind: input, shape index: {}]
  %s1 = inlined_call_operand.vmem [shape: bf16[64,128], index: 1, kind: input, shape index: {}]
  %s2 = inlined_call_operand.vmem [shape: f32[1,128], index: 2, kind: input, shape index: {}]
  %s3 = inlined_call_operand.vmem [shape: f32[1,64], index: 3, kind: input, shape index: {}]
  %s4 = inlined_call_operand.vmem [shape: f32[1,64], index: 4, kind: input, shape index: {}]
  %s5 = inlined_call_operand.vmem [shape: f32[64,128], index: 5, kind: output, shape index: {0}]
  %s6 = inlined_call_operand.vmem [shape: f32[1,1,128], index: 6, kind: output, shape index: {1}]
  %s7 = inlined_call_operand.vmem [shape: f32[1,1,128], index: 7, kind: output, shape index: {2}]
  %8 = xla_tuple %s5, %s6, %s7
  %s9 = sld [smem:[#allocation0]]
  $region46: #{forward.20} parent=0
    _
  %s11 = ssub.s32 1, %s9
  %s12 = scalar_select 0, %s11, %s9
  // Predicated region
  $region2: #{forward.20} parent=0 // pred_check
    _
  $region3: #{forward.20} parent=0 // pred_check_branch
    %14 = sbr.rel (0) target = $region5
  $region4: #{forward.20} parent=0 // pred_region
    _
  $region5: #{forward.20} parent=0 // pred_fallthru
    _
  // Predicated region
  $region6: #{forward.20} parent=0 // pred_check
    _
  $region7: #{forward.20} parent=0 // pred_check_branch
    %16 = sbr.rel (0) target = $region9
  $region8: #{forward.20} parent=0 // pred_region
    _
  $region9: #{forward.20} parent=0 // pred_fallthru
    _
  // Predicated region
  $region10: #{forward.20} parent=0 // pred_check
    _
  $region11: #{forward.20} parent=0 // pred_check_branch
    %18 = sbr.rel (0) target = $region13
  $region12: #{forward.20} parent=0 // pred_region
    _
  $region13: #{forward.20} parent=0 // pred_fallthru
    _
  // Predicated region
  $region14: #{forward.20} parent=0 // pred_check
    _
  $region15: #{forward.20} parent=0 // pred_check_branch
    %20 = sbr.rel (0) target = $region17
  $region16: #{forward.20} parent=0 // pred_region
    _
  $region17: #{forward.20} parent=0 // pred_fallthru
    _
  // Predicated region
  $region18: #{forward.20} parent=0 // pred_check
    _
  $region19: #{forward.20} parent=0 // pred_check_branch
    %22 = sbr.rel (0) target = $region21
  $region20: #{forward.20} parent=0 // pred_region
    _
  $region21: #{forward.20} parent=0 // pred_fallthru
    _
  %v24 = vld [vmem:[%s0] sm:$0xff]
  %v25 = vld [vmem:[%s0 + $0x8] sm:$0xff]
  %v26 = vld [vmem:[%s0 + $0x10] sm:$0xff]
  %v27 = vld [vmem:[%s0 + $0x18] sm:$0xff]
  %v28 = vld [vmem:[%s0 + $0x20] sm:$0xff]
  %v29 = vld [vmem:[%s0 + $0x28] sm:$0xff]
  %v30 = vld [vmem:[%s0 + $0x30] sm:$0xff]
  %v31 = vld [vmem:[%s0 + $0x38] sm:$0xff]
  %v32 = vld [vmem:[%s3] sm:$0x1]
  %v34 = vlaneseq
  %v35 = vshrl.u32 %v34, 7
  %v36 = vsub.s32 0, %v35
  %v37 = vrot.slane %v32, %v36
  %v39 = vmul.f32 %v24, %v37
  %v40 = vmul.f32 %v25, %v37
  %v41 = vmul.f32 %v26, %v37
  %v42 = vmul.f32 %v27, %v37
  %v43 = vmul.f32 %v28, %v37
  %v44 = vmul.f32 %v29, %v37
  %v45 = vmul.f32 %v30, %v37
  %v46 = vmul.f32 %v31, %v37
  %v47 = vld [vmem:[%s4] sm:$0x1]
  %v49 = vlaneseq
  %v50 = vshrl.u32 %v49, 7
  %v51 = vsub.s32 0, %v50
  %v52 = vrot.slane %v47, %v51
  %v54 = vadd.f32 %v39, %v52
  %v55 = vadd.f32 %v40, %v52
  %v56 = vadd.f32 %v41, %v52
  %v57 = vadd.f32 %v42, %v52
  %v58 = vadd.f32 %v43, %v52
  %v59 = vadd.f32 %v44, %v52
  %v60 = vadd.f32 %v45, %v52
  %v61 = vadd.f32 %v46, %v52
  %v62 = vmax.f32 %v54, 0.0
  %v63 = vmax.f32 %v55, 0.0
  %v64 = vmax.f32 %v56, 0.0
  %v65 = vmax.f32 %v57, 0.0
  %v66 = vmax.f32 %v58, 0.0
  %v67 = vmax.f32 %v59, 0.0
  %v68 = vmax.f32 %v60, 0.0
  %v69 = vmax.f32 %v61, 0.0
  %v70 = vpack.c.bf16 %v63, %v62
  %v71 = vpack.c.bf16 %v65, %v64
  %v72 = vpack.c.bf16 %v67, %v66
  %v73 = vpack.c.bf16 %v69, %v68
  %v74 = vld [vmem:[%s1] sm:$0xf]
  %v75 = vld [vmem:[%s1 + $0x4] sm:$0xf]
  %v76 = vld [vmem:[%s1 + $0x8] sm:$0xf]
  %v77 = vld [vmem:[%s1 + $0xc] sm:$0xf]
  %v78 = vld [vmem:[%s1 + $0x10] sm:$0xf]
  %v79 = vld [vmem:[%s1 + $0x14] sm:$0xf]
  %v80 = vld [vmem:[%s1 + $0x18] sm:$0xf]
  %v81 = vld [vmem:[%s1 + $0x1c] sm:$0xf]
  %v82 = vld [vmem:[%s2] sm:$0x1]
  %v84 = vlaneseq
  %v85 = vshrl.u32 %v84, 7
  %v86 = vsub.s32 0, %v85
  %v87 = vrot.slane %v82, %v86
  %v97 = vunpack.c.l.b16 %v74
  %v98 = vunpack.c.l.b16 %v75
  %v99 = vunpack.c.l.b16 %v76
  %v100 = vunpack.c.l.b16 %v77
  %v101 = vunpack.c.l.b16 %v78
  %v102 = vunpack.c.l.b16 %v79
  %v103 = vunpack.c.l.b16 %v80
  %v104 = vunpack.c.l.b16 %v81
  %v105 = vpack.c.b16 %v98, %v97
  %v106 = vpack.c.b16 %v100, %v99
  %v107 = vpack.c.b16 %v102, %v101
  %v108 = vpack.c.b16 %v104, %v103
  %vm113 = vcmask 523264
  %v115 = vsel %vm113, %v70, 0
  %v118 = vsel %vm113, %v71, 0
  %v121 = vsel %vm113, %v72, 0
  %v124 = vsel %vm113, %v73, 0
  %126 = vmatprep.subr.bf16.mxu0 0
  %127 = vmatpush1.bf16.msra.mxu0 %v105
  %128 = vmatprep.subr.bf16.mxu0 0
  %129 = vmatpush1.bf16.msra.mxu0 %v106
  %130 = vmatprep.subr.bf16.mxu0 0
  %131 = vmatpush1.bf16.msra.mxu0 %v107
  %132 = vmatprep.subr.bf16.mxu0 0
  %133 = vmatpush1.bf16.msra.mxu0 %v108
  %134 = vmatprep.subr.bf16.mxu0 0
  %135 = vmatpush1.bf16.msra.mxu0 0
  %136 = vmatprep.subr.bf16.mxu0 0
  %137 = vmatpush1.bf16.msra.mxu0 0
  %138 = vmatprep.subr.bf16.mxu0 0
  %139 = vmatpush1.bf16.msra.mxu0 0
  %140 = vmatprep.subr.bf16.mxu0 0
  %141 = vmatpush1.bf16.msra.mxu0 0
  %142 = vmatprep.subr.bf16.mxu0 0
  %143 = vmatpush1.bf16.msra.mxu0 0
  %144 = vmatprep.subr.bf16.mxu0 0
  %145 = vmatpush1.bf16.msra.mxu0 0
  %146 = vmatprep.subr.bf16.mxu0 0
  %147 = vmatpush1.bf16.msra.mxu0 0
  %148 = vmatprep.subr.bf16.mxu0 0
  %149 = vmatpush1.bf16.msra.mxu0 0
  %150 = vmatprep.subr.bf16.mxu0 0
  %151 = vmatpush1.bf16.msra.mxu0 0
  %152 = vmatprep.subr.bf16.mxu0 0
  %153 = vmatpush1.bf16.msra.mxu0 0
  %154 = vmatprep.subr.bf16.mxu0 0
  %155 = vmatpush1.bf16.msra.mxu0 0
  %156 = vmatprep.subr.bf16.mxu0 0
  %157 = vmatpush1.bf16.msra.mxu0 0
  %158 = vmatprep.mubr.bf16.mxu0 0
  %159 = vmatmul.mubr.bf16.gmra.mrb[0].mxu0 %v115
  %v160 = vpop.f32.mrb[0].mxu0
  %v161 = vadd.f32 %v87, %v160
  %v162 = vpop.f32.mrb[0].mxu0
  %v163 = vpop.f32.mrb[0].mxu0
  %v164 = vadd.f32 %v87, %v163
  %v165 = vpop.f32.mrb[0].mxu0
  %166 = vmatprep.mubr.bf16.mxu0 0
  %167 = vmatmul.mubr.bf16.gmra.mrb[0].mxu0 %v118
  %v168 = vpop.f32.mrb[0].mxu0
  %v169 = vadd.f32 %v87, %v168
  %v170 = vpop.f32.mrb[0].mxu0
  %v171 = vpop.f32.mrb[0].mxu0
  %v172 = vadd.f32 %v87, %v171
  %v173 = vpop.f32.mrb[0].mxu0
  %174 = vmatprep.mubr.bf16.mxu0 0
  %175 = vmatmul.mubr.bf16.gmra.mrb[0].mxu0 %v121
  %v176 = vpop.f32.mrb[0].mxu0
  %v177 = vadd.f32 %v87, %v176
  %v178 = vpop.f32.mrb[0].mxu0
  %v179 = vpop.f32.mrb[0].mxu0
  %v180 = vadd.f32 %v87, %v179
  %v181 = vpop.f32.mrb[0].mxu0
  %182 = vmatprep.mubr.bf16.mxu0 0
  %183 = vmatmul.mubr.bf16.gmra.mrb[0].mxu0 %v124
  %v184 = vpop.f32.mrb[0].mxu0
  %v185 = vadd.f32 %v87, %v184
  %v186 = vpop.f32.mrb[0].mxu0
  %v187 = vpop.f32.mrb[0].mxu0
  %v188 = vadd.f32 %v87, %v187
  %v189 = vpop.f32.mrb[0].mxu0
  %190 = vdwg.mxu0
  %191 = vst [vmem:[%s5] sm:$0xff] %v161
  %192 = vst [vmem:[%s5 + $0x8] sm:$0xff] %v164
  %193 = vst [vmem:[%s5 + $0x10] sm:$0xff] %v169
  %194 = vst [vmem:[%s5 + $0x18] sm:$0xff] %v172
  %195 = vst [vmem:[%s5 + $0x20] sm:$0xff] %v177
  %196 = vst [vmem:[%s5 + $0x28] sm:$0xff] %v180
  %197 = vst [vmem:[%s5 + $0x30] sm:$0xff] %v185
  %198 = vst [vmem:[%s5 + $0x38] sm:$0xff] %v188
  %v199 = vadd.f32 %v161, %v164
  %v200 = vadd.f32 %v199, %v169
  %v201 = vadd.f32 %v200, %v172
  %v202 = vadd.f32 %v201, %v177
  %v203 = vadd.f32 %v202, %v180
  %v204 = vadd.f32 %v203, %v185
  %v205 = vadd.f32 %v204, %v188
  %v206 = vrot.slane %v205, 4
  %v207 = vadd.f32 %v205, %v206
  %v208 = vrot.slane %v207, 2
  %v209 = vadd.f32 %v207, %v208
  %v210 = vrot.slane %v209, 1
  %v211 = vadd.f32 %v209, %v210
  %212 = vst [vmem:[%s6] sm:$0x1] %v211
  %v213 = vmul.f32 %v161, %v161
  %v214 = vmul.f32 %v164, %v164
  %v215 = vmul.f32 %v169, %v169
  %v216 = vmul.f32 %v172, %v172
  %v217 = vmul.f32 %v177, %v177
  %v218 = vmul.f32 %v180, %v180
  %v219 = vmul.f32 %v185, %v185
  %v220 = vmul.f32 %v188, %v188
  %v221 = vadd.f32 %v213, %v214
  %v222 = vadd.f32 %v221, %v215
  %v223 = vadd.f32 %v222, %v216
  %v224 = vadd.f32 %v223, %v217
  %v225 = vadd.f32 %v224, %v218
  %v226 = vadd.f32 %v225, %v219
  %v227 = vadd.f32 %v226, %v220
  %v228 = vrot.slane %v227, 4
  %v229 = vadd.f32 %v227, %v228
  %v230 = vrot.slane %v229, 2
  %v231 = vadd.f32 %v229, %v230
  %v232 = vrot.slane %v231, 1
  %v233 = vadd.f32 %v231, %v232
  %234 = vst [vmem:[%s7] sm:$0x1] %v233
  // Predicated region
  $region22: #{forward.20} parent=0 // pred_check
    _
  $region23: #{forward.20} parent=0 // pred_check_branch
    %236 = sbr.rel (0) target = $region25
  $region24: #{forward.20} parent=0 // pred_region
    _
  $region25: #{forward.20} parent=0 // pred_fallthru
    _
  // Predicated region
  $region26: #{forward.20} parent=0 // pred_check
    _
  $region27: #{forward.20} parent=0 // pred_check_branch
    %238 = sbr.rel (0) target = $region29
  $region28: #{forward.20} parent=0 // pred_region
    _
  $region29: #{forward.20} parent=0 // pred_fallthru
    _
  // Predicated region
  $region30: #{forward.20} parent=0 // pred_check
    _
  $region31: #{forward.20} parent=0 // pred_check_branch
    %240 = sbr.rel (0) target = $region33
  $region32: #{forward.20} parent=0 // pred_region
    _
  $region33: #{forward.20} parent=0 // pred_fallthru
    _
  // Predicated region
  $region34: #{forward.20} parent=0 // pred_check
    _
  $region35: #{forward.20} parent=0 // pred_check_branch
    %242 = sbr.rel (0) target = $region37
  $region36: #{forward.20} parent=0 // pred_region
    _
  $region37: #{forward.20} parent=0 // pred_fallthru
    _
  // Predicated region
  $region38: #{forward.20} parent=0 // pred_check
    _
  $region39: #{forward.20} parent=0 // pred_check_branch
    %244 = sbr.rel (0) target = $region41
  $region40: #{forward.20} parent=0 // pred_region
    _
  $region41: #{forward.20} parent=0 // pred_fallthru
    _
  // Predicated region
  $region42: #{forward.20} parent=0 // pred_check
    _
  $region43: #{forward.20} parent=0 // pred_check_branch
    %246 = sbr.rel (0) target = $region45
  $region44: #{forward.20} parent=0 // pred_region
    _
  $region45: #{forward.20} parent=0 // pred_fallthru
    _

// kernel: forward.21
$region0: #{forward.21}
  #allocation0 [shape = 'u32[]', space=smem, size = 0x4, offset = 0x4, fixed_abs, tag = 'smem constant byte address 0x4 - core index']
  #allocation1 [shape = 'u32[144,128]{1,0:T(1,128)}', space=vmem, size = 0x12000, scoped, tag = 'internal scratch']
  %s0 = inlined_call_operand.vmem [shape: f32[2,32,128], index: 0, kind: input, shape index: {}]
  %s1 = inlined_call_operand.vmem [shape: bf16[128,1024], index: 1, kind: input, shape index: {}]
  %s2 = inlined_call_operand.vmem [shape: f32[1,1024], index: 2, kind: input, shape index: {}]
  %s3 = inlined_call_operand.vmem [shape: f32[1,128], index: 3, kind: input, shape index: {}]
  %s4 = inlined_call_operand.vmem [shape: f32[1,128], index: 4, kind: input, shape index: {}]
  %s5 = inlined_call_operand.vmem [shape: f32[2,1,1024], index: 5, kind: output, shape index: {0}]
  %s6 = inlined_call_operand.vmem [shape: f32[2,1,1,1024], index: 6, kind: output, shape index: {1}]
  %s7 = inlined_call_operand.vmem [shape: f32[2,1,1,1024], index: 7, kind: output, shape index: {2}]
  %8 = xla_tuple %s5, %s6, %s7
  %s9 = sld [smem:[#allocation0]]
  $region77: #{forward.21} parent=0
    _
  %s11 = ssub.s32 1, %s9
  %s12 = scalar_select 0, %s11, %s9
  loop: start=0, step=1, limit=4
  $region2: #{forward.21} parent=0 // loop_pre_header
    _
  $region3: #{forward.21} parent=0 // loop_header
    %s14 = sphi 0, %s18
    %p15 = scmp.ge.s32.totalorder %s14, 4
    %s21 = sphi 0, %s33
    %s22 = sphi 0, %s29
    %s23 = sphi 0, %s21
    %s24 = sphi 0, %s22
    %s25 = sphi 0, %s23
    %s26 = sphi 0, %s24
    %s38 = sphi 0, %s40
    %s41 = sphi 0, %s38
    %s42 = sphi 0, %s41
    %s58 = sphi 0, %s42
    %s62 = sphi 0, %s62
    %s64 = sphi 0, %s62
    %s65 = sphi 0, %s64
    %s79 = sphi 0, %s65
    %s83 = sphi 0, %s83
    %s85 = sphi 0, %s83
    %s86 = sphi 0, %s85
    %s100 = sphi 0, %s86
    %s104 = sphi 0, %s104
    %s106 = sphi 0, %s104
    %s107 = sphi 0, %s106
    %s121 = sphi 0, %s107
    %s125 = sphi 0, %s125
    %s127 = sphi 0, %s125
    %s128 = sphi 0, %s127
    %s142 = sphi 0, %s128
    %s148 = sphi 0, %s150
    %s151 = sphi 0, %s148
    %s152 = sphi 0, %s151
    %s168 = sphi 0, %s152
    %s176 = sphi 0, %s178
    %s179 = sphi 0, %s176
    %s180 = sphi 0, %s179
    %s196 = sphi 0, %s180
    %s204 = sphi 0, %s206
    %s207 = sphi 0, %s204
    %s208 = sphi 0, %s207
    %s224 = sphi 0, %s208
  $region4: #{forward.21} parent=0 // loop_header_branch
    %17 = sbr.rel (%p15) target = $region8
  $region5: #{forward.21} parent=0 // loop_body
    %s19 = ssub.s32 %s14, 1
    %s20 = ssub.s32 %s14, 2
    %s27 = sadd.s32 1, %s22
    %p28 = scmp.ge.s32.totalorder %s27, 1
    %s29 = scalar_select %p28, 0, %s27
    %s30 = sadd.s32 1, %s21
    %s31 = scalar_select %p28, %s30, %s21
    %p32 = scmp.ge.s32.totalorder %s31, 2
    %s33 = scalar_select %p32, 0, %s31
    %s34 = ssub.s32 %s21, %s33
    %s35 = ssub.s32 %s22, %s29
    %s36 = sor.u32 %s34, %s35
    %p37 = scmp.eq.s32.totalorder %s36, 0
    %s39 = sadd.s32 %s38, 1
    %s40 = scalar_select %p37, %s38, %s39
    %p43 = pneg %p37
    %p44 = scmp.eq.s32.totalorder %s14, 1
    %p45 = por %p43, %p44
    %p46 = scmp.ne.s32.totalorder %s38, %s41
    %p47 = scmp.eq.s32.totalorder %s14, 0
    %p48 = por %p46, %p47
    %p49 = scmp.ne.s32.totalorder %s38, %s41
    %p50 = scmp.eq.s32.totalorder %s19, 1
    %p51 = por %p49, %p50
    %p52 = scmp.ne.s32.totalorder %s41, %s42
    %p53 = scmp.eq.s32.totalorder %s19, 0
    %p54 = por %p52, %p53
    %p55 = scmp.ne.s32.totalorder %s41, %s42
    %p56 = scmp.eq.s32.totalorder %s20, 1
    %p57 = por %p55, %p56
    %p59 = scmp.ne.s32.totalorder %s42, %s58
    %p60 = scmp.eq.s32.totalorder %s20, 0
    %p61 = por %p59, %p60
    %s63 = sadd.s32 %s62, 1
    %p66 = scmp.eq.s32.totalorder %s14, 1
    %p67 = scmp.ne.s32.totalorder %s62, %s64
    %p68 = scmp.eq.s32.totalorder %s14, 0
    %p69 = por %p67, %p68
    %p70 = scmp.ne.s32.totalorder %s62, %s64
    %p71 = scmp.eq.s32.totalorder %s19, 1
    %p72 = por %p70, %p71
    %p73 = scmp.ne.s32.totalorder %s64, %s65
    %p74 = scmp.eq.s32.totalorder %s19, 0
    %p75 = por %p73, %p74
    %p76 = scmp.ne.s32.totalorder %s64, %s65
    %p77 = scmp.eq.s32.totalorder %s20, 1
    %p78 = por %p76, %p77
    %p80 = scmp.ne.s32.totalorder %s65, %s79
    %p81 = scmp.eq.s32.totalorder %s20, 0
    %p82 = por %p80, %p81
    %s84 = sadd.s32 %s83, 1
    %p87 = scmp.eq.s32.totalorder %s14, 1
    %p88 = scmp.ne.s32.totalorder %s83, %s85
    %p89 = scmp.eq.s32.totalorder %s14, 0
    %p90 = por %p88, %p89
    %p91 = scmp.ne.s32.totalorder %s83, %s85
    %p92 = scmp.eq.s32.totalorder %s19, 1
    %p93 = por %p91, %p92
    %p94 = scmp.ne.s32.totalorder %s85, %s86
    %p95 = scmp.eq.s32.totalorder %s19, 0
    %p96 = por %p94, %p95
    %p97 = scmp.ne.s32.totalorder %s85, %s86
    %p98 = scmp.eq.s32.totalorder %s20, 1
    %p99 = por %p97, %p98
    %p101 = scmp.ne.s32.totalorder %s86, %s100
    %p102 = scmp.eq.s32.totalorder %s20, 0
    %p103 = por %p101, %p102
    %s105 = sadd.s32 %s104, 1
    %p108 = scmp.eq.s32.totalorder %s14, 1
    %p109 = scmp.ne.s32.totalorder %s104, %s106
    %p110 = scmp.eq.s32.totalorder %s14, 0
    %p111 = por %p109, %p110
    %p112 = scmp.ne.s32.totalorder %s104, %s106
    %p113 = scmp.eq.s32.totalorder %s19, 1
    %p114 = por %p112, %p113
    %p115 = scmp.ne.s32.totalorder %s106, %s107
    %p116 = scmp.eq.s32.totalorder %s19, 0
    %p117 = por %p115, %p116
    %p118 = scmp.ne.s32.totalorder %s106, %s107
    %p119 = scmp.eq.s32.totalorder %s20, 1
    %p120 = por %p118, %p119
    %p122 = scmp.ne.s32.totalorder %s107, %s121
    %p123 = scmp.eq.s32.totalorder %s20, 0
    %p124 = por %p122, %p123
    %s126 = sadd.s32 %s125, 1
    %p129 = scmp.eq.s32.totalorder %s14, 1
    %p130 = scmp.ne.s32.totalorder %s125, %s127
    %p131 = scmp.eq.s32.totalorder %s14, 0
    %p132 = por %p130, %p131
    %p133 = scmp.ne.s32.totalorder %s125, %s127
    %p134 = scmp.eq.s32.totalorder %s19, 1
    %p135 = por %p133, %p134
    %p136 = scmp.ne.s32.totalorder %s127, %s128
    %p137 = scmp.eq.s32.totalorder %s19, 0
    %p138 = por %p136, %p137
    %p139 = scmp.ne.s32.totalorder %s127, %s128
    %p140 = scmp.eq.s32.totalorder %s20, 1
    %p141 = por %p139, %p140
    %p143 = scmp.ne.s32.totalorder %s128, %s142
    %p144 = scmp.eq.s32.totalorder %s20, 0
    %p145 = por %p143, %p144
    %s146 = ssub.s32 %s21, %s33
    %p147 = scmp.eq.s32.totalorder %s146, 0
    %s149 = sadd.s32 %s148, 1
    %s150 = scalar_select %p147, %s148, %s149
    %p153 = pneg %p147
    %p154 = scmp.eq.s32.totalorder %s14, 1
    %p155 = por %p153, %p154
    %p156 = scmp.ne.s32.totalorder %s148, %s151
    %p157 = scmp.eq.s32.totalorder %s14, 0
    %p158 = por %p156, %p157
    %p159 = scmp.ne.s32.totalorder %s148, %s151
    %p160 = scmp.eq.s32.totalorder %s19, 1
    %p161 = por %p159, %p160
    %p162 = scmp.ne.s32.totalorder %s151, %s152
    %p163 = scmp.eq.s32.totalorder %s19, 0
    %p164 = por %p162, %p163
    %p165 = scmp.ne.s32.totalorder %s151, %s152
    %p166 = scmp.eq.s32.totalorder %s20, 1
    %p167 = por %p165, %p166
    %p169 = scmp.ne.s32.totalorder %s152, %s168
    %p170 = scmp.eq.s32.totalorder %s20, 0
    %p171 = por %p169, %p170
    %s172 = ssub.s32 %s21, %s33
    %s173 = ssub.s32 %s22, %s29
    %s174 = sor.u32 %s172, %s173
    %p175 = scmp.eq.s32.totalorder %s174, 0
    %s177 = sadd.s32 %s176, 1
    %s178 = scalar_select %p175, %s176, %s177
    %p181 = pneg %p175
    %p182 = scmp.eq.s32.totalorder %s14, 1
    %p183 = por %p181, %p182
    %p184 = scmp.ne.s32.totalorder %s176, %s179
    %p185 = scmp.eq.s32.totalorder %s14, 0
    %p186 = por %p184, %p185
    %p187 = scmp.ne.s32.totalorder %s176, %s179
    %p188 = scmp.eq.s32.totalorder %s19, 1
    %p189 = por %p187, %p188
    %p190 = scmp.ne.s32.totalorder %s179, %s180
    %p191 = scmp.eq.s32.totalorder %s19, 0
    %p192 = por %p190, %p191
    %p193 = scmp.ne.s32.totalorder %s179, %s180
    %p194 = scmp.eq.s32.totalorder %s20, 1
    %p195 = por %p193, %p194
    %p197 = scmp.ne.s32.totalorder %s180, %s196
    %p198 = scmp.eq.s32.totalorder %s20, 0
    %p199 = por %p197, %p198
    %s200 = ssub.s32 %s21, %s33
    %s201 = ssub.s32 %s22, %s29
    %s202 = sor.u32 %s200, %s201
    %p203 = scmp.eq.s32.totalorder %s202, 0
    %s205 = sadd.s32 %s204, 1
    %s206 = scalar_select %p203, %s204, %s205
    %p209 = pneg %p203
    %p210 = scmp.eq.s32.totalorder %s14, 1
    %p211 = por %p209, %p210
    %p212 = scmp.ne.s32.totalorder %s204, %s207
    %p213 = scmp.eq.s32.totalorder %s14, 0
    %p214 = por %p212, %p213
    %p215 = scmp.ne.s32.totalorder %s204, %s207
    %p216 = scmp.eq.s32.totalorder %s19, 1
    %p217 = por %p215, %p216
    %p218 = scmp.ne.s32.totalorder %s207, %s208
    %p219 = scmp.eq.s32.totalorder %s19, 0
    %p220 = por %p218, %p219
    %p221 = scmp.ne.s32.totalorder %s207, %s208
    %p222 = scmp.eq.s32.totalorder %s20, 1
    %p223 = por %p221, %p222
    %p225 = scmp.ne.s32.totalorder %s208, %s224
    %p226 = scmp.eq.s32.totalorder %s20, 0
    %p227 = por %p225, %p226
    %p228 = scmp.le.s32.totalorder 1, %s14
    %p229 = scmp.lt.s32.totalorder %s14, 3
    %p230 = pnand %p228, %p229
    %p231 = pneg %p230
    // Predicated region
    $region9: #{forward.21} parent=5 // pred_check
      _
    $region10: #{forward.21} parent=5 // pred_check_branch
      %233 = sbr.rel (%p230) target = $region12
    $region11: #{forward.21} parent=5 // pred_region
      %s234 = ssub.s32 %s14, 1
      // Predicated region
      $region13: #{forward.21} parent=11 // pred_check
        %p235 = pneg %p75
      $region14: #{forward.21} parent=11 // pred_check_branch
        %237 = sbr.rel (%p235) target = $region16
      $region15: #{forward.21} parent=11 // pred_region
        _
      $region16: #{forward.21} parent=11 // pred_fallthru
        _
      // Predicated region
      $region17: #{forward.21} parent=11 // pred_check
        %p238 = pneg %p96
      $region18: #{forward.21} parent=11 // pred_check_branch
        %240 = sbr.rel (%p238) target = $region20
      $region19: #{forward.21} parent=11 // pred_region
        _
      $region20: #{forward.21} parent=11 // pred_fallthru
        _
      // Predicated region
      $region21: #{forward.21} parent=11 // pred_check
        %p241 = pneg %p117
      $region22: #{forward.21} parent=11 // pred_check_branch
        %243 = sbr.rel (%p241) target = $region24
      $region23: #{forward.21} parent=11 // pred_region
        _
      $region24: #{forward.21} parent=11 // pred_fallthru
        _
      // Predicated region
      $region25: #{forward.21} parent=11 // pred_check
        %p244 = pneg %p138
      $region26: #{forward.21} parent=11 // pred_check_branch
        %246 = sbr.rel (%p244) target = $region28
      $region27: #{forward.21} parent=11 // pred_region
        _
      $region28: #{forward.21} parent=11 // pred_fallthru
        _
    $region12: #{forward.21} parent=5 // pred_fallthru
      _
    %p247 = scmp.lt.s32.totalorder %s14, 2
    // Predicated region
    $region29: #{forward.21} parent=5 // pred_check
      %p248 = pneg %p247
    $region30: #{forward.21} parent=5 // pred_check_branch
      %250 = sbr.rel (%p248) target = $region32
    $region31: #{forward.21} parent=5 // pred_region
      // Predicated region
      $region33: #{forward.21} parent=31 // pred_check
        %p251 = pneg %p48
      $region34: #{forward.21} parent=31 // pred_check_branch
        %253 = sbr.rel (%p251) target = $region36
      $region35: #{forward.21} parent=31 // pred_region
        %s254 = smul.u32 4, %s22
        %p255 = scmp.lt.s32.totalorder %s21, 1
        %s256 = scalar_select %p255, %s21, 1
        %p257 = scmp.lt.s32.totalorder %s254, 3
        %s258 = scalar_select %p257, %s254, 3
        %s259 = smul.addr %s256, 4
        %s260 = sadd.s32 %s258, %s259
        %s261 = smul.addr %s260, 8
        %s262 = scalar_lea.vmem %s0, %s261
        %s263 = smul.u32 4, %s22
      $region36: #{forward.21} parent=31 // pred_fallthru
        _
    $region32: #{forward.21} parent=5 // pred_fallthru
      _
    %p264 = scmp.le.s32.totalorder 1, %s14
    %p265 = scmp.lt.s32.totalorder %s14, 3
    %p266 = pnand %p264, %p265
    %p267 = pneg %p266
    // Predicated region
    $region37: #{forward.21} parent=5 // pred_check
      _
    $region38: #{forward.21} parent=5 // pred_check_branch
      %269 = sbr.rel (%p266) target = $region40
    $region39: #{forward.21} parent=5 // pred_region
      %s270 = ssub.s32 %s14, 1
      %s271 = smul.u32 4, %s24
      %p272 = scmp.lt.s32.totalorder %s23, 1
      %s273 = scalar_select %p272, %s23, 1
      %p274 = scmp.lt.s32.totalorder %s271, 3
      %s275 = scalar_select %p274, %s271, 3
      %s276 = smul.addr %s273, 4
      %s277 = sadd.s32 %s275, %s276
      %s278 = smul.addr %s277, 8
      %s279 = scalar_lea.vmem %s0, %s278
      %p280 = pneg %p54
      %p281 = pneg %p51
      %p282 = pneg %p75
      %p283 = pneg %p72
      %p284 = pneg %p96
      %p285 = pneg %p93
      %p286 = pneg %p117
      %p287 = pneg %p114
      %p288 = pneg %p138
      %p289 = pneg %p135
      %p290 = pneg %p164
      %p291 = pneg %p161
      %p292 = scmp.lt.s32.totalorder %s23, 1
      %s293 = scalar_select %p292, %s23, 1
      %s294 = smul.addr %s293, 8
      %s295 = scalar_lea.vmem %s5, %s294
      %p296 = pneg %p192
      %p297 = pneg %p189
      %p298 = scmp.lt.s32.totalorder %s23, 1
      %s299 = scalar_select %p298, %s23, 1
      %p300 = scmp.lt.s32.totalorder %s24, 0
      %s301 = scalar_select %p300, %s24, 0
      %s302 = smul.addr %s301, 8
      %s303 = smul.addr %s299, 8
      %s304 = sadd.s32 %s302, %s303
      %s305 = scalar_lea.vmem %s6, %s304
      %p306 = pneg %p220
      %p307 = pneg %p217
      %p308 = scmp.lt.s32.totalorder %s23, 1
      %s309 = scalar_select %p308, %s23, 1
      %p310 = scmp.lt.s32.totalorder %s24, 0
      %s311 = scalar_select %p310, %s24, 0
      %s312 = smul.addr %s311, 8
      %s313 = smul.addr %s309, 8
      %s314 = sadd.s32 %s312, %s313
      %s315 = scalar_lea.vmem %s7, %s314
      %s316 = smul.u32 4, %s24
      %p317 = scmp.lt.s32.totalorder %s23, 1
      %s318 = scalar_select %p317, %s23, 1
      %p319 = scmp.lt.s32.totalorder %s316, 3
      %s320 = scalar_select %p319, %s316, 3
      %s321 = smul.addr %s318, 4
      %s322 = sadd.s32 %s320, %s321
      %s323 = smul.addr %s322, 8
      %s324 = scalar_lea.vmem %s0, %s323
      %s325 = smul.u32 4, %s24
      %p326 = scmp.lt.s32.totalorder %s23, 1
      %s327 = scalar_select %p326, %s23, 1
      %s328 = smul.addr %s327, 8
      %s329 = scalar_lea.vmem %s5, %s328
      %p330 = scmp.lt.s32.totalorder %s23, 1
      %s331 = scalar_select %p330, %s23, 1
      %p332 = scmp.lt.s32.totalorder %s24, 0
      %s333 = scalar_select %p332, %s24, 0
      %s334 = smul.addr %s333, 8
      %s335 = smul.addr %s331, 8
      %s336 = sadd.s32 %s334, %s335
      %s337 = scalar_lea.vmem %s6, %s336
      %p338 = scmp.lt.s32.totalorder %s23, 1
      %s339 = scalar_select %p338, %s23, 1
      %p340 = scmp.lt.s32.totalorder %s24, 0
      %s341 = scalar_select %p340, %s24, 0
      %s342 = smul.addr %s341, 8
      %s343 = smul.addr %s339, 8
      %s344 = sadd.s32 %s342, %s343
      %s345 = scalar_lea.vmem %s7, %s344
      %v347 = vld [vmem:[%s324] sm:$0xff]
      %v348 = vld [vmem:[%s324 + $0x8] sm:$0xff]
      %v349 = vld [vmem:[%s324 + $0x10] sm:$0xff]
      %v350 = vld [vmem:[%s324 + $0x18] sm:$0xff]
      %v351 = vld [vmem:[%s3] sm:$0x1]
      %v353 = vlaneseq
      %v354 = vshrl.u32 %v353, 7
      %v355 = vsub.s32 0, %v354
      %v356 = vrot.slane %v351, %v355
      %v358 = vmul.f32 %v347, %v356
      %v359 = vmul.f32 %v348, %v356
      %v360 = vmul.f32 %v349, %v356
      %v361 = vmul.f32 %v350, %v356
      %v362 = vld [vmem:[%s4] sm:$0x1]
      %v364 = vlaneseq
      %v365 = vshrl.u32 %v364, 7
      %v366 = vsub.s32 0, %v365
      %v367 = vrot.slane %v362, %v366
      %v369 = vadd.f32 %v358, %v367
      %v370 = vadd.f32 %v359, %v367
      %v371 = vadd.f32 %v360, %v367
      %v372 = vadd.f32 %v361, %v367
      %v373 = vmax.f32 %v369, 0.0
      %v374 = vmax.f32 %v370, 0.0
      %v375 = vmax.f32 %v371, 0.0
      %v376 = vmax.f32 %v372, 0.0
      %v377 = vpack.c.bf16 %v374, %v373
      %v378 = vpack.c.bf16 %v376, %v375
      %v379 = vld [vmem:[%s1] sm:$0xff]
      %v380 = vld [vmem:[%s1 + $0x8] sm:$0xff]
      %v381 = vld [vmem:[%s1 + $0x10] sm:$0xff]
      %v382 = vld [vmem:[%s1 + $0x18] sm:$0xff]
      %v383 = vld [vmem:[%s1 + $0x20] sm:$0xff]
      %v384 = vld [vmem:[%s1 + $0x28] sm:$0xff]
      %v385 = vld [vmem:[%s1 + $0x30] sm:$0xff]
      %v386 = vld [vmem:[%s1 + $0x38] sm:$0xff]
      %v387 = vld [vmem:[%s1 + $0x40] sm:$0xff]
      %v388 = vld [vmem:[%s1 + $0x48] sm:$0xff]
      %v389 = vld [vmem:[%s1 + $0x50] sm:$0xff]
      %v390 = vld [vmem:[%s1 + $0x58] sm:$0xff]
      %v391 = vld [vmem:[%s1 + $0x60] sm:$0xff]
      %v392 = vld [vmem:[%s1 + $0x68] sm:$0xff]
      %v393 = vld [vmem:[%s1 + $0x70] sm:$0xff]
      %v394 = vld [vmem:[%s1 + $0x78] sm:$0xff]
      %v395 = vld [vmem:[%s1 + $0x80] sm:$0xff]
      %v396 = vld [vmem:[%s1 + $0x88] sm:$0xff]
      %v397 = vld [vmem:[%s1 + $0x90] sm:$0xff]
      %v398 = vld [vmem:[%s1 + $0x98] sm:$0xff]
      %v399 = vld [vmem:[%s1 + $0xa0] sm:$0xff]
      %v400 = vld [vmem:[%s1 + $0xa8] sm:$0xff]
      %v401 = vld [vmem:[%s1 + $0xb0] sm:$0xff]
      %v402 = vld [vmem:[%s1 + $0xb8] sm:$0xff]
      %v403 = vld [vmem:[%s1 + $0xc0] sm:$0xff]
      %v404 = vld [vmem:[%s1 + $0xc8] sm:$0xff]
      %v405 = vld [vmem:[%s1 + $0xd0] sm:$0xff]
      %v406 = vld [vmem:[%s1 + $0xd8] sm:$0xff]
      %v407 = vld [vmem:[%s1 + $0xe0] sm:$0xff]
      %v408 = vld [vmem:[%s1 + $0xe8] sm:$0xff]
      %v409 = vld [vmem:[%s1 + $0xf0] sm:$0xff]
      %v410 = vld [vmem:[%s1 + $0xf8] sm:$0xff]
      %v411 = vld [vmem:[%s1 + $0x100] sm:$0xff]
      %v412 = vld [vmem:[%s1 + $0x108] sm:$0xff]
      %v413 = vld [vmem:[%s1 + $0x110] sm:$0xff]
      %v414 = vld [vmem:[%s1 + $0x118] sm:$0xff]
      %v415 = vld [vmem:[%s1 + $0x120] sm:$0xff]
      %v416 = vld [vmem:[%s1 + $0x128] sm:$0xff]
      %v417 = vld [vmem:[%s1 + $0x130] sm:$0xff]
      %v418 = vld [vmem:[%s1 + $0x138] sm:$0xff]
      %v419 = vld [vmem:[%s1 + $0x140] sm:$0xff]
      %v420 = vld [vmem:[%s1 + $0x148] sm:$0xff]
      %v421 = vld [vmem:[%s1 + $0x150] sm:$0xff]
      %v422 = vld [vmem:[%s1 + $0x158] sm:$0xff]
      %v423 = vld [vmem:[%s1 + $0x160] sm:$0xff]
      %v424 = vld [vmem:[%s1 + $0x168] sm:$0xff]
      %v425 = vld [vmem:[%s1 + $0x170] sm:$0xff]
      %v426 = vld [vmem:[%s1 + $0x178] sm:$0xff]
      %v427 = vld [vmem:[%s1 + $0x180] sm:$0xff]
      %v428 = vld [vmem:[%s1 + $0x188] sm:$0xff]
      %v429 = vld [vmem:[%s1 + $0x190] sm:$0xff]
      %v430 = vld [vmem:[%s1 + $0x198] sm:$0xff]
      %v431 = vld [vmem:[%s1 + $0x1a0] sm:$0xff]
      %v432 = vld [vmem:[%s1 + $0x1a8] sm:$0xff]
      %v433 = vld [vmem:[%s1 + $0x1b0] sm:$0xff]
      %v434 = vld [vmem:[%s1 + $0x1b8] sm:$0xff]
      %v435 = vld [vmem:[%s1 + $0x1c0] sm:$0xff]
      %v436 = vld [vmem:[%s1 + $0x1c8] sm:$0xff]
      %v437 = vld [vmem:[%s1 + $0x1d0] sm:$0xff]
      %v438 = vld [vmem:[%s1 + $0x1d8] sm:$0xff]
      %v439 = vld [vmem:[%s1 + $0x1e0] sm:$0xff]
      %v440 = vld [vmem:[%s1 + $0x1e8] sm:$0xff]
      %v441 = vld [vmem:[%s1 + $0x1f0] sm:$0xff]
      %v442 = vld [vmem:[%s1 + $0x1f8] sm:$0xff]
      %v443 = vld [vmem:[%s2] sm:$0xff]
      %v445 = vlaneseq
      %v446 = vshrl.u32 %v445, 7
      %v447 = vsub.s32 0, %v446
      %v448 = vrot.slane %v443, %v447
      %v449 = vlaneseq
      %v450 = vshrl.u32 %v449, 7
      %v451 = vsub.s32 1, %v450
      %v452 = vrot.slane %v443, %v451
      %v453 = vlaneseq
      %v454 = vshrl.u32 %v453, 7
      %v455 = vsub.s32 2, %v454
      %v456 = vrot.slane %v443, %v455
      %v457 = vlaneseq
      %v458 = vshrl.u32 %v457, 7
      %v459 = vsub.s32 3, %v458
      %v460 = vrot.slane %v443, %v459
      %v461 = vlaneseq
      %v462 = vshrl.u32 %v461, 7
      %v463 = vsub.s32 4, %v462
      %v464 = vrot.slane %v443, %v463
      %v465 = vlaneseq
      %v466 = vshrl.u32 %v465, 7
      %v467 = vsub.s32 5, %v466
      %v468 = vrot.slane %v443, %v467
      %v469 = vlaneseq
      %v470 = vshrl.u32 %v469, 7
      %v471 = vsub.s32 6, %v470
      %v472 = vrot.slane %v443, %v471
      %v473 = vlaneseq
      %v474 = vshrl.u32 %v473, 7
      %v475 = vsub.s32 7, %v474
      %v476 = vrot.slane %v443, %v475
      %v549 = vunpack.c.l.b16 %v379
      %v550 = vunpack.c.h.b16 %v379
      %v551 = vunpack.c.l.b16 %v380
      %v552 = vunpack.c.h.b16 %v380
      %v553 = vunpack.c.l.b16 %v381
      %v554 = vunpack.c.h.b16 %v381
      %v555 = vunpack.c.l.b16 %v382
      %v556 = vunpack.c.h.b16 %v382
      %v557 = vunpack.c.l.b16 %v383
      %v558 = vunpack.c.h.b16 %v383
      %v559 = vunpack.c.l.b16 %v384
      %v560 = vunpack.c.h.b16 %v384
      %v561 = vunpack.c.l.b16 %v385
      %v562 = vunpack.c.h.b16 %v385
      %v563 = vunpack.c.l.b16 %v386
      %v564 = vunpack.c.h.b16 %v386
      %v565 = vunpack.c.l.b16 %v387
      %v566 = vunpack.c.h.b16 %v387
      %v567 = vunpack.c.l.b16 %v388
      %v568 = vunpack.c.h.b16 %v388
      %v569 = vunpack.c.l.b16 %v389
      %v570 = vunpack.c.h.b16 %v389
      %v571 = vunpack.c.l.b16 %v390
      %v572 = vunpack.c.h.b16 %v390
      %v573 = vunpack.c.l.b16 %v391
      %v574 = vunpack.c.h.b16 %v391
      %v575 = vunpack.c.l.b16 %v392
      %v576 = vunpack.c.h.b16 %v392
      %v577 = vunpack.c.l.b16 %v393
      %v578 = vunpack.c.h.b16 %v393
      %v579 = vunpack.c.l.b16 %v394
      %v580 = vunpack.c.h.b16 %v394
      %v581 = vunpack.c.l.b16 %v395
      %v582 = vunpack.c.h.b16 %v395
      %v583 = vunpack.c.l.b16 %v396
      %v584 = vunpack.c.h.b16 %v396
      %v585 = vunpack.c.l.b16 %v397
      %v586 = vunpack.c.h.b16 %v397
      %v587 = vunpack.c.l.b16 %v398
      %v588 = vunpack.c.h.b16 %v398
      %v589 = vunpack.c.l.b16 %v399
      %v590 = vunpack.c.h.b16 %v399
      %v591 = vunpack.c.l.b16 %v400
      %v592 = vunpack.c.h.b16 %v400
      %v593 = vunpack.c.l.b16 %v401
      %v594 = vunpack.c.h.b16 %v401
      %v595 = vunpack.c.l.b16 %v402
      %v596 = vunpack.c.h.b16 %v402
      %v597 = vunpack.c.l.b16 %v403
      %v598 = vunpack.c.h.b16 %v403
      %v599 = vunpack.c.l.b16 %v404
      %v600 = vunpack.c.h.b16 %v404
      %v601 = vunpack.c.l.b16 %v405
      %v602 = vunpack.c.h.b16 %v405
      %v603 = vunpack.c.l.b16 %v406
      %v604 = vunpack.c.h.b16 %v406
      %v605 = vunpack.c.l.b16 %v407
      %v606 = vunpack.c.h.b16 %v407
      %v607 = vunpack.c.l.b16 %v408
      %v608 = vunpack.c.h.b16 %v408
      %v609 = vunpack.c.l.b16 %v409
      %v610 = vunpack.c.h.b16 %v409
      %v611 = vunpack.c.l.b16 %v410
      %v612 = vunpack.c.h.b16 %v410
      %v613 = vunpack.c.l.b16 %v411
      %v614 = vunpack.c.h.b16 %v411
      %v615 = vunpack.c.l.b16 %v412
      %v616 = vunpack.c.h.b16 %v412
      %v617 = vunpack.c.l.b16 %v413
      %v618 = vunpack.c.h.b16 %v413
      %v619 = vunpack.c.l.b16 %v414
      %v620 = vunpack.c.h.b16 %v414
      %v621 = vunpack.c.l.b16 %v415
      %v622 = vunpack.c.h.b16 %v415
      %v623 = vunpack.c.l.b16 %v416
      %v624 = vunpack.c.h.b16 %v416
      %v625 = vunpack.c.l.b16 %v417
      %v626 = vunpack.c.h.b16 %v417
      %v627 = vunpack.c.l.b16 %v418
      %v628 = vunpack.c.h.b16 %v418
      %v629 = vunpack.c.l.b16 %v419
      %v630 = vunpack.c.h.b16 %v419
      %v631 = vunpack.c.l.b16 %v420
      %v632 = vunpack.c.h.b16 %v420
      %v633 = vunpack.c.l.b16 %v421
      %v634 = vunpack.c.h.b16 %v421
      %v635 = vunpack.c.l.b16 %v422
      %v636 = vunpack.c.h.b16 %v422
      %v637 = vunpack.c.l.b16 %v423
      %v638 = vunpack.c.h.b16 %v423
      %v639 = vunpack.c.l.b16 %v424
      %v640 = vunpack.c.h.b16 %v424
      %v641 = vunpack.c.l.b16 %v425
      %v642 = vunpack.c.h.b16 %v425
      %v643 = vunpack.c.l.b16 %v426
      %v644 = vunpack.c.h.b16 %v426
      %v645 = vunpack.c.l.b16 %v427
      %v646 = vunpack.c.h.b16 %v427
      %v647 = vunpack.c.l.b16 %v428
      %v648 = vunpack.c.h.b16 %v428
      %v649 = vunpack.c.l.b16 %v429
      %v650 = vunpack.c.h.b16 %v429
      %v651 = vunpack.c.l.b16 %v430
      %v652 = vunpack.c.h.b16 %v430
      %v653 = vunpack.c.l.b16 %v431
      %v654 = vunpack.c.h.b16 %v431
      %v655 = vunpack.c.l.b16 %v432
      %v656 = vunpack.c.h.b16 %v432
      %v657 = vunpack.c.l.b16 %v433
      %v658 = vunpack.c.h.b16 %v433
      %v659 = vunpack.c.l.b16 %v434
      %v660 = vunpack.c.h.b16 %v434
      %v661 = vunpack.c.l.b16 %v435
      %v662 = vunpack.c.h.b16 %v435
      %v663 = vunpack.c.l.b16 %v436
      %v664 = vunpack.c.h.b16 %v436
      %v665 = vunpack.c.l.b16 %v437
      %v666 = vunpack.c.h.b16 %v437
      %v667 = vunpack.c.l.b16 %v438
      %v668 = vunpack.c.h.b16 %v438
      %v669 = vunpack.c.l.b16 %v439
      %v670 = vunpack.c.h.b16 %v439
      %v671 = vunpack.c.l.b16 %v440
      %v672 = vunpack.c.h.b16 %v440
      %v673 = vunpack.c.l.b16 %v441
      %v674 = vunpack.c.h.b16 %v441
      %v675 = vunpack.c.l.b16 %v442
      %v676 = vunpack.c.h.b16 %v442
      %v677 = vpack.c.b16 %v557, %v549
      %v678 = vpack.c.b16 %v558, %v550
      %v679 = vpack.c.b16 %v559, %v551
      %v680 = vpack.c.b16 %v560, %v552
      %v681 = vpack.c.b16 %v561, %v553
      %v682 = vpack.c.b16 %v562, %v554
      %v683 = vpack.c.b16 %v563, %v555
      %v684 = vpack.c.b16 %v564, %v556
      %v685 = vpack.c.b16 %v573, %v565
      %v686 = vpack.c.b16 %v574, %v566
      %v687 = vpack.c.b16 %v575, %v567
      %v688 = vpack.c.b16 %v576, %v568
      %v689 = vpack.c.b16 %v577, %v569
      %v690 = vpack.c.b16 %v578, %v570
      %v691 = vpack.c.b16 %v579, %v571
      %v692 = vpack.c.b16 %v580, %v572
      %v693 = vpack.c.b16 %v589, %v581
      %v694 = vpack.c.b16 %v590, %v582
      %v695 = vpack.c.b16 %v591, %v583
      %v696 = vpack.c.b16 %v592, %v584
      %v697 = vpack.c.b16 %v593, %v585
      %v698 = vpack.c.b16 %v594, %v586
      %v699 = vpack.c.b16 %v595, %v587
      %v700 = vpack.c.b16 %v596, %v588
      %v701 = vpack.c.b16 %v605, %v597
      %v702 = vpack.c.b16 %v606, %v598
      %v703 = vpack.c.b16 %v607, %v599
      %v704 = vpack.c.b16 %v608, %v600
      %v705 = vpack.c.b16 %v609, %v601
      %v706 = vpack.c.b16 %v610, %v602
      %v707 = vpack.c.b16 %v611, %v603
      %v708 = vpack.c.b16 %v612, %v604
      %v709 = vpack.c.b16 %v621, %v613
      %v710 = vpack.c.b16 %v622, %v614
      %v711 = vpack.c.b16 %v623, %v615
      %v712 = vpack.c.b16 %v624, %v616
      %v713 = vpack.c.b16 %v625, %v617
      %v714 = vpack.c.b16 %v626, %v618
      %v715 = vpack.c.b16 %v627, %v619
      %v716 = vpack.c.b16 %v628, %v620
      %v717 = vpack.c.b16 %v637, %v629
      %v718 = vpack.c.b16 %v638, %v630
      %v719 = vpack.c.b16 %v639, %v631
      %v720 = vpack.c.b16 %v640, %v632
      %v721 = vpack.c.b16 %v641, %v633
      %v722 = vpack.c.b16 %v642, %v634
      %v723 = vpack.c.b16 %v643, %v635
      %v724 = vpack.c.b16 %v644, %v636
      %v725 = vpack.c.b16 %v653, %v645
      %v726 = vpack.c.b16 %v654, %v646
      %v727 = vpack.c.b16 %v655, %v647
      %v728 = vpack.c.b16 %v656, %v648
      %v729 = vpack.c.b16 %v657, %v649
      %v730 = vpack.c.b16 %v658, %v650
      %v731 = vpack.c.b16 %v659, %v651
      %v732 = vpack.c.b16 %v660, %v652
      %v733 = vpack.c.b16 %v669, %v661
      %v734 = vpack.c.b16 %v670, %v662
      %v735 = vpack.c.b16 %v671, %v663
      %v736 = vpack.c.b16 %v672, %v664
      %v737 = vpack.c.b16 %v673, %v665
      %v738 = vpack.c.b16 %v674, %v666
      %v739 = vpack.c.b16 %v675, %v667
      %v740 = vpack.c.b16 %v676, %v668
      %805 = vmatprep.subr.bf16.mxu0 %v678
      %806 = vmatpush1.bf16.msra.mxu0 %v677
      %807 = vmatprep.subr.bf16.mxu0 %v686
      %808 = vmatpush1.bf16.msra.mxu0 %v685
      %809 = vmatprep.subr.bf16.mxu0 %v694
      %810 = vmatpush1.bf16.msra.mxu0 %v693
      %811 = vmatprep.subr.bf16.mxu0 %v702
      %812 = vmatpush1.bf16.msra.mxu0 %v701
      %813 = vmatprep.subr.bf16.mxu0 %v710
      %814 = vmatpush1.bf16.msra.mxu0 %v709
      %815 = vmatprep.subr.bf16.mxu0 %v718
      %816 = vmatpush1.bf16.msra.mxu0 %v717
      %817 = vmatprep.subr.bf16.mxu0 %v726
      %818 = vmatpush1.bf16.msra.mxu0 %v725
      %819 = vmatprep.subr.bf16.mxu0 %v734
      %820 = vmatpush1.bf16.msra.mxu0 %v733
      %821 = vmatprep.subr.bf16.mxu0 0
      %822 = vmatpush1.bf16.msra.mxu0 0
      %823 = vmatprep.subr.bf16.mxu0 0
      %824 = vmatpush1.bf16.msra.mxu0 0
      %825 = vmatprep.subr.bf16.mxu0 0
      %826 = vmatpush1.bf16.msra.mxu0 0
      %827 = vmatprep.subr.bf16.mxu0 0
      %828 = vmatpush1.bf16.msra.mxu0 0
      %829 = vmatprep.subr.bf16.mxu0 0
      %830 = vmatpush1.bf16.msra.mxu0 0
      %831 = vmatprep.subr.bf16.mxu0 0
      %832 = vmatpush1.bf16.msra.mxu0 0
      %833 = vmatprep.subr.bf16.mxu0 0
      %834 = vmatpush1.bf16.msra.mxu0 0
      %835 = vmatprep.subr.bf16.mxu0 0
      %836 = vmatpush1.bf16.msra.mxu0 0
      %837 = vmatprep.mubr.bf16.mxu0 0
      %838 = vmatmul.mubr.bf16.gmra.mrb[0].mxu0 %v377
      %v839 = vpop.f32.mrb[0].mxu0
      %v840 = vadd.f32 %v448, %v839
      %v841 = vpop.f32.mrb[0].mxu0
      %v842 = vadd.f32 %v452, %v841
      %v843 = vpop.f32.mrb[0].mxu0
      %v844 = vadd.f32 %v448, %v843
      %v845 = vpop.f32.mrb[0].mxu0
      %v846 = vadd.f32 %v452, %v845
      %847 = vmatprep.mubr.bf16.mxu0 0
      %848 = vmatmul.mubr.bf16.gmra.mrb[0].mxu0 %v378
      %v849 = vpop.f32.mrb[0].mxu0
      %v850 = vadd.f32 %v448, %v849
      %v851 = vpop.f32.mrb[0].mxu0
      %v852 = vadd.f32 %v452, %v851
      %v853 = vpop.f32.mrb[0].mxu0
      %v854 = vadd.f32 %v448, %v853
      %v855 = vpop.f32.mrb[0].mxu0
      %v856 = vadd.f32 %v452, %v855
      %857 = vdwg.mxu0
      %858 = vmatprep.subr.bf16.mxu0 %v680
      %859 = vmatpush1.bf16.msra.mxu0 %v679
      %860 = vmatprep.subr.bf16.mxu0 %v688
      %861 = vmatpush1.bf16.msra.mxu0 %v687
      %862 = vmatprep.subr.bf16.mxu0 %v696
      %863 = vmatpush1.bf16.msra.mxu0 %v695
      %864 = vmatprep.subr.bf16.mxu0 %v704
      %865 = vmatpush1.bf16.msra.mxu0 %v703
      %866 = vmatprep.subr.bf16.mxu0 %v712
      %867 = vmatpush1.bf16.msra.mxu0 %v711
      %868 = vmatprep.subr.bf16.mxu0 %v720
      %869 = vmatpush1.bf16.msra.mxu0 %v719
      %870 = vmatprep.subr.bf16.mxu0 %v728
      %871 = vmatpush1.bf16.msra.mxu0 %v727
      %872 = vmatprep.subr.bf16.mxu0 %v736
      %873 = vmatpush1.bf16.msra.mxu0 %v735
      %874 = vmatprep.subr.bf16.mxu0 0
      %875 = vmatpush1.bf16.msra.mxu0 0
      %876 = vmatprep.subr.bf16.mxu0 0
      %877 = vmatpush1.bf16.msra.mxu0 0
      %878 = vmatprep.subr.bf16.mxu0 0
      %879 = vmatpush1.bf16.msra.mxu0 0
      %880 = vmatprep.subr.bf16.mxu0 0
      %881 = vmatpush1.bf16.msra.mxu0 0
      %882 = vmatprep.subr.bf16.mxu0 0
      %883 = vmatpush1.bf16.msra.mxu0 0
      %884 = vmatprep.subr.bf16.mxu0 0
      %885 = vmatpush1.bf16.msra.mxu0 0
      %886 = vmatprep.subr.bf16.mxu0 0
      %887 = vmatpush1.bf16.msra.mxu0 0
      %888 = vmatprep.subr.bf16.mxu0 0
      %889 = vmatpush1.bf16.msra.mxu0 0
      %890 = vmatprep.mubr.bf16.mxu0 0
      %891 = vmatmul.mubr.bf16.gmra.mrb[0].mxu0 %v377
      %v892 = vpop.f32.mrb[0].mxu0
      %v893 = vadd.f32 %v456, %v892
      %v894 = vpop.f32.mrb[0].mxu0
      %v895 = vadd.f32 %v460, %v894
      %v896 = vpop.f32.mrb[0].mxu0
      %v897 = vadd.f32 %v456, %v896
      %v898 = vpop.f32.mrb[0].mxu0
      %v899 = vadd.f32 %v460, %v898
      %900 = vmatprep.mubr.bf16.mxu0 0
      %901 = vmatmul.mubr.bf16.gmra.mrb[0].mxu0 %v378
      %v902 = vpop.f32.mrb[0].mxu0
      %v903 = vadd.f32 %v456, %v902
      %v904 = vpop.f32.mrb[0].mxu0
      %v905 = vadd.f32 %v460, %v904
      %v906 = vpop.f32.mrb[0].mxu0
      %v907 = vadd.f32 %v456, %v906
      %v908 = vpop.f32.mrb[0].mxu0
      %v909 = vadd.f32 %v460, %v908
      %910 = vdwg.mxu0
      %911 = vmatprep.subr.bf16.mxu0 %v682
      %912 = vmatpush1.bf16.msra.mxu0 %v681
      %913 = vmatprep.subr.bf16.mxu0 %v690
      %914 = vmatpush1.bf16.msra.mxu0 %v689
      %915 = vmatprep.subr.bf16.mxu0 %v698
      %916 = vmatpush1.bf16.msra.mxu0 %v697
      %917 = vmatprep.subr.bf16.mxu0 %v706
      %918 = vmatpush1.bf16.msra.mxu0 %v705
      %919 = vmatprep.subr.bf16.mxu0 %v714
      %920 = vmatpush1.bf16.msra.mxu0 %v713
      %921 = vmatprep.subr.bf16.mxu0 %v722
      %922 = vmatpush1.bf16.msra.mxu0 %v721
      %923 = vmatprep.subr.bf16.mxu0 %v730
      %924 = vmatpush1.bf16.msra.mxu0 %v729
      %925 = vmatprep.subr.bf16.mxu0 %v738
      %926 = vmatpush1.bf16.msra.mxu0 %v737
      %927 = vmatprep.subr.bf16.mxu0 0
      %928 = vmatpush1.bf16.msra.mxu0 0
      %929 = vmatprep.subr.bf16.mxu0 0
      %930 = vmatpush1.bf16.msra.mxu0 0
      %931 = vmatprep.subr.bf16.mxu0 0
      %932 = vmatpush1.bf16.msra.mxu0 0
      %933 = vmatprep.subr.bf16.mxu0 0
      %934 = vmatpush1.bf16.msra.mxu0 0
      %935 = vmatprep.subr.bf16.mxu0 0
      %936 = vmatpush1.bf16.msra.mxu0 0
      %937 = vmatprep.subr.bf16.mxu0 0
      %938 = vmatpush1.bf16.msra.mxu0 0
      %939 = vmatprep.subr.bf16.mxu0 0
      %940 = vmatpush1.bf16.msra.mxu0 0
      %941 = vmatprep.subr.bf16.mxu0 0
      %942 = vmatpush1.bf16.msra.mxu0 0
      %943 = vmatprep.mubr.bf16.mxu0 0
      %944 = vmatmul.mubr.bf16.gmra.mrb[0].mxu0 %v377
      %v945 = vpop.f32.mrb[0].mxu0
      %v946 = vadd.f32 %v464, %v945
      %v947 = vpop.f32.mrb[0].mxu0
      %v948 = vadd.f32 %v468, %v947
      %v949 = vpop.f32.mrb[0].mxu0
      %v950 = vadd.f32 %v464, %v949
      %v951 = vpop.f32.mrb[0].mxu0
      %v952 = vadd.f32 %v468, %v951
      %953 = vmatprep.mubr.bf16.mxu0 0
      %954 = vmatmul.mubr.bf16.gmra.mrb[0].mxu0 %v378
      %v955 = vpop.f32.mrb[0].mxu0
      %v956 = vadd.f32 %v464, %v955
      %v957 = vpop.f32.mrb[0].mxu0
      %v958 = vadd.f32 %v468, %v957
      %v959 = vpop.f32.mrb[0].mxu0
      %v960 = vadd.f32 %v464, %v959
      %v961 = vpop.f32.mrb[0].mxu0
      %v962 = vadd.f32 %v468, %v961
      %963 = vdwg.mxu0
      %964 = vmatprep.subr.bf16.mxu0 %v684
      %965 = vmatpush1.bf16.msra.mxu0 %v683
      %966 = vmatprep.subr.bf16.mxu0 %v692
      %967 = vmatpush1.bf16.msra.mxu0 %v691
      %968 = vmatprep.subr.bf16.mxu0 %v700
      %969 = vmatpush1.bf16.msra.mxu0 %v699
      %970 = vmatprep.subr.bf16.mxu0 %v708
      %971 = vmatpush1.bf16.msra.mxu0 %v707
      %972 = vmatprep.subr.bf16.mxu0 %v716
      %973 = vmatpush1.bf16.msra.mxu0 %v715
      %974 = vmatprep.subr.bf16.mxu0 %v724
      %975 = vmatpush1.bf16.msra.mxu0 %v723
      %976 = vmatprep.subr.bf16.mxu0 %v732
      %977 = vmatpush1.bf16.msra.mxu0 %v731
      %978 = vmatprep.subr.bf16.mxu0 %v740
      %979 = vmatpush1.bf16.msra.mxu0 %v739
      %980 = vmatprep.subr.bf16.mxu0 0
      %981 = vmatpush1.bf16.msra.mxu0 0
      %982 = vmatprep.subr.bf16.mxu0 0
      %983 = vmatpush1.bf16.msra.mxu0 0
      %984 = vmatprep.subr.bf16.mxu0 0
      %985 = vmatpush1.bf16.msra.mxu0 0
      %986 = vmatprep.subr.bf16.mxu0 0
      %987 = vmatpush1.bf16.msra.mxu0 0
      %988 = vmatprep.subr.bf16.mxu0 0
      %989 = vmatpush1.bf16.msra.mxu0 0
      %990 = vmatprep.subr.bf16.mxu0 0
      %991 = vmatpush1.bf16.msra.mxu0 0
      %992 = vmatprep.subr.bf16.mxu0 0
      %993 = vmatpush1.bf16.msra.mxu0 0
      %994 = vmatprep.subr.bf16.mxu0 0
      %995 = vmatpush1.bf16.msra.mxu0 0
      %996 = vmatprep.mubr.bf16.mxu0 0
      %997 = vmatmul.mubr.bf16.gmra.mrb[0].mxu0 %v377
      %v998 = vpop.f32.mrb[0].mxu0
      %v999 = vadd.f32 %v472, %v998
      %v1000 = vpop.f32.mrb[0].mxu0
      %v1001 = vadd.f32 %v476, %v1000
      %v1002 = vpop.f32.mrb[0].mxu0
      %v1003 = vadd.f32 %v472, %v1002
      %v1004 = vpop.f32.mrb[0].mxu0
      %v1005 = vadd.f32 %v476, %v1004
      %1006 = vmatprep.mubr.bf16.mxu0 0
      %1007 = vmatmul.mubr.bf16.gmra.mrb[0].mxu0 %v378
      %v1008 = vpop.f32.mrb[0].mxu0
      %v1009 = vadd.f32 %v472, %v1008
      %v1010 = vpop.f32.mrb[0].mxu0
      %v1011 = vadd.f32 %v476, %v1010
      %v1012 = vpop.f32.mrb[0].mxu0
      %v1013 = vadd.f32 %v472, %v1012
      %v1014 = vpop.f32.mrb[0].mxu0
      %v1015 = vadd.f32 %v476, %v1014
      %1016 = vdwg.mxu0
      %v1017 = vmax.f32 %v840, %v844
      %v1018 = vmax.f32 %v1017, %v850
      %v1019 = vmax.f32 %v1018, %v854
      %v1020 = vrot.slane %v1019, 4
      %v1021 = vmax.f32 %v1019, %v1020
      %v1022 = vrot.slane %v1021, 2
      %v1023 = vmax.f32 %v1021, %v1022
      %v1024 = vrot.slane %v1023, 1
      %v1025 = vmax.f32 %v1023, %v1024
      %v1026 = vmax.f32 %v842, %v846
      %v1027 = vmax.f32 %v1026, %v852
      %v1028 = vmax.f32 %v1027, %v856
      %v1029 = vrot.slane %v1028, 4
      %v1030 = vmax.f32 %v1028, %v1029
      %v1031 = vrot.slane %v1030, 2
      %v1032 = vmax.f32 %v1030, %v1031
      %v1033 = vrot.slane %v1032, 1
      %v1034 = vmax.f32 %v1032, %v1033
      %v1035 = vmax.f32 %v893, %v897
      %v1036 = vmax.f32 %v1035, %v903
      %v1037 = vmax.f32 %v1036, %v907
      %v1038 = vrot.slane %v1037, 4
      %v1039 = vmax.f32 %v1037, %v1038
      %v1040 = vrot.slane %v1039, 2
      %v1041 = vmax.f32 %v1039, %v1040
      %v1042 = vrot.slane %v1041, 1
      %v1043 = vmax.f32 %v1041, %v1042
      %v1044 = vmax.f32 %v895, %v899
      %v1045 = vmax.f32 %v1044, %v905
      %v1046 = vmax.f32 %v1045, %v909
      %v1047 = vrot.slane %v1046, 4
      %v1048 = vmax.f32 %v1046, %v1047
      %v1049 = vrot.slane %v1048, 2
      %v1050 = vmax.f32 %v1048, %v1049
      %v1051 = vrot.slane %v1050, 1
      %v1052 = vmax.f32 %v1050, %v1051
      %v1053 = vmax.f32 %v946, %v950
      %v1054 = vmax.f32 %v1053, %v956
      %v1055 = vmax.f32 %v1054, %v960
      %v1056 = vrot.slane %v1055, 4
      %v1057 = vmax.f32 %v1055, %v1056
      %v1058 = vrot.slane %v1057, 2
      %v1059 = vmax.f32 %v1057, %v1058
      %v1060 = vrot.slane %v1059, 1
      %v1061 = vmax.f32 %v1059, %v1060
      %v1062 = vmax.f32 %v948, %v952
      %v1063 = vmax.f32 %v1062, %v958
      %v1064 = vmax.f32 %v1063, %v962
      %v1065 = vrot.slane %v1064, 4
      %v1066 = vmax.f32 %v1064, %v1065
      %v1067 = vrot.slane %v1066, 2
      %v1068 = vmax.f32 %v1066, %v1067
      %v1069 = vrot.slane %v1068, 1
      %v1070 = vmax.f32 %v1068, %v1069
      %v1071 = vmax.f32 %v999, %v1003
      %v1072 = vmax.f32 %v1071, %v1009
      %v1073 = vmax.f32 %v1072, %v1013
      %v1074 = vrot.slane %v1073, 4
      %v1075 = vmax.f32 %v1073, %v1074
      %v1076 = vrot.slane %v1075, 2
      %v1077 = vmax.f32 %v1075, %v1076
      %v1078 = vrot.slane %v1077, 1
      %v1079 = vmax.f32 %v1077, %v1078
      %v1080 = vmax.f32 %v1001, %v1005
      %v1081 = vmax.f32 %v1080, %v1011
      %v1082 = vmax.f32 %v1081, %v1015
      %v1083 = vrot.slane %v1082, 4
      %v1084 = vmax.f32 %v1082, %v1083
      %v1085 = vrot.slane %v1084, 2
      %v1086 = vmax.f32 %v1084, %v1085
      %v1087 = vrot.slane %v1086, 1
      %v1088 = vmax.f32 %v1086, %v1087
      %p1089 = scmp.eq.s32.totalorder %s24, 0
      // Predicated region
      $region41: #{forward.21} parent=39 // pred_check
        %p1090 = pneg %p1089
      $region42: #{forward.21} parent=39 // pred_check_branch
        %1092 = sbr.rel (%p1090) target = $region44
      $region43: #{forward.21} parent=39 // pred_region
        %v1101 = vcombine.low %v1025, %v1034
        %v1102 = vcombine.low %v1043, %v1052
        %v1103 = vcombine.low %v1061, %v1070
        %v1104 = vcombine.low %v1079, %v1088
        %v1106 = vunpack.c.l.s4 1966171168
        %v1107 = vunpack.c.0.s8 %v1106
        %v1108 = vlaneseq
        %v1109 = vshrl.u32 %v1108, 7
        %v1110 = vsub.s32 %v1107, %v1109
        %v1111 = vrot.slane %v1101, %v1110
        %v1113 = vunpack.c.l.s4 1966171168
        %v1114 = vunpack.c.0.s8 %v1113
        %v1115 = vlaneseq
        %v1116 = vshrl.u32 %v1115, 7
        %v1117 = vsub.s32 %v1114, %v1116
        %v1118 = vrot.slane %v1102, %v1117
        %v1120 = vunpack.c.l.s4 1966171168
        %v1121 = vunpack.c.0.s8 %v1120
        %v1122 = vlaneseq
        %v1123 = vshrl.u32 %v1122, 7
        %v1124 = vsub.s32 %v1121, %v1123
        %v1125 = vrot.slane %v1103, %v1124
        %v1127 = vunpack.c.l.s4 1966171168
        %v1128 = vunpack.c.0.s8 %v1127
        %v1129 = vlaneseq
        %v1130 = vshrl.u32 %v1129, 7
        %v1131 = vsub.s32 %v1128, %v1130
        %v1132 = vrot.slane %v1104, %v1131
        %v1133 = vcombine.low %v1111, %v1118
        %v1134 = vcombine.low %v1125, %v1132
        %v1136 = vunpack.c.l.s4 1966171168
        %v1137 = vunpack.c.0.s8 %v1136
        %v1138 = vlaneseq
        %v1139 = vshrl.u32 %v1138, 7
        %v1140 = vsub.s32 %v1137, %v1139
        %v1141 = vrot.slane %v1133, %v1140
        %v1143 = vunpack.c.l.s4 1966171168
        %v1144 = vunpack.c.0.s8 %v1143
        %v1145 = vlaneseq
        %v1146 = vshrl.u32 %v1145, 7
        %v1147 = vsub.s32 %v1144, %v1146
        %v1148 = vrot.slane %v1134, %v1147
        %v1149 = vcombine.low %v1141, %v1148
        %1151 = vst [vmem:[%s329] sm:$0xff] %v1149
      $region44: #{forward.21} parent=39 // pred_fallthru
        _
      %p1152 = scmp.ne.s32.totalorder %s24, 0
      // Predicated region
      $region45: #{forward.21} parent=39 // pred_check
        %p1153 = pneg %p1152
      $region46: #{forward.21} parent=39 // pred_check_branch
        %1155 = sbr.rel (%p1153) target = $region48
      $region47: #{forward.21} parent=39 // pred_region
        %v1156 = vld [vmem:[%s329] sm:$0xff]
        %v1165 = vcombine.low %v1025, %v1034
        %v1166 = vcombine.low %v1043, %v1052
        %v1167 = vcombine.low %v1061, %v1070
        %v1168 = vcombine.low %v1079, %v1088
        %v1170 = vunpack.c.l.s4 1966171168
        %v1171 = vunpack.c.0.s8 %v1170
        %v1172 = vlaneseq
        %v1173 = vshrl.u32 %v1172, 7
        %v1174 = vsub.s32 %v1171, %v1173
        %v1175 = vrot.slane %v1165, %v1174
        %v1177 = vunpack.c.l.s4 1966171168
        %v1178 = vunpack.c.0.s8 %v1177
        %v1179 = vlaneseq
        %v1180 = vshrl.u32 %v1179, 7
        %v1181 = vsub.s32 %v1178, %v1180
        %v1182 = vrot.slane %v1166, %v1181
        %v1184 = vunpack.c.l.s4 1966171168
        %v1185 = vunpack.c.0.s8 %v1184
        %v1186 = vlaneseq
        %v1187 = vshrl.u32 %v1186, 7
        %v1188 = vsub.s32 %v1185, %v1187
        %v1189 = vrot.slane %v1167, %v1188
        %v1191 = vunpack.c.l.s4 1966171168
        %v1192 = vunpack.c.0.s8 %v1191
        %v1193 = vlaneseq
        %v1194 = vshrl.u32 %v1193, 7
        %v1195 = vsub.s32 %v1192, %v1194
        %v1196 = vrot.slane %v1168, %v1195
        %v1197 = vcombine.low %v1175, %v1182
        %v1198 = vcombine.low %v1189, %v1196
        %v1200 = vunpack.c.l.s4 1966171168
        %v1201 = vunpack.c.0.s8 %v1200
        %v1202 = vlaneseq
        %v1203 = vshrl.u32 %v1202, 7
        %v1204 = vsub.s32 %v1201, %v1203
        %v1205 = vrot.slane %v1197, %v1204
        %v1207 = vunpack.c.l.s4 1966171168
        %v1208 = vunpack.c.0.s8 %v1207
        %v1209 = vlaneseq
        %v1210 = vshrl.u32 %v1209, 7
        %v1211 = vsub.s32 %v1208, %v1210
        %v1212 = vrot.slane %v1198, %v1211
        %v1213 = vcombine.low %v1205, %v1212
        %v1215 = vmax.f32 %v1156, %v1213
        %1216 = vst [vmem:[%s329] sm:$0xff] %v1215
      $region48: #{forward.21} parent=39 // pred_fallthru
        _
      %v1217 = vadd.f32 %v840, %v844
      %v1218 = vadd.f32 %v1217, %v850
      %v1219 = vadd.f32 %v1218, %v854
      %v1220 = vrot.slane %v1219, 4
      %v1221 = vadd.f32 %v1219, %v1220
      %v1222 = vrot.slane %v1221, 2
      %v1223 = vadd.f32 %v1221, %v1222
      %v1224 = vrot.slane %v1223, 1
      %v1225 = vadd.f32 %v1223, %v1224
      %v1226 = vadd.f32 %v842, %v846
      %v1227 = vadd.f32 %v1226, %v852
      %v1228 = vadd.f32 %v1227, %v856
      %v1229 = vrot.slane %v1228, 4
      %v1230 = vadd.f32 %v1228, %v1229
      %v1231 = vrot.slane %v1230, 2
      %v1232 = vadd.f32 %v1230, %v1231
      %v1233 = vrot.slane %v1232, 1
      %v1234 = vadd.f32 %v1232, %v1233
      %v1235 = vadd.f32 %v893, %v897
      %v1236 = vadd.f32 %v1235, %v903
      %v1237 = vadd.f32 %v1236, %v907
      %v1238 = vrot.slane %v1237, 4
      %v1239 = vadd.f32 %v1237, %v1238
      %v1240 = vrot.slane %v1239, 2
      %v1241 = vadd.f32 %v1239, %v1240
      %v1242 = vrot.slane %v1241, 1
      %v1243 = vadd.f32 %v1241, %v1242
      %v1244 = vadd.f32 %v895, %v899
      %v1245 = vadd.f32 %v1244, %v905
      %v1246 = vadd.f32 %v1245, %v909
      %v1247 = vrot.slane %v1246, 4
      %v1248 = vadd.f32 %v1246, %v1247
      %v1249 = vrot.slane %v1248, 2
      %v1250 = vadd.f32 %v1248, %v1249
      %v1251 = vrot.slane %v1250, 1
      %v1252 = vadd.f32 %v1250, %v1251
      %v1253 = vadd.f32 %v946, %v950
      %v1254 = vadd.f32 %v1253, %v956
      %v1255 = vadd.f32 %v1254, %v960
      %v1256 = vrot.slane %v1255, 4
      %v1257 = vadd.f32 %v1255, %v1256
      %v1258 = vrot.slane %v1257, 2
      %v1259 = vadd.f32 %v1257, %v1258
      %v1260 = vrot.slane %v1259, 1
      %v1261 = vadd.f32 %v1259, %v1260
      %v1262 = vadd.f32 %v948, %v952
      %v1263 = vadd.f32 %v1262, %v958
      %v1264 = vadd.f32 %v1263, %v962
      %v1265 = vrot.slane %v1264, 4
      %v1266 = vadd.f32 %v1264, %v1265
      %v1267 = vrot.slane %v1266, 2
      %v1268 = vadd.f32 %v1266, %v1267
      %v1269 = vrot.slane %v1268, 1
      %v1270 = vadd.f32 %v1268, %v1269
      %v1271 = vadd.f32 %v999, %v1003
      %v1272 = vadd.f32 %v1271, %v1009
      %v1273 = vadd.f32 %v1272, %v1013
      %v1274 = vrot.slane %v1273, 4
      %v1275 = vadd.f32 %v1273, %v1274
      %v1276 = vrot.slane %v1275, 2
      %v1277 = vadd.f32 %v1275, %v1276
      %v1278 = vrot.slane %v1277, 1
      %v1279 = vadd.f32 %v1277, %v1278
      %v1280 = vadd.f32 %v1001, %v1005
      %v1281 = vadd.f32 %v1280, %v1011
      %v1282 = vadd.f32 %v1281, %v1015
      %v1283 = vrot.slane %v1282, 4
      %v1284 = vadd.f32 %v1282, %v1283
      %v1285 = vrot.slane %v1284, 2
      %v1286 = vadd.f32 %v1284, %v1285
      %v1287 = vrot.slane %v1286, 1
      %v1288 = vadd.f32 %v1286, %v1287
      %v1297 = vcombine.low %v1225, %v1234
      %v1298 = vcombine.low %v1243, %v1252
      %v1299 = vcombine.low %v1261, %v1270
      %v1300 = vcombine.low %v1279, %v1288
      %v1302 = vunpack.c.l.s4 1966171168
      %v1303 = vunpack.c.0.s8 %v1302
      %v1304 = vlaneseq
      %v1305 = vshrl.u32 %v1304, 7
      %v1306 = vsub.s32 %v1303, %v1305
      %v1307 = vrot.slane %v1297, %v1306
      %v1309 = vunpack.c.l.s4 1966171168
      %v1310 = vunpack.c.0.s8 %v1309
      %v1311 = vlaneseq
      %v1312 = vshrl.u32 %v1311, 7
      %v1313 = vsub.s32 %v1310, %v1312
      %v1314 = vrot.slane %v1298, %v1313
      %v1316 = vunpack.c.l.s4 1966171168
      %v1317 = vunpack.c.0.s8 %v1316
      %v1318 = vlaneseq
      %v1319 = vshrl.u32 %v1318, 7
      %v1320 = vsub.s32 %v1317, %v1319
      %v1321 = vrot.slane %v1299, %v1320
      %v1323 = vunpack.c.l.s4 1966171168
      %v1324 = vunpack.c.0.s8 %v1323
      %v1325 = vlaneseq
      %v1326 = vshrl.u32 %v1325, 7
      %v1327 = vsub.s32 %v1324, %v1326
      %v1328 = vrot.slane %v1300, %v1327
      %v1329 = vcombine.low %v1307, %v1314
      %v1330 = vcombine.low %v1321, %v1328
      %v1332 = vunpack.c.l.s4 1966171168
      %v1333 = vunpack.c.0.s8 %v1332
      %v1334 = vlaneseq
      %v1335 = vshrl.u32 %v1334, 7
      %v1336 = vsub.s32 %v1333, %v1335
      %v1337 = vrot.slane %v1329, %v1336
      %v1339 = vunpack.c.l.s4 1966171168
      %v1340 = vunpack.c.0.s8 %v1339
      %v1341 = vlaneseq
      %v1342 = vshrl.u32 %v1341, 7
      %v1343 = vsub.s32 %v1340, %v1342
      %v1344 = vrot.slane %v1330, %v1343
      %v1345 = vcombine.low %v1337, %v1344
      %1347 = vst [vmem:[%s337] sm:$0xff] %v1345
      %v1348 = vmul.f32 %v840, %v840
      %v1349 = vmul.f32 %v842, %v842
      %v1350 = vmul.f32 %v893, %v893
      %v1351 = vmul.f32 %v895, %v895
      %v1352 = vmul.f32 %v946, %v946
      %v1353 = vmul.f32 %v948, %v948
      %v1354 = vmul.f32 %v999, %v999
      %v1355 = vmul.f32 %v1001, %v1001
      %v1356 = vmul.f32 %v844, %v844
      %v1357 = vmul.f32 %v846, %v846
      %v1358 = vmul.f32 %v897, %v897
      %v1359 = vmul.f32 %v899, %v899
      %v1360 = vmul.f32 %v950, %v950
      %v1361 = vmul.f32 %v952, %v952
      %v1362 = vmul.f32 %v1003, %v1003
      %v1363 = vmul.f32 %v1005, %v1005
      %v1364 = vmul.f32 %v850, %v850
      %v1365 = vmul.f32 %v852, %v852
      %v1366 = vmul.f32 %v903, %v903
      %v1367 = vmul.f32 %v905, %v905
      %v1368 = vmul.f32 %v956, %v956
      %v1369 = vmul.f32 %v958, %v958
      %v1370 = vmul.f32 %v1009, %v1009
      %v1371 = vmul.f32 %v1011, %v1011
      %v1372 = vmul.f32 %v854, %v854
      %v1373 = vmul.f32 %v856, %v856
      %v1374 = vmul.f32 %v907, %v907
      %v1375 = vmul.f32 %v909, %v909
      %v1376 = vmul.f32 %v960, %v960
      %v1377 = vmul.f32 %v962, %v962
      %v1378 = vmul.f32 %v1013, %v1013
      %v1379 = vmul.f32 %v1015, %v1015
      %v1380 = vadd.f32 %v1348, %v1356
      %v1381 = vadd.f32 %v1380, %v1364
      %v1382 = vadd.f32 %v1381, %v1372
      %v1383 = vrot.slane %v1382, 4
      %v1384 = vadd.f32 %v1382, %v1383
      %v1385 = vrot.slane %v1384, 2
      %v1386 = vadd.f32 %v1384, %v1385
      %v1387 = vrot.slane %v1386, 1
      %v1388 = vadd.f32 %v1386, %v1387
      %v1389 = vadd.f32 %v1349, %v1357
      %v1390 = vadd.f32 %v1389, %v1365
      %v1391 = vadd.f32 %v1390, %v1373
      %v1392 = vrot.slane %v1391, 4
      %v1393 = vadd.f32 %v1391, %v1392
      %v1394 = vrot.slane %v1393, 2
      %v1395 = vadd.f32 %v1393, %v1394
      %v1396 = vrot.slane %v1395, 1
      %v1397 = vadd.f32 %v1395, %v1396
      %v1398 = vadd.f32 %v1350, %v1358
      %v1399 = vadd.f32 %v1398, %v1366
      %v1400 = vadd.f32 %v1399, %v1374
      %v1401 = vrot.slane %v1400, 4
      %v1402 = vadd.f32 %v1400, %v1401
      %v1403 = vrot.slane %v1402, 2
      %v1404 = vadd.f32 %v1402, %v1403
      %v1405 = vrot.slane %v1404, 1
      %v1406 = vadd.f32 %v1404, %v1405
      %v1407 = vadd.f32 %v1351, %v1359
      %v1408 = vadd.f32 %v1407, %v1367
      %v1409 = vadd.f32 %v1408, %v1375
      %v1410 = vrot.slane %v1409, 4
      %v1411 = vadd.f32 %v1409, %v1410
      %v1412 = vrot.slane %v1411, 2
      %v1413 = vadd.f32 %v1411, %v1412
      %v1414 = vrot.slane %v1413, 1
      %v1415 = vadd.f32 %v1413, %v1414
      %v1416 = vadd.f32 %v1352, %v1360
      %v1417 = vadd.f32 %v1416, %v1368
      %v1418 = vadd.f32 %v1417, %v1376
      %v1419 = vrot.slane %v1418, 4
      %v1420 = vadd.f32 %v1418, %v1419
      %v1421 = vrot.slane %v1420, 2
      %v1422 = vadd.f32 %v1420, %v1421
      %v1423 = vrot.slane %v1422, 1
      %v1424 = vadd.f32 %v1422, %v1423
      %v1425 = vadd.f32 %v1353, %v1361
      %v1426 = vadd.f32 %v1425, %v1369
      %v1427 = vadd.f32 %v1426, %v1377
      %v1428 = vrot.slane %v1427, 4
      %v1429 = vadd.f32 %v1427, %v1428
      %v1430 = vrot.slane %v1429, 2
      %v1431 = vadd.f32 %v1429, %v1430
      %v1432 = vrot.slane %v1431, 1
      %v1433 = vadd.f32 %v1431, %v1432
      %v1434 = vadd.f32 %v1354, %v1362
      %v1435 = vadd.f32 %v1434, %v1370
      %v1436 = vadd.f32 %v1435, %v1378
      %v1437 = vrot.slane %v1436, 4
      %v1438 = vadd.f32 %v1436, %v1437
      %v1439 = vrot.slane %v1438, 2
      %v1440 = vadd.f32 %v1438, %v1439
      %v1441 = vrot.slane %v1440, 1
      %v1442 = vadd.f32 %v1440, %v1441
      %v1443 = vadd.f32 %v1355, %v1363
      %v1444 = vadd.f32 %v1443, %v1371
      %v1445 = vadd.f32 %v1444, %v1379
      %v1446 = vrot.slane %v1445, 4
      %v1447 = vadd.f32 %v1445, %v1446
      %v1448 = vrot.slane %v1447, 2
      %v1449 = vadd.f32 %v1447, %v1448
      %v1450 = vrot.slane %v1449, 1
      %v1451 = vadd.f32 %v1449, %v1450
      %v1460 = vcombine.low %v1388, %v1397
      %v1461 = vcombine.low %v1406, %v1415
      %v1462 = vcombine.low %v1424, %v1433
      %v1463 = vcombine.low %v1442, %v1451
      %v1465 = vunpack.c.l.s4 1966171168
      %v1466 = vunpack.c.0.s8 %v1465
      %v1467 = vlaneseq
      %v1468 = vshrl.u32 %v1467, 7
      %v1469 = vsub.s32 %v1466, %v1468
      %v1470 = vrot.slane %v1460, %v1469
      %v1472 = vunpack.c.l.s4 1966171168
      %v1473 = vunpack.c.0.s8 %v1472
      %v1474 = vlaneseq
      %v1475 = vshrl.u32 %v1474, 7
      %v1476 = vsub.s32 %v1473, %v1475
      %v1477 = vrot.slane %v1461, %v1476
      %v1479 = vunpack.c.l.s4 1966171168
      %v1480 = vunpack.c.0.s8 %v1479
      %v1481 = vlaneseq
      %v1482 = vshrl.u32 %v1481, 7
      %v1483 = vsub.s32 %v1480, %v1482
      %v1484 = vrot.slane %v1462, %v1483
      %v1486 = vunpack.c.l.s4 1966171168
      %v1487 = vunpack.c.0.s8 %v1486
      %v1488 = vlaneseq
      %v1489 = vshrl.u32 %v1488, 7
      %v1490 = vsub.s32 %v1487, %v1489
      %v1491 = vrot.slane %v1463, %v1490
      %v1492 = vcombine.low %v1470, %v1477
      %v1493 = vcombine.low %v1484, %v1491
      %v1495 = vunpack.c.l.s4 1966171168
      %v1496 = vunpack.c.0.s8 %v1495
      %v1497 = vlaneseq
      %v1498 = vshrl.u32 %v1497, 7
      %v1499 = vsub.s32 %v1496, %v1498
      %v1500 = vrot.slane %v1492, %v1499
      %v1502 = vunpack.c.l.s4 1966171168
      %v1503 = vunpack.c.0.s8 %v1502
      %v1504 = vlaneseq
      %v1505 = vshrl.u32 %v1504, 7
      %v1506 = vsub.s32 %v1503, %v1505
      %v1507 = vrot.slane %v1493, %v1506
      %v1508 = vcombine.low %v1500, %v1507
      %1510 = vst [vmem:[%s345] sm:$0xff] %v1508
      %p1511 = scmp.lt.s32.totalorder %s23, 1
      %s1512 = scalar_select %p1511, %s23, 1
      %s1513 = smul.addr %s1512, 8
      %s1514 = scalar_lea.vmem %s5, %s1513
      %p1515 = scmp.lt.s32.totalorder %s23, 1
      %s1516 = scalar_select %p1515, %s23, 1
      %p1517 = scmp.lt.s32.totalorder %s24, 0
      %s1518 = scalar_select %p1517, %s24, 0
      %s1519 = smul.addr %s1518, 8
      %s1520 = smul.addr %s1516, 8
      %s1521 = sadd.s32 %s1519, %s1520
      %s1522 = scalar_lea.vmem %s6, %s1521
      %p1523 = scmp.lt.s32.totalorder %s23, 1
      %s1524 = scalar_select %p1523, %s23, 1
      %p1525 = scmp.lt.s32.totalorder %s24, 0
      %s1526 = scalar_select %p1525, %s24, 0
      %s1527 = smul.addr %s1526, 8
      %s1528 = smul.addr %s1524, 8
      %s1529 = sadd.s32 %s1527, %s1528
      %s1530 = scalar_lea.vmem %s7, %s1529
      // Predicated region
      $region49: #{forward.21} parent=39 // pred_check
        %p1531 = pneg %p161
      $region50: #{forward.21} parent=39 // pred_check_branch
        %1533 = sbr.rel (%p1531) target = $region52
      $region51: #{forward.21} parent=39 // pred_region
        _
      $region52: #{forward.21} parent=39 // pred_fallthru
        _
      // Predicated region
      $region53: #{forward.21} parent=39 // pred_check
        %p1534 = pneg %p189
      $region54: #{forward.21} parent=39 // pred_check_branch
        %1536 = sbr.rel (%p1534) target = $region56
      $region55: #{forward.21} parent=39 // pred_region
        _
      $region56: #{forward.21} parent=39 // pred_fallthru
        _
      // Predicated region
      $region57: #{forward.21} parent=39 // pred_check
        %p1537 = pneg %p217
      $region58: #{forward.21} parent=39 // pred_check_branch
        %1539 = sbr.rel (%p1537) target = $region60
      $region59: #{forward.21} parent=39 // pred_region
        _
      $region60: #{forward.21} parent=39 // pred_fallthru
        _
    $region40: #{forward.21} parent=5 // pred_fallthru
      _
    %p1540 = scmp.le.s32.totalorder 2, %s14
    // Predicated region
    $region61: #{forward.21} parent=5 // pred_check
      %p1541 = pneg %p1540
    $region62: #{forward.21} parent=5 // pred_check_branch
      %1543 = sbr.rel (%p1541) target = $region64
    $region63: #{forward.21} parent=5 // pred_region
      %s1544 = ssub.s32 %s14, 2
      // Predicated region
      $region65: #{forward.21} parent=63 // pred_check
        %p1545 = pneg %p167
      $region66: #{forward.21} parent=63 // pred_check_branch
        %1547 = sbr.rel (%p1545) target = $region68
      $region67: #{forward.21} parent=63 // pred_region
        %p1548 = scmp.lt.s32.totalorder %s25, 1
        %s1549 = scalar_select %p1548, %s25, 1
        %s1550 = smul.addr %s1549, 8
        %s1551 = scalar_lea.vmem %s5, %s1550
      $region68: #{forward.21} parent=63 // pred_fallthru
        _
      // Predicated region
      $region69: #{forward.21} parent=63 // pred_check
        %p1552 = pneg %p195
      $region70: #{forward.21} parent=63 // pred_check_branch
        %1554 = sbr.rel (%p1552) target = $region72
      $region71: #{forward.21} parent=63 // pred_region
        %p1555 = scmp.lt.s32.totalorder %s25, 1
        %s1556 = scalar_select %p1555, %s25, 1
        %p1557 = scmp.lt.s32.totalorder %s26, 0
        %s1558 = scalar_select %p1557, %s26, 0
        %s1559 = smul.addr %s1558, 8
        %s1560 = smul.addr %s1556, 8
        %s1561 = sadd.s32 %s1559, %s1560
        %s1562 = scalar_lea.vmem %s6, %s1561
      $region72: #{forward.21} parent=63 // pred_fallthru
        _
      // Predicated region
      $region73: #{forward.21} parent=63 // pred_check
        %p1563 = pneg %p223
      $region74: #{forward.21} parent=63 // pred_check_branch
        %1565 = sbr.rel (%p1563) target = $region76
      $region75: #{forward.21} parent=63 // pred_region
        %p1566 = scmp.lt.s32.totalorder %s25, 1
        %s1567 = scalar_select %p1566, %s25, 1
        %p1568 = scmp.lt.s32.totalorder %s26, 0
        %s1569 = scalar_select %p1568, %s26, 0
        %s1570 = smul.addr %s1569, 8
        %s1571 = smul.addr %s1567, 8
        %s1572 = sadd.s32 %s1570, %s1571
        %s1573 = scalar_lea.vmem %s7, %s1572
      $region76: #{forward.21} parent=63 // pred_fallthru
        _
    $region64: #{forward.21} parent=5 // pred_fallthru
      _
  $region6: #{forward.21} parent=0 // loop_footer
    %s18 = sadd.s32 1, %s14
  $region7: #{forward.21} parent=0 // loop_footer_branch
    %13 = sbr.rel target = $region3
  $region8: #{forward.21} parent=0 // loop_exit
    _

</llo_original>
